<compile_context>
chip_gen: v7x
topology: tpu7x:2x2x1
jax: 0.10.0
libtpu: 0.0.40
codegen_flags: <defaults>
</compile_context>

<pallas_src>
import functools

import jax
import jax.numpy as jnp
from jax import lax
from jax.experimental import pallas as pl
from jax.experimental.pallas import tpu as pltpu


# ----------------------------------------------------------------------------
# Pallas kernels
# ----------------------------------------------------------------------------
def _gemm_kernel(x_ref, w_ref, o_ref):
    # bf16 x bf16 -> f32 accumulate on the MXU.
    o_ref[...] = jnp.dot(x_ref[...], w_ref[...],
                         preferred_element_type=jnp.float32)


def _gemm_bias_kernel(x_ref, w_ref, b_ref, o_ref):
    y = jnp.dot(x_ref[...], w_ref[...], preferred_element_type=jnp.float32)
    o_ref[...] = y + b_ref[...]


_SINGLE_SHOT_BYTES = 8 * 1024 * 1024   # operands + result comfortably in VMEM


def tap_gemm(x, w, *, tm=1024):
    """(M, K) @ (K, N) -> f32 (M, N).  Expects bf16 inputs."""
    M, K = x.shape
    _, N = w.shape
    total = M * K * x.dtype.itemsize + K * N * w.dtype.itemsize + M * N * 4
    if total <= _SINGLE_SHOT_BYTES:
        # Single full-array block: no padding, no per-step grid overhead.
        return pl.pallas_call(
            _gemm_kernel,
            out_shape=jax.ShapeDtypeStruct((M, N), jnp.float32),
        )(x, w)

    # Large problem: tile the row axis with a big tile (per-step overhead was
    # the old bottleneck).  A ragged last tile is handled by Pallas boundary
    # masking (rows are independent), so no jnp.pad / output slice passes.
    return pl.pallas_call(
        _gemm_kernel,
        out_shape=jax.ShapeDtypeStruct((M, N), jnp.float32),
        grid_spec=pltpu.PrefetchScalarGridSpec(
            num_scalar_prefetch=0,
            grid=(pl.cdiv(M, tm),),
            in_specs=[pl.BlockSpec((tm, K), lambda i: (i, 0)),
                      pl.BlockSpec((K, N), lambda i: (0, 0))],
            out_specs=pl.BlockSpec((tm, N), lambda i: (i, 0)),
        ),
        compiler_params=pltpu.CompilerParams(
            dimension_semantics=("parallel",),      # megacore shard rows (v7x)
            vmem_limit_bytes=32 * 1024 * 1024,      # v5e scoped default is 16 MiB
        ),
    )(x, w)


def fc_forward(z, w_t, b):
    """Linear: batch rows on sublanes (padded 2->8 only), features on lanes."""
    M, K = z.shape
    _, N = w_t.shape
    Mp = max(8, ((M + 7) // 8) * 8)
    zp = jnp.pad(z, ((0, Mp - M), (0, 0))) if Mp != M else z
    out = pl.pallas_call(
        _gemm_bias_kernel,
        out_shape=jax.ShapeDtypeStruct((Mp, N), jnp.float32),
    )(zp, w_t, b.reshape(1, N))
    return out[:M]


# ----------------------------------------------------------------------------
# ConvTranspose2d = per-input-pixel tap GEMM (Pallas) + col2im scatter (glue)
# ----------------------------------------------------------------------------
def conv_transpose2d_nhwc(x, w, b, *, stride, padding, output_padding, act):
    # x: (B, H, W, Cin) f32;  w: (Cin, Cout, k, k) PyTorch layout;  b: (Cout,)
    B, H, W, Cin = x.shape
    _, Cout, k, _ = w.shape
    s, p, op = stride, padding, output_padding
    OH = (H - 1) * s - 2 * p + k + op
    OW = (W - 1) * s - 2 * p + k + op

    # Direct GEMM over input pixels: K = Cin (no k*k duplication), N = Cout*k*k.
    xm = x.reshape(B * H * W, Cin).astype(jnp.bfloat16)
    wm = w.reshape(Cin, Cout * k * k).astype(jnp.bfloat16)
    taps = tap_gemm(xm, wm)                                 # (B*H*W, Cout*k*k) f32
    taps = taps.reshape(B, H, W, Cout, k, k)

    # col2im: output pixel (i*s - p + kh, j*s - p + kw) accumulates tap (kh, kw).
    # Done as k*k static strided adds on the small output; XLA fuses these with
    # the bias + activation into one elementwise pass.
    FH, FW = (H - 1) * s + k, (W - 1) * s + k
    full = jnp.zeros((B, FH, FW, Cout), jnp.float32)
    for kh in range(k):
        for kw in range(k):
            full = full.at[:, kh:kh + (H - 1) * s + 1:s,
                              kw:kw + (W - 1) * s + 1:s, :].add(
                                  taps[:, :, :, :, kh, kw])
    y = full[:, p:p + OH, p:p + OW, :] + b.reshape(1, 1, 1, Cout)
    if act == "relu":
        y = jnp.maximum(y, 0.0)
    elif act == "tanh":
        y = jnp.tanh(y)
    return y                                               # (B, OH, OW, Cout) f32


# ----------------------------------------------------------------------------
# Parameters (deterministic synthetic init, PyTorch-shaped)
# ----------------------------------------------------------------------------
def _uniform(key, shape, fan_in):
    bound = 1.0 / jnp.sqrt(jnp.float32(fan_in))
    return jax.random.uniform(key, shape, jnp.float32, -bound, bound)


def init_params(key, latent_dim, out_channels, hidden_units):
    h = hidden_units
    ks = jax.random.split(key, 8)
    params = {}
    fc_out = h * 4 * 10 * 10
    params["fc"] = (_uniform(ks[0], (fc_out, latent_dim), latent_dim),
                    _uniform(ks[1], (fc_out,), latent_dim))
    params["deconv1"] = (_uniform(ks[2], (h * 4, h * 2, 4, 4), h * 4 * 16),
                         _uniform(ks[3], (h * 2,), h * 4 * 16))
    params["deconv2"] = (_uniform(ks[4], (h * 2, h, 4, 4), h * 2 * 16),
                         _uniform(ks[5], (h,), h * 2 * 16))
    params["deconv3"] = (_uniform(ks[6], (h, out_channels, 4, 4), h * 16),
                         _uniform(ks[7], (out_channels,), h * 16))
    return params


# ----------------------------------------------------------------------------
# Forward pass (Pallas) and pure-XLA reference for validation
# ----------------------------------------------------------------------------
def cnn_decoder_forward(params, z, hidden_units):
    B = z.shape[0]
    fc_w, fc_b = params["fc"]
    x = fc_forward(z, fc_w.T, fc_b)                              # (B, 4h*100)
    # PyTorch .view(B, 4h, 10, 10) is channel-major: one tiny transpose to
    # NHWC, then the decoder stays channels-last throughout.
    x = x.reshape(B, hidden_units * 4, 10, 10).transpose(0, 2, 3, 1)
    x = conv_transpose2d_nhwc(x, *params["deconv1"], stride=2, padding=1,
                              output_padding=1, act="relu")      # (B,21,21,2h)
    x = conv_transpose2d_nhwc(x, *params["deconv2"], stride=2, padding=1,
                              output_padding=0, act="relu")      # (B,42,42,h)
    x = conv_transpose2d_nhwc(x, *params["deconv3"], stride=2, padding=1,
                              output_padding=0, act="tanh")      # (B,84,84,C)
    return x.transpose(0, 3, 1, 2)                               # NCHW once


def _ref_convT(x, w, b, s, p, op):
    k = w.shape[-1]
    rhs = jnp.flip(w, (2, 3)).transpose(1, 0, 2, 3)              # (Cout, Cin, k, k)
    y = lax.conv_general_dilated(
        x, rhs, window_strides=(1, 1),
        padding=[(k - 1 - p, k - 1 - p + op)] * 2,
        lhs_dilation=(s, s),
        dimension_numbers=("NCHW", "OIHW", "NCHW"))
    return y + b.reshape(1, -1, 1, 1)


def cnn_decoder_reference(params, z, hidden_units):
    B = z.shape[0]
    fc_w, fc_b = params["fc"]
    x = (z @ fc_w.T + fc_b).reshape(B, hidden_units * 4, 10, 10)
    x = jax.nn.relu(_ref_convT(x, *params["deconv1"], 2, 1, 1))
    x = jax.nn.relu(_ref_convT(x, *params["deconv2"], 2, 1, 0))
    x = jnp.tanh(_ref_convT(x, *params["deconv3"], 2, 1, 0))
    return x


if __name__ == "__main__":
    latent_dim, out_channels, hidden_units, batch = 16, 1, 8, 2
    key = jax.random.PRNGKey(0)
    params = init_params(key, latent_dim, out_channels, hidden_units)
    z = jax.random.normal(jax.random.fold_in(key, 999),
                          (batch, latent_dim), jnp.float32)

    fwd = jax.jit(functools.partial(cnn_decoder_forward,
                                    hidden_units=hidden_units))
    out = jax.block_until_ready(fwd(params, z))
    assert out.shape == (batch, out_channels, 84, 84), out.shape

    ref = cnn_decoder_reference(params, z, hidden_units)
    max_err = float(jnp.max(jnp.abs(out - ref)))
    # bf16 GEMM inputs (f32 accumulate) vs f32 XLA reference.
    assert max_err < 2e-2, f"mismatch vs reference: {max_err}"

    print("KERNEL_OK")
</pallas_src>

<mosaic_0001>
module attributes {stable_mosaic.version = 11 : i64} {
  func.func @_gemm_bias_kernel(%arg0: memref<8x16xf32, #tpu.memory_space<vmem>>, %arg1: memref<16x3200xf32, #tpu.memory_space<vmem>>, %arg2: memref<1x3200xf32, #tpu.memory_space<vmem>>, %arg3: memref<8x3200xf32, #tpu.memory_space<vmem>>) attributes {dimension_semantics = [], scalar_prefetch = 0 : i64, scratch_operands = 0 : i64, tpu.core_type = #tpu.core_type<tc>} {
    %c0 = arith.constant 0 : index
    %c0_0 = arith.constant 0 : index
    %0 = vector.load %arg0[%c0, %c0_0] : memref<8x16xf32, #tpu.memory_space<vmem>>, vector<8x16xf32>
    %c0_1 = arith.constant 0 : index
    %c0_2 = arith.constant 0 : index
    %1 = vector.load %arg1[%c0_1, %c0_2] : memref<16x3200xf32, #tpu.memory_space<vmem>>, vector<16x3200xf32>
    %cst = arith.constant dense<0.000000e+00> : vector<8x3200xf32>
    %2 = tpu.matmul %0, %1, %cst {dimension_numbers = #tpu.dot_dimension_numbers<[1], [0], [0], [1], [0, 0, 1, 1], [], []>} : vector<8x16xf32>, vector<16x3200xf32>, vector<8x3200xf32> -> vector<8x3200xf32>
    %c0_3 = arith.constant 0 : index
    %c0_4 = arith.constant 0 : index
    %3 = vector.load %arg2[%c0_3, %c0_4] : memref<1x3200xf32, #tpu.memory_space<vmem>>, vector<1x3200xf32>
    %4 = vector.broadcast %3 : vector<1x3200xf32> to vector<8x3200xf32>
    %5 = arith.addf %2, %4 : vector<8x3200xf32>
    %c0_5 = arith.constant 0 : index
    %c0_6 = arith.constant 0 : index
    %6 = vector.load %arg3[%c0_5, %c0_6] : memref<8x3200xf32, #tpu.memory_space<vmem>>, vector<8x3200xf32>
    tpu.vector_store %arg3[%c0_5, %c0_6], %5 {strides = array<i32>} : memref<8x3200xf32, #tpu.memory_space<vmem>>, vector<8x3200xf32>,
    return
  }
}

module attributes {stable_mosaic.version = 11 : i64} {
  func.func @_gemm_kernel(%arg0: memref<200x32xbf16, #tpu.memory_space<vmem>>, %arg1: memref<32x256xbf16, #tpu.memory_space<vmem>>, %arg2: memref<200x256xf32, #tpu.memory_space<vmem>>) attributes {dimension_semantics = [], scalar_prefetch = 0 : i64, scratch_operands = 0 : i64, tpu.core_type = #tpu.core_type<tc>} {
    %c0 = arith.constant 0 : index
    %c0_0 = arith.constant 0 : index
    %0 = vector.load %arg0[%c0, %c0_0] : memref<200x32xbf16, #tpu.memory_space<vmem>>, vector<200x32xbf16>
    %c0_1 = arith.constant 0 : index
    %c0_2 = arith.constant 0 : index
    %1 = vector.load %arg1[%c0_1, %c0_2] : memref<32x256xbf16, #tpu.memory_space<vmem>>, vector<32x256xbf16>
    %cst = arith.constant dense<0.000000e+00> : vector<200x256xf32>
    %2 = tpu.matmul %0, %1, %cst {dimension_numbers = #tpu.dot_dimension_numbers<[1], [0], [0], [1], [0, 0, 1, 1], [], []>} : vector<200x32xbf16>, vector<32x256xbf16>, vector<200x256xf32> -> vector<200x256xf32>
    %c0_3 = arith.constant 0 : index
    %c0_4 = arith.constant 0 : index
    %3 = vector.load %arg2[%c0_3, %c0_4] : memref<200x256xf32, #tpu.memory_space<vmem>>, vector<200x256xf32>
    tpu.vector_store %arg2[%c0_3, %c0_4], %2 {strides = array<i32>} : memref<200x256xf32, #tpu.memory_space<vmem>>, vector<200x256xf32>,
    return
  }
}

module attributes {stable_mosaic.version = 11 : i64} {
  func.func @_gemm_kernel(%arg0: memref<882x16xbf16, #tpu.memory_space<vmem>>, %arg1: memref<16x128xbf16, #tpu.memory_space<vmem>>, %arg2: memref<882x128xf32, #tpu.memory_space<vmem>>) attributes {dimension_semantics = [], scalar_prefetch = 0 : i64, scratch_operands = 0 : i64, tpu.core_type = #tpu.core_type<tc>} {
    %c0 = arith.constant 0 : index
    %c0_0 = arith.constant 0 : index
    %0 = vector.load %arg0[%c0, %c0_0] : memref<882x16xbf16, #tpu.memory_space<vmem>>, vector<882x16xbf16>
    %c0_1 = arith.constant 0 : index
    %c0_2 = arith.constant 0 : index
    %1 = vector.load %arg1[%c0_1, %c0_2] : memref<16x128xbf16, #tpu.memory_space<vmem>>, vector<16x128xbf16>
    %cst = arith.constant dense<0.000000e+00> : vector<882x128xf32>
    %2 = tpu.matmul %0, %1, %cst {dimension_numbers = #tpu.dot_dimension_numbers<[1], [0], [0], [1], [0, 0, 1, 1], [], []>} : vector<882x16xbf16>, vector<16x128xbf16>, vector<882x128xf32> -> vector<882x128xf32>
    %c0_3 = arith.constant 0 : index
    %c0_4 = arith.constant 0 : index
    %3 = vector.load %arg2[%c0_3, %c0_4] : memref<882x128xf32, #tpu.memory_space<vmem>>, vector<882x128xf32>
    tpu.vector_store %arg2[%c0_3, %c0_4], %2 {strides = array<i32>} : memref<882x128xf32, #tpu.memory_space<vmem>>, vector<882x128xf32>,
    return
  }
}

module attributes {stable_mosaic.version = 11 : i64} {
  func.func @_gemm_kernel(%arg0: memref<3528x8xbf16, #tpu.memory_space<vmem>>, %arg1: memref<8x16xbf16, #tpu.memory_space<vmem>>, %arg2: memref<3528x16xf32, #tpu.memory_space<vmem>>) attributes {dimension_semantics = [], scalar_prefetch = 0 : i64, scratch_operands = 0 : i64, tpu.core_type = #tpu.core_type<tc>} {
    %c0 = arith.constant 0 : index
    %c0_0 = arith.constant 0 : index
    %0 = vector.load %arg0[%c0, %c0_0] : memref<3528x8xbf16, #tpu.memory_space<vmem>>, vector<3528x8xbf16>
    %c0_1 = arith.constant 0 : index
    %c0_2 = arith.constant 0 : index
    %1 = vector.load %arg1[%c0_1, %c0_2] : memref<8x16xbf16, #tpu.memory_space<vmem>>, vector<8x16xbf16>
    %cst = arith.constant dense<0.000000e+00> : vector<3528x16xf32>
    %2 = tpu.matmul %0, %1, %cst {dimension_numbers = #tpu.dot_dimension_numbers<[1], [0], [0], [1], [0, 0, 1, 1], [], []>} : vector<3528x8xbf16>, vector<8x16xbf16>, vector<3528x16xf32> -> vector<3528x16xf32>
    %c0_3 = arith.constant 0 : index
    %c0_4 = arith.constant 0 : index
    %3 = vector.load %arg2[%c0_3, %c0_4] : memref<3528x16xf32, #tpu.memory_space<vmem>>, vector<3528x16xf32>
    tpu.vector_store %arg2[%c0_3, %c0_4], %2 {strides = array<i32>} : memref<3528x16xf32, #tpu.memory_space<vmem>>, vector<3528x16xf32>,
    return
  }
}

</mosaic_0001>

<llo_original>
// kernel: cnn_decoder_forward.4
$region0: #{cnn_decoder_forward.4}
  #allocation0 [shape = 'u32[]', space=smem, size = 0x4, offset = 0x4, fixed_abs, tag = 'smem constant byte address 0x4 - core index']
  #allocation1 [shape = 'u32[144,128]{1,0:T(1,128)}', space=vmem, size = 0x12000, scoped, tag = 'internal scratch']
  %s0 = inlined_call_operand.vmem [shape: f32[8,16], index: 0, kind: input, shape index: {}]
  %s1 = inlined_call_operand.hbm [shape: f32[16,3200], index: 1, kind: input, shape index: {}]
  %s2 = inlined_call_operand.vmem [shape: f32[1,3200], index: 2, kind: input, shape index: {}]
  %s3 = inlined_call_operand.vmem [shape: f32[8,3200], index: 3, kind: output, shape index: {}]
  %s4 = sld [smem:[#allocation0]]
  $region26: #{cnn_decoder_forward.4} parent=0
    _
  %s6 = ssub.s32 1, %s4
  %s7 = scalar_select 0, %s6, %s4
  $region1: #{cnn_decoder_forward.4} parent=0
    #allocation2 [shape = 'u8[204800]{0}', space=vmem, size = 0x32000, scoped, tag = 'input window, operand 1, single buffered']
    #allocation3 [shape = 's32[1]{0}', space=sflag, size = 0x4, scoped, tag = 'scoped memory for cnn_decoder_forward.4']
    %8 = vsyncpa [#allocation3], 0
    // Predicated region
    $region2: #{cnn_decoder_forward.4} parent=1 // pred_check
      _
    $region3: #{cnn_decoder_forward.4} parent=1 // pred_check_branch
      %10 = sbr.rel (0) target = $region5
    $region4: #{cnn_decoder_forward.4} parent=1 // pred_region
      _
    $region5: #{cnn_decoder_forward.4} parent=1 // pred_fallthru
      _
    // Predicated region
    $region6: #{cnn_decoder_forward.4} parent=1 // pred_check
      _
    $region7: #{cnn_decoder_forward.4} parent=1 // pred_check_branch
      %12 = sbr.rel (0) target = $region9
    $region8: #{cnn_decoder_forward.4} parent=1 // pred_region
      %s14 = ssub.s32 6400, 6400
      %15 = vsyncadd [#allocation3], %s14
      %s16 = sshll.u32 [#allocation2], 4
      %s17 = int_to_ptr.vmem [resolvable:$true] %s16
      %22 = dma.hbm_to_vmem [thread:$0]  %s1, 6400, %s17, [#allocation3], 3200, 3200, 200
    $region9: #{cnn_decoder_forward.4} parent=1 // pred_fallthru
      _
    // Predicated region
    $region10: #{cnn_decoder_forward.4} parent=1 // pred_check
      _
    $region11: #{cnn_decoder_forward.4} parent=1 // pred_check_branch
      %24 = sbr.rel (0) target = $region13
    $region12: #{cnn_decoder_forward.4} parent=1 // pred_region
      _
    $region13: #{cnn_decoder_forward.4} parent=1 // pred_fallthru
      _
    // Predicated region
    $region14: #{cnn_decoder_forward.4} parent=1 // pred_check
      _
    $region15: #{cnn_decoder_forward.4} parent=1 // pred_check_branch
      %26 = sbr.rel (0) target = $region17
    $region16: #{cnn_decoder_forward.4} parent=1 // pred_region
      %27 = dma.done [#allocation3], 6400
    $region17: #{cnn_decoder_forward.4} parent=1 // pred_fallthru
      _
    %v28 = vld [vmem:[%s0] sm:$0xff]
    %v29 = vld [vmem:[#allocation2] sm:$0xff]
    %v30 = vld [vmem:[#allocation2 + $0x8] sm:$0xff]
    %v31 = vld [vmem:[#allocation2 + $0x10] sm:$0xff]
    %v32 = vld [vmem:[#allocation2 + $0x18] sm:$0xff]
    %v33 = vld [vmem:[#allocation2 + $0x20] sm:$0xff]
    %v34 = vld [vmem:[#allocation2 + $0x28] sm:$0xff]
    %v35 = vld [vmem:[#allocation2 + $0x30] sm:$0xff]
    %v36 = vld [vmem:[#allocation2 + $0x38] sm:$0xff]
    %v37 = vld [vmem:[#allocation2 + $0x40] sm:$0xff]
    %v38 = vld [vmem:[#allocation2 + $0x48] sm:$0xff]
    %v39 = vld [vmem:[#allocation2 + $0x50] sm:$0xff]
    %v40 = vld [vmem:[#allocation2 + $0x58] sm:$0xff]
    %v41 = vld [vmem:[#allocation2 + $0x60] sm:$0xff]
    %v42 = vld [vmem:[#allocation2 + $0x68] sm:$0xff]
    %v43 = vld [vmem:[#allocation2 + $0x70] sm:$0xff]
    %v44 = vld [vmem:[#allocation2 + $0x78] sm:$0xff]
    %v45 = vld [vmem:[#allocation2 + $0x80] sm:$0xff]
    %v46 = vld [vmem:[#allocation2 + $0x88] sm:$0xff]
    %v47 = vld [vmem:[#allocation2 + $0x90] sm:$0xff]
    %v48 = vld [vmem:[#allocation2 + $0x98] sm:$0xff]
    %v49 = vld [vmem:[#allocation2 + $0xa0] sm:$0xff]
    %v50 = vld [vmem:[#allocation2 + $0xa8] sm:$0xff]
    %v51 = vld [vmem:[#allocation2 + $0xb0] sm:$0xff]
    %v52 = vld [vmem:[#allocation2 + $0xb8] sm:$0xff]
    %v53 = vld [vmem:[#allocation2 + $0xc0] sm:$0xff]
    %v54 = vld [vmem:[#allocation2 + $0xc8] sm:$0xff]
    %v55 = vld [vmem:[#allocation2 + $0xd0] sm:$0xff]
    %v56 = vld [vmem:[#allocation2 + $0xd8] sm:$0xff]
    %v57 = vld [vmem:[#allocation2 + $0xe0] sm:$0xff]
    %v58 = vld [vmem:[#allocation2 + $0xe8] sm:$0xff]
    %v59 = vld [vmem:[#allocation2 + $0xf0] sm:$0xff]
    %v60 = vld [vmem:[#allocation2 + $0xf8] sm:$0xff]
    %v61 = vld [vmem:[#allocation2 + $0x100] sm:$0xff]
    %v62 = vld [vmem:[#allocation2 + $0x108] sm:$0xff]
    %v63 = vld [vmem:[#allocation2 + $0x110] sm:$0xff]
    %v64 = vld [vmem:[#allocation2 + $0x118] sm:$0xff]
    %v65 = vld [vmem:[#allocation2 + $0x120] sm:$0xff]
    %v66 = vld [vmem:[#allocation2 + $0x128] sm:$0xff]
    %v67 = vld [vmem:[#allocation2 + $0x130] sm:$0xff]
    %v68 = vld [vmem:[#allocation2 + $0x138] sm:$0xff]
    %v69 = vld [vmem:[#allocation2 + $0x140] sm:$0xff]
    %v70 = vld [vmem:[#allocation2 + $0x148] sm:$0xff]
    %v71 = vld [vmem:[#allocation2 + $0x150] sm:$0xff]
    %v72 = vld [vmem:[#allocation2 + $0x158] sm:$0xff]
    %v73 = vld [vmem:[#allocation2 + $0x160] sm:$0xff]
    %v74 = vld [vmem:[#allocation2 + $0x168] sm:$0xff]
    %v75 = vld [vmem:[#allocation2 + $0x170] sm:$0xff]
    %v76 = vld [vmem:[#allocation2 + $0x178] sm:$0xff]
    %v77 = vld [vmem:[#allocation2 + $0x180] sm:$0xff]
    %v78 = vld [vmem:[#allocation2 + $0x188] sm:$0xff]
    %v79 = vld [vmem:[%s2] sm:$0xff]
    %v80 = vld [vmem:[%s2 + $0x8] sm:$0xff]
    %v81 = vld [vmem:[%s2 + $0x10] sm:$0xff]
    %v82 = vld [vmem:[%s2 + $0x18] sm:$0x1]
    %v87 = vlaneseq
    %v88 = vshrl.u32 %v87, 7
    %v89 = vsub.s32 0, %v88
    %v90 = vrot.slane %v79, %v89
    %v91 = vlaneseq
    %v92 = vshrl.u32 %v91, 7
    %v93 = vsub.s32 1, %v92
    %v94 = vrot.slane %v79, %v93
    %v95 = vlaneseq
    %v96 = vshrl.u32 %v95, 7
    %v97 = vsub.s32 2, %v96
    %v98 = vrot.slane %v79, %v97
    %v99 = vlaneseq
    %v100 = vshrl.u32 %v99, 7
    %v101 = vsub.s32 3, %v100
    %v102 = vrot.slane %v79, %v101
    %v103 = vlaneseq
    %v104 = vshrl.u32 %v103, 7
    %v105 = vsub.s32 4, %v104
    %v106 = vrot.slane %v79, %v105
    %v107 = vlaneseq
    %v108 = vshrl.u32 %v107, 7
    %v109 = vsub.s32 5, %v108
    %v110 = vrot.slane %v79, %v109
    %v111 = vlaneseq
    %v112 = vshrl.u32 %v111, 7
    %v113 = vsub.s32 6, %v112
    %v114 = vrot.slane %v79, %v113
    %v115 = vlaneseq
    %v116 = vshrl.u32 %v115, 7
    %v117 = vsub.s32 7, %v116
    %v118 = vrot.slane %v79, %v117
    %v119 = vlaneseq
    %v120 = vshrl.u32 %v119, 7
    %v121 = vsub.s32 0, %v120
    %v122 = vrot.slane %v80, %v121
    %v123 = vlaneseq
    %v124 = vshrl.u32 %v123, 7
    %v125 = vsub.s32 1, %v124
    %v126 = vrot.slane %v80, %v125
    %v127 = vlaneseq
    %v128 = vshrl.u32 %v127, 7
    %v129 = vsub.s32 2, %v128
    %v130 = vrot.slane %v80, %v129
    %v131 = vlaneseq
    %v132 = vshrl.u32 %v131, 7
    %v133 = vsub.s32 3, %v132
    %v134 = vrot.slane %v80, %v133
    %v135 = vlaneseq
    %v136 = vshrl.u32 %v135, 7
    %v137 = vsub.s32 4, %v136
    %v138 = vrot.slane %v80, %v137
    %v139 = vlaneseq
    %v140 = vshrl.u32 %v139, 7
    %v141 = vsub.s32 5, %v140
    %v142 = vrot.slane %v80, %v141
    %v143 = vlaneseq
    %v144 = vshrl.u32 %v143, 7
    %v145 = vsub.s32 6, %v144
    %v146 = vrot.slane %v80, %v145
    %v147 = vlaneseq
    %v148 = vshrl.u32 %v147, 7
    %v149 = vsub.s32 7, %v148
    %v150 = vrot.slane %v80, %v149
    %v151 = vlaneseq
    %v152 = vshrl.u32 %v151, 7
    %v153 = vsub.s32 0, %v152
    %v154 = vrot.slane %v81, %v153
    %v155 = vlaneseq
    %v156 = vshrl.u32 %v155, 7
    %v157 = vsub.s32 1, %v156
    %v158 = vrot.slane %v81, %v157
    %v159 = vlaneseq
    %v160 = vshrl.u32 %v159, 7
    %v161 = vsub.s32 2, %v160
    %v162 = vrot.slane %v81, %v161
    %v163 = vlaneseq
    %v164 = vshrl.u32 %v163, 7
    %v165 = vsub.s32 3, %v164
    %v166 = vrot.slane %v81, %v165
    %v167 = vlaneseq
    %v168 = vshrl.u32 %v167, 7
    %v169 = vsub.s32 4, %v168
    %v170 = vrot.slane %v81, %v169
    %v171 = vlaneseq
    %v172 = vshrl.u32 %v171, 7
    %v173 = vsub.s32 5, %v172
    %v174 = vrot.slane %v81, %v173
    %v175 = vlaneseq
    %v176 = vshrl.u32 %v175, 7
    %v177 = vsub.s32 6, %v176
    %v178 = vrot.slane %v81, %v177
    %v179 = vlaneseq
    %v180 = vshrl.u32 %v179, 7
    %v181 = vsub.s32 7, %v180
    %v182 = vrot.slane %v81, %v181
    %v183 = vlaneseq
    %v184 = vshrl.u32 %v183, 7
    %v185 = vsub.s32 0, %v184
    %v186 = vrot.slane %v82, %v185
    %vm212 = vcmask 130048
    %v214 = vsel %vm212, %v28, 0
    %216 = vmatprep.subr.mxu0 %v30
    %217 = vmatpush1.msra.mxu0 %v29
    %218 = vmatprep.subr.mxu0 %v55
    %219 = vmatpush1.msra.mxu0 %v54
    %220 = vmatprep.subr.mxu0 0.0
    %221 = vmatpush1.msra.mxu0 0.0
    %222 = vmatprep.subr.mxu0 0.0
    %223 = vmatpush1.msra.mxu0 0.0
    %224 = vmatprep.subr.mxu0 0.0
    %225 = vmatpush1.msra.mxu0 0.0
    %226 = vmatprep.subr.mxu0 0.0
    %227 = vmatpush1.msra.mxu0 0.0
    %228 = vmatprep.subr.mxu0 0.0
    %229 = vmatpush1.msra.mxu0 0.0
    %230 = vmatprep.subr.mxu0 0.0
    %231 = vmatpush1.msra.mxu0 0.0
    %232 = vmatprep.subr.mxu0 0.0
    %233 = vmatpush1.msra.mxu0 0.0
    %234 = vmatprep.subr.mxu0 0.0
    %235 = vmatpush1.msra.mxu0 0.0
    %236 = vmatprep.subr.mxu0 0.0
    %237 = vmatpush1.msra.mxu0 0.0
    %238 = vmatprep.subr.mxu0 0.0
    %239 = vmatpush1.msra.mxu0 0.0
    %240 = vmatprep.subr.mxu0 0.0
    %241 = vmatpush1.msra.mxu0 0.0
    %242 = vmatprep.subr.mxu0 0.0
    %243 = vmatpush1.msra.mxu0 0.0
    %244 = vmatprep.subr.mxu0 0.0
    %245 = vmatpush1.msra.mxu0 0.0
    %246 = vmatprep.subr.mxu0 0.0
    %247 = vmatpush1.msra.mxu0 0.0
    %248 = vmatprep.subr.mxu0 0.0
    %249 = vmatpush1.msra.mxu0 0.0
    %250 = vmatprep.subr.mxu0 0.0
    %251 = vmatpush1.msra.mxu0 0.0
    %252 = vmatprep.subr.mxu0 0.0
    %253 = vmatpush1.msra.mxu0 0.0
    %254 = vmatprep.subr.mxu0 0.0
    %255 = vmatpush1.msra.mxu0 0.0
    %256 = vmatprep.subr.mxu0 0.0
    %257 = vmatpush1.msra.mxu0 0.0
    %258 = vmatprep.subr.mxu0 0.0
    %259 = vmatpush1.msra.mxu0 0.0
    %260 = vmatprep.subr.mxu0 0.0
    %261 = vmatpush1.msra.mxu0 0.0
    %262 = vmatprep.subr.mxu0 0.0
    %263 = vmatpush1.msra.mxu0 0.0
    %264 = vmatprep.subr.mxu0 0.0
    %265 = vmatpush1.msra.mxu0 0.0
    %266 = vmatprep.subr.mxu0 0.0
    %267 = vmatpush1.msra.mxu0 0.0
    %268 = vmatprep.subr.mxu0 0.0
    %269 = vmatpush1.msra.mxu0 0.0
    %270 = vmatprep.subr.mxu0 0.0
    %271 = vmatpush1.msra.mxu0 0.0
    %272 = vmatprep.subr.mxu0 0.0
    %273 = vmatpush1.msra.mxu0 0.0
    %274 = vmatprep.subr.mxu0 0.0
    %275 = vmatpush1.msra.mxu0 0.0
    %276 = vmatprep.subr.mxu0 0.0
    %277 = vmatpush1.msra.mxu0 0.0
    %278 = vmatprep.subr.mxu0 0.0
    %279 = vmatpush1.msra.mxu0 0.0
    %280 = vmatprep.mubr.f32.mxu0 0.0
    %281 = vmatmul.mubr.f32.gmra.mrb[0].mxu0 %v214
    %v282 = vpop.f32.mrb[0].mxu0
    %v283 = vadd.f32 %v90, %v282
    %v284 = vpop.f32.mrb[0].mxu0
    %v285 = vadd.f32 %v94, %v284
    %286 = vdwg.mxu0
    %287 = vmatprep.subr.mxu0 %v32
    %288 = vmatpush1.msra.mxu0 %v31
    %289 = vmatprep.subr.mxu0 %v57
    %290 = vmatpush1.msra.mxu0 %v56
    %291 = vmatprep.subr.mxu0 0.0
    %292 = vmatpush1.msra.mxu0 0.0
    %293 = vmatprep.subr.mxu0 0.0
    %294 = vmatpush1.msra.mxu0 0.0
    %295 = vmatprep.subr.mxu0 0.0
    %296 = vmatpush1.msra.mxu0 0.0
    %297 = vmatprep.subr.mxu0 0.0
    %298 = vmatpush1.msra.mxu0 0.0
    %299 = vmatprep.subr.mxu0 0.0
    %300 = vmatpush1.msra.mxu0 0.0
    %301 = vmatprep.subr.mxu0 0.0
    %302 = vmatpush1.msra.mxu0 0.0
    %303 = vmatprep.subr.mxu0 0.0
    %304 = vmatpush1.msra.mxu0 0.0
    %305 = vmatprep.subr.mxu0 0.0
    %306 = vmatpush1.msra.mxu0 0.0
    %307 = vmatprep.subr.mxu0 0.0
    %308 = vmatpush1.msra.mxu0 0.0
    %309 = vmatprep.subr.mxu0 0.0
    %310 = vmatpush1.msra.mxu0 0.0
    %311 = vmatprep.subr.mxu0 0.0
    %312 = vmatpush1.msra.mxu0 0.0
    %313 = vmatprep.subr.mxu0 0.0
    %314 = vmatpush1.msra.mxu0 0.0
    %315 = vmatprep.subr.mxu0 0.0
    %316 = vmatpush1.msra.mxu0 0.0
    %317 = vmatprep.subr.mxu0 0.0
    %318 = vmatpush1.msra.mxu0 0.0
    %319 = vmatprep.subr.mxu0 0.0
    %320 = vmatpush1.msra.mxu0 0.0
    %321 = vmatprep.subr.mxu0 0.0
    %322 = vmatpush1.msra.mxu0 0.0
    %323 = vmatprep.subr.mxu0 0.0
    %324 = vmatpush1.msra.mxu0 0.0
    %325 = vmatprep.subr.mxu0 0.0
    %326 = vmatpush1.msra.mxu0 0.0
    %327 = vmatprep.subr.mxu0 0.0
    %328 = vmatpush1.msra.mxu0 0.0
    %329 = vmatprep.subr.mxu0 0.0
    %330 = vmatpush1.msra.mxu0 0.0
    %331 = vmatprep.subr.mxu0 0.0
    %332 = vmatpush1.msra.mxu0 0.0
    %333 = vmatprep.subr.mxu0 0.0
    %334 = vmatpush1.msra.mxu0 0.0
    %335 = vmatprep.subr.mxu0 0.0
    %336 = vmatpush1.msra.mxu0 0.0
    %337 = vmatprep.subr.mxu0 0.0
    %338 = vmatpush1.msra.mxu0 0.0
    %339 = vmatprep.subr.mxu0 0.0
    %340 = vmatpush1.msra.mxu0 0.0
    %341 = vmatprep.subr.mxu0 0.0
    %342 = vmatpush1.msra.mxu0 0.0
    %343 = vmatprep.subr.mxu0 0.0
    %344 = vmatpush1.msra.mxu0 0.0
    %345 = vmatprep.subr.mxu0 0.0
    %346 = vmatpush1.msra.mxu0 0.0
    %347 = vmatprep.subr.mxu0 0.0
    %348 = vmatpush1.msra.mxu0 0.0
    %349 = vmatprep.subr.mxu0 0.0
    %350 = vmatpush1.msra.mxu0 0.0
    %351 = vmatprep.mubr.f32.mxu0 0.0
    %352 = vmatmul.mubr.f32.gmra.mrb[0].mxu0 %v214
    %v353 = vpop.f32.mrb[0].mxu0
    %v354 = vadd.f32 %v98, %v353
    %v355 = vpop.f32.mrb[0].mxu0
    %v356 = vadd.f32 %v102, %v355
    %357 = vdwg.mxu0
    %358 = vmatprep.subr.mxu0 %v34
    %359 = vmatpush1.msra.mxu0 %v33
    %360 = vmatprep.subr.mxu0 %v59
    %361 = vmatpush1.msra.mxu0 %v58
    %362 = vmatprep.subr.mxu0 0.0
    %363 = vmatpush1.msra.mxu0 0.0
    %364 = vmatprep.subr.mxu0 0.0
    %365 = vmatpush1.msra.mxu0 0.0
    %366 = vmatprep.subr.mxu0 0.0
    %367 = vmatpush1.msra.mxu0 0.0
    %368 = vmatprep.subr.mxu0 0.0
    %369 = vmatpush1.msra.mxu0 0.0
    %370 = vmatprep.subr.mxu0 0.0
    %371 = vmatpush1.msra.mxu0 0.0
    %372 = vmatprep.subr.mxu0 0.0
    %373 = vmatpush1.msra.mxu0 0.0
    %374 = vmatprep.subr.mxu0 0.0
    %375 = vmatpush1.msra.mxu0 0.0
    %376 = vmatprep.subr.mxu0 0.0
    %377 = vmatpush1.msra.mxu0 0.0
    %378 = vmatprep.subr.mxu0 0.0
    %379 = vmatpush1.msra.mxu0 0.0
    %380 = vmatprep.subr.mxu0 0.0
    %381 = vmatpush1.msra.mxu0 0.0
    %382 = vmatprep.subr.mxu0 0.0
    %383 = vmatpush1.msra.mxu0 0.0
    %384 = vmatprep.subr.mxu0 0.0
    %385 = vmatpush1.msra.mxu0 0.0
    %386 = vmatprep.subr.mxu0 0.0
    %387 = vmatpush1.msra.mxu0 0.0
    %388 = vmatprep.subr.mxu0 0.0
    %389 = vmatpush1.msra.mxu0 0.0
    %390 = vmatprep.subr.mxu0 0.0
    %391 = vmatpush1.msra.mxu0 0.0
    %392 = vmatprep.subr.mxu0 0.0
    %393 = vmatpush1.msra.mxu0 0.0
    %394 = vmatprep.subr.mxu0 0.0
    %395 = vmatpush1.msra.mxu0 0.0
    %396 = vmatprep.subr.mxu0 0.0
    %397 = vmatpush1.msra.mxu0 0.0
    %398 = vmatprep.subr.mxu0 0.0
    %399 = vmatpush1.msra.mxu0 0.0
    %400 = vmatprep.subr.mxu0 0.0
    %401 = vmatpush1.msra.mxu0 0.0
    %402 = vmatprep.subr.mxu0 0.0
    %403 = vmatpush1.msra.mxu0 0.0
    %404 = vmatprep.subr.mxu0 0.0
    %405 = vmatpush1.msra.mxu0 0.0
    %406 = vmatprep.subr.mxu0 0.0
    %407 = vmatpush1.msra.mxu0 0.0
    %408 = vmatprep.subr.mxu0 0.0
    %409 = vmatpush1.msra.mxu0 0.0
    %410 = vmatprep.subr.mxu0 0.0
    %411 = vmatpush1.msra.mxu0 0.0
    %412 = vmatprep.subr.mxu0 0.0
    %413 = vmatpush1.msra.mxu0 0.0
    %414 = vmatprep.subr.mxu0 0.0
    %415 = vmatpush1.msra.mxu0 0.0
    %416 = vmatprep.subr.mxu0 0.0
    %417 = vmatpush1.msra.mxu0 0.0
    %418 = vmatprep.subr.mxu0 0.0
    %419 = vmatpush1.msra.mxu0 0.0
    %420 = vmatprep.subr.mxu0 0.0
    %421 = vmatpush1.msra.mxu0 0.0
    %422 = vmatprep.mubr.f32.mxu0 0.0
    %423 = vmatmul.mubr.f32.gmra.mrb[0].mxu0 %v214
    %v424 = vpop.f32.mrb[0].mxu0
    %v425 = vadd.f32 %v106, %v424
    %v426 = vpop.f32.mrb[0].mxu0
    %v427 = vadd.f32 %v110, %v426
    %428 = vdwg.mxu0
    %429 = vmatprep.subr.mxu0 %v36
    %430 = vmatpush1.msra.mxu0 %v35
    %431 = vmatprep.subr.mxu0 %v61
    %432 = vmatpush1.msra.mxu0 %v60
    %433 = vmatprep.subr.mxu0 0.0
    %434 = vmatpush1.msra.mxu0 0.0
    %435 = vmatprep.subr.mxu0 0.0
    %436 = vmatpush1.msra.mxu0 0.0
    %437 = vmatprep.subr.mxu0 0.0
    %438 = vmatpush1.msra.mxu0 0.0
    %439 = vmatprep.subr.mxu0 0.0
    %440 = vmatpush1.msra.mxu0 0.0
    %441 = vmatprep.subr.mxu0 0.0
    %442 = vmatpush1.msra.mxu0 0.0
    %443 = vmatprep.subr.mxu0 0.0
    %444 = vmatpush1.msra.mxu0 0.0
    %445 = vmatprep.subr.mxu0 0.0
    %446 = vmatpush1.msra.mxu0 0.0
    %447 = vmatprep.subr.mxu0 0.0
    %448 = vmatpush1.msra.mxu0 0.0
    %449 = vmatprep.subr.mxu0 0.0
    %450 = vmatpush1.msra.mxu0 0.0
    %451 = vmatprep.subr.mxu0 0.0
    %452 = vmatpush1.msra.mxu0 0.0
    %453 = vmatprep.subr.mxu0 0.0
    %454 = vmatpush1.msra.mxu0 0.0
    %455 = vmatprep.subr.mxu0 0.0
    %456 = vmatpush1.msra.mxu0 0.0
    %457 = vmatprep.subr.mxu0 0.0
    %458 = vmatpush1.msra.mxu0 0.0
    %459 = vmatprep.subr.mxu0 0.0
    %460 = vmatpush1.msra.mxu0 0.0
    %461 = vmatprep.subr.mxu0 0.0
    %462 = vmatpush1.msra.mxu0 0.0
    %463 = vmatprep.subr.mxu0 0.0
    %464 = vmatpush1.msra.mxu0 0.0
    %465 = vmatprep.subr.mxu0 0.0
    %466 = vmatpush1.msra.mxu0 0.0
    %467 = vmatprep.subr.mxu0 0.0
    %468 = vmatpush1.msra.mxu0 0.0
    %469 = vmatprep.subr.mxu0 0.0
    %470 = vmatpush1.msra.mxu0 0.0
    %471 = vmatprep.subr.mxu0 0.0
    %472 = vmatpush1.msra.mxu0 0.0
    %473 = vmatprep.subr.mxu0 0.0
    %474 = vmatpush1.msra.mxu0 0.0
    %475 = vmatprep.subr.mxu0 0.0
    %476 = vmatpush1.msra.mxu0 0.0
    %477 = vmatprep.subr.mxu0 0.0
    %478 = vmatpush1.msra.mxu0 0.0
    %479 = vmatprep.subr.mxu0 0.0
    %480 = vmatpush1.msra.mxu0 0.0
    %481 = vmatprep.subr.mxu0 0.0
    %482 = vmatpush1.msra.mxu0 0.0
    %483 = vmatprep.subr.mxu0 0.0
    %484 = vmatpush1.msra.mxu0 0.0
    %485 = vmatprep.subr.mxu0 0.0
    %486 = vmatpush1.msra.mxu0 0.0
    %487 = vmatprep.subr.mxu0 0.0
    %488 = vmatpush1.msra.mxu0 0.0
    %489 = vmatprep.subr.mxu0 0.0
    %490 = vmatpush1.msra.mxu0 0.0
    %491 = vmatprep.subr.mxu0 0.0
    %492 = vmatpush1.msra.mxu0 0.0
    %493 = vmatprep.mubr.f32.mxu0 0.0
    %494 = vmatmul.mubr.f32.gmra.mrb[0].mxu0 %v214
    %v495 = vpop.f32.mrb[0].mxu0
    %v496 = vadd.f32 %v114, %v495
    %v497 = vpop.f32.mrb[0].mxu0
    %v498 = vadd.f32 %v118, %v497
    %499 = vdwg.mxu0
    %500 = vmatprep.subr.mxu0 %v38
    %501 = vmatpush1.msra.mxu0 %v37
    %502 = vmatprep.subr.mxu0 %v63
    %503 = vmatpush1.msra.mxu0 %v62
    %504 = vmatprep.subr.mxu0 0.0
    %505 = vmatpush1.msra.mxu0 0.0
    %506 = vmatprep.subr.mxu0 0.0
    %507 = vmatpush1.msra.mxu0 0.0
    %508 = vmatprep.subr.mxu0 0.0
    %509 = vmatpush1.msra.mxu0 0.0
    %510 = vmatprep.subr.mxu0 0.0
    %511 = vmatpush1.msra.mxu0 0.0
    %512 = vmatprep.subr.mxu0 0.0
    %513 = vmatpush1.msra.mxu0 0.0
    %514 = vmatprep.subr.mxu0 0.0
    %515 = vmatpush1.msra.mxu0 0.0
    %516 = vmatprep.subr.mxu0 0.0
    %517 = vmatpush1.msra.mxu0 0.0
    %518 = vmatprep.subr.mxu0 0.0
    %519 = vmatpush1.msra.mxu0 0.0
    %520 = vmatprep.subr.mxu0 0.0
    %521 = vmatpush1.msra.mxu0 0.0
    %522 = vmatprep.subr.mxu0 0.0
    %523 = vmatpush1.msra.mxu0 0.0
    %524 = vmatprep.subr.mxu0 0.0
    %525 = vmatpush1.msra.mxu0 0.0
    %526 = vmatprep.subr.mxu0 0.0
    %527 = vmatpush1.msra.mxu0 0.0
    %528 = vmatprep.subr.mxu0 0.0
    %529 = vmatpush1.msra.mxu0 0.0
    %530 = vmatprep.subr.mxu0 0.0
    %531 = vmatpush1.msra.mxu0 0.0
    %532 = vmatprep.subr.mxu0 0.0
    %533 = vmatpush1.msra.mxu0 0.0
    %534 = vmatprep.subr.mxu0 0.0
    %535 = vmatpush1.msra.mxu0 0.0
    %536 = vmatprep.subr.mxu0 0.0
    %537 = vmatpush1.msra.mxu0 0.0
    %538 = vmatprep.subr.mxu0 0.0
    %539 = vmatpush1.msra.mxu0 0.0
    %540 = vmatprep.subr.mxu0 0.0
    %541 = vmatpush1.msra.mxu0 0.0
    %542 = vmatprep.subr.mxu0 0.0
    %543 = vmatpush1.msra.mxu0 0.0
    %544 = vmatprep.subr.mxu0 0.0
    %545 = vmatpush1.msra.mxu0 0.0
    %546 = vmatprep.subr.mxu0 0.0
    %547 = vmatpush1.msra.mxu0 0.0
    %548 = vmatprep.subr.mxu0 0.0
    %549 = vmatpush1.msra.mxu0 0.0
    %550 = vmatprep.subr.mxu0 0.0
    %551 = vmatpush1.msra.mxu0 0.0
    %552 = vmatprep.subr.mxu0 0.0
    %553 = vmatpush1.msra.mxu0 0.0
    %554 = vmatprep.subr.mxu0 0.0
    %555 = vmatpush1.msra.mxu0 0.0
    %556 = vmatprep.subr.mxu0 0.0
    %557 = vmatpush1.msra.mxu0 0.0
    %558 = vmatprep.subr.mxu0 0.0
    %559 = vmatpush1.msra.mxu0 0.0
    %560 = vmatprep.subr.mxu0 0.0
    %561 = vmatpush1.msra.mxu0 0.0
    %562 = vmatprep.subr.mxu0 0.0
    %563 = vmatpush1.msra.mxu0 0.0
    %564 = vmatprep.mubr.f32.mxu0 0.0
    %565 = vmatmul.mubr.f32.gmra.mrb[0].mxu0 %v214
    %v566 = vpop.f32.mrb[0].mxu0
    %v567 = vadd.f32 %v122, %v566
    %v568 = vpop.f32.mrb[0].mxu0
    %v569 = vadd.f32 %v126, %v568
    %570 = vdwg.mxu0
    %571 = vmatprep.subr.mxu0 %v40
    %572 = vmatpush1.msra.mxu0 %v39
    %573 = vmatprep.subr.mxu0 %v65
    %574 = vmatpush1.msra.mxu0 %v64
    %575 = vmatprep.subr.mxu0 0.0
    %576 = vmatpush1.msra.mxu0 0.0
    %577 = vmatprep.subr.mxu0 0.0
    %578 = vmatpush1.msra.mxu0 0.0
    %579 = vmatprep.subr.mxu0 0.0
    %580 = vmatpush1.msra.mxu0 0.0
    %581 = vmatprep.subr.mxu0 0.0
    %582 = vmatpush1.msra.mxu0 0.0
    %583 = vmatprep.subr.mxu0 0.0
    %584 = vmatpush1.msra.mxu0 0.0
    %585 = vmatprep.subr.mxu0 0.0
    %586 = vmatpush1.msra.mxu0 0.0
    %587 = vmatprep.subr.mxu0 0.0
    %588 = vmatpush1.msra.mxu0 0.0
    %589 = vmatprep.subr.mxu0 0.0
    %590 = vmatpush1.msra.mxu0 0.0
    %591 = vmatprep.subr.mxu0 0.0
    %592 = vmatpush1.msra.mxu0 0.0
    %593 = vmatprep.subr.mxu0 0.0
    %594 = vmatpush1.msra.mxu0 0.0
    %595 = vmatprep.subr.mxu0 0.0
    %596 = vmatpush1.msra.mxu0 0.0
    %597 = vmatprep.subr.mxu0 0.0
    %598 = vmatpush1.msra.mxu0 0.0
    %599 = vmatprep.subr.mxu0 0.0
    %600 = vmatpush1.msra.mxu0 0.0
    %601 = vmatprep.subr.mxu0 0.0
    %602 = vmatpush1.msra.mxu0 0.0
    %603 = vmatprep.subr.mxu0 0.0
    %604 = vmatpush1.msra.mxu0 0.0
    %605 = vmatprep.subr.mxu0 0.0
    %606 = vmatpush1.msra.mxu0 0.0
    %607 = vmatprep.subr.mxu0 0.0
    %608 = vmatpush1.msra.mxu0 0.0
    %609 = vmatprep.subr.mxu0 0.0
    %610 = vmatpush1.msra.mxu0 0.0
    %611 = vmatprep.subr.mxu0 0.0
    %612 = vmatpush1.msra.mxu0 0.0
    %613 = vmatprep.subr.mxu0 0.0
    %614 = vmatpush1.msra.mxu0 0.0
    %615 = vmatprep.subr.mxu0 0.0
    %616 = vmatpush1.msra.mxu0 0.0
    %617 = vmatprep.subr.mxu0 0.0
    %618 = vmatpush1.msra.mxu0 0.0
    %619 = vmatprep.subr.mxu0 0.0
    %620 = vmatpush1.msra.mxu0 0.0
    %621 = vmatprep.subr.mxu0 0.0
    %622 = vmatpush1.msra.mxu0 0.0
    %623 = vmatprep.subr.mxu0 0.0
    %624 = vmatpush1.msra.mxu0 0.0
    %625 = vmatprep.subr.mxu0 0.0
    %626 = vmatpush1.msra.mxu0 0.0
    %627 = vmatprep.subr.mxu0 0.0
    %628 = vmatpush1.msra.mxu0 0.0
    %629 = vmatprep.subr.mxu0 0.0
    %630 = vmatpush1.msra.mxu0 0.0
    %631 = vmatprep.subr.mxu0 0.0
    %632 = vmatpush1.msra.mxu0 0.0
    %633 = vmatprep.subr.mxu0 0.0
    %634 = vmatpush1.msra.mxu0 0.0
    %635 = vmatprep.mubr.f32.mxu0 0.0
    %636 = vmatmul.mubr.f32.gmra.mrb[0].mxu0 %v214
    %v637 = vpop.f32.mrb[0].mxu0
    %v638 = vadd.f32 %v130, %v637
    %v639 = vpop.f32.mrb[0].mxu0
    %v640 = vadd.f32 %v134, %v639
    %641 = vdwg.mxu0
    %642 = vmatprep.subr.mxu0 %v42
    %643 = vmatpush1.msra.mxu0 %v41
    %644 = vmatprep.subr.mxu0 %v67
    %645 = vmatpush1.msra.mxu0 %v66
    %646 = vmatprep.subr.mxu0 0.0
    %647 = vmatpush1.msra.mxu0 0.0
    %648 = vmatprep.subr.mxu0 0.0
    %649 = vmatpush1.msra.mxu0 0.0
    %650 = vmatprep.subr.mxu0 0.0
    %651 = vmatpush1.msra.mxu0 0.0
    %652 = vmatprep.subr.mxu0 0.0
    %653 = vmatpush1.msra.mxu0 0.0
    %654 = vmatprep.subr.mxu0 0.0
    %655 = vmatpush1.msra.mxu0 0.0
    %656 = vmatprep.subr.mxu0 0.0
    %657 = vmatpush1.msra.mxu0 0.0
    %658 = vmatprep.subr.mxu0 0.0
    %659 = vmatpush1.msra.mxu0 0.0
    %660 = vmatprep.subr.mxu0 0.0
    %661 = vmatpush1.msra.mxu0 0.0
    %662 = vmatprep.subr.mxu0 0.0
    %663 = vmatpush1.msra.mxu0 0.0
    %664 = vmatprep.subr.mxu0 0.0
    %665 = vmatpush1.msra.mxu0 0.0
    %666 = vmatprep.subr.mxu0 0.0
    %667 = vmatpush1.msra.mxu0 0.0
    %668 = vmatprep.subr.mxu0 0.0
    %669 = vmatpush1.msra.mxu0 0.0
    %670 = vmatprep.subr.mxu0 0.0
    %671 = vmatpush1.msra.mxu0 0.0
    %672 = vmatprep.subr.mxu0 0.0
    %673 = vmatpush1.msra.mxu0 0.0
    %674 = vmatprep.subr.mxu0 0.0
    %675 = vmatpush1.msra.mxu0 0.0
    %676 = vmatprep.subr.mxu0 0.0
    %677 = vmatpush1.msra.mxu0 0.0
    %678 = vmatprep.subr.mxu0 0.0
    %679 = vmatpush1.msra.mxu0 0.0
    %680 = vmatprep.subr.mxu0 0.0
    %681 = vmatpush1.msra.mxu0 0.0
    %682 = vmatprep.subr.mxu0 0.0
    %683 = vmatpush1.msra.mxu0 0.0
    %684 = vmatprep.subr.mxu0 0.0
    %685 = vmatpush1.msra.mxu0 0.0
    %686 = vmatprep.subr.mxu0 0.0
    %687 = vmatpush1.msra.mxu0 0.0
    %688 = vmatprep.subr.mxu0 0.0
    %689 = vmatpush1.msra.mxu0 0.0
    %690 = vmatprep.subr.mxu0 0.0
    %691 = vmatpush1.msra.mxu0 0.0
    %692 = vmatprep.subr.mxu0 0.0
    %693 = vmatpush1.msra.mxu0 0.0
    %694 = vmatprep.subr.mxu0 0.0
    %695 = vmatpush1.msra.mxu0 0.0
    %696 = vmatprep.subr.mxu0 0.0
    %697 = vmatpush1.msra.mxu0 0.0
    %698 = vmatprep.subr.mxu0 0.0
    %699 = vmatpush1.msra.mxu0 0.0
    %700 = vmatprep.subr.mxu0 0.0
    %701 = vmatpush1.msra.mxu0 0.0
    %702 = vmatprep.subr.mxu0 0.0
    %703 = vmatpush1.msra.mxu0 0.0
    %704 = vmatprep.subr.mxu0 0.0
    %705 = vmatpush1.msra.mxu0 0.0
    %706 = vmatprep.mubr.f32.mxu0 0.0
    %707 = vmatmul.mubr.f32.gmra.mrb[0].mxu0 %v214
    %v708 = vpop.f32.mrb[0].mxu0
    %v709 = vadd.f32 %v138, %v708
    %v710 = vpop.f32.mrb[0].mxu0
    %v711 = vadd.f32 %v142, %v710
    %712 = vdwg.mxu0
    %713 = vmatprep.subr.mxu0 %v44
    %714 = vmatpush1.msra.mxu0 %v43
    %715 = vmatprep.subr.mxu0 %v69
    %716 = vmatpush1.msra.mxu0 %v68
    %717 = vmatprep.subr.mxu0 0.0
    %718 = vmatpush1.msra.mxu0 0.0
    %719 = vmatprep.subr.mxu0 0.0
    %720 = vmatpush1.msra.mxu0 0.0
    %721 = vmatprep.subr.mxu0 0.0
    %722 = vmatpush1.msra.mxu0 0.0
    %723 = vmatprep.subr.mxu0 0.0
    %724 = vmatpush1.msra.mxu0 0.0
    %725 = vmatprep.subr.mxu0 0.0
    %726 = vmatpush1.msra.mxu0 0.0
    %727 = vmatprep.subr.mxu0 0.0
    %728 = vmatpush1.msra.mxu0 0.0
    %729 = vmatprep.subr.mxu0 0.0
    %730 = vmatpush1.msra.mxu0 0.0
    %731 = vmatprep.subr.mxu0 0.0
    %732 = vmatpush1.msra.mxu0 0.0
    %733 = vmatprep.subr.mxu0 0.0
    %734 = vmatpush1.msra.mxu0 0.0
    %735 = vmatprep.subr.mxu0 0.0
    %736 = vmatpush1.msra.mxu0 0.0
    %737 = vmatprep.subr.mxu0 0.0
    %738 = vmatpush1.msra.mxu0 0.0
    %739 = vmatprep.subr.mxu0 0.0
    %740 = vmatpush1.msra.mxu0 0.0
    %741 = vmatprep.subr.mxu0 0.0
    %742 = vmatpush1.msra.mxu0 0.0
    %743 = vmatprep.subr.mxu0 0.0
    %744 = vmatpush1.msra.mxu0 0.0
    %745 = vmatprep.subr.mxu0 0.0
    %746 = vmatpush1.msra.mxu0 0.0
    %747 = vmatprep.subr.mxu0 0.0
    %748 = vmatpush1.msra.mxu0 0.0
    %749 = vmatprep.subr.mxu0 0.0
    %750 = vmatpush1.msra.mxu0 0.0
    %751 = vmatprep.subr.mxu0 0.0
    %752 = vmatpush1.msra.mxu0 0.0
    %753 = vmatprep.subr.mxu0 0.0
    %754 = vmatpush1.msra.mxu0 0.0
    %755 = vmatprep.subr.mxu0 0.0
    %756 = vmatpush1.msra.mxu0 0.0
    %757 = vmatprep.subr.mxu0 0.0
    %758 = vmatpush1.msra.mxu0 0.0
    %759 = vmatprep.subr.mxu0 0.0
    %760 = vmatpush1.msra.mxu0 0.0
    %761 = vmatprep.subr.mxu0 0.0
    %762 = vmatpush1.msra.mxu0 0.0
    %763 = vmatprep.subr.mxu0 0.0
    %764 = vmatpush1.msra.mxu0 0.0
    %765 = vmatprep.subr.mxu0 0.0
    %766 = vmatpush1.msra.mxu0 0.0
    %767 = vmatprep.subr.mxu0 0.0
    %768 = vmatpush1.msra.mxu0 0.0
    %769 = vmatprep.subr.mxu0 0.0
    %770 = vmatpush1.msra.mxu0 0.0
    %771 = vmatprep.subr.mxu0 0.0
    %772 = vmatpush1.msra.mxu0 0.0
    %773 = vmatprep.subr.mxu0 0.0
    %774 = vmatpush1.msra.mxu0 0.0
    %775 = vmatprep.subr.mxu0 0.0
    %776 = vmatpush1.msra.mxu0 0.0
    %777 = vmatprep.mubr.f32.mxu0 0.0
    %778 = vmatmul.mubr.f32.gmra.mrb[0].mxu0 %v214
    %v779 = vpop.f32.mrb[0].mxu0
    %v780 = vadd.f32 %v146, %v779
    %v781 = vpop.f32.mrb[0].mxu0
    %v782 = vadd.f32 %v150, %v781
    %783 = vdwg.mxu0
    %784 = vmatprep.subr.mxu0 %v46
    %785 = vmatpush1.msra.mxu0 %v45
    %786 = vmatprep.subr.mxu0 %v71
    %787 = vmatpush1.msra.mxu0 %v70
    %788 = vmatprep.subr.mxu0 0.0
    %789 = vmatpush1.msra.mxu0 0.0
    %790 = vmatprep.subr.mxu0 0.0
    %791 = vmatpush1.msra.mxu0 0.0
    %792 = vmatprep.subr.mxu0 0.0
    %793 = vmatpush1.msra.mxu0 0.0
    %794 = vmatprep.subr.mxu0 0.0
    %795 = vmatpush1.msra.mxu0 0.0
    %796 = vmatprep.subr.mxu0 0.0
    %797 = vmatpush1.msra.mxu0 0.0
    %798 = vmatprep.subr.mxu0 0.0
    %799 = vmatpush1.msra.mxu0 0.0
    %800 = vmatprep.subr.mxu0 0.0
    %801 = vmatpush1.msra.mxu0 0.0
    %802 = vmatprep.subr.mxu0 0.0
    %803 = vmatpush1.msra.mxu0 0.0
    %804 = vmatprep.subr.mxu0 0.0
    %805 = vmatpush1.msra.mxu0 0.0
    %806 = vmatprep.subr.mxu0 0.0
    %807 = vmatpush1.msra.mxu0 0.0
    %808 = vmatprep.subr.mxu0 0.0
    %809 = vmatpush1.msra.mxu0 0.0
    %810 = vmatprep.subr.mxu0 0.0
    %811 = vmatpush1.msra.mxu0 0.0
    %812 = vmatprep.subr.mxu0 0.0
    %813 = vmatpush1.msra.mxu0 0.0
    %814 = vmatprep.subr.mxu0 0.0
    %815 = vmatpush1.msra.mxu0 0.0
    %816 = vmatprep.subr.mxu0 0.0
    %817 = vmatpush1.msra.mxu0 0.0
    %818 = vmatprep.subr.mxu0 0.0
    %819 = vmatpush1.msra.mxu0 0.0
    %820 = vmatprep.subr.mxu0 0.0
    %821 = vmatpush1.msra.mxu0 0.0
    %822 = vmatprep.subr.mxu0 0.0
    %823 = vmatpush1.msra.mxu0 0.0
    %824 = vmatprep.subr.mxu0 0.0
    %825 = vmatpush1.msra.mxu0 0.0
    %826 = vmatprep.subr.mxu0 0.0
    %827 = vmatpush1.msra.mxu0 0.0
    %828 = vmatprep.subr.mxu0 0.0
    %829 = vmatpush1.msra.mxu0 0.0
    %830 = vmatprep.subr.mxu0 0.0
    %831 = vmatpush1.msra.mxu0 0.0
    %832 = vmatprep.subr.mxu0 0.0
    %833 = vmatpush1.msra.mxu0 0.0
    %834 = vmatprep.subr.mxu0 0.0
    %835 = vmatpush1.msra.mxu0 0.0
    %836 = vmatprep.subr.mxu0 0.0
    %837 = vmatpush1.msra.mxu0 0.0
    %838 = vmatprep.subr.mxu0 0.0
    %839 = vmatpush1.msra.mxu0 0.0
    %840 = vmatprep.subr.mxu0 0.0
    %841 = vmatpush1.msra.mxu0 0.0
    %842 = vmatprep.subr.mxu0 0.0
    %843 = vmatpush1.msra.mxu0 0.0
    %844 = vmatprep.subr.mxu0 0.0
    %845 = vmatpush1.msra.mxu0 0.0
    %846 = vmatprep.subr.mxu0 0.0
    %847 = vmatpush1.msra.mxu0 0.0
    %848 = vmatprep.mubr.f32.mxu0 0.0
    %849 = vmatmul.mubr.f32.gmra.mrb[0].mxu0 %v214
    %v850 = vpop.f32.mrb[0].mxu0
    %v851 = vadd.f32 %v154, %v850
    %v852 = vpop.f32.mrb[0].mxu0
    %v853 = vadd.f32 %v158, %v852
    %854 = vdwg.mxu0
    %855 = vmatprep.subr.mxu0 %v48
    %856 = vmatpush1.msra.mxu0 %v47
    %857 = vmatprep.subr.mxu0 %v73
    %858 = vmatpush1.msra.mxu0 %v72
    %859 = vmatprep.subr.mxu0 0.0
    %860 = vmatpush1.msra.mxu0 0.0
    %861 = vmatprep.subr.mxu0 0.0
    %862 = vmatpush1.msra.mxu0 0.0
    %863 = vmatprep.subr.mxu0 0.0
    %864 = vmatpush1.msra.mxu0 0.0
    %865 = vmatprep.subr.mxu0 0.0
    %866 = vmatpush1.msra.mxu0 0.0
    %867 = vmatprep.subr.mxu0 0.0
    %868 = vmatpush1.msra.mxu0 0.0
    %869 = vmatprep.subr.mxu0 0.0
    %870 = vmatpush1.msra.mxu0 0.0
    %871 = vmatprep.subr.mxu0 0.0
    %872 = vmatpush1.msra.mxu0 0.0
    %873 = vmatprep.subr.mxu0 0.0
    %874 = vmatpush1.msra.mxu0 0.0
    %875 = vmatprep.subr.mxu0 0.0
    %876 = vmatpush1.msra.mxu0 0.0
    %877 = vmatprep.subr.mxu0 0.0
    %878 = vmatpush1.msra.mxu0 0.0
    %879 = vmatprep.subr.mxu0 0.0
    %880 = vmatpush1.msra.mxu0 0.0
    %881 = vmatprep.subr.mxu0 0.0
    %882 = vmatpush1.msra.mxu0 0.0
    %883 = vmatprep.subr.mxu0 0.0
    %884 = vmatpush1.msra.mxu0 0.0
    %885 = vmatprep.subr.mxu0 0.0
    %886 = vmatpush1.msra.mxu0 0.0
    %887 = vmatprep.subr.mxu0 0.0
    %888 = vmatpush1.msra.mxu0 0.0
    %889 = vmatprep.subr.mxu0 0.0
    %890 = vmatpush1.msra.mxu0 0.0
    %891 = vmatprep.subr.mxu0 0.0
    %892 = vmatpush1.msra.mxu0 0.0
    %893 = vmatprep.subr.mxu0 0.0
    %894 = vmatpush1.msra.mxu0 0.0
    %895 = vmatprep.subr.mxu0 0.0
    %896 = vmatpush1.msra.mxu0 0.0
    %897 = vmatprep.subr.mxu0 0.0
    %898 = vmatpush1.msra.mxu0 0.0
    %899 = vmatprep.subr.mxu0 0.0
    %900 = vmatpush1.msra.mxu0 0.0
    %901 = vmatprep.subr.mxu0 0.0
    %902 = vmatpush1.msra.mxu0 0.0
    %903 = vmatprep.subr.mxu0 0.0
    %904 = vmatpush1.msra.mxu0 0.0
    %905 = vmatprep.subr.mxu0 0.0
    %906 = vmatpush1.msra.mxu0 0.0
    %907 = vmatprep.subr.mxu0 0.0
    %908 = vmatpush1.msra.mxu0 0.0
    %909 = vmatprep.subr.mxu0 0.0
    %910 = vmatpush1.msra.mxu0 0.0
    %911 = vmatprep.subr.mxu0 0.0
    %912 = vmatpush1.msra.mxu0 0.0
    %913 = vmatprep.subr.mxu0 0.0
    %914 = vmatpush1.msra.mxu0 0.0
    %915 = vmatprep.subr.mxu0 0.0
    %916 = vmatpush1.msra.mxu0 0.0
    %917 = vmatprep.subr.mxu0 0.0
    %918 = vmatpush1.msra.mxu0 0.0
    %919 = vmatprep.mubr.f32.mxu0 0.0
    %920 = vmatmul.mubr.f32.gmra.mrb[0].mxu0 %v214
    %v921 = vpop.f32.mrb[0].mxu0
    %v922 = vadd.f32 %v162, %v921
    %v923 = vpop.f32.mrb[0].mxu0
    %v924 = vadd.f32 %v166, %v923
    %925 = vdwg.mxu0
    %926 = vmatprep.subr.mxu0 %v50
    %927 = vmatpush1.msra.mxu0 %v49
    %928 = vmatprep.subr.mxu0 %v75
    %929 = vmatpush1.msra.mxu0 %v74
    %930 = vmatprep.subr.mxu0 0.0
    %931 = vmatpush1.msra.mxu0 0.0
    %932 = vmatprep.subr.mxu0 0.0
    %933 = vmatpush1.msra.mxu0 0.0
    %934 = vmatprep.subr.mxu0 0.0
    %935 = vmatpush1.msra.mxu0 0.0
    %936 = vmatprep.subr.mxu0 0.0
    %937 = vmatpush1.msra.mxu0 0.0
    %938 = vmatprep.subr.mxu0 0.0
    %939 = vmatpush1.msra.mxu0 0.0
    %940 = vmatprep.subr.mxu0 0.0
    %941 = vmatpush1.msra.mxu0 0.0
    %942 = vmatprep.subr.mxu0 0.0
    %943 = vmatpush1.msra.mxu0 0.0
    %944 = vmatprep.subr.mxu0 0.0
    %945 = vmatpush1.msra.mxu0 0.0
    %946 = vmatprep.subr.mxu0 0.0
    %947 = vmatpush1.msra.mxu0 0.0
    %948 = vmatprep.subr.mxu0 0.0
    %949 = vmatpush1.msra.mxu0 0.0
    %950 = vmatprep.subr.mxu0 0.0
    %951 = vmatpush1.msra.mxu0 0.0
    %952 = vmatprep.subr.mxu0 0.0
    %953 = vmatpush1.msra.mxu0 0.0
    %954 = vmatprep.subr.mxu0 0.0
    %955 = vmatpush1.msra.mxu0 0.0
    %956 = vmatprep.subr.mxu0 0.0
    %957 = vmatpush1.msra.mxu0 0.0
    %958 = vmatprep.subr.mxu0 0.0
    %959 = vmatpush1.msra.mxu0 0.0
    %960 = vmatprep.subr.mxu0 0.0
    %961 = vmatpush1.msra.mxu0 0.0
    %962 = vmatprep.subr.mxu0 0.0
    %963 = vmatpush1.msra.mxu0 0.0
    %964 = vmatprep.subr.mxu0 0.0
    %965 = vmatpush1.msra.mxu0 0.0
    %966 = vmatprep.subr.mxu0 0.0
    %967 = vmatpush1.msra.mxu0 0.0
    %968 = vmatprep.subr.mxu0 0.0
    %969 = vmatpush1.msra.mxu0 0.0
    %970 = vmatprep.subr.mxu0 0.0
    %971 = vmatpush1.msra.mxu0 0.0
    %972 = vmatprep.subr.mxu0 0.0
    %973 = vmatpush1.msra.mxu0 0.0
    %974 = vmatprep.subr.mxu0 0.0
    %975 = vmatpush1.msra.mxu0 0.0
    %976 = vmatprep.subr.mxu0 0.0
    %977 = vmatpush1.msra.mxu0 0.0
    %978 = vmatprep.subr.mxu0 0.0
    %979 = vmatpush1.msra.mxu0 0.0
    %980 = vmatprep.subr.mxu0 0.0
    %981 = vmatpush1.msra.mxu0 0.0
    %982 = vmatprep.subr.mxu0 0.0
    %983 = vmatpush1.msra.mxu0 0.0
    %984 = vmatprep.subr.mxu0 0.0
    %985 = vmatpush1.msra.mxu0 0.0
    %986 = vmatprep.subr.mxu0 0.0
    %987 = vmatpush1.msra.mxu0 0.0
    %988 = vmatprep.subr.mxu0 0.0
    %989 = vmatpush1.msra.mxu0 0.0
    %990 = vmatprep.mubr.f32.mxu0 0.0
    %991 = vmatmul.mubr.f32.gmra.mrb[0].mxu0 %v214
    %v992 = vpop.f32.mrb[0].mxu0
    %v993 = vadd.f32 %v170, %v992
    %v994 = vpop.f32.mrb[0].mxu0
    %v995 = vadd.f32 %v174, %v994
    %996 = vdwg.mxu0
    %997 = vmatprep.subr.mxu0 %v52
    %998 = vmatpush1.msra.mxu0 %v51
    %999 = vmatprep.subr.mxu0 %v77
    %1000 = vmatpush1.msra.mxu0 %v76
    %1001 = vmatprep.subr.mxu0 0.0
    %1002 = vmatpush1.msra.mxu0 0.0
    %1003 = vmatprep.subr.mxu0 0.0
    %1004 = vmatpush1.msra.mxu0 0.0
    %1005 = vmatprep.subr.mxu0 0.0
    %1006 = vmatpush1.msra.mxu0 0.0
    %1007 = vmatprep.subr.mxu0 0.0
    %1008 = vmatpush1.msra.mxu0 0.0
    %1009 = vmatprep.subr.mxu0 0.0
    %1010 = vmatpush1.msra.mxu0 0.0
    %1011 = vmatprep.subr.mxu0 0.0
    %1012 = vmatpush1.msra.mxu0 0.0
    %1013 = vmatprep.subr.mxu0 0.0
    %1014 = vmatpush1.msra.mxu0 0.0
    %1015 = vmatprep.subr.mxu0 0.0
    %1016 = vmatpush1.msra.mxu0 0.0
    %1017 = vmatprep.subr.mxu0 0.0
    %1018 = vmatpush1.msra.mxu0 0.0
    %1019 = vmatprep.subr.mxu0 0.0
    %1020 = vmatpush1.msra.mxu0 0.0
    %1021 = vmatprep.subr.mxu0 0.0
    %1022 = vmatpush1.msra.mxu0 0.0
    %1023 = vmatprep.subr.mxu0 0.0
    %1024 = vmatpush1.msra.mxu0 0.0
    %1025 = vmatprep.subr.mxu0 0.0
    %1026 = vmatpush1.msra.mxu0 0.0
    %1027 = vmatprep.subr.mxu0 0.0
    %1028 = vmatpush1.msra.mxu0 0.0
    %1029 = vmatprep.subr.mxu0 0.0
    %1030 = vmatpush1.msra.mxu0 0.0
    %1031 = vmatprep.subr.mxu0 0.0
    %1032 = vmatpush1.msra.mxu0 0.0
    %1033 = vmatprep.subr.mxu0 0.0
    %1034 = vmatpush1.msra.mxu0 0.0
    %1035 = vmatprep.subr.mxu0 0.0
    %1036 = vmatpush1.msra.mxu0 0.0
    %1037 = vmatprep.subr.mxu0 0.0
    %1038 = vmatpush1.msra.mxu0 0.0
    %1039 = vmatprep.subr.mxu0 0.0
    %1040 = vmatpush1.msra.mxu0 0.0
    %1041 = vmatprep.subr.mxu0 0.0
    %1042 = vmatpush1.msra.mxu0 0.0
    %1043 = vmatprep.subr.mxu0 0.0
    %1044 = vmatpush1.msra.mxu0 0.0
    %1045 = vmatprep.subr.mxu0 0.0
    %1046 = vmatpush1.msra.mxu0 0.0
    %1047 = vmatprep.subr.mxu0 0.0
    %1048 = vmatpush1.msra.mxu0 0.0
    %1049 = vmatprep.subr.mxu0 0.0
    %1050 = vmatpush1.msra.mxu0 0.0
    %1051 = vmatprep.subr.mxu0 0.0
    %1052 = vmatpush1.msra.mxu0 0.0
    %1053 = vmatprep.subr.mxu0 0.0
    %1054 = vmatpush1.msra.mxu0 0.0
    %1055 = vmatprep.subr.mxu0 0.0
    %1056 = vmatpush1.msra.mxu0 0.0
    %1057 = vmatprep.subr.mxu0 0.0
    %1058 = vmatpush1.msra.mxu0 0.0
    %1059 = vmatprep.subr.mxu0 0.0
    %1060 = vmatpush1.msra.mxu0 0.0
    %1061 = vmatprep.mubr.f32.mxu0 0.0
    %1062 = vmatmul.mubr.f32.gmra.mrb[0].mxu0 %v214
    %v1063 = vpop.f32.mrb[0].mxu0
    %v1064 = vadd.f32 %v178, %v1063
    %v1065 = vpop.f32.mrb[0].mxu0
    %v1066 = vadd.f32 %v182, %v1065
    %1067 = vdwg.mxu0
    %1068 = vmatprep.subr.mxu0 0.0
    %1069 = vmatpush1.msra.mxu0 %v53
    %1070 = vmatprep.subr.mxu0 0.0
    %1071 = vmatpush1.msra.mxu0 %v78
    %1072 = vmatprep.subr.mxu0 0.0
    %1073 = vmatpush1.msra.mxu0 0.0
    %1074 = vmatprep.subr.mxu0 0.0
    %1075 = vmatpush1.msra.mxu0 0.0
    %1076 = vmatprep.subr.mxu0 0.0
    %1077 = vmatpush1.msra.mxu0 0.0
    %1078 = vmatprep.subr.mxu0 0.0
    %1079 = vmatpush1.msra.mxu0 0.0
    %1080 = vmatprep.subr.mxu0 0.0
    %1081 = vmatpush1.msra.mxu0 0.0
    %1082 = vmatprep.subr.mxu0 0.0
    %1083 = vmatpush1.msra.mxu0 0.0
    %1084 = vmatprep.subr.mxu0 0.0
    %1085 = vmatpush1.msra.mxu0 0.0
    %1086 = vmatprep.subr.mxu0 0.0
    %1087 = vmatpush1.msra.mxu0 0.0
    %1088 = vmatprep.subr.mxu0 0.0
    %1089 = vmatpush1.msra.mxu0 0.0
    %1090 = vmatprep.subr.mxu0 0.0
    %1091 = vmatpush1.msra.mxu0 0.0
    %1092 = vmatprep.subr.mxu0 0.0
    %1093 = vmatpush1.msra.mxu0 0.0
    %1094 = vmatprep.subr.mxu0 0.0
    %1095 = vmatpush1.msra.mxu0 0.0
    %1096 = vmatprep.subr.mxu0 0.0
    %1097 = vmatpush1.msra.mxu0 0.0
    %1098 = vmatprep.subr.mxu0 0.0
    %1099 = vmatpush1.msra.mxu0 0.0
    %1100 = vmatprep.subr.mxu0 0.0
    %1101 = vmatpush1.msra.mxu0 0.0
    %1102 = vmatprep.subr.mxu0 0.0
    %1103 = vmatpush1.msra.mxu0 0.0
    %1104 = vmatprep.subr.mxu0 0.0
    %1105 = vmatpush1.msra.mxu0 0.0
    %1106 = vmatprep.subr.mxu0 0.0
    %1107 = vmatpush1.msra.mxu0 0.0
    %1108 = vmatprep.subr.mxu0 0.0
    %1109 = vmatpush1.msra.mxu0 0.0
    %1110 = vmatprep.subr.mxu0 0.0
    %1111 = vmatpush1.msra.mxu0 0.0
    %1112 = vmatprep.subr.mxu0 0.0
    %1113 = vmatpush1.msra.mxu0 0.0
    %1114 = vmatprep.subr.mxu0 0.0
    %1115 = vmatpush1.msra.mxu0 0.0
    %1116 = vmatprep.subr.mxu0 0.0
    %1117 = vmatpush1.msra.mxu0 0.0
    %1118 = vmatprep.subr.mxu0 0.0
    %1119 = vmatpush1.msra.mxu0 0.0
    %1120 = vmatprep.subr.mxu0 0.0
    %1121 = vmatpush1.msra.mxu0 0.0
    %1122 = vmatprep.subr.mxu0 0.0
    %1123 = vmatpush1.msra.mxu0 0.0
    %1124 = vmatprep.subr.mxu0 0.0
    %1125 = vmatpush1.msra.mxu0 0.0
    %1126 = vmatprep.subr.mxu0 0.0
    %1127 = vmatpush1.msra.mxu0 0.0
    %1128 = vmatprep.subr.mxu0 0.0
    %1129 = vmatpush1.msra.mxu0 0.0
    %1130 = vmatprep.subr.mxu0 0.0
    %1131 = vmatpush1.msra.mxu0 0.0
    %1132 = vmatprep.mubr.f32.mxu0 0.0
    %1133 = vmatmul.mubr.f32.gmra.mrb[0].mxu0 %v214
    %v1134 = vpop.f32.mrb[0].mxu0
    %v1135 = vadd.f32 %v186, %v1134
    %v1136 = vpop.f32.mrb[0].mxu0
    %1137 = vdwg.mxu0
    %1138 = vst [vmem:[%s3] sm:$0xff] %v283
    %1139 = vst [vmem:[%s3 + $0x8] sm:$0xff] %v285
    %1140 = vst [vmem:[%s3 + $0x10] sm:$0xff] %v354
    %1141 = vst [vmem:[%s3 + $0x18] sm:$0xff] %v356
    %1142 = vst [vmem:[%s3 + $0x20] sm:$0xff] %v425
    %1143 = vst [vmem:[%s3 + $0x28] sm:$0xff] %v427
    %1144 = vst [vmem:[%s3 + $0x30] sm:$0xff] %v496
    %1145 = vst [vmem:[%s3 + $0x38] sm:$0xff] %v498
    %1146 = vst [vmem:[%s3 + $0x40] sm:$0xff] %v567
    %1147 = vst [vmem:[%s3 + $0x48] sm:$0xff] %v569
    %1148 = vst [vmem:[%s3 + $0x50] sm:$0xff] %v638
    %1149 = vst [vmem:[%s3 + $0x58] sm:$0xff] %v640
    %1150 = vst [vmem:[%s3 + $0x60] sm:$0xff] %v709
    %1151 = vst [vmem:[%s3 + $0x68] sm:$0xff] %v711
    %1152 = vst [vmem:[%s3 + $0x70] sm:$0xff] %v780
    %1153 = vst [vmem:[%s3 + $0x78] sm:$0xff] %v782
    %1154 = vst [vmem:[%s3 + $0x80] sm:$0xff] %v851
    %1155 = vst [vmem:[%s3 + $0x88] sm:$0xff] %v853
    %1156 = vst [vmem:[%s3 + $0x90] sm:$0xff] %v922
    %1157 = vst [vmem:[%s3 + $0x98] sm:$0xff] %v924
    %1158 = vst [vmem:[%s3 + $0xa0] sm:$0xff] %v993
    %1159 = vst [vmem:[%s3 + $0xa8] sm:$0xff] %v995
    %1160 = vst [vmem:[%s3 + $0xb0] sm:$0xff] %v1064
    %1161 = vst [vmem:[%s3 + $0xb8] sm:$0xff] %v1066
    %1162 = vst [vmem:[%s3 + $0xc0] sm:$0xff] %v1135
    // Predicated region
    $region18: #{cnn_decoder_forward.4} parent=1 // pred_check
      _
    $region19: #{cnn_decoder_forward.4} parent=1 // pred_check_branch
      %1164 = sbr.rel (0) target = $region21
    $region20: #{cnn_decoder_forward.4} parent=1 // pred_region
      _
    $region21: #{cnn_decoder_forward.4} parent=1 // pred_fallthru
      _
    // Predicated region
    $region22: #{cnn_decoder_forward.4} parent=1 // pred_check
      _
    $region23: #{cnn_decoder_forward.4} parent=1 // pred_check_branch
      %1166 = sbr.rel (0) target = $region25
    $region24: #{cnn_decoder_forward.4} parent=1 // pred_region
      _
    $region25: #{cnn_decoder_forward.4} parent=1 // pred_fallthru
      _
    %1167 = vsyncpa [#allocation3], 1

// kernel: cnn_decoder_forward.5
$region0: #{cnn_decoder_forward.5}
  #allocation0 [shape = 'u32[]', space=smem, size = 0x4, offset = 0x4, fixed_abs, tag = 'smem constant byte address 0x4 - core index']
  #allocation1 [shape = 'u32[144,128]{1,0:T(1,128)}', space=vmem, size = 0x12000, scoped, tag = 'internal scratch']
  %s0 = inlined_call_operand.vmem [shape: bf16[200,32], index: 0, kind: input, shape index: {}]
  %s1 = inlined_call_operand.vmem [shape: bf16[32,256], index: 1, kind: input, shape index: {}]
  %s2 = inlined_call_operand.vmem [shape: f32[200,256], index: 2, kind: output, shape index: {}]
  %s3 = sld [smem:[#allocation0]]
  $region18: #{cnn_decoder_forward.5} parent=0
    _
  %s5 = ssub.s32 1, %s3
  %s6 = scalar_select 0, %s5, %s3
  // Predicated region
  $region2: #{cnn_decoder_forward.5} parent=0 // pred_check
    _
  $region3: #{cnn_decoder_forward.5} parent=0 // pred_check_branch
    %8 = sbr.rel (0) target = $region5
  $region4: #{cnn_decoder_forward.5} parent=0 // pred_region
    _
  $region5: #{cnn_decoder_forward.5} parent=0 // pred_fallthru
    _
  // Predicated region
  $region6: #{cnn_decoder_forward.5} parent=0 // pred_check
    _
  $region7: #{cnn_decoder_forward.5} parent=0 // pred_check_branch
    %10 = sbr.rel (0) target = $region9
  $region8: #{cnn_decoder_forward.5} parent=0 // pred_region
    _
  $region9: #{cnn_decoder_forward.5} parent=0 // pred_fallthru
    _
  %v12 = vld [vmem:[%s0] sm:$0xf]
  %v13 = vld [vmem:[%s0 + $0x4] sm:$0xf]
  %v14 = vld [vmem:[%s0 + $0x8] sm:$0xf]
  %v15 = vld [vmem:[%s0 + $0xc] sm:$0xf]
  %v16 = vld [vmem:[%s0 + $0x10] sm:$0xf]
  %v17 = vld [vmem:[%s0 + $0x14] sm:$0xf]
  %v18 = vld [vmem:[%s0 + $0x18] sm:$0xf]
  %v19 = vld [vmem:[%s0 + $0x1c] sm:$0xf]
  %v20 = vld [vmem:[%s0 + $0x20] sm:$0xf]
  %v21 = vld [vmem:[%s0 + $0x24] sm:$0xf]
  %v22 = vld [vmem:[%s0 + $0x28] sm:$0xf]
  %v23 = vld [vmem:[%s0 + $0x2c] sm:$0xf]
  %v24 = vld [vmem:[%s0 + $0x30] sm:$0xf]
  %v25 = vld [vmem:[%s0 + $0x34] sm:$0xf]
  %v26 = vld [vmem:[%s0 + $0x38] sm:$0xf]
  %v27 = vld [vmem:[%s0 + $0x3c] sm:$0xf]
  %v28 = vld [vmem:[%s0 + $0x40] sm:$0xf]
  %v29 = vld [vmem:[%s0 + $0x44] sm:$0xf]
  %v30 = vld [vmem:[%s0 + $0x48] sm:$0xf]
  %v31 = vld [vmem:[%s0 + $0x4c] sm:$0xf]
  %v32 = vld [vmem:[%s0 + $0x50] sm:$0xf]
  %v33 = vld [vmem:[%s0 + $0x54] sm:$0xf]
  %v34 = vld [vmem:[%s0 + $0x58] sm:$0xf]
  %v35 = vld [vmem:[%s0 + $0x5c] sm:$0xf]
  %v36 = vld [vmem:[%s0 + $0x60] sm:$0xf]
  %v37 = vld [vmem:[%s1] sm:$0xff]
  %v38 = vld [vmem:[%s1 + $0x8] sm:$0xff]
  %v39 = vld [vmem:[%s1 + $0x10] sm:$0xff]
  %v40 = vld [vmem:[%s1 + $0x18] sm:$0xff]
  %v66 = vunpack.c.l.b16 %v12
  %v67 = vunpack.c.l.b16 %v13
  %v68 = vunpack.c.l.b16 %v14
  %v69 = vunpack.c.l.b16 %v15
  %v70 = vunpack.c.l.b16 %v16
  %v71 = vunpack.c.l.b16 %v17
  %v72 = vunpack.c.l.b16 %v18
  %v73 = vunpack.c.l.b16 %v19
  %v74 = vunpack.c.l.b16 %v20
  %v75 = vunpack.c.l.b16 %v21
  %v76 = vunpack.c.l.b16 %v22
  %v77 = vunpack.c.l.b16 %v23
  %v78 = vunpack.c.l.b16 %v24
  %v79 = vunpack.c.l.b16 %v25
  %v80 = vunpack.c.l.b16 %v26
  %v81 = vunpack.c.l.b16 %v27
  %v82 = vunpack.c.l.b16 %v28
  %v83 = vunpack.c.l.b16 %v29
  %v84 = vunpack.c.l.b16 %v30
  %v85 = vunpack.c.l.b16 %v31
  %v86 = vunpack.c.l.b16 %v32
  %v87 = vunpack.c.l.b16 %v33
  %v88 = vunpack.c.l.b16 %v34
  %v89 = vunpack.c.l.b16 %v35
  %v90 = vunpack.c.l.b16 %v36
  %v91 = vpack.c.b16 %v67, %v66
  %v92 = vpack.c.b16 %v69, %v68
  %v93 = vpack.c.b16 %v71, %v70
  %v94 = vpack.c.b16 %v73, %v72
  %v95 = vpack.c.b16 %v75, %v74
  %v96 = vpack.c.b16 %v77, %v76
  %v97 = vpack.c.b16 %v79, %v78
  %v98 = vpack.c.b16 %v81, %v80
  %v99 = vpack.c.b16 %v83, %v82
  %v100 = vpack.c.b16 %v85, %v84
  %v101 = vpack.c.b16 %v87, %v86
  %v102 = vpack.c.b16 %v89, %v88
  %v103 = vpack.c.b16 %v90, %v90
  %v108 = vunpack.c.l.b16 %v37
  %v109 = vunpack.c.h.b16 %v37
  %v110 = vunpack.c.l.b16 %v38
  %v111 = vunpack.c.h.b16 %v38
  %v112 = vunpack.c.l.b16 %v39
  %v113 = vunpack.c.h.b16 %v39
  %v114 = vunpack.c.l.b16 %v40
  %v115 = vunpack.c.h.b16 %v40
  %v116 = vpack.c.b16 %v110, %v108
  %v117 = vpack.c.b16 %v111, %v109
  %v118 = vpack.c.b16 %v114, %v112
  %v119 = vpack.c.b16 %v115, %v113
  %vm124 = vcmask 261120
  %v126 = vsel %vm124, %v91, 0
  %v129 = vsel %vm124, %v92, 0
  %v132 = vsel %vm124, %v93, 0
  %v135 = vsel %vm124, %v94, 0
  %v138 = vsel %vm124, %v95, 0
  %v141 = vsel %vm124, %v96, 0
  %v144 = vsel %vm124, %v97, 0
  %v147 = vsel %vm124, %v98, 0
  %v150 = vsel %vm124, %v99, 0
  %v153 = vsel %vm124, %v100, 0
  %v156 = vsel %vm124, %v101, 0
  %v159 = vsel %vm124, %v102, 0
  %v162 = vsel %vm124, %v103, 0
  %164 = vmatprep.subr.bf16.mxu0 %v117
  %165 = vmatpush1.bf16.msra.mxu0 %v116
  %166 = vmatprep.subr.bf16.mxu0 %v119
  %167 = vmatpush1.bf16.msra.mxu0 %v118
  %168 = vmatprep.subr.bf16.mxu0 0
  %169 = vmatpush1.bf16.msra.mxu0 0
  %170 = vmatprep.subr.bf16.mxu0 0
  %171 = vmatpush1.bf16.msra.mxu0 0
  %172 = vmatprep.subr.bf16.mxu0 0
  %173 = vmatpush1.bf16.msra.mxu0 0
  %174 = vmatprep.subr.bf16.mxu0 0
  %175 = vmatpush1.bf16.msra.mxu0 0
  %176 = vmatprep.subr.bf16.mxu0 0
  %177 = vmatpush1.bf16.msra.mxu0 0
  %178 = vmatprep.subr.bf16.mxu0 0
  %179 = vmatpush1.bf16.msra.mxu0 0
  %180 = vmatprep.subr.bf16.mxu0 0
  %181 = vmatpush1.bf16.msra.mxu0 0
  %182 = vmatprep.subr.bf16.mxu0 0
  %183 = vmatpush1.bf16.msra.mxu0 0
  %184 = vmatprep.subr.bf16.mxu0 0
  %185 = vmatpush1.bf16.msra.mxu0 0
  %186 = vmatprep.subr.bf16.mxu0 0
  %187 = vmatpush1.bf16.msra.mxu0 0
  %188 = vmatprep.subr.bf16.mxu0 0
  %189 = vmatpush1.bf16.msra.mxu0 0
  %190 = vmatprep.subr.bf16.mxu0 0
  %191 = vmatpush1.bf16.msra.mxu0 0
  %192 = vmatprep.subr.bf16.mxu0 0
  %193 = vmatpush1.bf16.msra.mxu0 0
  %194 = vmatprep.subr.bf16.mxu0 0
  %195 = vmatpush1.bf16.msra.mxu0 0
  %196 = vmatprep.mubr.bf16.mxu0 0
  %197 = vmatmul.mubr.bf16.gmra.mrb[0].mxu0 %v126
  %v198 = vpop.f32.mrb[0].mxu0
  %v199 = vadd.f32 0.0, %v198
  %v200 = vpop.f32.mrb[0].mxu0
  %v201 = vadd.f32 0.0, %v200
  %v202 = vpop.f32.mrb[0].mxu0
  %v203 = vadd.f32 0.0, %v202
  %v204 = vpop.f32.mrb[0].mxu0
  %v205 = vadd.f32 0.0, %v204
  %206 = vmatprep.mubr.bf16.mxu0 0
  %207 = vmatmul.mubr.bf16.gmra.mrb[0].mxu0 %v129
  %v208 = vpop.f32.mrb[0].mxu0
  %v209 = vadd.f32 0.0, %v208
  %v210 = vpop.f32.mrb[0].mxu0
  %v211 = vadd.f32 0.0, %v210
  %v212 = vpop.f32.mrb[0].mxu0
  %v213 = vadd.f32 0.0, %v212
  %v214 = vpop.f32.mrb[0].mxu0
  %v215 = vadd.f32 0.0, %v214
  %216 = vmatprep.mubr.bf16.mxu0 0
  %217 = vmatmul.mubr.bf16.gmra.mrb[0].mxu0 %v132
  %v218 = vpop.f32.mrb[0].mxu0
  %v219 = vadd.f32 0.0, %v218
  %v220 = vpop.f32.mrb[0].mxu0
  %v221 = vadd.f32 0.0, %v220
  %v222 = vpop.f32.mrb[0].mxu0
  %v223 = vadd.f32 0.0, %v222
  %v224 = vpop.f32.mrb[0].mxu0
  %v225 = vadd.f32 0.0, %v224
  %226 = vmatprep.mubr.bf16.mxu0 0
  %227 = vmatmul.mubr.bf16.gmra.mrb[0].mxu0 %v135
  %v228 = vpop.f32.mrb[0].mxu0
  %v229 = vadd.f32 0.0, %v228
  %v230 = vpop.f32.mrb[0].mxu0
  %v231 = vadd.f32 0.0, %v230
  %v232 = vpop.f32.mrb[0].mxu0
  %v233 = vadd.f32 0.0, %v232
  %v234 = vpop.f32.mrb[0].mxu0
  %v235 = vadd.f32 0.0, %v234
  %236 = vmatprep.mubr.bf16.mxu0 0
  %237 = vmatmul.mubr.bf16.gmra.mrb[0].mxu0 %v138
  %v238 = vpop.f32.mrb[0].mxu0
  %v239 = vadd.f32 0.0, %v238
  %v240 = vpop.f32.mrb[0].mxu0
  %v241 = vadd.f32 0.0, %v240
  %v242 = vpop.f32.mrb[0].mxu0
  %v243 = vadd.f32 0.0, %v242
  %v244 = vpop.f32.mrb[0].mxu0
  %v245 = vadd.f32 0.0, %v244
  %246 = vmatprep.mubr.bf16.mxu0 0
  %247 = vmatmul.mubr.bf16.gmra.mrb[0].mxu0 %v141
  %v248 = vpop.f32.mrb[0].mxu0
  %v249 = vadd.f32 0.0, %v248
  %v250 = vpop.f32.mrb[0].mxu0
  %v251 = vadd.f32 0.0, %v250
  %v252 = vpop.f32.mrb[0].mxu0
  %v253 = vadd.f32 0.0, %v252
  %v254 = vpop.f32.mrb[0].mxu0
  %v255 = vadd.f32 0.0, %v254
  %256 = vmatprep.mubr.bf16.mxu0 0
  %257 = vmatmul.mubr.bf16.gmra.mrb[0].mxu0 %v144
  %v258 = vpop.f32.mrb[0].mxu0
  %v259 = vadd.f32 0.0, %v258
  %v260 = vpop.f32.mrb[0].mxu0
  %v261 = vadd.f32 0.0, %v260
  %v262 = vpop.f32.mrb[0].mxu0
  %v263 = vadd.f32 0.0, %v262
  %v264 = vpop.f32.mrb[0].mxu0
  %v265 = vadd.f32 0.0, %v264
  %266 = vmatprep.mubr.bf16.mxu0 0
  %267 = vmatmul.mubr.bf16.gmra.mrb[0].mxu0 %v147
  %v268 = vpop.f32.mrb[0].mxu0
  %v269 = vadd.f32 0.0, %v268
  %v270 = vpop.f32.mrb[0].mxu0
  %v271 = vadd.f32 0.0, %v270
  %v272 = vpop.f32.mrb[0].mxu0
  %v273 = vadd.f32 0.0, %v272
  %v274 = vpop.f32.mrb[0].mxu0
  %v275 = vadd.f32 0.0, %v274
  %276 = vmatprep.mubr.bf16.mxu0 0
  %277 = vmatmul.mubr.bf16.gmra.mrb[0].mxu0 %v150
  %v278 = vpop.f32.mrb[0].mxu0
  %v279 = vadd.f32 0.0, %v278
  %v280 = vpop.f32.mrb[0].mxu0
  %v281 = vadd.f32 0.0, %v280
  %v282 = vpop.f32.mrb[0].mxu0
  %v283 = vadd.f32 0.0, %v282
  %v284 = vpop.f32.mrb[0].mxu0
  %v285 = vadd.f32 0.0, %v284
  %286 = vmatprep.mubr.bf16.mxu0 0
  %287 = vmatmul.mubr.bf16.gmra.mrb[0].mxu0 %v153
  %v288 = vpop.f32.mrb[0].mxu0
  %v289 = vadd.f32 0.0, %v288
  %v290 = vpop.f32.mrb[0].mxu0
  %v291 = vadd.f32 0.0, %v290
  %v292 = vpop.f32.mrb[0].mxu0
  %v293 = vadd.f32 0.0, %v292
  %v294 = vpop.f32.mrb[0].mxu0
  %v295 = vadd.f32 0.0, %v294
  %296 = vmatprep.mubr.bf16.mxu0 0
  %297 = vmatmul.mubr.bf16.gmra.mrb[0].mxu0 %v156
  %v298 = vpop.f32.mrb[0].mxu0
  %v299 = vadd.f32 0.0, %v298
  %v300 = vpop.f32.mrb[0].mxu0
  %v301 = vadd.f32 0.0, %v300
  %v302 = vpop.f32.mrb[0].mxu0
  %v303 = vadd.f32 0.0, %v302
  %v304 = vpop.f32.mrb[0].mxu0
  %v305 = vadd.f32 0.0, %v304
  %306 = vmatprep.mubr.bf16.mxu0 0
  %307 = vmatmul.mubr.bf16.gmra.mrb[0].mxu0 %v159
  %v308 = vpop.f32.mrb[0].mxu0
  %v309 = vadd.f32 0.0, %v308
  %v310 = vpop.f32.mrb[0].mxu0
  %v311 = vadd.f32 0.0, %v310
  %v312 = vpop.f32.mrb[0].mxu0
  %v313 = vadd.f32 0.0, %v312
  %v314 = vpop.f32.mrb[0].mxu0
  %v315 = vadd.f32 0.0, %v314
  %316 = vmatprep.mubr.bf16.mxu0 0
  %317 = vmatmul.mubr.bf16.gmra.mrb[0].mxu0 %v162
  %v318 = vpop.f32.mrb[0].mxu0
  %v319 = vadd.f32 0.0, %v318
  %v320 = vpop.f32.mrb[0].mxu0
  %v321 = vadd.f32 0.0, %v320
  %v322 = vpop.f32.mrb[0].mxu0
  %v323 = vpop.f32.mrb[0].mxu0
  %324 = vdwg.mxu0
  %325 = vst [vmem:[%s2] sm:$0xff] %v199
  %326 = vst [vmem:[%s2 + $0x8] sm:$0xff] %v201
  %327 = vst [vmem:[%s2 + $0x10] sm:$0xff] %v203
  %328 = vst [vmem:[%s2 + $0x18] sm:$0xff] %v205
  %329 = vst [vmem:[%s2 + $0x20] sm:$0xff] %v209
  %330 = vst [vmem:[%s2 + $0x28] sm:$0xff] %v211
  %331 = vst [vmem:[%s2 + $0x30] sm:$0xff] %v213
  %332 = vst [vmem:[%s2 + $0x38] sm:$0xff] %v215
  %333 = vst [vmem:[%s2 + $0x40] sm:$0xff] %v219
  %334 = vst [vmem:[%s2 + $0x48] sm:$0xff] %v221
  %335 = vst [vmem:[%s2 + $0x50] sm:$0xff] %v223
  %336 = vst [vmem:[%s2 + $0x58] sm:$0xff] %v225
  %337 = vst [vmem:[%s2 + $0x60] sm:$0xff] %v229
  %338 = vst [vmem:[%s2 + $0x68] sm:$0xff] %v231
  %339 = vst [vmem:[%s2 + $0x70] sm:$0xff] %v233
  %340 = vst [vmem:[%s2 + $0x78] sm:$0xff] %v235
  %341 = vst [vmem:[%s2 + $0x80] sm:$0xff] %v239
  %342 = vst [vmem:[%s2 + $0x88] sm:$0xff] %v241
  %343 = vst [vmem:[%s2 + $0x90] sm:$0xff] %v243
  %344 = vst [vmem:[%s2 + $0x98] sm:$0xff] %v245
  %345 = vst [vmem:[%s2 + $0xa0] sm:$0xff] %v249
  %346 = vst [vmem:[%s2 + $0xa8] sm:$0xff] %v251
  %347 = vst [vmem:[%s2 + $0xb0] sm:$0xff] %v253
  %348 = vst [vmem:[%s2 + $0xb8] sm:$0xff] %v255
  %349 = vst [vmem:[%s2 + $0xc0] sm:$0xff] %v259
  %350 = vst [vmem:[%s2 + $0xc8] sm:$0xff] %v261
  %351 = vst [vmem:[%s2 + $0xd0] sm:$0xff] %v263
  %352 = vst [vmem:[%s2 + $0xd8] sm:$0xff] %v265
  %353 = vst [vmem:[%s2 + $0xe0] sm:$0xff] %v269
  %354 = vst [vmem:[%s2 + $0xe8] sm:$0xff] %v271
  %355 = vst [vmem:[%s2 + $0xf0] sm:$0xff] %v273
  %356 = vst [vmem:[%s2 + $0xf8] sm:$0xff] %v275
  %357 = vst [vmem:[%s2 + $0x100] sm:$0xff] %v279
  %358 = vst [vmem:[%s2 + $0x108] sm:$0xff] %v281
  %359 = vst [vmem:[%s2 + $0x110] sm:$0xff] %v283
  %360 = vst [vmem:[%s2 + $0x118] sm:$0xff] %v285
  %361 = vst [vmem:[%s2 + $0x120] sm:$0xff] %v289
  %362 = vst [vmem:[%s2 + $0x128] sm:$0xff] %v291
  %363 = vst [vmem:[%s2 + $0x130] sm:$0xff] %v293
  %364 = vst [vmem:[%s2 + $0x138] sm:$0xff] %v295
  %365 = vst [vmem:[%s2 + $0x140] sm:$0xff] %v299
  %366 = vst [vmem:[%s2 + $0x148] sm:$0xff] %v301
  %367 = vst [vmem:[%s2 + $0x150] sm:$0xff] %v303
  %368 = vst [vmem:[%s2 + $0x158] sm:$0xff] %v305
  %369 = vst [vmem:[%s2 + $0x160] sm:$0xff] %v309
  %370 = vst [vmem:[%s2 + $0x168] sm:$0xff] %v311
  %371 = vst [vmem:[%s2 + $0x170] sm:$0xff] %v313
  %372 = vst [vmem:[%s2 + $0x178] sm:$0xff] %v315
  %373 = vst [vmem:[%s2 + $0x180] sm:$0xff] %v319
  %374 = vst [vmem:[%s2 + $0x188] sm:$0xff] %v321
  // Predicated region
  $region10: #{cnn_decoder_forward.5} parent=0 // pred_check
    _
  $region11: #{cnn_decoder_forward.5} parent=0 // pred_check_branch
    %376 = sbr.rel (0) target = $region13
  $region12: #{cnn_decoder_forward.5} parent=0 // pred_region
    _
  $region13: #{cnn_decoder_forward.5} parent=0 // pred_fallthru
    _
  // Predicated region
  $region14: #{cnn_decoder_forward.5} parent=0 // pred_check
    _
  $region15: #{cnn_decoder_forward.5} parent=0 // pred_check_branch
    %378 = sbr.rel (0) target = $region17
  $region16: #{cnn_decoder_forward.5} parent=0 // pred_region
    _
  $region17: #{cnn_decoder_forward.5} parent=0 // pred_fallthru
    _

// kernel: cnn_decoder_forward.6
$region0: #{cnn_decoder_forward.6}
  #allocation0 [shape = 'u32[]', space=smem, size = 0x4, offset = 0x4, fixed_abs, tag = 'smem constant byte address 0x4 - core index']
  #allocation1 [shape = 'u32[144,128]{1,0:T(1,128)}', space=vmem, size = 0x12000, scoped, tag = 'internal scratch']
  %s0 = inlined_call_operand.vmem [shape: bf16[882,16], index: 0, kind: input, shape index: {}]
  %s1 = inlined_call_operand.vmem [shape: bf16[16,128], index: 1, kind: input, shape index: {}]
  %s2 = inlined_call_operand.vmem [shape: f32[882,128], index: 2, kind: output, shape index: {}]
  %s3 = sld [smem:[#allocation0]]
  $region18: #{cnn_decoder_forward.6} parent=0
    _
  %s5 = ssub.s32 1, %s3
  %s6 = scalar_select 0, %s5, %s3
  // Predicated region
  $region2: #{cnn_decoder_forward.6} parent=0 // pred_check
    _
  $region3: #{cnn_decoder_forward.6} parent=0 // pred_check_branch
    %8 = sbr.rel (0) target = $region5
  $region4: #{cnn_decoder_forward.6} parent=0 // pred_region
    _
  $region5: #{cnn_decoder_forward.6} parent=0 // pred_fallthru
    _
  // Predicated region
  $region6: #{cnn_decoder_forward.6} parent=0 // pred_check
    _
  $region7: #{cnn_decoder_forward.6} parent=0 // pred_check_branch
    %10 = sbr.rel (0) target = $region9
  $region8: #{cnn_decoder_forward.6} parent=0 // pred_region
    _
  $region9: #{cnn_decoder_forward.6} parent=0 // pred_fallthru
    _
  %v12 = vld [vmem:[%s0] sm:$0xf]
  %v13 = vld [vmem:[%s0 + $0x4] sm:$0xf]
  %v14 = vld [vmem:[%s0 + $0x8] sm:$0xf]
  %v15 = vld [vmem:[%s0 + $0xc] sm:$0xf]
  %v16 = vld [vmem:[%s0 + $0x10] sm:$0xf]
  %v17 = vld [vmem:[%s0 + $0x14] sm:$0xf]
  %v18 = vld [vmem:[%s0 + $0x18] sm:$0xf]
  %v19 = vld [vmem:[%s0 + $0x1c] sm:$0xf]
  %v20 = vld [vmem:[%s0 + $0x20] sm:$0xf]
  %v21 = vld [vmem:[%s0 + $0x24] sm:$0xf]
  %v22 = vld [vmem:[%s0 + $0x28] sm:$0xf]
  %v23 = vld [vmem:[%s0 + $0x2c] sm:$0xf]
  %v24 = vld [vmem:[%s0 + $0x30] sm:$0xf]
  %v25 = vld [vmem:[%s0 + $0x34] sm:$0xf]
  %v26 = vld [vmem:[%s0 + $0x38] sm:$0xf]
  %v27 = vld [vmem:[%s0 + $0x3c] sm:$0xf]
  %v28 = vld [vmem:[%s0 + $0x40] sm:$0xf]
  %v29 = vld [vmem:[%s0 + $0x44] sm:$0xf]
  %v30 = vld [vmem:[%s0 + $0x48] sm:$0xf]
  %v31 = vld [vmem:[%s0 + $0x4c] sm:$0xf]
  %v32 = vld [vmem:[%s0 + $0x50] sm:$0xf]
  %v33 = vld [vmem:[%s0 + $0x54] sm:$0xf]
  %v34 = vld [vmem:[%s0 + $0x58] sm:$0xf]
  %v35 = vld [vmem:[%s0 + $0x5c] sm:$0xf]
  %v36 = vld [vmem:[%s0 + $0x60] sm:$0xf]
  %v37 = vld [vmem:[%s0 + $0x64] sm:$0xf]
  %v38 = vld [vmem:[%s0 + $0x68] sm:$0xf]
  %v39 = vld [vmem:[%s0 + $0x6c] sm:$0xf]
  %v40 = vld [vmem:[%s0 + $0x70] sm:$0xf]
  %v41 = vld [vmem:[%s0 + $0x74] sm:$0xf]
  %v42 = vld [vmem:[%s0 + $0x78] sm:$0xf]
  %v43 = vld [vmem:[%s0 + $0x7c] sm:$0xf]
  %v44 = vld [vmem:[%s0 + $0x80] sm:$0xf]
  %v45 = vld [vmem:[%s0 + $0x84] sm:$0xf]
  %v46 = vld [vmem:[%s0 + $0x88] sm:$0xf]
  %v47 = vld [vmem:[%s0 + $0x8c] sm:$0xf]
  %v48 = vld [vmem:[%s0 + $0x90] sm:$0xf]
  %v49 = vld [vmem:[%s0 + $0x94] sm:$0xf]
  %v50 = vld [vmem:[%s0 + $0x98] sm:$0xf]
  %v51 = vld [vmem:[%s0 + $0x9c] sm:$0xf]
  %v52 = vld [vmem:[%s0 + $0xa0] sm:$0xf]
  %v53 = vld [vmem:[%s0 + $0xa4] sm:$0xf]
  %v54 = vld [vmem:[%s0 + $0xa8] sm:$0xf]
  %v55 = vld [vmem:[%s0 + $0xac] sm:$0xf]
  %v56 = vld [vmem:[%s0 + $0xb0] sm:$0xf]
  %v57 = vld [vmem:[%s0 + $0xb4] sm:$0xf]
  %v58 = vld [vmem:[%s0 + $0xb8] sm:$0xf]
  %v59 = vld [vmem:[%s0 + $0xbc] sm:$0xf]
  %v60 = vld [vmem:[%s0 + $0xc0] sm:$0xf]
  %v61 = vld [vmem:[%s0 + $0xc4] sm:$0xf]
  %v62 = vld [vmem:[%s0 + $0xc8] sm:$0xf]
  %v63 = vld [vmem:[%s0 + $0xcc] sm:$0xf]
  %v64 = vld [vmem:[%s0 + $0xd0] sm:$0xf]
  %v65 = vld [vmem:[%s0 + $0xd4] sm:$0xf]
  %v66 = vld [vmem:[%s0 + $0xd8] sm:$0xf]
  %v67 = vld [vmem:[%s0 + $0xdc] sm:$0xf]
  %v68 = vld [vmem:[%s0 + $0xe0] sm:$0xf]
  %v69 = vld [vmem:[%s0 + $0xe4] sm:$0xf]
  %v70 = vld [vmem:[%s0 + $0xe8] sm:$0xf]
  %v71 = vld [vmem:[%s0 + $0xec] sm:$0xf]
  %v72 = vld [vmem:[%s0 + $0xf0] sm:$0xf]
  %v73 = vld [vmem:[%s0 + $0xf4] sm:$0xf]
  %v74 = vld [vmem:[%s0 + $0xf8] sm:$0xf]
  %v75 = vld [vmem:[%s0 + $0xfc] sm:$0xf]
  %v76 = vld [vmem:[%s0 + $0x100] sm:$0xf]
  %v77 = vld [vmem:[%s0 + $0x104] sm:$0xf]
  %v78 = vld [vmem:[%s0 + $0x108] sm:$0xf]
  %v79 = vld [vmem:[%s0 + $0x10c] sm:$0xf]
  %v80 = vld [vmem:[%s0 + $0x110] sm:$0xf]
  %v81 = vld [vmem:[%s0 + $0x114] sm:$0xf]
  %v82 = vld [vmem:[%s0 + $0x118] sm:$0xf]
  %v83 = vld [vmem:[%s0 + $0x11c] sm:$0xf]
  %v84 = vld [vmem:[%s0 + $0x120] sm:$0xf]
  %v85 = vld [vmem:[%s0 + $0x124] sm:$0xf]
  %v86 = vld [vmem:[%s0 + $0x128] sm:$0xf]
  %v87 = vld [vmem:[%s0 + $0x12c] sm:$0xf]
  %v88 = vld [vmem:[%s0 + $0x130] sm:$0xf]
  %v89 = vld [vmem:[%s0 + $0x134] sm:$0xf]
  %v90 = vld [vmem:[%s0 + $0x138] sm:$0xf]
  %v91 = vld [vmem:[%s0 + $0x13c] sm:$0xf]
  %v92 = vld [vmem:[%s0 + $0x140] sm:$0xf]
  %v93 = vld [vmem:[%s0 + $0x144] sm:$0xf]
  %v94 = vld [vmem:[%s0 + $0x148] sm:$0xf]
  %v95 = vld [vmem:[%s0 + $0x14c] sm:$0xf]
  %v96 = vld [vmem:[%s0 + $0x150] sm:$0xf]
  %v97 = vld [vmem:[%s0 + $0x154] sm:$0xf]
  %v98 = vld [vmem:[%s0 + $0x158] sm:$0xf]
  %v99 = vld [vmem:[%s0 + $0x15c] sm:$0xf]
  %v100 = vld [vmem:[%s0 + $0x160] sm:$0xf]
  %v101 = vld [vmem:[%s0 + $0x164] sm:$0xf]
  %v102 = vld [vmem:[%s0 + $0x168] sm:$0xf]
  %v103 = vld [vmem:[%s0 + $0x16c] sm:$0xf]
  %v104 = vld [vmem:[%s0 + $0x170] sm:$0xf]
  %v105 = vld [vmem:[%s0 + $0x174] sm:$0xf]
  %v106 = vld [vmem:[%s0 + $0x178] sm:$0xf]
  %v107 = vld [vmem:[%s0 + $0x17c] sm:$0xf]
  %v108 = vld [vmem:[%s0 + $0x180] sm:$0xf]
  %v109 = vld [vmem:[%s0 + $0x184] sm:$0xf]
  %v110 = vld [vmem:[%s0 + $0x188] sm:$0xf]
  %v111 = vld [vmem:[%s0 + $0x18c] sm:$0xf]
  %v112 = vld [vmem:[%s0 + $0x190] sm:$0xf]
  %v113 = vld [vmem:[%s0 + $0x194] sm:$0xf]
  %v114 = vld [vmem:[%s0 + $0x198] sm:$0xf]
  %v115 = vld [vmem:[%s0 + $0x19c] sm:$0xf]
  %v116 = vld [vmem:[%s0 + $0x1a0] sm:$0xf]
  %v117 = vld [vmem:[%s0 + $0x1a4] sm:$0xf]
  %v118 = vld [vmem:[%s0 + $0x1a8] sm:$0xf]
  %v119 = vld [vmem:[%s0 + $0x1ac] sm:$0xf]
  %v120 = vld [vmem:[%s0 + $0x1b0] sm:$0xf]
  %v121 = vld [vmem:[%s0 + $0x1b4] sm:$0xf]
  %v122 = vld [vmem:[%s0 + $0x1b8] sm:$0x1]
  %v123 = vld [vmem:[%s1] sm:$0xf]
  %v124 = vld [vmem:[%s1 + $0x4] sm:$0xf]
  %v236 = vunpack.c.l.b16 %v12
  %v237 = vunpack.c.l.b16 %v13
  %v238 = vunpack.c.l.b16 %v14
  %v239 = vunpack.c.l.b16 %v15
  %v240 = vunpack.c.l.b16 %v16
  %v241 = vunpack.c.l.b16 %v17
  %v242 = vunpack.c.l.b16 %v18
  %v243 = vunpack.c.l.b16 %v19
  %v244 = vunpack.c.l.b16 %v20
  %v245 = vunpack.c.l.b16 %v21
  %v246 = vunpack.c.l.b16 %v22
  %v247 = vunpack.c.l.b16 %v23
  %v248 = vunpack.c.l.b16 %v24
  %v249 = vunpack.c.l.b16 %v25
  %v250 = vunpack.c.l.b16 %v26
  %v251 = vunpack.c.l.b16 %v27
  %v252 = vunpack.c.l.b16 %v28
  %v253 = vunpack.c.l.b16 %v29
  %v254 = vunpack.c.l.b16 %v30
  %v255 = vunpack.c.l.b16 %v31
  %v256 = vunpack.c.l.b16 %v32
  %v257 = vunpack.c.l.b16 %v33
  %v258 = vunpack.c.l.b16 %v34
  %v259 = vunpack.c.l.b16 %v35
  %v260 = vunpack.c.l.b16 %v36
  %v261 = vunpack.c.l.b16 %v37
  %v262 = vunpack.c.l.b16 %v38
  %v263 = vunpack.c.l.b16 %v39
  %v264 = vunpack.c.l.b16 %v40
  %v265 = vunpack.c.l.b16 %v41
  %v266 = vunpack.c.l.b16 %v42
  %v267 = vunpack.c.l.b16 %v43
  %v268 = vunpack.c.l.b16 %v44
  %v269 = vunpack.c.l.b16 %v45
  %v270 = vunpack.c.l.b16 %v46
  %v271 = vunpack.c.l.b16 %v47
  %v272 = vunpack.c.l.b16 %v48
  %v273 = vunpack.c.l.b16 %v49
  %v274 = vunpack.c.l.b16 %v50
  %v275 = vunpack.c.l.b16 %v51
  %v276 = vunpack.c.l.b16 %v52
  %v277 = vunpack.c.l.b16 %v53
  %v278 = vunpack.c.l.b16 %v54
  %v279 = vunpack.c.l.b16 %v55
  %v280 = vunpack.c.l.b16 %v56
  %v281 = vunpack.c.l.b16 %v57
  %v282 = vunpack.c.l.b16 %v58
  %v283 = vunpack.c.l.b16 %v59
  %v284 = vunpack.c.l.b16 %v60
  %v285 = vunpack.c.l.b16 %v61
  %v286 = vunpack.c.l.b16 %v62
  %v287 = vunpack.c.l.b16 %v63
  %v288 = vunpack.c.l.b16 %v64
  %v289 = vunpack.c.l.b16 %v65
  %v290 = vunpack.c.l.b16 %v66
  %v291 = vunpack.c.l.b16 %v67
  %v292 = vunpack.c.l.b16 %v68
  %v293 = vunpack.c.l.b16 %v69
  %v294 = vunpack.c.l.b16 %v70
  %v295 = vunpack.c.l.b16 %v71
  %v296 = vunpack.c.l.b16 %v72
  %v297 = vunpack.c.l.b16 %v73
  %v298 = vunpack.c.l.b16 %v74
  %v299 = vunpack.c.l.b16 %v75
  %v300 = vunpack.c.l.b16 %v76
  %v301 = vunpack.c.l.b16 %v77
  %v302 = vunpack.c.l.b16 %v78
  %v303 = vunpack.c.l.b16 %v79
  %v304 = vunpack.c.l.b16 %v80
  %v305 = vunpack.c.l.b16 %v81
  %v306 = vunpack.c.l.b16 %v82
  %v307 = vunpack.c.l.b16 %v83
  %v308 = vunpack.c.l.b16 %v84
  %v309 = vunpack.c.l.b16 %v85
  %v310 = vunpack.c.l.b16 %v86
  %v311 = vunpack.c.l.b16 %v87
  %v312 = vunpack.c.l.b16 %v88
  %v313 = vunpack.c.l.b16 %v89
  %v314 = vunpack.c.l.b16 %v90
  %v315 = vunpack.c.l.b16 %v91
  %v316 = vunpack.c.l.b16 %v92
  %v317 = vunpack.c.l.b16 %v93
  %v318 = vunpack.c.l.b16 %v94
  %v319 = vunpack.c.l.b16 %v95
  %v320 = vunpack.c.l.b16 %v96
  %v321 = vunpack.c.l.b16 %v97
  %v322 = vunpack.c.l.b16 %v98
  %v323 = vunpack.c.l.b16 %v99
  %v324 = vunpack.c.l.b16 %v100
  %v325 = vunpack.c.l.b16 %v101
  %v326 = vunpack.c.l.b16 %v102
  %v327 = vunpack.c.l.b16 %v103
  %v328 = vunpack.c.l.b16 %v104
  %v329 = vunpack.c.l.b16 %v105
  %v330 = vunpack.c.l.b16 %v106
  %v331 = vunpack.c.l.b16 %v107
  %v332 = vunpack.c.l.b16 %v108
  %v333 = vunpack.c.l.b16 %v109
  %v334 = vunpack.c.l.b16 %v110
  %v335 = vunpack.c.l.b16 %v111
  %v336 = vunpack.c.l.b16 %v112
  %v337 = vunpack.c.l.b16 %v113
  %v338 = vunpack.c.l.b16 %v114
  %v339 = vunpack.c.l.b16 %v115
  %v340 = vunpack.c.l.b16 %v116
  %v341 = vunpack.c.l.b16 %v117
  %v342 = vunpack.c.l.b16 %v118
  %v343 = vunpack.c.l.b16 %v119
  %v344 = vunpack.c.l.b16 %v120
  %v345 = vunpack.c.l.b16 %v121
  %v346 = vunpack.c.l.b16 %v122
  %v347 = vpack.c.b16 %v237, %v236
  %v348 = vpack.c.b16 %v239, %v238
  %v349 = vpack.c.b16 %v241, %v240
  %v350 = vpack.c.b16 %v243, %v242
  %v351 = vpack.c.b16 %v245, %v244
  %v352 = vpack.c.b16 %v247, %v246
  %v353 = vpack.c.b16 %v249, %v248
  %v354 = vpack.c.b16 %v251, %v250
  %v355 = vpack.c.b16 %v253, %v252
  %v356 = vpack.c.b16 %v255, %v254
  %v357 = vpack.c.b16 %v257, %v256
  %v358 = vpack.c.b16 %v259, %v258
  %v359 = vpack.c.b16 %v261, %v260
  %v360 = vpack.c.b16 %v263, %v262
  %v361 = vpack.c.b16 %v265, %v264
  %v362 = vpack.c.b16 %v267, %v266
  %v363 = vpack.c.b16 %v269, %v268
  %v364 = vpack.c.b16 %v271, %v270
  %v365 = vpack.c.b16 %v273, %v272
  %v366 = vpack.c.b16 %v275, %v274
  %v367 = vpack.c.b16 %v277, %v276
  %v368 = vpack.c.b16 %v279, %v278
  %v369 = vpack.c.b16 %v281, %v280
  %v370 = vpack.c.b16 %v283, %v282
  %v371 = vpack.c.b16 %v285, %v284
  %v372 = vpack.c.b16 %v287, %v286
  %v373 = vpack.c.b16 %v289, %v288
  %v374 = vpack.c.b16 %v291, %v290
  %v375 = vpack.c.b16 %v293, %v292
  %v376 = vpack.c.b16 %v295, %v294
  %v377 = vpack.c.b16 %v297, %v296
  %v378 = vpack.c.b16 %v299, %v298
  %v379 = vpack.c.b16 %v301, %v300
  %v380 = vpack.c.b16 %v303, %v302
  %v381 = vpack.c.b16 %v305, %v304
  %v382 = vpack.c.b16 %v307, %v306
  %v383 = vpack.c.b16 %v309, %v308
  %v384 = vpack.c.b16 %v311, %v310
  %v385 = vpack.c.b16 %v313, %v312
  %v386 = vpack.c.b16 %v315, %v314
  %v387 = vpack.c.b16 %v317, %v316
  %v388 = vpack.c.b16 %v319, %v318
  %v389 = vpack.c.b16 %v321, %v320
  %v390 = vpack.c.b16 %v323, %v322
  %v391 = vpack.c.b16 %v325, %v324
  %v392 = vpack.c.b16 %v327, %v326
  %v393 = vpack.c.b16 %v329, %v328
  %v394 = vpack.c.b16 %v331, %v330
  %v395 = vpack.c.b16 %v333, %v332
  %v396 = vpack.c.b16 %v335, %v334
  %v397 = vpack.c.b16 %v337, %v336
  %v398 = vpack.c.b16 %v339, %v338
  %v399 = vpack.c.b16 %v341, %v340
  %v400 = vpack.c.b16 %v343, %v342
  %v401 = vpack.c.b16 %v345, %v344
  %v402 = vpack.c.b16 %v346, %v346
  %v405 = vunpack.c.l.b16 %v123
  %v406 = vunpack.c.l.b16 %v124
  %v407 = vpack.c.b16 %v406, %v405
  %vm409 = vcmask 130048
  %v411 = vsel %vm409, %v347, 0
  %v414 = vsel %vm409, %v348, 0
  %v417 = vsel %vm409, %v349, 0
  %v420 = vsel %vm409, %v350, 0
  %v423 = vsel %vm409, %v351, 0
  %v426 = vsel %vm409, %v352, 0
  %v429 = vsel %vm409, %v353, 0
  %v432 = vsel %vm409, %v354, 0
  %v435 = vsel %vm409, %v355, 0
  %v438 = vsel %vm409, %v356, 0
  %v441 = vsel %vm409, %v357, 0
  %v444 = vsel %vm409, %v358, 0
  %v447 = vsel %vm409, %v359, 0
  %v450 = vsel %vm409, %v360, 0
  %v453 = vsel %vm409, %v361, 0
  %v456 = vsel %vm409, %v362, 0
  %v459 = vsel %vm409, %v363, 0
  %v462 = vsel %vm409, %v364, 0
  %v465 = vsel %vm409, %v365, 0
  %v468 = vsel %vm409, %v366, 0
  %v471 = vsel %vm409, %v367, 0
  %v474 = vsel %vm409, %v368, 0
  %v477 = vsel %vm409, %v369, 0
  %v480 = vsel %vm409, %v370, 0
  %v483 = vsel %vm409, %v371, 0
  %v486 = vsel %vm409, %v372, 0
  %v489 = vsel %vm409, %v373, 0
  %v492 = vsel %vm409, %v374, 0
  %v495 = vsel %vm409, %v375, 0
  %v498 = vsel %vm409, %v376, 0
  %v501 = vsel %vm409, %v377, 0
  %v504 = vsel %vm409, %v378, 0
  %v507 = vsel %vm409, %v379, 0
  %v510 = vsel %vm409, %v380, 0
  %v513 = vsel %vm409, %v381, 0
  %v516 = vsel %vm409, %v382, 0
  %v519 = vsel %vm409, %v383, 0
  %v522 = vsel %vm409, %v384, 0
  %v525 = vsel %vm409, %v385, 0
  %v528 = vsel %vm409, %v386, 0
  %v531 = vsel %vm409, %v387, 0
  %v534 = vsel %vm409, %v388, 0
  %v537 = vsel %vm409, %v389, 0
  %v540 = vsel %vm409, %v390, 0
  %v543 = vsel %vm409, %v391, 0
  %v546 = vsel %vm409, %v392, 0
  %v549 = vsel %vm409, %v393, 0
  %v552 = vsel %vm409, %v394, 0
  %v555 = vsel %vm409, %v395, 0
  %v558 = vsel %vm409, %v396, 0
  %v561 = vsel %vm409, %v397, 0
  %v564 = vsel %vm409, %v398, 0
  %v567 = vsel %vm409, %v399, 0
  %v570 = vsel %vm409, %v400, 0
  %v573 = vsel %vm409, %v401, 0
  %v576 = vsel %vm409, %v402, 0
  %578 = vmatprep.subr.bf16.mxu0 0
  %579 = vmatpush1.bf16.msra.mxu0 %v407
  %580 = vmatprep.subr.bf16.mxu0 0
  %581 = vmatpush1.bf16.msra.mxu0 0
  %582 = vmatprep.subr.bf16.mxu0 0
  %583 = vmatpush1.bf16.msra.mxu0 0
  %584 = vmatprep.subr.bf16.mxu0 0
  %585 = vmatpush1.bf16.msra.mxu0 0
  %586 = vmatprep.subr.bf16.mxu0 0
  %587 = vmatpush1.bf16.msra.mxu0 0
  %588 = vmatprep.subr.bf16.mxu0 0
  %589 = vmatpush1.bf16.msra.mxu0 0
  %590 = vmatprep.subr.bf16.mxu0 0
  %591 = vmatpush1.bf16.msra.mxu0 0
  %592 = vmatprep.subr.bf16.mxu0 0
  %593 = vmatpush1.bf16.msra.mxu0 0
  %594 = vmatprep.subr.bf16.mxu0 0
  %595 = vmatpush1.bf16.msra.mxu0 0
  %596 = vmatprep.subr.bf16.mxu0 0
  %597 = vmatpush1.bf16.msra.mxu0 0
  %598 = vmatprep.subr.bf16.mxu0 0
  %599 = vmatpush1.bf16.msra.mxu0 0
  %600 = vmatprep.subr.bf16.mxu0 0
  %601 = vmatpush1.bf16.msra.mxu0 0
  %602 = vmatprep.subr.bf16.mxu0 0
  %603 = vmatpush1.bf16.msra.mxu0 0
  %604 = vmatprep.subr.bf16.mxu0 0
  %605 = vmatpush1.bf16.msra.mxu0 0
  %606 = vmatprep.subr.bf16.mxu0 0
  %607 = vmatpush1.bf16.msra.mxu0 0
  %608 = vmatprep.subr.bf16.mxu0 0
  %609 = vmatpush1.bf16.msra.mxu0 0
  %610 = vmatprep.mubr.bf16.mxu0 0
  %611 = vmatmul.mubr.bf16.gmra.mrb[0].mxu0 %v411
  %v612 = vpop.f32.mrb[0].mxu0
  %v613 = vadd.f32 0.0, %v612
  %v614 = vpop.f32.mrb[0].mxu0
  %v615 = vpop.f32.mrb[0].mxu0
  %v616 = vadd.f32 0.0, %v615
  %v617 = vpop.f32.mrb[0].mxu0
  %618 = vmatprep.mubr.bf16.mxu0 0
  %619 = vmatmul.mubr.bf16.gmra.mrb[0].mxu0 %v414
  %v620 = vpop.f32.mrb[0].mxu0
  %v621 = vadd.f32 0.0, %v620
  %v622 = vpop.f32.mrb[0].mxu0
  %v623 = vpop.f32.mrb[0].mxu0
  %v624 = vadd.f32 0.0, %v623
  %v625 = vpop.f32.mrb[0].mxu0
  %626 = vmatprep.mubr.bf16.mxu0 0
  %627 = vmatmul.mubr.bf16.gmra.mrb[0].mxu0 %v417
  %v628 = vpop.f32.mrb[0].mxu0
  %v629 = vadd.f32 0.0, %v628
  %v630 = vpop.f32.mrb[0].mxu0
  %v631 = vpop.f32.mrb[0].mxu0
  %v632 = vadd.f32 0.0, %v631
  %v633 = vpop.f32.mrb[0].mxu0
  %634 = vmatprep.mubr.bf16.mxu0 0
  %635 = vmatmul.mubr.bf16.gmra.mrb[0].mxu0 %v420
  %v636 = vpop.f32.mrb[0].mxu0
  %v637 = vadd.f32 0.0, %v636
  %v638 = vpop.f32.mrb[0].mxu0
  %v639 = vpop.f32.mrb[0].mxu0
  %v640 = vadd.f32 0.0, %v639
  %v641 = vpop.f32.mrb[0].mxu0
  %642 = vmatprep.mubr.bf16.mxu0 0
  %643 = vmatmul.mubr.bf16.gmra.mrb[0].mxu0 %v423
  %v644 = vpop.f32.mrb[0].mxu0
  %v645 = vadd.f32 0.0, %v644
  %v646 = vpop.f32.mrb[0].mxu0
  %v647 = vpop.f32.mrb[0].mxu0
  %v648 = vadd.f32 0.0, %v647
  %v649 = vpop.f32.mrb[0].mxu0
  %650 = vmatprep.mubr.bf16.mxu0 0
  %651 = vmatmul.mubr.bf16.gmra.mrb[0].mxu0 %v426
  %v652 = vpop.f32.mrb[0].mxu0
  %v653 = vadd.f32 0.0, %v652
  %v654 = vpop.f32.mrb[0].mxu0
  %v655 = vpop.f32.mrb[0].mxu0
  %v656 = vadd.f32 0.0, %v655
  %v657 = vpop.f32.mrb[0].mxu0
  %658 = vmatprep.mubr.bf16.mxu0 0
  %659 = vmatmul.mubr.bf16.gmra.mrb[0].mxu0 %v429
  %v660 = vpop.f32.mrb[0].mxu0
  %v661 = vadd.f32 0.0, %v660
  %v662 = vpop.f32.mrb[0].mxu0
  %v663 = vpop.f32.mrb[0].mxu0
  %v664 = vadd.f32 0.0, %v663
  %v665 = vpop.f32.mrb[0].mxu0
  %666 = vmatprep.mubr.bf16.mxu0 0
  %667 = vmatmul.mubr.bf16.gmra.mrb[0].mxu0 %v432
  %v668 = vpop.f32.mrb[0].mxu0
  %v669 = vadd.f32 0.0, %v668
  %v670 = vpop.f32.mrb[0].mxu0
  %v671 = vpop.f32.mrb[0].mxu0
  %v672 = vadd.f32 0.0, %v671
  %v673 = vpop.f32.mrb[0].mxu0
  %674 = vmatprep.mubr.bf16.mxu0 0
  %675 = vmatmul.mubr.bf16.gmra.mrb[0].mxu0 %v435
  %v676 = vpop.f32.mrb[0].mxu0
  %v677 = vadd.f32 0.0, %v676
  %v678 = vpop.f32.mrb[0].mxu0
  %v679 = vpop.f32.mrb[0].mxu0
  %v680 = vadd.f32 0.0, %v679
  %v681 = vpop.f32.mrb[0].mxu0
  %682 = vmatprep.mubr.bf16.mxu0 0
  %683 = vmatmul.mubr.bf16.gmra.mrb[0].mxu0 %v438
  %v684 = vpop.f32.mrb[0].mxu0
  %v685 = vadd.f32 0.0, %v684
  %v686 = vpop.f32.mrb[0].mxu0
  %v687 = vpop.f32.mrb[0].mxu0
  %v688 = vadd.f32 0.0, %v687
  %v689 = vpop.f32.mrb[0].mxu0
  %690 = vmatprep.mubr.bf16.mxu0 0
  %691 = vmatmul.mubr.bf16.gmra.mrb[0].mxu0 %v441
  %v692 = vpop.f32.mrb[0].mxu0
  %v693 = vadd.f32 0.0, %v692
  %v694 = vpop.f32.mrb[0].mxu0
  %v695 = vpop.f32.mrb[0].mxu0
  %v696 = vadd.f32 0.0, %v695
  %v697 = vpop.f32.mrb[0].mxu0
  %698 = vmatprep.mubr.bf16.mxu0 0
  %699 = vmatmul.mubr.bf16.gmra.mrb[0].mxu0 %v444
  %v700 = vpop.f32.mrb[0].mxu0
  %v701 = vadd.f32 0.0, %v700
  %v702 = vpop.f32.mrb[0].mxu0
  %v703 = vpop.f32.mrb[0].mxu0
  %v704 = vadd.f32 0.0, %v703
  %v705 = vpop.f32.mrb[0].mxu0
  %706 = vmatprep.mubr.bf16.mxu0 0
  %707 = vmatmul.mubr.bf16.gmra.mrb[0].mxu0 %v447
  %v708 = vpop.f32.mrb[0].mxu0
  %v709 = vadd.f32 0.0, %v708
  %v710 = vpop.f32.mrb[0].mxu0
  %v711 = vpop.f32.mrb[0].mxu0
  %v712 = vadd.f32 0.0, %v711
  %v713 = vpop.f32.mrb[0].mxu0
  %714 = vmatprep.mubr.bf16.mxu0 0
  %715 = vmatmul.mubr.bf16.gmra.mrb[0].mxu0 %v450
  %v716 = vpop.f32.mrb[0].mxu0
  %v717 = vadd.f32 0.0, %v716
  %v718 = vpop.f32.mrb[0].mxu0
  %v719 = vpop.f32.mrb[0].mxu0
  %v720 = vadd.f32 0.0, %v719
  %v721 = vpop.f32.mrb[0].mxu0
  %722 = vmatprep.mubr.bf16.mxu0 0
  %723 = vmatmul.mubr.bf16.gmra.mrb[0].mxu0 %v453
  %v724 = vpop.f32.mrb[0].mxu0
  %v725 = vadd.f32 0.0, %v724
  %v726 = vpop.f32.mrb[0].mxu0
  %v727 = vpop.f32.mrb[0].mxu0
  %v728 = vadd.f32 0.0, %v727
  %v729 = vpop.f32.mrb[0].mxu0
  %730 = vmatprep.mubr.bf16.mxu0 0
  %731 = vmatmul.mubr.bf16.gmra.mrb[0].mxu0 %v456
  %v732 = vpop.f32.mrb[0].mxu0
  %v733 = vadd.f32 0.0, %v732
  %v734 = vpop.f32.mrb[0].mxu0
  %v735 = vpop.f32.mrb[0].mxu0
  %v736 = vadd.f32 0.0, %v735
  %v737 = vpop.f32.mrb[0].mxu0
  %738 = vmatprep.mubr.bf16.mxu0 0
  %739 = vmatmul.mubr.bf16.gmra.mrb[0].mxu0 %v459
  %v740 = vpop.f32.mrb[0].mxu0
  %v741 = vadd.f32 0.0, %v740
  %v742 = vpop.f32.mrb[0].mxu0
  %v743 = vpop.f32.mrb[0].mxu0
  %v744 = vadd.f32 0.0, %v743
  %v745 = vpop.f32.mrb[0].mxu0
  %746 = vmatprep.mubr.bf16.mxu0 0
  %747 = vmatmul.mubr.bf16.gmra.mrb[0].mxu0 %v462
  %v748 = vpop.f32.mrb[0].mxu0
  %v749 = vadd.f32 0.0, %v748
  %v750 = vpop.f32.mrb[0].mxu0
  %v751 = vpop.f32.mrb[0].mxu0
  %v752 = vadd.f32 0.0, %v751
  %v753 = vpop.f32.mrb[0].mxu0
  %754 = vmatprep.mubr.bf16.mxu0 0
  %755 = vmatmul.mubr.bf16.gmra.mrb[0].mxu0 %v465
  %v756 = vpop.f32.mrb[0].mxu0
  %v757 = vadd.f32 0.0, %v756
  %v758 = vpop.f32.mrb[0].mxu0
  %v759 = vpop.f32.mrb[0].mxu0
  %v760 = vadd.f32 0.0, %v759
  %v761 = vpop.f32.mrb[0].mxu0
  %762 = vmatprep.mubr.bf16.mxu0 0
  %763 = vmatmul.mubr.bf16.gmra.mrb[0].mxu0 %v468
  %v764 = vpop.f32.mrb[0].mxu0
  %v765 = vadd.f32 0.0, %v764
  %v766 = vpop.f32.mrb[0].mxu0
  %v767 = vpop.f32.mrb[0].mxu0
  %v768 = vadd.f32 0.0, %v767
  %v769 = vpop.f32.mrb[0].mxu0
  %770 = vmatprep.mubr.bf16.mxu0 0
  %771 = vmatmul.mubr.bf16.gmra.mrb[0].mxu0 %v471
  %v772 = vpop.f32.mrb[0].mxu0
  %v773 = vadd.f32 0.0, %v772
  %v774 = vpop.f32.mrb[0].mxu0
  %v775 = vpop.f32.mrb[0].mxu0
  %v776 = vadd.f32 0.0, %v775
  %v777 = vpop.f32.mrb[0].mxu0
  %778 = vmatprep.mubr.bf16.mxu0 0
  %779 = vmatmul.mubr.bf16.gmra.mrb[0].mxu0 %v474
  %v780 = vpop.f32.mrb[0].mxu0
  %v781 = vadd.f32 0.0, %v780
  %v782 = vpop.f32.mrb[0].mxu0
  %v783 = vpop.f32.mrb[0].mxu0
  %v784 = vadd.f32 0.0, %v783
  %v785 = vpop.f32.mrb[0].mxu0
  %786 = vmatprep.mubr.bf16.mxu0 0
  %787 = vmatmul.mubr.bf16.gmra.mrb[0].mxu0 %v477
  %v788 = vpop.f32.mrb[0].mxu0
  %v789 = vadd.f32 0.0, %v788
  %v790 = vpop.f32.mrb[0].mxu0
  %v791 = vpop.f32.mrb[0].mxu0
  %v792 = vadd.f32 0.0, %v791
  %v793 = vpop.f32.mrb[0].mxu0
  %794 = vmatprep.mubr.bf16.mxu0 0
  %795 = vmatmul.mubr.bf16.gmra.mrb[0].mxu0 %v480
  %v796 = vpop.f32.mrb[0].mxu0
  %v797 = vadd.f32 0.0, %v796
  %v798 = vpop.f32.mrb[0].mxu0
  %v799 = vpop.f32.mrb[0].mxu0
  %v800 = vadd.f32 0.0, %v799
  %v801 = vpop.f32.mrb[0].mxu0
  %802 = vmatprep.mubr.bf16.mxu0 0
  %803 = vmatmul.mubr.bf16.gmra.mrb[0].mxu0 %v483
  %v804 = vpop.f32.mrb[0].mxu0
  %v805 = vadd.f32 0.0, %v804
  %v806 = vpop.f32.mrb[0].mxu0
  %v807 = vpop.f32.mrb[0].mxu0
  %v808 = vadd.f32 0.0, %v807
  %v809 = vpop.f32.mrb[0].mxu0
  %810 = vmatprep.mubr.bf16.mxu0 0
  %811 = vmatmul.mubr.bf16.gmra.mrb[0].mxu0 %v486
  %v812 = vpop.f32.mrb[0].mxu0
  %v813 = vadd.f32 0.0, %v812
  %v814 = vpop.f32.mrb[0].mxu0
  %v815 = vpop.f32.mrb[0].mxu0
  %v816 = vadd.f32 0.0, %v815
  %v817 = vpop.f32.mrb[0].mxu0
  %818 = vmatprep.mubr.bf16.mxu0 0
  %819 = vmatmul.mubr.bf16.gmra.mrb[0].mxu0 %v489
  %v820 = vpop.f32.mrb[0].mxu0
  %v821 = vadd.f32 0.0, %v820
  %v822 = vpop.f32.mrb[0].mxu0
  %v823 = vpop.f32.mrb[0].mxu0
  %v824 = vadd.f32 0.0, %v823
  %v825 = vpop.f32.mrb[0].mxu0
  %826 = vmatprep.mubr.bf16.mxu0 0
  %827 = vmatmul.mubr.bf16.gmra.mrb[0].mxu0 %v492
  %v828 = vpop.f32.mrb[0].mxu0
  %v829 = vadd.f32 0.0, %v828
  %v830 = vpop.f32.mrb[0].mxu0
  %v831 = vpop.f32.mrb[0].mxu0
  %v832 = vadd.f32 0.0, %v831
  %v833 = vpop.f32.mrb[0].mxu0
  %834 = vmatprep.mubr.bf16.mxu0 0
  %835 = vmatmul.mubr.bf16.gmra.mrb[0].mxu0 %v495
  %v836 = vpop.f32.mrb[0].mxu0
  %v837 = vadd.f32 0.0, %v836
  %v838 = vpop.f32.mrb[0].mxu0
  %v839 = vpop.f32.mrb[0].mxu0
  %v840 = vadd.f32 0.0, %v839
  %v841 = vpop.f32.mrb[0].mxu0
  %842 = vmatprep.mubr.bf16.mxu0 0
  %843 = vmatmul.mubr.bf16.gmra.mrb[0].mxu0 %v498
  %v844 = vpop.f32.mrb[0].mxu0
  %v845 = vadd.f32 0.0, %v844
  %v846 = vpop.f32.mrb[0].mxu0
  %v847 = vpop.f32.mrb[0].mxu0
  %v848 = vadd.f32 0.0, %v847
  %v849 = vpop.f32.mrb[0].mxu0
  %850 = vmatprep.mubr.bf16.mxu0 0
  %851 = vmatmul.mubr.bf16.gmra.mrb[0].mxu0 %v501
  %v852 = vpop.f32.mrb[0].mxu0
  %v853 = vadd.f32 0.0, %v852
  %v854 = vpop.f32.mrb[0].mxu0
  %v855 = vpop.f32.mrb[0].mxu0
  %v856 = vadd.f32 0.0, %v855
  %v857 = vpop.f32.mrb[0].mxu0
  %858 = vmatprep.mubr.bf16.mxu0 0
  %859 = vmatmul.mubr.bf16.gmra.mrb[0].mxu0 %v504
  %v860 = vpop.f32.mrb[0].mxu0
  %v861 = vadd.f32 0.0, %v860
  %v862 = vpop.f32.mrb[0].mxu0
  %v863 = vpop.f32.mrb[0].mxu0
  %v864 = vadd.f32 0.0, %v863
  %v865 = vpop.f32.mrb[0].mxu0
  %866 = vmatprep.mubr.bf16.mxu0 0
  %867 = vmatmul.mubr.bf16.gmra.mrb[0].mxu0 %v507
  %v868 = vpop.f32.mrb[0].mxu0
  %v869 = vadd.f32 0.0, %v868
  %v870 = vpop.f32.mrb[0].mxu0
  %v871 = vpop.f32.mrb[0].mxu0
  %v872 = vadd.f32 0.0, %v871
  %v873 = vpop.f32.mrb[0].mxu0
  %874 = vmatprep.mubr.bf16.mxu0 0
  %875 = vmatmul.mubr.bf16.gmra.mrb[0].mxu0 %v510
  %v876 = vpop.f32.mrb[0].mxu0
  %v877 = vadd.f32 0.0, %v876
  %v878 = vpop.f32.mrb[0].mxu0
  %v879 = vpop.f32.mrb[0].mxu0
  %v880 = vadd.f32 0.0, %v879
  %v881 = vpop.f32.mrb[0].mxu0
  %882 = vmatprep.mubr.bf16.mxu0 0
  %883 = vmatmul.mubr.bf16.gmra.mrb[0].mxu0 %v513
  %v884 = vpop.f32.mrb[0].mxu0
  %v885 = vadd.f32 0.0, %v884
  %v886 = vpop.f32.mrb[0].mxu0
  %v887 = vpop.f32.mrb[0].mxu0
  %v888 = vadd.f32 0.0, %v887
  %v889 = vpop.f32.mrb[0].mxu0
  %890 = vmatprep.mubr.bf16.mxu0 0
  %891 = vmatmul.mubr.bf16.gmra.mrb[0].mxu0 %v516
  %v892 = vpop.f32.mrb[0].mxu0
  %v893 = vadd.f32 0.0, %v892
  %v894 = vpop.f32.mrb[0].mxu0
  %v895 = vpop.f32.mrb[0].mxu0
  %v896 = vadd.f32 0.0, %v895
  %v897 = vpop.f32.mrb[0].mxu0
  %898 = vmatprep.mubr.bf16.mxu0 0
  %899 = vmatmul.mubr.bf16.gmra.mrb[0].mxu0 %v519
  %v900 = vpop.f32.mrb[0].mxu0
  %v901 = vadd.f32 0.0, %v900
  %v902 = vpop.f32.mrb[0].mxu0
  %v903 = vpop.f32.mrb[0].mxu0
  %v904 = vadd.f32 0.0, %v903
  %v905 = vpop.f32.mrb[0].mxu0
  %906 = vmatprep.mubr.bf16.mxu0 0
  %907 = vmatmul.mubr.bf16.gmra.mrb[0].mxu0 %v522
  %v908 = vpop.f32.mrb[0].mxu0
  %v909 = vadd.f32 0.0, %v908
  %v910 = vpop.f32.mrb[0].mxu0
  %v911 = vpop.f32.mrb[0].mxu0
  %v912 = vadd.f32 0.0, %v911
  %v913 = vpop.f32.mrb[0].mxu0
  %914 = vmatprep.mubr.bf16.mxu0 0
  %915 = vmatmul.mubr.bf16.gmra.mrb[0].mxu0 %v525
  %v916 = vpop.f32.mrb[0].mxu0
  %v917 = vadd.f32 0.0, %v916
  %v918 = vpop.f32.mrb[0].mxu0
  %v919 = vpop.f32.mrb[0].mxu0
  %v920 = vadd.f32 0.0, %v919
  %v921 = vpop.f32.mrb[0].mxu0
  %922 = vmatprep.mubr.bf16.mxu0 0
  %923 = vmatmul.mubr.bf16.gmra.mrb[0].mxu0 %v528
  %v924 = vpop.f32.mrb[0].mxu0
  %v925 = vadd.f32 0.0, %v924
  %v926 = vpop.f32.mrb[0].mxu0
  %v927 = vpop.f32.mrb[0].mxu0
  %v928 = vadd.f32 0.0, %v927
  %v929 = vpop.f32.mrb[0].mxu0
  %930 = vmatprep.mubr.bf16.mxu0 0
  %931 = vmatmul.mubr.bf16.gmra.mrb[0].mxu0 %v531
  %v932 = vpop.f32.mrb[0].mxu0
  %v933 = vadd.f32 0.0, %v932
  %v934 = vpop.f32.mrb[0].mxu0
  %v935 = vpop.f32.mrb[0].mxu0
  %v936 = vadd.f32 0.0, %v935
  %v937 = vpop.f32.mrb[0].mxu0
  %938 = vmatprep.mubr.bf16.mxu0 0
  %939 = vmatmul.mubr.bf16.gmra.mrb[0].mxu0 %v534
  %v940 = vpop.f32.mrb[0].mxu0
  %v941 = vadd.f32 0.0, %v940
  %v942 = vpop.f32.mrb[0].mxu0
  %v943 = vpop.f32.mrb[0].mxu0
  %v944 = vadd.f32 0.0, %v943
  %v945 = vpop.f32.mrb[0].mxu0
  %946 = vmatprep.mubr.bf16.mxu0 0
  %947 = vmatmul.mubr.bf16.gmra.mrb[0].mxu0 %v537
  %v948 = vpop.f32.mrb[0].mxu0
  %v949 = vadd.f32 0.0, %v948
  %v950 = vpop.f32.mrb[0].mxu0
  %v951 = vpop.f32.mrb[0].mxu0
  %v952 = vadd.f32 0.0, %v951
  %v953 = vpop.f32.mrb[0].mxu0
  %954 = vmatprep.mubr.bf16.mxu0 0
  %955 = vmatmul.mubr.bf16.gmra.mrb[0].mxu0 %v540
  %v956 = vpop.f32.mrb[0].mxu0
  %v957 = vadd.f32 0.0, %v956
  %v958 = vpop.f32.mrb[0].mxu0
  %v959 = vpop.f32.mrb[0].mxu0
  %v960 = vadd.f32 0.0, %v959
  %v961 = vpop.f32.mrb[0].mxu0
  %962 = vmatprep.mubr.bf16.mxu0 0
  %963 = vmatmul.mubr.bf16.gmra.mrb[0].mxu0 %v543
  %v964 = vpop.f32.mrb[0].mxu0
  %v965 = vadd.f32 0.0, %v964
  %v966 = vpop.f32.mrb[0].mxu0
  %v967 = vpop.f32.mrb[0].mxu0
  %v968 = vadd.f32 0.0, %v967
  %v969 = vpop.f32.mrb[0].mxu0
  %970 = vmatprep.mubr.bf16.mxu0 0
  %971 = vmatmul.mubr.bf16.gmra.mrb[0].mxu0 %v546
  %v972 = vpop.f32.mrb[0].mxu0
  %v973 = vadd.f32 0.0, %v972
  %v974 = vpop.f32.mrb[0].mxu0
  %v975 = vpop.f32.mrb[0].mxu0
  %v976 = vadd.f32 0.0, %v975
  %v977 = vpop.f32.mrb[0].mxu0
  %978 = vmatprep.mubr.bf16.mxu0 0
  %979 = vmatmul.mubr.bf16.gmra.mrb[0].mxu0 %v549
  %v980 = vpop.f32.mrb[0].mxu0
  %v981 = vadd.f32 0.0, %v980
  %v982 = vpop.f32.mrb[0].mxu0
  %v983 = vpop.f32.mrb[0].mxu0
  %v984 = vadd.f32 0.0, %v983
  %v985 = vpop.f32.mrb[0].mxu0
  %986 = vmatprep.mubr.bf16.mxu0 0
  %987 = vmatmul.mubr.bf16.gmra.mrb[0].mxu0 %v552
  %v988 = vpop.f32.mrb[0].mxu0
  %v989 = vadd.f32 0.0, %v988
  %v990 = vpop.f32.mrb[0].mxu0
  %v991 = vpop.f32.mrb[0].mxu0
  %v992 = vadd.f32 0.0, %v991
  %v993 = vpop.f32.mrb[0].mxu0
  %994 = vmatprep.mubr.bf16.mxu0 0
  %995 = vmatmul.mubr.bf16.gmra.mrb[0].mxu0 %v555
  %v996 = vpop.f32.mrb[0].mxu0
  %v997 = vadd.f32 0.0, %v996
  %v998 = vpop.f32.mrb[0].mxu0
  %v999 = vpop.f32.mrb[0].mxu0
  %v1000 = vadd.f32 0.0, %v999
  %v1001 = vpop.f32.mrb[0].mxu0
  %1002 = vmatprep.mubr.bf16.mxu0 0
  %1003 = vmatmul.mubr.bf16.gmra.mrb[0].mxu0 %v558
  %v1004 = vpop.f32.mrb[0].mxu0
  %v1005 = vadd.f32 0.0, %v1004
  %v1006 = vpop.f32.mrb[0].mxu0
  %v1007 = vpop.f32.mrb[0].mxu0
  %v1008 = vadd.f32 0.0, %v1007
  %v1009 = vpop.f32.mrb[0].mxu0
  %1010 = vmatprep.mubr.bf16.mxu0 0
  %1011 = vmatmul.mubr.bf16.gmra.mrb[0].mxu0 %v561
  %v1012 = vpop.f32.mrb[0].mxu0
  %v1013 = vadd.f32 0.0, %v1012
  %v1014 = vpop.f32.mrb[0].mxu0
  %v1015 = vpop.f32.mrb[0].mxu0
  %v1016 = vadd.f32 0.0, %v1015
  %v1017 = vpop.f32.mrb[0].mxu0
  %1018 = vmatprep.mubr.bf16.mxu0 0
  %1019 = vmatmul.mubr.bf16.gmra.mrb[0].mxu0 %v564
  %v1020 = vpop.f32.mrb[0].mxu0
  %v1021 = vadd.f32 0.0, %v1020
  %v1022 = vpop.f32.mrb[0].mxu0
  %v1023 = vpop.f32.mrb[0].mxu0
  %v1024 = vadd.f32 0.0, %v1023
  %v1025 = vpop.f32.mrb[0].mxu0
  %1026 = vmatprep.mubr.bf16.mxu0 0
  %1027 = vmatmul.mubr.bf16.gmra.mrb[0].mxu0 %v567
  %v1028 = vpop.f32.mrb[0].mxu0
  %v1029 = vadd.f32 0.0, %v1028
  %v1030 = vpop.f32.mrb[0].mxu0
  %v1031 = vpop.f32.mrb[0].mxu0
  %v1032 = vadd.f32 0.0, %v1031
  %v1033 = vpop.f32.mrb[0].mxu0
  %1034 = vmatprep.mubr.bf16.mxu0 0
  %1035 = vmatmul.mubr.bf16.gmra.mrb[0].mxu0 %v570
  %v1036 = vpop.f32.mrb[0].mxu0
  %v1037 = vadd.f32 0.0, %v1036
  %v1038 = vpop.f32.mrb[0].mxu0
  %v1039 = vpop.f32.mrb[0].mxu0
  %v1040 = vadd.f32 0.0, %v1039
  %v1041 = vpop.f32.mrb[0].mxu0
  %1042 = vmatprep.mubr.bf16.mxu0 0
  %1043 = vmatmul.mubr.bf16.gmra.mrb[0].mxu0 %v573
  %v1044 = vpop.f32.mrb[0].mxu0
  %v1045 = vadd.f32 0.0, %v1044
  %v1046 = vpop.f32.mrb[0].mxu0
  %v1047 = vpop.f32.mrb[0].mxu0
  %v1048 = vadd.f32 0.0, %v1047
  %v1049 = vpop.f32.mrb[0].mxu0
  %1050 = vmatprep.mubr.bf16.mxu0 0
  %1051 = vmatmul.mubr.bf16.gmra.mrb[0].mxu0 %v576
  %v1052 = vpop.f32.mrb[0].mxu0
  %v1053 = vadd.f32 0.0, %v1052
  %v1054 = vpop.f32.mrb[0].mxu0
  %v1055 = vpop.f32.mrb[0].mxu0
  %v1056 = vpop.f32.mrb[0].mxu0
  %1057 = vdwg.mxu0
  %1058 = vst [vmem:[%s2] sm:$0xff] %v613
  %1059 = vst [vmem:[%s2 + $0x8] sm:$0xff] %v616
  %1060 = vst [vmem:[%s2 + $0x10] sm:$0xff] %v621
  %1061 = vst [vmem:[%s2 + $0x18] sm:$0xff] %v624
  %1062 = vst [vmem:[%s2 + $0x20] sm:$0xff] %v629
  %1063 = vst [vmem:[%s2 + $0x28] sm:$0xff] %v632
  %1064 = vst [vmem:[%s2 + $0x30] sm:$0xff] %v637
  %1065 = vst [vmem:[%s2 + $0x38] sm:$0xff] %v640
  %1066 = vst [vmem:[%s2 + $0x40] sm:$0xff] %v645
  %1067 = vst [vmem:[%s2 + $0x48] sm:$0xff] %v648
  %1068 = vst [vmem:[%s2 + $0x50] sm:$0xff] %v653
  %1069 = vst [vmem:[%s2 + $0x58] sm:$0xff] %v656
  %1070 = vst [vmem:[%s2 + $0x60] sm:$0xff] %v661
  %1071 = vst [vmem:[%s2 + $0x68] sm:$0xff] %v664
  %1072 = vst [vmem:[%s2 + $0x70] sm:$0xff] %v669
  %1073 = vst [vmem:[%s2 + $0x78] sm:$0xff] %v672
  %1074 = vst [vmem:[%s2 + $0x80] sm:$0xff] %v677
  %1075 = vst [vmem:[%s2 + $0x88] sm:$0xff] %v680
  %1076 = vst [vmem:[%s2 + $0x90] sm:$0xff] %v685
  %1077 = vst [vmem:[%s2 + $0x98] sm:$0xff] %v688
  %1078 = vst [vmem:[%s2 + $0xa0] sm:$0xff] %v693
  %1079 = vst [vmem:[%s2 + $0xa8] sm:$0xff] %v696
  %1080 = vst [vmem:[%s2 + $0xb0] sm:$0xff] %v701
  %1081 = vst [vmem:[%s2 + $0xb8] sm:$0xff] %v704
  %1082 = vst [vmem:[%s2 + $0xc0] sm:$0xff] %v709
  %1083 = vst [vmem:[%s2 + $0xc8] sm:$0xff] %v712
  %1084 = vst [vmem:[%s2 + $0xd0] sm:$0xff] %v717
  %1085 = vst [vmem:[%s2 + $0xd8] sm:$0xff] %v720
  %1086 = vst [vmem:[%s2 + $0xe0] sm:$0xff] %v725
  %1087 = vst [vmem:[%s2 + $0xe8] sm:$0xff] %v728
  %1088 = vst [vmem:[%s2 + $0xf0] sm:$0xff] %v733
  %1089 = vst [vmem:[%s2 + $0xf8] sm:$0xff] %v736
  %1090 = vst [vmem:[%s2 + $0x100] sm:$0xff] %v741
  %1091 = vst [vmem:[%s2 + $0x108] sm:$0xff] %v744
  %1092 = vst [vmem:[%s2 + $0x110] sm:$0xff] %v749
  %1093 = vst [vmem:[%s2 + $0x118] sm:$0xff] %v752
  %1094 = vst [vmem:[%s2 + $0x120] sm:$0xff] %v757
  %1095 = vst [vmem:[%s2 + $0x128] sm:$0xff] %v760
  %1096 = vst [vmem:[%s2 + $0x130] sm:$0xff] %v765
  %1097 = vst [vmem:[%s2 + $0x138] sm:$0xff] %v768
  %1098 = vst [vmem:[%s2 + $0x140] sm:$0xff] %v773
  %1099 = vst [vmem:[%s2 + $0x148] sm:$0xff] %v776
  %1100 = vst [vmem:[%s2 + $0x150] sm:$0xff] %v781
  %1101 = vst [vmem:[%s2 + $0x158] sm:$0xff] %v784
  %1102 = vst [vmem:[%s2 + $0x160] sm:$0xff] %v789
  %1103 = vst [vmem:[%s2 + $0x168] sm:$0xff] %v792
  %1104 = vst [vmem:[%s2 + $0x170] sm:$0xff] %v797
  %1105 = vst [vmem:[%s2 + $0x178] sm:$0xff] %v800
  %1106 = vst [vmem:[%s2 + $0x180] sm:$0xff] %v805
  %1107 = vst [vmem:[%s2 + $0x188] sm:$0xff] %v808
  %1108 = vst [vmem:[%s2 + $0x190] sm:$0xff] %v813
  %1109 = vst [vmem:[%s2 + $0x198] sm:$0xff] %v816
  %1110 = vst [vmem:[%s2 + $0x1a0] sm:$0xff] %v821
  %1111 = vst [vmem:[%s2 + $0x1a8] sm:$0xff] %v824
  %1112 = vst [vmem:[%s2 + $0x1b0] sm:$0xff] %v829
  %1113 = vst [vmem:[%s2 + $0x1b8] sm:$0xff] %v832
  %1114 = vst [vmem:[%s2 + $0x1c0] sm:$0xff] %v837
  %1115 = vst [vmem:[%s2 + $0x1c8] sm:$0xff] %v840
  %1116 = vst [vmem:[%s2 + $0x1d0] sm:$0xff] %v845
  %1117 = vst [vmem:[%s2 + $0x1d8] sm:$0xff] %v848
  %1118 = vst [vmem:[%s2 + $0x1e0] sm:$0xff] %v853
  %1119 = vst [vmem:[%s2 + $0x1e8] sm:$0xff] %v856
  %1120 = vst [vmem:[%s2 + $0x1f0] sm:$0xff] %v861
  %1121 = vst [vmem:[%s2 + $0x1f8] sm:$0xff] %v864
  %1122 = vst [vmem:[%s2 + $0x200] sm:$0xff] %v869
  %1123 = vst [vmem:[%s2 + $0x208] sm:$0xff] %v872
  %1124 = vst [vmem:[%s2 + $0x210] sm:$0xff] %v877
  %1125 = vst [vmem:[%s2 + $0x218] sm:$0xff] %v880
  %1126 = vst [vmem:[%s2 + $0x220] sm:$0xff] %v885
  %1127 = vst [vmem:[%s2 + $0x228] sm:$0xff] %v888
  %1128 = vst [vmem:[%s2 + $0x230] sm:$0xff] %v893
  %1129 = vst [vmem:[%s2 + $0x238] sm:$0xff] %v896
  %1130 = vst [vmem:[%s2 + $0x240] sm:$0xff] %v901
  %1131 = vst [vmem:[%s2 + $0x248] sm:$0xff] %v904
  %1132 = vst [vmem:[%s2 + $0x250] sm:$0xff] %v909
  %1133 = vst [vmem:[%s2 + $0x258] sm:$0xff] %v912
  %1134 = vst [vmem:[%s2 + $0x260] sm:$0xff] %v917
  %1135 = vst [vmem:[%s2 + $0x268] sm:$0xff] %v920
  %1136 = vst [vmem:[%s2 + $0x270] sm:$0xff] %v925
  %1137 = vst [vmem:[%s2 + $0x278] sm:$0xff] %v928
  %1138 = vst [vmem:[%s2 + $0x280] sm:$0xff] %v933
  %1139 = vst [vmem:[%s2 + $0x288] sm:$0xff] %v936
  %1140 = vst [vmem:[%s2 + $0x290] sm:$0xff] %v941
  %1141 = vst [vmem:[%s2 + $0x298] sm:$0xff] %v944
  %1142 = vst [vmem:[%s2 + $0x2a0] sm:$0xff] %v949
  %1143 = vst [vmem:[%s2 + $0x2a8] sm:$0xff] %v952
  %1144 = vst [vmem:[%s2 + $0x2b0] sm:$0xff] %v957
  %1145 = vst [vmem:[%s2 + $0x2b8] sm:$0xff] %v960
  %1146 = vst [vmem:[%s2 + $0x2c0] sm:$0xff] %v965
  %1147 = vst [vmem:[%s2 + $0x2c8] sm:$0xff] %v968
  %1148 = vst [vmem:[%s2 + $0x2d0] sm:$0xff] %v973
  %1149 = vst [vmem:[%s2 + $0x2d8] sm:$0xff] %v976
  %1150 = vst [vmem:[%s2 + $0x2e0] sm:$0xff] %v981
  %1151 = vst [vmem:[%s2 + $0x2e8] sm:$0xff] %v984
  %1152 = vst [vmem:[%s2 + $0x2f0] sm:$0xff] %v989
  %1153 = vst [vmem:[%s2 + $0x2f8] sm:$0xff] %v992
  %1154 = vst [vmem:[%s2 + $0x300] sm:$0xff] %v997
  %1155 = vst [vmem:[%s2 + $0x308] sm:$0xff] %v1000
  %1156 = vst [vmem:[%s2 + $0x310] sm:$0xff] %v1005
  %1157 = vst [vmem:[%s2 + $0x318] sm:$0xff] %v1008
  %1158 = vst [vmem:[%s2 + $0x320] sm:$0xff] %v1013
  %1159 = vst [vmem:[%s2 + $0x328] sm:$0xff] %v1016
  %1160 = vst [vmem:[%s2 + $0x330] sm:$0xff] %v1021
  %1161 = vst [vmem:[%s2 + $0x338] sm:$0xff] %v1024
  %1162 = vst [vmem:[%s2 + $0x340] sm:$0xff] %v1029
  %1163 = vst [vmem:[%s2 + $0x348] sm:$0xff] %v1032
  %1164 = vst [vmem:[%s2 + $0x350] sm:$0xff] %v1037
  %1165 = vst [vmem:[%s2 + $0x358] sm:$0xff] %v1040
  %1166 = vst [vmem:[%s2 + $0x360] sm:$0xff] %v1045
  %1167 = vst [vmem:[%s2 + $0x368] sm:$0xff] %v1048
  %1168 = vst [vmem:[%s2 + $0x370] sm:$0x3] %v1053
  // Predicated region
  $region10: #{cnn_decoder_forward.6} parent=0 // pred_check
    _
  $region11: #{cnn_decoder_forward.6} parent=0 // pred_check_branch
    %1170 = sbr.rel (0) target = $region13
  $region12: #{cnn_decoder_forward.6} parent=0 // pred_region
    _
  $region13: #{cnn_decoder_forward.6} parent=0 // pred_fallthru
    _
  // Predicated region
  $region14: #{cnn_decoder_forward.6} parent=0 // pred_check
    _
  $region15: #{cnn_decoder_forward.6} parent=0 // pred_check_branch
    %1172 = sbr.rel (0) target = $region17
  $region16: #{cnn_decoder_forward.6} parent=0 // pred_region
    _
  $region17: #{cnn_decoder_forward.6} parent=0 // pred_fallthru
    _

// kernel: cnn_decoder_forward.7
$region0: #{cnn_decoder_forward.7}
  #allocation0 [shape = 'u32[]', space=smem, size = 0x4, offset = 0x4, fixed_abs, tag = 'smem constant byte address 0x4 - core index']
  #allocation1 [shape = 'u32[144,128]{1,0:T(1,128)}', space=vmem, size = 0x12000, scoped, tag = 'internal scratch']
  %s0 = inlined_call_operand.vmem [shape: bf16[3528,8], index: 0, kind: input, shape index: {}]
  %s1 = inlined_call_operand.vmem [shape: bf16[8,16], index: 1, kind: input, shape index: {}]
  %s2 = inlined_call_operand.vmem [shape: f32[3528,16], index: 2, kind: output, shape index: {}]
  %s3 = sld [smem:[#allocation0]]
  $region18: #{cnn_decoder_forward.7} parent=0
    _
  %s5 = ssub.s32 1, %s3
  %s6 = scalar_select 0, %s5, %s3
  // Predicated region
  $region2: #{cnn_decoder_forward.7} parent=0 // pred_check
    _
  $region3: #{cnn_decoder_forward.7} parent=0 // pred_check_branch
    %8 = sbr.rel (0) target = $region5
  $region4: #{cnn_decoder_forward.7} parent=0 // pred_region
    _
  $region5: #{cnn_decoder_forward.7} parent=0 // pred_fallthru
    _
  // Predicated region
  $region6: #{cnn_decoder_forward.7} parent=0 // pred_check
    _
  $region7: #{cnn_decoder_forward.7} parent=0 // pred_check_branch
    %10 = sbr.rel (0) target = $region9
  $region8: #{cnn_decoder_forward.7} parent=0 // pred_region
    _
  $region9: #{cnn_decoder_forward.7} parent=0 // pred_fallthru
    _
  %v12 = vld [vmem:[%s0] sm:$0xf]
  %v13 = vld [vmem:[%s0 + $0x4] sm:$0xf]
  %v14 = vld [vmem:[%s0 + $0x8] sm:$0xf]
  %v15 = vld [vmem:[%s0 + $0xc] sm:$0xf]
  %v16 = vld [vmem:[%s0 + $0x10] sm:$0xf]
  %v17 = vld [vmem:[%s0 + $0x14] sm:$0xf]
  %v18 = vld [vmem:[%s0 + $0x18] sm:$0xf]
  %v19 = vld [vmem:[%s0 + $0x1c] sm:$0xf]
  %v20 = vld [vmem:[%s0 + $0x20] sm:$0xf]
  %v21 = vld [vmem:[%s0 + $0x24] sm:$0xf]
  %v22 = vld [vmem:[%s0 + $0x28] sm:$0xf]
  %v23 = vld [vmem:[%s0 + $0x2c] sm:$0xf]
  %v24 = vld [vmem:[%s0 + $0x30] sm:$0xf]
  %v25 = vld [vmem:[%s0 + $0x34] sm:$0xf]
  %v26 = vld [vmem:[%s0 + $0x38] sm:$0xf]
  %v27 = vld [vmem:[%s0 + $0x3c] sm:$0xf]
  %v28 = vld [vmem:[%s0 + $0x40] sm:$0xf]
  %v29 = vld [vmem:[%s0 + $0x44] sm:$0xf]
  %v30 = vld [vmem:[%s0 + $0x48] sm:$0xf]
  %v31 = vld [vmem:[%s0 + $0x4c] sm:$0xf]
  %v32 = vld [vmem:[%s0 + $0x50] sm:$0xf]
  %v33 = vld [vmem:[%s0 + $0x54] sm:$0xf]
  %v34 = vld [vmem:[%s0 + $0x58] sm:$0xf]
  %v35 = vld [vmem:[%s0 + $0x5c] sm:$0xf]
  %v36 = vld [vmem:[%s0 + $0x60] sm:$0xf]
  %v37 = vld [vmem:[%s0 + $0x64] sm:$0xf]
  %v38 = vld [vmem:[%s0 + $0x68] sm:$0xf]
  %v39 = vld [vmem:[%s0 + $0x6c] sm:$0xf]
  %v40 = vld [vmem:[%s0 + $0x70] sm:$0xf]
  %v41 = vld [vmem:[%s0 + $0x74] sm:$0xf]
  %v42 = vld [vmem:[%s0 + $0x78] sm:$0xf]
  %v43 = vld [vmem:[%s0 + $0x7c] sm:$0xf]
  %v44 = vld [vmem:[%s0 + $0x80] sm:$0xf]
  %v45 = vld [vmem:[%s0 + $0x84] sm:$0xf]
  %v46 = vld [vmem:[%s0 + $0x88] sm:$0xf]
  %v47 = vld [vmem:[%s0 + $0x8c] sm:$0xf]
  %v48 = vld [vmem:[%s0 + $0x90] sm:$0xf]
  %v49 = vld [vmem:[%s0 + $0x94] sm:$0xf]
  %v50 = vld [vmem:[%s0 + $0x98] sm:$0xf]
  %v51 = vld [vmem:[%s0 + $0x9c] sm:$0xf]
  %v52 = vld [vmem:[%s0 + $0xa0] sm:$0xf]
  %v53 = vld [vmem:[%s0 + $0xa4] sm:$0xf]
  %v54 = vld [vmem:[%s0 + $0xa8] sm:$0xf]
  %v55 = vld [vmem:[%s0 + $0xac] sm:$0xf]
  %v56 = vld [vmem:[%s0 + $0xb0] sm:$0xf]
  %v57 = vld [vmem:[%s0 + $0xb4] sm:$0xf]
  %v58 = vld [vmem:[%s0 + $0xb8] sm:$0xf]
  %v59 = vld [vmem:[%s0 + $0xbc] sm:$0xf]
  %v60 = vld [vmem:[%s0 + $0xc0] sm:$0xf]
  %v61 = vld [vmem:[%s0 + $0xc4] sm:$0xf]
  %v62 = vld [vmem:[%s0 + $0xc8] sm:$0xf]
  %v63 = vld [vmem:[%s0 + $0xcc] sm:$0xf]
  %v64 = vld [vmem:[%s0 + $0xd0] sm:$0xf]
  %v65 = vld [vmem:[%s0 + $0xd4] sm:$0xf]
  %v66 = vld [vmem:[%s0 + $0xd8] sm:$0xf]
  %v67 = vld [vmem:[%s0 + $0xdc] sm:$0xf]
  %v68 = vld [vmem:[%s0 + $0xe0] sm:$0xf]
  %v69 = vld [vmem:[%s0 + $0xe4] sm:$0xf]
  %v70 = vld [vmem:[%s0 + $0xe8] sm:$0xf]
  %v71 = vld [vmem:[%s0 + $0xec] sm:$0xf]
  %v72 = vld [vmem:[%s0 + $0xf0] sm:$0xf]
  %v73 = vld [vmem:[%s0 + $0xf4] sm:$0xf]
  %v74 = vld [vmem:[%s0 + $0xf8] sm:$0xf]
  %v75 = vld [vmem:[%s0 + $0xfc] sm:$0xf]
  %v76 = vld [vmem:[%s0 + $0x100] sm:$0xf]
  %v77 = vld [vmem:[%s0 + $0x104] sm:$0xf]
  %v78 = vld [vmem:[%s0 + $0x108] sm:$0xf]
  %v79 = vld [vmem:[%s0 + $0x10c] sm:$0xf]
  %v80 = vld [vmem:[%s0 + $0x110] sm:$0xf]
  %v81 = vld [vmem:[%s0 + $0x114] sm:$0xf]
  %v82 = vld [vmem:[%s0 + $0x118] sm:$0xf]
  %v83 = vld [vmem:[%s0 + $0x11c] sm:$0xf]
  %v84 = vld [vmem:[%s0 + $0x120] sm:$0xf]
  %v85 = vld [vmem:[%s0 + $0x124] sm:$0xf]
  %v86 = vld [vmem:[%s0 + $0x128] sm:$0xf]
  %v87 = vld [vmem:[%s0 + $0x12c] sm:$0xf]
  %v88 = vld [vmem:[%s0 + $0x130] sm:$0xf]
  %v89 = vld [vmem:[%s0 + $0x134] sm:$0xf]
  %v90 = vld [vmem:[%s0 + $0x138] sm:$0xf]
  %v91 = vld [vmem:[%s0 + $0x13c] sm:$0xf]
  %v92 = vld [vmem:[%s0 + $0x140] sm:$0xf]
  %v93 = vld [vmem:[%s0 + $0x144] sm:$0xf]
  %v94 = vld [vmem:[%s0 + $0x148] sm:$0xf]
  %v95 = vld [vmem:[%s0 + $0x14c] sm:$0xf]
  %v96 = vld [vmem:[%s0 + $0x150] sm:$0xf]
  %v97 = vld [vmem:[%s0 + $0x154] sm:$0xf]
  %v98 = vld [vmem:[%s0 + $0x158] sm:$0xf]
  %v99 = vld [vmem:[%s0 + $0x15c] sm:$0xf]
  %v100 = vld [vmem:[%s0 + $0x160] sm:$0xf]
  %v101 = vld [vmem:[%s0 + $0x164] sm:$0xf]
  %v102 = vld [vmem:[%s0 + $0x168] sm:$0xf]
  %v103 = vld [vmem:[%s0 + $0x16c] sm:$0xf]
  %v104 = vld [vmem:[%s0 + $0x170] sm:$0xf]
  %v105 = vld [vmem:[%s0 + $0x174] sm:$0xf]
  %v106 = vld [vmem:[%s0 + $0x178] sm:$0xf]
  %v107 = vld [vmem:[%s0 + $0x17c] sm:$0xf]
  %v108 = vld [vmem:[%s0 + $0x180] sm:$0xf]
  %v109 = vld [vmem:[%s0 + $0x184] sm:$0xf]
  %v110 = vld [vmem:[%s0 + $0x188] sm:$0xf]
  %v111 = vld [vmem:[%s0 + $0x18c] sm:$0xf]
  %v112 = vld [vmem:[%s0 + $0x190] sm:$0xf]
  %v113 = vld [vmem:[%s0 + $0x194] sm:$0xf]
  %v114 = vld [vmem:[%s0 + $0x198] sm:$0xf]
  %v115 = vld [vmem:[%s0 + $0x19c] sm:$0xf]
  %v116 = vld [vmem:[%s0 + $0x1a0] sm:$0xf]
  %v117 = vld [vmem:[%s0 + $0x1a4] sm:$0xf]
  %v118 = vld [vmem:[%s0 + $0x1a8] sm:$0xf]
  %v119 = vld [vmem:[%s0 + $0x1ac] sm:$0xf]
  %v120 = vld [vmem:[%s0 + $0x1b0] sm:$0xf]
  %v121 = vld [vmem:[%s0 + $0x1b4] sm:$0xf]
  %v122 = vld [vmem:[%s0 + $0x1b8] sm:$0xf]
  %v123 = vld [vmem:[%s0 + $0x1bc] sm:$0xf]
  %v124 = vld [vmem:[%s0 + $0x1c0] sm:$0xf]
  %v125 = vld [vmem:[%s0 + $0x1c4] sm:$0xf]
  %v126 = vld [vmem:[%s0 + $0x1c8] sm:$0xf]
  %v127 = vld [vmem:[%s0 + $0x1cc] sm:$0xf]
  %v128 = vld [vmem:[%s0 + $0x1d0] sm:$0xf]
  %v129 = vld [vmem:[%s0 + $0x1d4] sm:$0xf]
  %v130 = vld [vmem:[%s0 + $0x1d8] sm:$0xf]
  %v131 = vld [vmem:[%s0 + $0x1dc] sm:$0xf]
  %v132 = vld [vmem:[%s0 + $0x1e0] sm:$0xf]
  %v133 = vld [vmem:[%s0 + $0x1e4] sm:$0xf]
  %v134 = vld [vmem:[%s0 + $0x1e8] sm:$0xf]
  %v135 = vld [vmem:[%s0 + $0x1ec] sm:$0xf]
  %v136 = vld [vmem:[%s0 + $0x1f0] sm:$0xf]
  %v137 = vld [vmem:[%s0 + $0x1f4] sm:$0xf]
  %v138 = vld [vmem:[%s0 + $0x1f8] sm:$0xf]
  %v139 = vld [vmem:[%s0 + $0x1fc] sm:$0xf]
  %v140 = vld [vmem:[%s0 + $0x200] sm:$0xf]
  %v141 = vld [vmem:[%s0 + $0x204] sm:$0xf]
  %v142 = vld [vmem:[%s0 + $0x208] sm:$0xf]
  %v143 = vld [vmem:[%s0 + $0x20c] sm:$0xf]
  %v144 = vld [vmem:[%s0 + $0x210] sm:$0xf]
  %v145 = vld [vmem:[%s0 + $0x214] sm:$0xf]
  %v146 = vld [vmem:[%s0 + $0x218] sm:$0xf]
  %v147 = vld [vmem:[%s0 + $0x21c] sm:$0xf]
  %v148 = vld [vmem:[%s0 + $0x220] sm:$0xf]
  %v149 = vld [vmem:[%s0 + $0x224] sm:$0xf]
  %v150 = vld [vmem:[%s0 + $0x228] sm:$0xf]
  %v151 = vld [vmem:[%s0 + $0x22c] sm:$0xf]
  %v152 = vld [vmem:[%s0 + $0x230] sm:$0xf]
  %v153 = vld [vmem:[%s0 + $0x234] sm:$0xf]
  %v154 = vld [vmem:[%s0 + $0x238] sm:$0xf]
  %v155 = vld [vmem:[%s0 + $0x23c] sm:$0xf]
  %v156 = vld [vmem:[%s0 + $0x240] sm:$0xf]
  %v157 = vld [vmem:[%s0 + $0x244] sm:$0xf]
  %v158 = vld [vmem:[%s0 + $0x248] sm:$0xf]
  %v159 = vld [vmem:[%s0 + $0x24c] sm:$0xf]
  %v160 = vld [vmem:[%s0 + $0x250] sm:$0xf]
  %v161 = vld [vmem:[%s0 + $0x254] sm:$0xf]
  %v162 = vld [vmem:[%s0 + $0x258] sm:$0xf]
  %v163 = vld [vmem:[%s0 + $0x25c] sm:$0xf]
  %v164 = vld [vmem:[%s0 + $0x260] sm:$0xf]
  %v165 = vld [vmem:[%s0 + $0x264] sm:$0xf]
  %v166 = vld [vmem:[%s0 + $0x268] sm:$0xf]
  %v167 = vld [vmem:[%s0 + $0x26c] sm:$0xf]
  %v168 = vld [vmem:[%s0 + $0x270] sm:$0xf]
  %v169 = vld [vmem:[%s0 + $0x274] sm:$0xf]
  %v170 = vld [vmem:[%s0 + $0x278] sm:$0xf]
  %v171 = vld [vmem:[%s0 + $0x27c] sm:$0xf]
  %v172 = vld [vmem:[%s0 + $0x280] sm:$0xf]
  %v173 = vld [vmem:[%s0 + $0x284] sm:$0xf]
  %v174 = vld [vmem:[%s0 + $0x288] sm:$0xf]
  %v175 = vld [vmem:[%s0 + $0x28c] sm:$0xf]
  %v176 = vld [vmem:[%s0 + $0x290] sm:$0xf]
  %v177 = vld [vmem:[%s0 + $0x294] sm:$0xf]
  %v178 = vld [vmem:[%s0 + $0x298] sm:$0xf]
  %v179 = vld [vmem:[%s0 + $0x29c] sm:$0xf]
  %v180 = vld [vmem:[%s0 + $0x2a0] sm:$0xf]
  %v181 = vld [vmem:[%s0 + $0x2a4] sm:$0xf]
  %v182 = vld [vmem:[%s0 + $0x2a8] sm:$0xf]
  %v183 = vld [vmem:[%s0 + $0x2ac] sm:$0xf]
  %v184 = vld [vmem:[%s0 + $0x2b0] sm:$0xf]
  %v185 = vld [vmem:[%s0 + $0x2b4] sm:$0xf]
  %v186 = vld [vmem:[%s0 + $0x2b8] sm:$0xf]
  %v187 = vld [vmem:[%s0 + $0x2bc] sm:$0xf]
  %v188 = vld [vmem:[%s0 + $0x2c0] sm:$0xf]
  %v189 = vld [vmem:[%s0 + $0x2c4] sm:$0xf]
  %v190 = vld [vmem:[%s0 + $0x2c8] sm:$0xf]
  %v191 = vld [vmem:[%s0 + $0x2cc] sm:$0xf]
  %v192 = vld [vmem:[%s0 + $0x2d0] sm:$0xf]
  %v193 = vld [vmem:[%s0 + $0x2d4] sm:$0xf]
  %v194 = vld [vmem:[%s0 + $0x2d8] sm:$0xf]
  %v195 = vld [vmem:[%s0 + $0x2dc] sm:$0xf]
  %v196 = vld [vmem:[%s0 + $0x2e0] sm:$0xf]
  %v197 = vld [vmem:[%s0 + $0x2e4] sm:$0xf]
  %v198 = vld [vmem:[%s0 + $0x2e8] sm:$0xf]
  %v199 = vld [vmem:[%s0 + $0x2ec] sm:$0xf]
  %v200 = vld [vmem:[%s0 + $0x2f0] sm:$0xf]
  %v201 = vld [vmem:[%s0 + $0x2f4] sm:$0xf]
  %v202 = vld [vmem:[%s0 + $0x2f8] sm:$0xf]
  %v203 = vld [vmem:[%s0 + $0x2fc] sm:$0xf]
  %v204 = vld [vmem:[%s0 + $0x300] sm:$0xf]
  %v205 = vld [vmem:[%s0 + $0x304] sm:$0xf]
  %v206 = vld [vmem:[%s0 + $0x308] sm:$0xf]
  %v207 = vld [vmem:[%s0 + $0x30c] sm:$0xf]
  %v208 = vld [vmem:[%s0 + $0x310] sm:$0xf]
  %v209 = vld [vmem:[%s0 + $0x314] sm:$0xf]
  %v210 = vld [vmem:[%s0 + $0x318] sm:$0xf]
  %v211 = vld [vmem:[%s0 + $0x31c] sm:$0xf]
  %v212 = vld [vmem:[%s0 + $0x320] sm:$0xf]
  %v213 = vld [vmem:[%s0 + $0x324] sm:$0xf]
  %v214 = vld [vmem:[%s0 + $0x328] sm:$0xf]
  %v215 = vld [vmem:[%s0 + $0x32c] sm:$0xf]
  %v216 = vld [vmem:[%s0 + $0x330] sm:$0xf]
  %v217 = vld [vmem:[%s0 + $0x334] sm:$0xf]
  %v218 = vld [vmem:[%s0 + $0x338] sm:$0xf]
  %v219 = vld [vmem:[%s0 + $0x33c] sm:$0xf]
  %v220 = vld [vmem:[%s0 + $0x340] sm:$0xf]
  %v221 = vld [vmem:[%s0 + $0x344] sm:$0xf]
  %v222 = vld [vmem:[%s0 + $0x348] sm:$0xf]
  %v223 = vld [vmem:[%s0 + $0x34c] sm:$0xf]
  %v224 = vld [vmem:[%s0 + $0x350] sm:$0xf]
  %v225 = vld [vmem:[%s0 + $0x354] sm:$0xf]
  %v226 = vld [vmem:[%s0 + $0x358] sm:$0xf]
  %v227 = vld [vmem:[%s0 + $0x35c] sm:$0xf]
  %v228 = vld [vmem:[%s0 + $0x360] sm:$0xf]
  %v229 = vld [vmem:[%s0 + $0x364] sm:$0xf]
  %v230 = vld [vmem:[%s0 + $0x368] sm:$0xf]
  %v231 = vld [vmem:[%s0 + $0x36c] sm:$0xf]
  %v232 = vld [vmem:[%s0 + $0x370] sm:$0xf]
  %v233 = vld [vmem:[%s0 + $0x374] sm:$0xf]
  %v234 = vld [vmem:[%s0 + $0x378] sm:$0xf]
  %v235 = vld [vmem:[%s0 + $0x37c] sm:$0xf]
  %v236 = vld [vmem:[%s0 + $0x380] sm:$0xf]
  %v237 = vld [vmem:[%s0 + $0x384] sm:$0xf]
  %v238 = vld [vmem:[%s0 + $0x388] sm:$0xf]
  %v239 = vld [vmem:[%s0 + $0x38c] sm:$0xf]
  %v240 = vld [vmem:[%s0 + $0x390] sm:$0xf]
  %v241 = vld [vmem:[%s0 + $0x394] sm:$0xf]
  %v242 = vld [vmem:[%s0 + $0x398] sm:$0xf]
  %v243 = vld [vmem:[%s0 + $0x39c] sm:$0xf]
  %v244 = vld [vmem:[%s0 + $0x3a0] sm:$0xf]
  %v245 = vld [vmem:[%s0 + $0x3a4] sm:$0xf]
  %v246 = vld [vmem:[%s0 + $0x3a8] sm:$0xf]
  %v247 = vld [vmem:[%s0 + $0x3ac] sm:$0xf]
  %v248 = vld [vmem:[%s0 + $0x3b0] sm:$0xf]
  %v249 = vld [vmem:[%s0 + $0x3b4] sm:$0xf]
  %v250 = vld [vmem:[%s0 + $0x3b8] sm:$0xf]
  %v251 = vld [vmem:[%s0 + $0x3bc] sm:$0xf]
  %v252 = vld [vmem:[%s0 + $0x3c0] sm:$0xf]
  %v253 = vld [vmem:[%s0 + $0x3c4] sm:$0xf]
  %v254 = vld [vmem:[%s0 + $0x3c8] sm:$0xf]
  %v255 = vld [vmem:[%s0 + $0x3cc] sm:$0xf]
  %v256 = vld [vmem:[%s0 + $0x3d0] sm:$0xf]
  %v257 = vld [vmem:[%s0 + $0x3d4] sm:$0xf]
  %v258 = vld [vmem:[%s0 + $0x3d8] sm:$0xf]
  %v259 = vld [vmem:[%s0 + $0x3dc] sm:$0xf]
  %v260 = vld [vmem:[%s0 + $0x3e0] sm:$0xf]
  %v261 = vld [vmem:[%s0 + $0x3e4] sm:$0xf]
  %v262 = vld [vmem:[%s0 + $0x3e8] sm:$0xf]
  %v263 = vld [vmem:[%s0 + $0x3ec] sm:$0xf]
  %v264 = vld [vmem:[%s0 + $0x3f0] sm:$0xf]
  %v265 = vld [vmem:[%s0 + $0x3f4] sm:$0xf]
  %v266 = vld [vmem:[%s0 + $0x3f8] sm:$0xf]
  %v267 = vld [vmem:[%s0 + $0x3fc] sm:$0xf]
  %v268 = vld [vmem:[%s0 + $0x400] sm:$0xf]
  %v269 = vld [vmem:[%s0 + $0x404] sm:$0xf]
  %v270 = vld [vmem:[%s0 + $0x408] sm:$0xf]
  %v271 = vld [vmem:[%s0 + $0x40c] sm:$0xf]
  %v272 = vld [vmem:[%s0 + $0x410] sm:$0xf]
  %v273 = vld [vmem:[%s0 + $0x414] sm:$0xf]
  %v274 = vld [vmem:[%s0 + $0x418] sm:$0xf]
  %v275 = vld [vmem:[%s0 + $0x41c] sm:$0xf]
  %v276 = vld [vmem:[%s0 + $0x420] sm:$0xf]
  %v277 = vld [vmem:[%s0 + $0x424] sm:$0xf]
  %v278 = vld [vmem:[%s0 + $0x428] sm:$0xf]
  %v279 = vld [vmem:[%s0 + $0x42c] sm:$0xf]
  %v280 = vld [vmem:[%s0 + $0x430] sm:$0xf]
  %v281 = vld [vmem:[%s0 + $0x434] sm:$0xf]
  %v282 = vld [vmem:[%s0 + $0x438] sm:$0xf]
  %v283 = vld [vmem:[%s0 + $0x43c] sm:$0xf]
  %v284 = vld [vmem:[%s0 + $0x440] sm:$0xf]
  %v285 = vld [vmem:[%s0 + $0x444] sm:$0xf]
  %v286 = vld [vmem:[%s0 + $0x448] sm:$0xf]
  %v287 = vld [vmem:[%s0 + $0x44c] sm:$0xf]
  %v288 = vld [vmem:[%s0 + $0x450] sm:$0xf]
  %v289 = vld [vmem:[%s0 + $0x454] sm:$0xf]
  %v290 = vld [vmem:[%s0 + $0x458] sm:$0xf]
  %v291 = vld [vmem:[%s0 + $0x45c] sm:$0xf]
  %v292 = vld [vmem:[%s0 + $0x460] sm:$0xf]
  %v293 = vld [vmem:[%s0 + $0x464] sm:$0xf]
  %v294 = vld [vmem:[%s0 + $0x468] sm:$0xf]
  %v295 = vld [vmem:[%s0 + $0x46c] sm:$0xf]
  %v296 = vld [vmem:[%s0 + $0x470] sm:$0xf]
  %v297 = vld [vmem:[%s0 + $0x474] sm:$0xf]
  %v298 = vld [vmem:[%s0 + $0x478] sm:$0xf]
  %v299 = vld [vmem:[%s0 + $0x47c] sm:$0xf]
  %v300 = vld [vmem:[%s0 + $0x480] sm:$0xf]
  %v301 = vld [vmem:[%s0 + $0x484] sm:$0xf]
  %v302 = vld [vmem:[%s0 + $0x488] sm:$0xf]
  %v303 = vld [vmem:[%s0 + $0x48c] sm:$0xf]
  %v304 = vld [vmem:[%s0 + $0x490] sm:$0xf]
  %v305 = vld [vmem:[%s0 + $0x494] sm:$0xf]
  %v306 = vld [vmem:[%s0 + $0x498] sm:$0xf]
  %v307 = vld [vmem:[%s0 + $0x49c] sm:$0xf]
  %v308 = vld [vmem:[%s0 + $0x4a0] sm:$0xf]
  %v309 = vld [vmem:[%s0 + $0x4a4] sm:$0xf]
  %v310 = vld [vmem:[%s0 + $0x4a8] sm:$0xf]
  %v311 = vld [vmem:[%s0 + $0x4ac] sm:$0xf]
  %v312 = vld [vmem:[%s0 + $0x4b0] sm:$0xf]
  %v313 = vld [vmem:[%s0 + $0x4b4] sm:$0xf]
  %v314 = vld [vmem:[%s0 + $0x4b8] sm:$0xf]
  %v315 = vld [vmem:[%s0 + $0x4bc] sm:$0xf]
  %v316 = vld [vmem:[%s0 + $0x4c0] sm:$0xf]
  %v317 = vld [vmem:[%s0 + $0x4c4] sm:$0xf]
  %v318 = vld [vmem:[%s0 + $0x4c8] sm:$0xf]
  %v319 = vld [vmem:[%s0 + $0x4cc] sm:$0xf]
  %v320 = vld [vmem:[%s0 + $0x4d0] sm:$0xf]
  %v321 = vld [vmem:[%s0 + $0x4d4] sm:$0xf]
  %v322 = vld [vmem:[%s0 + $0x4d8] sm:$0xf]
  %v323 = vld [vmem:[%s0 + $0x4dc] sm:$0xf]
  %v324 = vld [vmem:[%s0 + $0x4e0] sm:$0xf]
  %v325 = vld [vmem:[%s0 + $0x4e4] sm:$0xf]
  %v326 = vld [vmem:[%s0 + $0x4e8] sm:$0xf]
  %v327 = vld [vmem:[%s0 + $0x4ec] sm:$0xf]
  %v328 = vld [vmem:[%s0 + $0x4f0] sm:$0xf]
  %v329 = vld [vmem:[%s0 + $0x4f4] sm:$0xf]
  %v330 = vld [vmem:[%s0 + $0x4f8] sm:$0xf]
  %v331 = vld [vmem:[%s0 + $0x4fc] sm:$0xf]
  %v332 = vld [vmem:[%s0 + $0x500] sm:$0xf]
  %v333 = vld [vmem:[%s0 + $0x504] sm:$0xf]
  %v334 = vld [vmem:[%s0 + $0x508] sm:$0xf]
  %v335 = vld [vmem:[%s0 + $0x50c] sm:$0xf]
  %v336 = vld [vmem:[%s0 + $0x510] sm:$0xf]
  %v337 = vld [vmem:[%s0 + $0x514] sm:$0xf]
  %v338 = vld [vmem:[%s0 + $0x518] sm:$0xf]
  %v339 = vld [vmem:[%s0 + $0x51c] sm:$0xf]
  %v340 = vld [vmem:[%s0 + $0x520] sm:$0xf]
  %v341 = vld [vmem:[%s0 + $0x524] sm:$0xf]
  %v342 = vld [vmem:[%s0 + $0x528] sm:$0xf]
  %v343 = vld [vmem:[%s0 + $0x52c] sm:$0xf]
  %v344 = vld [vmem:[%s0 + $0x530] sm:$0xf]
  %v345 = vld [vmem:[%s0 + $0x534] sm:$0xf]
  %v346 = vld [vmem:[%s0 + $0x538] sm:$0xf]
  %v347 = vld [vmem:[%s0 + $0x53c] sm:$0xf]
  %v348 = vld [vmem:[%s0 + $0x540] sm:$0xf]
  %v349 = vld [vmem:[%s0 + $0x544] sm:$0xf]
  %v350 = vld [vmem:[%s0 + $0x548] sm:$0xf]
  %v351 = vld [vmem:[%s0 + $0x54c] sm:$0xf]
  %v352 = vld [vmem:[%s0 + $0x550] sm:$0xf]
  %v353 = vld [vmem:[%s0 + $0x554] sm:$0xf]
  %v354 = vld [vmem:[%s0 + $0x558] sm:$0xf]
  %v355 = vld [vmem:[%s0 + $0x55c] sm:$0xf]
  %v356 = vld [vmem:[%s0 + $0x560] sm:$0xf]
  %v357 = vld [vmem:[%s0 + $0x564] sm:$0xf]
  %v358 = vld [vmem:[%s0 + $0x568] sm:$0xf]
  %v359 = vld [vmem:[%s0 + $0x56c] sm:$0xf]
  %v360 = vld [vmem:[%s0 + $0x570] sm:$0xf]
  %v361 = vld [vmem:[%s0 + $0x574] sm:$0xf]
  %v362 = vld [vmem:[%s0 + $0x578] sm:$0xf]
  %v363 = vld [vmem:[%s0 + $0x57c] sm:$0xf]
  %v364 = vld [vmem:[%s0 + $0x580] sm:$0xf]
  %v365 = vld [vmem:[%s0 + $0x584] sm:$0xf]
  %v366 = vld [vmem:[%s0 + $0x588] sm:$0xf]
  %v367 = vld [vmem:[%s0 + $0x58c] sm:$0xf]
  %v368 = vld [vmem:[%s0 + $0x590] sm:$0xf]
  %v369 = vld [vmem:[%s0 + $0x594] sm:$0xf]
  %v370 = vld [vmem:[%s0 + $0x598] sm:$0xf]
  %v371 = vld [vmem:[%s0 + $0x59c] sm:$0xf]
  %v372 = vld [vmem:[%s0 + $0x5a0] sm:$0xf]
  %v373 = vld [vmem:[%s0 + $0x5a4] sm:$0xf]
  %v374 = vld [vmem:[%s0 + $0x5a8] sm:$0xf]
  %v375 = vld [vmem:[%s0 + $0x5ac] sm:$0xf]
  %v376 = vld [vmem:[%s0 + $0x5b0] sm:$0xf]
  %v377 = vld [vmem:[%s0 + $0x5b4] sm:$0xf]
  %v378 = vld [vmem:[%s0 + $0x5b8] sm:$0xf]
  %v379 = vld [vmem:[%s0 + $0x5bc] sm:$0xf]
  %v380 = vld [vmem:[%s0 + $0x5c0] sm:$0xf]
  %v381 = vld [vmem:[%s0 + $0x5c4] sm:$0xf]
  %v382 = vld [vmem:[%s0 + $0x5c8] sm:$0xf]
  %v383 = vld [vmem:[%s0 + $0x5cc] sm:$0xf]
  %v384 = vld [vmem:[%s0 + $0x5d0] sm:$0xf]
  %v385 = vld [vmem:[%s0 + $0x5d4] sm:$0xf]
  %v386 = vld [vmem:[%s0 + $0x5d8] sm:$0xf]
  %v387 = vld [vmem:[%s0 + $0x5dc] sm:$0xf]
  %v388 = vld [vmem:[%s0 + $0x5e0] sm:$0xf]
  %v389 = vld [vmem:[%s0 + $0x5e4] sm:$0xf]
  %v390 = vld [vmem:[%s0 + $0x5e8] sm:$0xf]
  %v391 = vld [vmem:[%s0 + $0x5ec] sm:$0xf]
  %v392 = vld [vmem:[%s0 + $0x5f0] sm:$0xf]
  %v393 = vld [vmem:[%s0 + $0x5f4] sm:$0xf]
  %v394 = vld [vmem:[%s0 + $0x5f8] sm:$0xf]
  %v395 = vld [vmem:[%s0 + $0x5fc] sm:$0xf]
  %v396 = vld [vmem:[%s0 + $0x600] sm:$0xf]
  %v397 = vld [vmem:[%s0 + $0x604] sm:$0xf]
  %v398 = vld [vmem:[%s0 + $0x608] sm:$0xf]
  %v399 = vld [vmem:[%s0 + $0x60c] sm:$0xf]
  %v400 = vld [vmem:[%s0 + $0x610] sm:$0xf]
  %v401 = vld [vmem:[%s0 + $0x614] sm:$0xf]
  %v402 = vld [vmem:[%s0 + $0x618] sm:$0xf]
  %v403 = vld [vmem:[%s0 + $0x61c] sm:$0xf]
  %v404 = vld [vmem:[%s0 + $0x620] sm:$0xf]
  %v405 = vld [vmem:[%s0 + $0x624] sm:$0xf]
  %v406 = vld [vmem:[%s0 + $0x628] sm:$0xf]
  %v407 = vld [vmem:[%s0 + $0x62c] sm:$0xf]
  %v408 = vld [vmem:[%s0 + $0x630] sm:$0xf]
  %v409 = vld [vmem:[%s0 + $0x634] sm:$0xf]
  %v410 = vld [vmem:[%s0 + $0x638] sm:$0xf]
  %v411 = vld [vmem:[%s0 + $0x63c] sm:$0xf]
  %v412 = vld [vmem:[%s0 + $0x640] sm:$0xf]
  %v413 = vld [vmem:[%s0 + $0x644] sm:$0xf]
  %v414 = vld [vmem:[%s0 + $0x648] sm:$0xf]
  %v415 = vld [vmem:[%s0 + $0x64c] sm:$0xf]
  %v416 = vld [vmem:[%s0 + $0x650] sm:$0xf]
  %v417 = vld [vmem:[%s0 + $0x654] sm:$0xf]
  %v418 = vld [vmem:[%s0 + $0x658] sm:$0xf]
  %v419 = vld [vmem:[%s0 + $0x65c] sm:$0xf]
  %v420 = vld [vmem:[%s0 + $0x660] sm:$0xf]
  %v421 = vld [vmem:[%s0 + $0x664] sm:$0xf]
  %v422 = vld [vmem:[%s0 + $0x668] sm:$0xf]
  %v423 = vld [vmem:[%s0 + $0x66c] sm:$0xf]
  %v424 = vld [vmem:[%s0 + $0x670] sm:$0xf]
  %v425 = vld [vmem:[%s0 + $0x674] sm:$0xf]
  %v426 = vld [vmem:[%s0 + $0x678] sm:$0xf]
  %v427 = vld [vmem:[%s0 + $0x67c] sm:$0xf]
  %v428 = vld [vmem:[%s0 + $0x680] sm:$0xf]
  %v429 = vld [vmem:[%s0 + $0x684] sm:$0xf]
  %v430 = vld [vmem:[%s0 + $0x688] sm:$0xf]
  %v431 = vld [vmem:[%s0 + $0x68c] sm:$0xf]
  %v432 = vld [vmem:[%s0 + $0x690] sm:$0xf]
  %v433 = vld [vmem:[%s0 + $0x694] sm:$0xf]
  %v434 = vld [vmem:[%s0 + $0x698] sm:$0xf]
  %v435 = vld [vmem:[%s0 + $0x69c] sm:$0xf]
  %v436 = vld [vmem:[%s0 + $0x6a0] sm:$0xf]
  %v437 = vld [vmem:[%s0 + $0x6a4] sm:$0xf]
  %v438 = vld [vmem:[%s0 + $0x6a8] sm:$0xf]
  %v439 = vld [vmem:[%s0 + $0x6ac] sm:$0xf]
  %v440 = vld [vmem:[%s0 + $0x6b0] sm:$0xf]
  %v441 = vld [vmem:[%s0 + $0x6b4] sm:$0xf]
  %v442 = vld [vmem:[%s0 + $0x6b8] sm:$0xf]
  %v443 = vld [vmem:[%s0 + $0x6bc] sm:$0xf]
  %v444 = vld [vmem:[%s0 + $0x6c0] sm:$0xf]
  %v445 = vld [vmem:[%s0 + $0x6c4] sm:$0xf]
  %v446 = vld [vmem:[%s0 + $0x6c8] sm:$0xf]
  %v447 = vld [vmem:[%s0 + $0x6cc] sm:$0xf]
  %v448 = vld [vmem:[%s0 + $0x6d0] sm:$0xf]
  %v449 = vld [vmem:[%s0 + $0x6d4] sm:$0xf]
  %v450 = vld [vmem:[%s0 + $0x6d8] sm:$0xf]
  %v451 = vld [vmem:[%s0 + $0x6dc] sm:$0xf]
  %v452 = vld [vmem:[%s0 + $0x6e0] sm:$0xf]
  %v453 = vld [vmem:[%s1] sm:$0xf]
  %v895 = vunpack.c.l.b16 %v12
  %v896 = vunpack.c.l.b16 %v13
  %v897 = vunpack.c.l.b16 %v14
  %v898 = vunpack.c.l.b16 %v15
  %v899 = vunpack.c.l.b16 %v16
  %v900 = vunpack.c.l.b16 %v17
  %v901 = vunpack.c.l.b16 %v18
  %v902 = vunpack.c.l.b16 %v19
  %v903 = vunpack.c.l.b16 %v20
  %v904 = vunpack.c.l.b16 %v21
  %v905 = vunpack.c.l.b16 %v22
  %v906 = vunpack.c.l.b16 %v23
  %v907 = vunpack.c.l.b16 %v24
  %v908 = vunpack.c.l.b16 %v25
  %v909 = vunpack.c.l.b16 %v26
  %v910 = vunpack.c.l.b16 %v27
  %v911 = vunpack.c.l.b16 %v28
  %v912 = vunpack.c.l.b16 %v29
  %v913 = vunpack.c.l.b16 %v30
  %v914 = vunpack.c.l.b16 %v31
  %v915 = vunpack.c.l.b16 %v32
  %v916 = vunpack.c.l.b16 %v33
  %v917 = vunpack.c.l.b16 %v34
  %v918 = vunpack.c.l.b16 %v35
  %v919 = vunpack.c.l.b16 %v36
  %v920 = vunpack.c.l.b16 %v37
  %v921 = vunpack.c.l.b16 %v38
  %v922 = vunpack.c.l.b16 %v39
  %v923 = vunpack.c.l.b16 %v40
  %v924 = vunpack.c.l.b16 %v41
  %v925 = vunpack.c.l.b16 %v42
  %v926 = vunpack.c.l.b16 %v43
  %v927 = vunpack.c.l.b16 %v44
  %v928 = vunpack.c.l.b16 %v45
  %v929 = vunpack.c.l.b16 %v46
  %v930 = vunpack.c.l.b16 %v47
  %v931 = vunpack.c.l.b16 %v48
  %v932 = vunpack.c.l.b16 %v49
  %v933 = vunpack.c.l.b16 %v50
  %v934 = vunpack.c.l.b16 %v51
  %v935 = vunpack.c.l.b16 %v52
  %v936 = vunpack.c.l.b16 %v53
  %v937 = vunpack.c.l.b16 %v54
  %v938 = vunpack.c.l.b16 %v55
  %v939 = vunpack.c.l.b16 %v56
  %v940 = vunpack.c.l.b16 %v57
  %v941 = vunpack.c.l.b16 %v58
  %v942 = vunpack.c.l.b16 %v59
  %v943 = vunpack.c.l.b16 %v60
  %v944 = vunpack.c.l.b16 %v61
  %v945 = vunpack.c.l.b16 %v62
  %v946 = vunpack.c.l.b16 %v63
  %v947 = vunpack.c.l.b16 %v64
  %v948 = vunpack.c.l.b16 %v65
  %v949 = vunpack.c.l.b16 %v66
  %v950 = vunpack.c.l.b16 %v67
  %v951 = vunpack.c.l.b16 %v68
  %v952 = vunpack.c.l.b16 %v69
  %v953 = vunpack.c.l.b16 %v70
  %v954 = vunpack.c.l.b16 %v71
  %v955 = vunpack.c.l.b16 %v72
  %v956 = vunpack.c.l.b16 %v73
  %v957 = vunpack.c.l.b16 %v74
  %v958 = vunpack.c.l.b16 %v75
  %v959 = vunpack.c.l.b16 %v76
  %v960 = vunpack.c.l.b16 %v77
  %v961 = vunpack.c.l.b16 %v78
  %v962 = vunpack.c.l.b16 %v79
  %v963 = vunpack.c.l.b16 %v80
  %v964 = vunpack.c.l.b16 %v81
  %v965 = vunpack.c.l.b16 %v82
  %v966 = vunpack.c.l.b16 %v83
  %v967 = vunpack.c.l.b16 %v84
  %v968 = vunpack.c.l.b16 %v85
  %v969 = vunpack.c.l.b16 %v86
  %v970 = vunpack.c.l.b16 %v87
  %v971 = vunpack.c.l.b16 %v88
  %v972 = vunpack.c.l.b16 %v89
  %v973 = vunpack.c.l.b16 %v90
  %v974 = vunpack.c.l.b16 %v91
  %v975 = vunpack.c.l.b16 %v92
  %v976 = vunpack.c.l.b16 %v93
  %v977 = vunpack.c.l.b16 %v94
  %v978 = vunpack.c.l.b16 %v95
  %v979 = vunpack.c.l.b16 %v96
  %v980 = vunpack.c.l.b16 %v97
  %v981 = vunpack.c.l.b16 %v98
  %v982 = vunpack.c.l.b16 %v99
  %v983 = vunpack.c.l.b16 %v100
  %v984 = vunpack.c.l.b16 %v101
  %v985 = vunpack.c.l.b16 %v102
  %v986 = vunpack.c.l.b16 %v103
  %v987 = vunpack.c.l.b16 %v104
  %v988 = vunpack.c.l.b16 %v105
  %v989 = vunpack.c.l.b16 %v106
  %v990 = vunpack.c.l.b16 %v107
  %v991 = vunpack.c.l.b16 %v108
  %v992 = vunpack.c.l.b16 %v109
  %v993 = vunpack.c.l.b16 %v110
  %v994 = vunpack.c.l.b16 %v111
  %v995 = vunpack.c.l.b16 %v112
  %v996 = vunpack.c.l.b16 %v113
  %v997 = vunpack.c.l.b16 %v114
  %v998 = vunpack.c.l.b16 %v115
  %v999 = vunpack.c.l.b16 %v116
  %v1000 = vunpack.c.l.b16 %v117
  %v1001 = vunpack.c.l.b16 %v118
  %v1002 = vunpack.c.l.b16 %v119
  %v1003 = vunpack.c.l.b16 %v120
  %v1004 = vunpack.c.l.b16 %v121
  %v1005 = vunpack.c.l.b16 %v122
  %v1006 = vunpack.c.l.b16 %v123
  %v1007 = vunpack.c.l.b16 %v124
  %v1008 = vunpack.c.l.b16 %v125
  %v1009 = vunpack.c.l.b16 %v126
  %v1010 = vunpack.c.l.b16 %v127
  %v1011 = vunpack.c.l.b16 %v128
  %v1012 = vunpack.c.l.b16 %v129
  %v1013 = vunpack.c.l.b16 %v130
  %v1014 = vunpack.c.l.b16 %v131
  %v1015 = vunpack.c.l.b16 %v132
  %v1016 = vunpack.c.l.b16 %v133
  %v1017 = vunpack.c.l.b16 %v134
  %v1018 = vunpack.c.l.b16 %v135
  %v1019 = vunpack.c.l.b16 %v136
  %v1020 = vunpack.c.l.b16 %v137
  %v1021 = vunpack.c.l.b16 %v138
  %v1022 = vunpack.c.l.b16 %v139
  %v1023 = vunpack.c.l.b16 %v140
  %v1024 = vunpack.c.l.b16 %v141
  %v1025 = vunpack.c.l.b16 %v142
  %v1026 = vunpack.c.l.b16 %v143
  %v1027 = vunpack.c.l.b16 %v144
  %v1028 = vunpack.c.l.b16 %v145
  %v1029 = vunpack.c.l.b16 %v146
  %v1030 = vunpack.c.l.b16 %v147
  %v1031 = vunpack.c.l.b16 %v148
  %v1032 = vunpack.c.l.b16 %v149
  %v1033 = vunpack.c.l.b16 %v150
  %v1034 = vunpack.c.l.b16 %v151
  %v1035 = vunpack.c.l.b16 %v152
  %v1036 = vunpack.c.l.b16 %v153
  %v1037 = vunpack.c.l.b16 %v154
  %v1038 = vunpack.c.l.b16 %v155
  %v1039 = vunpack.c.l.b16 %v156
  %v1040 = vunpack.c.l.b16 %v157
  %v1041 = vunpack.c.l.b16 %v158
  %v1042 = vunpack.c.l.b16 %v159
  %v1043 = vunpack.c.l.b16 %v160
  %v1044 = vunpack.c.l.b16 %v161
  %v1045 = vunpack.c.l.b16 %v162
  %v1046 = vunpack.c.l.b16 %v163
  %v1047 = vunpack.c.l.b16 %v164
  %v1048 = vunpack.c.l.b16 %v165
  %v1049 = vunpack.c.l.b16 %v166
  %v1050 = vunpack.c.l.b16 %v167
  %v1051 = vunpack.c.l.b16 %v168
  %v1052 = vunpack.c.l.b16 %v169
  %v1053 = vunpack.c.l.b16 %v170
  %v1054 = vunpack.c.l.b16 %v171
  %v1055 = vunpack.c.l.b16 %v172
  %v1056 = vunpack.c.l.b16 %v173
  %v1057 = vunpack.c.l.b16 %v174
  %v1058 = vunpack.c.l.b16 %v175
  %v1059 = vunpack.c.l.b16 %v176
  %v1060 = vunpack.c.l.b16 %v177
  %v1061 = vunpack.c.l.b16 %v178
  %v1062 = vunpack.c.l.b16 %v179
  %v1063 = vunpack.c.l.b16 %v180
  %v1064 = vunpack.c.l.b16 %v181
  %v1065 = vunpack.c.l.b16 %v182
  %v1066 = vunpack.c.l.b16 %v183
  %v1067 = vunpack.c.l.b16 %v184
  %v1068 = vunpack.c.l.b16 %v185
  %v1069 = vunpack.c.l.b16 %v186
  %v1070 = vunpack.c.l.b16 %v187
  %v1071 = vunpack.c.l.b16 %v188
  %v1072 = vunpack.c.l.b16 %v189
  %v1073 = vunpack.c.l.b16 %v190
  %v1074 = vunpack.c.l.b16 %v191
  %v1075 = vunpack.c.l.b16 %v192
  %v1076 = vunpack.c.l.b16 %v193
  %v1077 = vunpack.c.l.b16 %v194
  %v1078 = vunpack.c.l.b16 %v195
  %v1079 = vunpack.c.l.b16 %v196
  %v1080 = vunpack.c.l.b16 %v197
  %v1081 = vunpack.c.l.b16 %v198
  %v1082 = vunpack.c.l.b16 %v199
  %v1083 = vunpack.c.l.b16 %v200
  %v1084 = vunpack.c.l.b16 %v201
  %v1085 = vunpack.c.l.b16 %v202
  %v1086 = vunpack.c.l.b16 %v203
  %v1087 = vunpack.c.l.b16 %v204
  %v1088 = vunpack.c.l.b16 %v205
  %v1089 = vunpack.c.l.b16 %v206
  %v1090 = vunpack.c.l.b16 %v207
  %v1091 = vunpack.c.l.b16 %v208
  %v1092 = vunpack.c.l.b16 %v209
  %v1093 = vunpack.c.l.b16 %v210
  %v1094 = vunpack.c.l.b16 %v211
  %v1095 = vunpack.c.l.b16 %v212
  %v1096 = vunpack.c.l.b16 %v213
  %v1097 = vunpack.c.l.b16 %v214
  %v1098 = vunpack.c.l.b16 %v215
  %v1099 = vunpack.c.l.b16 %v216
  %v1100 = vunpack.c.l.b16 %v217
  %v1101 = vunpack.c.l.b16 %v218
  %v1102 = vunpack.c.l.b16 %v219
  %v1103 = vunpack.c.l.b16 %v220
  %v1104 = vunpack.c.l.b16 %v221
  %v1105 = vunpack.c.l.b16 %v222
  %v1106 = vunpack.c.l.b16 %v223
  %v1107 = vunpack.c.l.b16 %v224
  %v1108 = vunpack.c.l.b16 %v225
  %v1109 = vunpack.c.l.b16 %v226
  %v1110 = vunpack.c.l.b16 %v227
  %v1111 = vunpack.c.l.b16 %v228
  %v1112 = vunpack.c.l.b16 %v229
  %v1113 = vunpack.c.l.b16 %v230
  %v1114 = vunpack.c.l.b16 %v231
  %v1115 = vunpack.c.l.b16 %v232
  %v1116 = vunpack.c.l.b16 %v233
  %v1117 = vunpack.c.l.b16 %v234
  %v1118 = vunpack.c.l.b16 %v235
  %v1119 = vunpack.c.l.b16 %v236
  %v1120 = vunpack.c.l.b16 %v237
  %v1121 = vunpack.c.l.b16 %v238
  %v1122 = vunpack.c.l.b16 %v239
  %v1123 = vunpack.c.l.b16 %v240
  %v1124 = vunpack.c.l.b16 %v241
  %v1125 = vunpack.c.l.b16 %v242
  %v1126 = vunpack.c.l.b16 %v243
  %v1127 = vunpack.c.l.b16 %v244
  %v1128 = vunpack.c.l.b16 %v245
  %v1129 = vunpack.c.l.b16 %v246
  %v1130 = vunpack.c.l.b16 %v247
  %v1131 = vunpack.c.l.b16 %v248
  %v1132 = vunpack.c.l.b16 %v249
  %v1133 = vunpack.c.l.b16 %v250
  %v1134 = vunpack.c.l.b16 %v251
  %v1135 = vunpack.c.l.b16 %v252
  %v1136 = vunpack.c.l.b16 %v253
  %v1137 = vunpack.c.l.b16 %v254
  %v1138 = vunpack.c.l.b16 %v255
  %v1139 = vunpack.c.l.b16 %v256
  %v1140 = vunpack.c.l.b16 %v257
  %v1141 = vunpack.c.l.b16 %v258
  %v1142 = vunpack.c.l.b16 %v259
  %v1143 = vunpack.c.l.b16 %v260
  %v1144 = vunpack.c.l.b16 %v261
  %v1145 = vunpack.c.l.b16 %v262
  %v1146 = vunpack.c.l.b16 %v263
  %v1147 = vunpack.c.l.b16 %v264
  %v1148 = vunpack.c.l.b16 %v265
  %v1149 = vunpack.c.l.b16 %v266
  %v1150 = vunpack.c.l.b16 %v267
  %v1151 = vunpack.c.l.b16 %v268
  %v1152 = vunpack.c.l.b16 %v269
  %v1153 = vunpack.c.l.b16 %v270
  %v1154 = vunpack.c.l.b16 %v271
  %v1155 = vunpack.c.l.b16 %v272
  %v1156 = vunpack.c.l.b16 %v273
  %v1157 = vunpack.c.l.b16 %v274
  %v1158 = vunpack.c.l.b16 %v275
  %v1159 = vunpack.c.l.b16 %v276
  %v1160 = vunpack.c.l.b16 %v277
  %v1161 = vunpack.c.l.b16 %v278
  %v1162 = vunpack.c.l.b16 %v279
  %v1163 = vunpack.c.l.b16 %v280
  %v1164 = vunpack.c.l.b16 %v281
  %v1165 = vunpack.c.l.b16 %v282
  %v1166 = vunpack.c.l.b16 %v283
  %v1167 = vunpack.c.l.b16 %v284
  %v1168 = vunpack.c.l.b16 %v285
  %v1169 = vunpack.c.l.b16 %v286
  %v1170 = vunpack.c.l.b16 %v287
  %v1171 = vunpack.c.l.b16 %v288
  %v1172 = vunpack.c.l.b16 %v289
  %v1173 = vunpack.c.l.b16 %v290
  %v1174 = vunpack.c.l.b16 %v291
  %v1175 = vunpack.c.l.b16 %v292
  %v1176 = vunpack.c.l.b16 %v293
  %v1177 = vunpack.c.l.b16 %v294
  %v1178 = vunpack.c.l.b16 %v295
  %v1179 = vunpack.c.l.b16 %v296
  %v1180 = vunpack.c.l.b16 %v297
  %v1181 = vunpack.c.l.b16 %v298
  %v1182 = vunpack.c.l.b16 %v299
  %v1183 = vunpack.c.l.b16 %v300
  %v1184 = vunpack.c.l.b16 %v301
  %v1185 = vunpack.c.l.b16 %v302
  %v1186 = vunpack.c.l.b16 %v303
  %v1187 = vunpack.c.l.b16 %v304
  %v1188 = vunpack.c.l.b16 %v305
  %v1189 = vunpack.c.l.b16 %v306
  %v1190 = vunpack.c.l.b16 %v307
  %v1191 = vunpack.c.l.b16 %v308
  %v1192 = vunpack.c.l.b16 %v309
  %v1193 = vunpack.c.l.b16 %v310
  %v1194 = vunpack.c.l.b16 %v311
  %v1195 = vunpack.c.l.b16 %v312
  %v1196 = vunpack.c.l.b16 %v313
  %v1197 = vunpack.c.l.b16 %v314
  %v1198 = vunpack.c.l.b16 %v315
  %v1199 = vunpack.c.l.b16 %v316
  %v1200 = vunpack.c.l.b16 %v317
  %v1201 = vunpack.c.l.b16 %v318
  %v1202 = vunpack.c.l.b16 %v319
  %v1203 = vunpack.c.l.b16 %v320
  %v1204 = vunpack.c.l.b16 %v321
  %v1205 = vunpack.c.l.b16 %v322
  %v1206 = vunpack.c.l.b16 %v323
  %v1207 = vunpack.c.l.b16 %v324
  %v1208 = vunpack.c.l.b16 %v325
  %v1209 = vunpack.c.l.b16 %v326
  %v1210 = vunpack.c.l.b16 %v327
  %v1211 = vunpack.c.l.b16 %v328
  %v1212 = vunpack.c.l.b16 %v329
  %v1213 = vunpack.c.l.b16 %v330
  %v1214 = vunpack.c.l.b16 %v331
  %v1215 = vunpack.c.l.b16 %v332
  %v1216 = vunpack.c.l.b16 %v333
  %v1217 = vunpack.c.l.b16 %v334
  %v1218 = vunpack.c.l.b16 %v335
  %v1219 = vunpack.c.l.b16 %v336
  %v1220 = vunpack.c.l.b16 %v337
  %v1221 = vunpack.c.l.b16 %v338
  %v1222 = vunpack.c.l.b16 %v339
  %v1223 = vunpack.c.l.b16 %v340
  %v1224 = vunpack.c.l.b16 %v341
  %v1225 = vunpack.c.l.b16 %v342
  %v1226 = vunpack.c.l.b16 %v343
  %v1227 = vunpack.c.l.b16 %v344
  %v1228 = vunpack.c.l.b16 %v345
  %v1229 = vunpack.c.l.b16 %v346
  %v1230 = vunpack.c.l.b16 %v347
  %v1231 = vunpack.c.l.b16 %v348
  %v1232 = vunpack.c.l.b16 %v349
  %v1233 = vunpack.c.l.b16 %v350
  %v1234 = vunpack.c.l.b16 %v351
  %v1235 = vunpack.c.l.b16 %v352
  %v1236 = vunpack.c.l.b16 %v353
  %v1237 = vunpack.c.l.b16 %v354
  %v1238 = vunpack.c.l.b16 %v355
  %v1239 = vunpack.c.l.b16 %v356
  %v1240 = vunpack.c.l.b16 %v357
  %v1241 = vunpack.c.l.b16 %v358
  %v1242 = vunpack.c.l.b16 %v359
  %v1243 = vunpack.c.l.b16 %v360
  %v1244 = vunpack.c.l.b16 %v361
  %v1245 = vunpack.c.l.b16 %v362
  %v1246 = vunpack.c.l.b16 %v363
  %v1247 = vunpack.c.l.b16 %v364
  %v1248 = vunpack.c.l.b16 %v365
  %v1249 = vunpack.c.l.b16 %v366
  %v1250 = vunpack.c.l.b16 %v367
  %v1251 = vunpack.c.l.b16 %v368
  %v1252 = vunpack.c.l.b16 %v369
  %v1253 = vunpack.c.l.b16 %v370
  %v1254 = vunpack.c.l.b16 %v371
  %v1255 = vunpack.c.l.b16 %v372
  %v1256 = vunpack.c.l.b16 %v373
  %v1257 = vunpack.c.l.b16 %v374
  %v1258 = vunpack.c.l.b16 %v375
  %v1259 = vunpack.c.l.b16 %v376
  %v1260 = vunpack.c.l.b16 %v377
  %v1261 = vunpack.c.l.b16 %v378
  %v1262 = vunpack.c.l.b16 %v379
  %v1263 = vunpack.c.l.b16 %v380
  %v1264 = vunpack.c.l.b16 %v381
  %v1265 = vunpack.c.l.b16 %v382
  %v1266 = vunpack.c.l.b16 %v383
  %v1267 = vunpack.c.l.b16 %v384
  %v1268 = vunpack.c.l.b16 %v385
  %v1269 = vunpack.c.l.b16 %v386
  %v1270 = vunpack.c.l.b16 %v387
  %v1271 = vunpack.c.l.b16 %v388
  %v1272 = vunpack.c.l.b16 %v389
  %v1273 = vunpack.c.l.b16 %v390
  %v1274 = vunpack.c.l.b16 %v391
  %v1275 = vunpack.c.l.b16 %v392
  %v1276 = vunpack.c.l.b16 %v393
  %v1277 = vunpack.c.l.b16 %v394
  %v1278 = vunpack.c.l.b16 %v395
  %v1279 = vunpack.c.l.b16 %v396
  %v1280 = vunpack.c.l.b16 %v397
  %v1281 = vunpack.c.l.b16 %v398
  %v1282 = vunpack.c.l.b16 %v399
  %v1283 = vunpack.c.l.b16 %v400
  %v1284 = vunpack.c.l.b16 %v401
  %v1285 = vunpack.c.l.b16 %v402
  %v1286 = vunpack.c.l.b16 %v403
  %v1287 = vunpack.c.l.b16 %v404
  %v1288 = vunpack.c.l.b16 %v405
  %v1289 = vunpack.c.l.b16 %v406
  %v1290 = vunpack.c.l.b16 %v407
  %v1291 = vunpack.c.l.b16 %v408
  %v1292 = vunpack.c.l.b16 %v409
  %v1293 = vunpack.c.l.b16 %v410
  %v1294 = vunpack.c.l.b16 %v411
  %v1295 = vunpack.c.l.b16 %v412
  %v1296 = vunpack.c.l.b16 %v413
  %v1297 = vunpack.c.l.b16 %v414
  %v1298 = vunpack.c.l.b16 %v415
  %v1299 = vunpack.c.l.b16 %v416
  %v1300 = vunpack.c.l.b16 %v417
  %v1301 = vunpack.c.l.b16 %v418
  %v1302 = vunpack.c.l.b16 %v419
  %v1303 = vunpack.c.l.b16 %v420
  %v1304 = vunpack.c.l.b16 %v421
  %v1305 = vunpack.c.l.b16 %v422
  %v1306 = vunpack.c.l.b16 %v423
  %v1307 = vunpack.c.l.b16 %v424
  %v1308 = vunpack.c.l.b16 %v425
  %v1309 = vunpack.c.l.b16 %v426
  %v1310 = vunpack.c.l.b16 %v427
  %v1311 = vunpack.c.l.b16 %v428
  %v1312 = vunpack.c.l.b16 %v429
  %v1313 = vunpack.c.l.b16 %v430
  %v1314 = vunpack.c.l.b16 %v431
  %v1315 = vunpack.c.l.b16 %v432
  %v1316 = vunpack.c.l.b16 %v433
  %v1317 = vunpack.c.l.b16 %v434
  %v1318 = vunpack.c.l.b16 %v435
  %v1319 = vunpack.c.l.b16 %v436
  %v1320 = vunpack.c.l.b16 %v437
  %v1321 = vunpack.c.l.b16 %v438
  %v1322 = vunpack.c.l.b16 %v439
  %v1323 = vunpack.c.l.b16 %v440
  %v1324 = vunpack.c.l.b16 %v441
  %v1325 = vunpack.c.l.b16 %v442
  %v1326 = vunpack.c.l.b16 %v443
  %v1327 = vunpack.c.l.b16 %v444
  %v1328 = vunpack.c.l.b16 %v445
  %v1329 = vunpack.c.l.b16 %v446
  %v1330 = vunpack.c.l.b16 %v447
  %v1331 = vunpack.c.l.b16 %v448
  %v1332 = vunpack.c.l.b16 %v449
  %v1333 = vunpack.c.l.b16 %v450
  %v1334 = vunpack.c.l.b16 %v451
  %v1335 = vunpack.c.l.b16 %v452
  %v1336 = vpack.c.b16 %v896, %v895
  %v1337 = vpack.c.b16 %v898, %v897
  %v1338 = vpack.c.b16 %v900, %v899
  %v1339 = vpack.c.b16 %v902, %v901
  %v1340 = vpack.c.b16 %v904, %v903
  %v1341 = vpack.c.b16 %v906, %v905
  %v1342 = vpack.c.b16 %v908, %v907
  %v1343 = vpack.c.b16 %v910, %v909
  %v1344 = vpack.c.b16 %v912, %v911
  %v1345 = vpack.c.b16 %v914, %v913
  %v1346 = vpack.c.b16 %v916, %v915
  %v1347 = vpack.c.b16 %v918, %v917
  %v1348 = vpack.c.b16 %v920, %v919
  %v1349 = vpack.c.b16 %v922, %v921
  %v1350 = vpack.c.b16 %v924, %v923
  %v1351 = vpack.c.b16 %v926, %v925
  %v1352 = vpack.c.b16 %v928, %v927
  %v1353 = vpack.c.b16 %v930, %v929
  %v1354 = vpack.c.b16 %v932, %v931
  %v1355 = vpack.c.b16 %v934, %v933
  %v1356 = vpack.c.b16 %v936, %v935
  %v1357 = vpack.c.b16 %v938, %v937
  %v1358 = vpack.c.b16 %v940, %v939
  %v1359 = vpack.c.b16 %v942, %v941
  %v1360 = vpack.c.b16 %v944, %v943
  %v1361 = vpack.c.b16 %v946, %v945
  %v1362 = vpack.c.b16 %v948, %v947
  %v1363 = vpack.c.b16 %v950, %v949
  %v1364 = vpack.c.b16 %v952, %v951
  %v1365 = vpack.c.b16 %v954, %v953
  %v1366 = vpack.c.b16 %v956, %v955
  %v1367 = vpack.c.b16 %v958, %v957
  %v1368 = vpack.c.b16 %v960, %v959
  %v1369 = vpack.c.b16 %v962, %v961
  %v1370 = vpack.c.b16 %v964, %v963
  %v1371 = vpack.c.b16 %v966, %v965
  %v1372 = vpack.c.b16 %v968, %v967
  %v1373 = vpack.c.b16 %v970, %v969
  %v1374 = vpack.c.b16 %v972, %v971
  %v1375 = vpack.c.b16 %v974, %v973
  %v1376 = vpack.c.b16 %v976, %v975
  %v1377 = vpack.c.b16 %v978, %v977
  %v1378 = vpack.c.b16 %v980, %v979
  %v1379 = vpack.c.b16 %v982, %v981
  %v1380 = vpack.c.b16 %v984, %v983
  %v1381 = vpack.c.b16 %v986, %v985
  %v1382 = vpack.c.b16 %v988, %v987
  %v1383 = vpack.c.b16 %v990, %v989
  %v1384 = vpack.c.b16 %v992, %v991
  %v1385 = vpack.c.b16 %v994, %v993
  %v1386 = vpack.c.b16 %v996, %v995
  %v1387 = vpack.c.b16 %v998, %v997
  %v1388 = vpack.c.b16 %v1000, %v999
  %v1389 = vpack.c.b16 %v1002, %v1001
  %v1390 = vpack.c.b16 %v1004, %v1003
  %v1391 = vpack.c.b16 %v1006, %v1005
  %v1392 = vpack.c.b16 %v1008, %v1007
  %v1393 = vpack.c.b16 %v1010, %v1009
  %v1394 = vpack.c.b16 %v1012, %v1011
  %v1395 = vpack.c.b16 %v1014, %v1013
  %v1396 = vpack.c.b16 %v1016, %v1015
  %v1397 = vpack.c.b16 %v1018, %v1017
  %v1398 = vpack.c.b16 %v1020, %v1019
  %v1399 = vpack.c.b16 %v1022, %v1021
  %v1400 = vpack.c.b16 %v1024, %v1023
  %v1401 = vpack.c.b16 %v1026, %v1025
  %v1402 = vpack.c.b16 %v1028, %v1027
  %v1403 = vpack.c.b16 %v1030, %v1029
  %v1404 = vpack.c.b16 %v1032, %v1031
  %v1405 = vpack.c.b16 %v1034, %v1033
  %v1406 = vpack.c.b16 %v1036, %v1035
  %v1407 = vpack.c.b16 %v1038, %v1037
  %v1408 = vpack.c.b16 %v1040, %v1039
  %v1409 = vpack.c.b16 %v1042, %v1041
  %v1410 = vpack.c.b16 %v1044, %v1043
  %v1411 = vpack.c.b16 %v1046, %v1045
  %v1412 = vpack.c.b16 %v1048, %v1047
  %v1413 = vpack.c.b16 %v1050, %v1049
  %v1414 = vpack.c.b16 %v1052, %v1051
  %v1415 = vpack.c.b16 %v1054, %v1053
  %v1416 = vpack.c.b16 %v1056, %v1055
  %v1417 = vpack.c.b16 %v1058, %v1057
  %v1418 = vpack.c.b16 %v1060, %v1059
  %v1419 = vpack.c.b16 %v1062, %v1061
  %v1420 = vpack.c.b16 %v1064, %v1063
  %v1421 = vpack.c.b16 %v1066, %v1065
  %v1422 = vpack.c.b16 %v1068, %v1067
  %v1423 = vpack.c.b16 %v1070, %v1069
  %v1424 = vpack.c.b16 %v1072, %v1071
  %v1425 = vpack.c.b16 %v1074, %v1073
  %v1426 = vpack.c.b16 %v1076, %v1075
  %v1427 = vpack.c.b16 %v1078, %v1077
  %v1428 = vpack.c.b16 %v1080, %v1079
  %v1429 = vpack.c.b16 %v1082, %v1081
  %v1430 = vpack.c.b16 %v1084, %v1083
  %v1431 = vpack.c.b16 %v1086, %v1085
  %v1432 = vpack.c.b16 %v1088, %v1087
  %v1433 = vpack.c.b16 %v1090, %v1089
  %v1434 = vpack.c.b16 %v1092, %v1091
  %v1435 = vpack.c.b16 %v1094, %v1093
  %v1436 = vpack.c.b16 %v1096, %v1095
  %v1437 = vpack.c.b16 %v1098, %v1097
  %v1438 = vpack.c.b16 %v1100, %v1099
  %v1439 = vpack.c.b16 %v1102, %v1101
  %v1440 = vpack.c.b16 %v1104, %v1103
  %v1441 = vpack.c.b16 %v1106, %v1105
  %v1442 = vpack.c.b16 %v1108, %v1107
  %v1443 = vpack.c.b16 %v1110, %v1109
  %v1444 = vpack.c.b16 %v1112, %v1111
  %v1445 = vpack.c.b16 %v1114, %v1113
  %v1446 = vpack.c.b16 %v1116, %v1115
  %v1447 = vpack.c.b16 %v1118, %v1117
  %v1448 = vpack.c.b16 %v1120, %v1119
  %v1449 = vpack.c.b16 %v1122, %v1121
  %v1450 = vpack.c.b16 %v1124, %v1123
  %v1451 = vpack.c.b16 %v1126, %v1125
  %v1452 = vpack.c.b16 %v1128, %v1127
  %v1453 = vpack.c.b16 %v1130, %v1129
  %v1454 = vpack.c.b16 %v1132, %v1131
  %v1455 = vpack.c.b16 %v1134, %v1133
  %v1456 = vpack.c.b16 %v1136, %v1135
  %v1457 = vpack.c.b16 %v1138, %v1137
  %v1458 = vpack.c.b16 %v1140, %v1139
  %v1459 = vpack.c.b16 %v1142, %v1141
  %v1460 = vpack.c.b16 %v1144, %v1143
  %v1461 = vpack.c.b16 %v1146, %v1145
  %v1462 = vpack.c.b16 %v1148, %v1147
  %v1463 = vpack.c.b16 %v1150, %v1149
  %v1464 = vpack.c.b16 %v1152, %v1151
  %v1465 = vpack.c.b16 %v1154, %v1153
  %v1466 = vpack.c.b16 %v1156, %v1155
  %v1467 = vpack.c.b16 %v1158, %v1157
  %v1468 = vpack.c.b16 %v1160, %v1159
  %v1469 = vpack.c.b16 %v1162, %v1161
  %v1470 = vpack.c.b16 %v1164, %v1163
  %v1471 = vpack.c.b16 %v1166, %v1165
  %v1472 = vpack.c.b16 %v1168, %v1167
  %v1473 = vpack.c.b16 %v1170, %v1169
  %v1474 = vpack.c.b16 %v1172, %v1171
  %v1475 = vpack.c.b16 %v1174, %v1173
  %v1476 = vpack.c.b16 %v1176, %v1175
  %v1477 = vpack.c.b16 %v1178, %v1177
  %v1478 = vpack.c.b16 %v1180, %v1179
  %v1479 = vpack.c.b16 %v1182, %v1181
  %v1480 = vpack.c.b16 %v1184, %v1183
  %v1481 = vpack.c.b16 %v1186, %v1185
  %v1482 = vpack.c.b16 %v1188, %v1187
  %v1483 = vpack.c.b16 %v1190, %v1189
  %v1484 = vpack.c.b16 %v1192, %v1191
  %v1485 = vpack.c.b16 %v1194, %v1193
  %v1486 = vpack.c.b16 %v1196, %v1195
  %v1487 = vpack.c.b16 %v1198, %v1197
  %v1488 = vpack.c.b16 %v1200, %v1199
  %v1489 = vpack.c.b16 %v1202, %v1201
  %v1490 = vpack.c.b16 %v1204, %v1203
  %v1491 = vpack.c.b16 %v1206, %v1205
  %v1492 = vpack.c.b16 %v1208, %v1207
  %v1493 = vpack.c.b16 %v1210, %v1209
  %v1494 = vpack.c.b16 %v1212, %v1211
  %v1495 = vpack.c.b16 %v1214, %v1213
  %v1496 = vpack.c.b16 %v1216, %v1215
  %v1497 = vpack.c.b16 %v1218, %v1217
  %v1498 = vpack.c.b16 %v1220, %v1219
  %v1499 = vpack.c.b16 %v1222, %v1221
  %v1500 = vpack.c.b16 %v1224, %v1223
  %v1501 = vpack.c.b16 %v1226, %v1225
  %v1502 = vpack.c.b16 %v1228, %v1227
  %v1503 = vpack.c.b16 %v1230, %v1229
  %v1504 = vpack.c.b16 %v1232, %v1231
  %v1505 = vpack.c.b16 %v1234, %v1233
  %v1506 = vpack.c.b16 %v1236, %v1235
  %v1507 = vpack.c.b16 %v1238, %v1237
  %v1508 = vpack.c.b16 %v1240, %v1239
  %v1509 = vpack.c.b16 %v1242, %v1241
  %v1510 = vpack.c.b16 %v1244, %v1243
  %v1511 = vpack.c.b16 %v1246, %v1245
  %v1512 = vpack.c.b16 %v1248, %v1247
  %v1513 = vpack.c.b16 %v1250, %v1249
  %v1514 = vpack.c.b16 %v1252, %v1251
  %v1515 = vpack.c.b16 %v1254, %v1253
  %v1516 = vpack.c.b16 %v1256, %v1255
  %v1517 = vpack.c.b16 %v1258, %v1257
  %v1518 = vpack.c.b16 %v1260, %v1259
  %v1519 = vpack.c.b16 %v1262, %v1261
  %v1520 = vpack.c.b16 %v1264, %v1263
  %v1521 = vpack.c.b16 %v1266, %v1265
  %v1522 = vpack.c.b16 %v1268, %v1267
  %v1523 = vpack.c.b16 %v1270, %v1269
  %v1524 = vpack.c.b16 %v1272, %v1271
  %v1525 = vpack.c.b16 %v1274, %v1273
  %v1526 = vpack.c.b16 %v1276, %v1275
  %v1527 = vpack.c.b16 %v1278, %v1277
  %v1528 = vpack.c.b16 %v1280, %v1279
  %v1529 = vpack.c.b16 %v1282, %v1281
  %v1530 = vpack.c.b16 %v1284, %v1283
  %v1531 = vpack.c.b16 %v1286, %v1285
  %v1532 = vpack.c.b16 %v1288, %v1287
  %v1533 = vpack.c.b16 %v1290, %v1289
  %v1534 = vpack.c.b16 %v1292, %v1291
  %v1535 = vpack.c.b16 %v1294, %v1293
  %v1536 = vpack.c.b16 %v1296, %v1295
  %v1537 = vpack.c.b16 %v1298, %v1297
  %v1538 = vpack.c.b16 %v1300, %v1299
  %v1539 = vpack.c.b16 %v1302, %v1301
  %v1540 = vpack.c.b16 %v1304, %v1303
  %v1541 = vpack.c.b16 %v1306, %v1305
  %v1542 = vpack.c.b16 %v1308, %v1307
  %v1543 = vpack.c.b16 %v1310, %v1309
  %v1544 = vpack.c.b16 %v1312, %v1311
  %v1545 = vpack.c.b16 %v1314, %v1313
  %v1546 = vpack.c.b16 %v1316, %v1315
  %v1547 = vpack.c.b16 %v1318, %v1317
  %v1548 = vpack.c.b16 %v1320, %v1319
  %v1549 = vpack.c.b16 %v1322, %v1321
  %v1550 = vpack.c.b16 %v1324, %v1323
  %v1551 = vpack.c.b16 %v1326, %v1325
  %v1552 = vpack.c.b16 %v1328, %v1327
  %v1553 = vpack.c.b16 %v1330, %v1329
  %v1554 = vpack.c.b16 %v1332, %v1331
  %v1555 = vpack.c.b16 %v1334, %v1333
  %v1556 = vpack.c.b16 %v1335, %v1335
  %vm1557 = vcmask 64512
  %v1559 = vsel %vm1557, %v1336, 0
  %v1562 = vsel %vm1557, %v1337, 0
  %v1565 = vsel %vm1557, %v1338, 0
  %v1568 = vsel %vm1557, %v1339, 0
  %v1571 = vsel %vm1557, %v1340, 0
  %v1574 = vsel %vm1557, %v1341, 0
  %v1577 = vsel %vm1557, %v1342, 0
  %v1580 = vsel %vm1557, %v1343, 0
  %v1583 = vsel %vm1557, %v1344, 0
  %v1586 = vsel %vm1557, %v1345, 0
  %v1589 = vsel %vm1557, %v1346, 0
  %v1592 = vsel %vm1557, %v1347, 0
  %v1595 = vsel %vm1557, %v1348, 0
  %v1598 = vsel %vm1557, %v1349, 0
  %v1601 = vsel %vm1557, %v1350, 0
  %v1604 = vsel %vm1557, %v1351, 0
  %v1607 = vsel %vm1557, %v1352, 0
  %v1610 = vsel %vm1557, %v1353, 0
  %v1613 = vsel %vm1557, %v1354, 0
  %v1616 = vsel %vm1557, %v1355, 0
  %v1619 = vsel %vm1557, %v1356, 0
  %v1622 = vsel %vm1557, %v1357, 0
  %v1625 = vsel %vm1557, %v1358, 0
  %v1628 = vsel %vm1557, %v1359, 0
  %v1631 = vsel %vm1557, %v1360, 0
  %v1634 = vsel %vm1557, %v1361, 0
  %v1637 = vsel %vm1557, %v1362, 0
  %v1640 = vsel %vm1557, %v1363, 0
  %v1643 = vsel %vm1557, %v1364, 0
  %v1646 = vsel %vm1557, %v1365, 0
  %v1649 = vsel %vm1557, %v1366, 0
  %v1652 = vsel %vm1557, %v1367, 0
  %v1655 = vsel %vm1557, %v1368, 0
  %v1658 = vsel %vm1557, %v1369, 0
  %v1661 = vsel %vm1557, %v1370, 0
  %v1664 = vsel %vm1557, %v1371, 0
  %v1667 = vsel %vm1557, %v1372, 0
  %v1670 = vsel %vm1557, %v1373, 0
  %v1673 = vsel %vm1557, %v1374, 0
  %v1676 = vsel %vm1557, %v1375, 0
  %v1679 = vsel %vm1557, %v1376, 0
  %v1682 = vsel %vm1557, %v1377, 0
  %v1685 = vsel %vm1557, %v1378, 0
  %v1688 = vsel %vm1557, %v1379, 0
  %v1691 = vsel %vm1557, %v1380, 0
  %v1694 = vsel %vm1557, %v1381, 0
  %v1697 = vsel %vm1557, %v1382, 0
  %v1700 = vsel %vm1557, %v1383, 0
  %v1703 = vsel %vm1557, %v1384, 0
  %v1706 = vsel %vm1557, %v1385, 0
  %v1709 = vsel %vm1557, %v1386, 0
  %v1712 = vsel %vm1557, %v1387, 0
  %v1715 = vsel %vm1557, %v1388, 0
  %v1718 = vsel %vm1557, %v1389, 0
  %v1721 = vsel %vm1557, %v1390, 0
  %v1724 = vsel %vm1557, %v1391, 0
  %v1727 = vsel %vm1557, %v1392, 0
  %v1730 = vsel %vm1557, %v1393, 0
  %v1733 = vsel %vm1557, %v1394, 0
  %v1736 = vsel %vm1557, %v1395, 0
  %v1739 = vsel %vm1557, %v1396, 0
  %v1742 = vsel %vm1557, %v1397, 0
  %v1745 = vsel %vm1557, %v1398, 0
  %v1748 = vsel %vm1557, %v1399, 0
  %v1751 = vsel %vm1557, %v1400, 0
  %v1754 = vsel %vm1557, %v1401, 0
  %v1757 = vsel %vm1557, %v1402, 0
  %v1760 = vsel %vm1557, %v1403, 0
  %v1763 = vsel %vm1557, %v1404, 0
  %v1766 = vsel %vm1557, %v1405, 0
  %v1769 = vsel %vm1557, %v1406, 0
  %v1772 = vsel %vm1557, %v1407, 0
  %v1775 = vsel %vm1557, %v1408, 0
  %v1778 = vsel %vm1557, %v1409, 0
  %v1781 = vsel %vm1557, %v1410, 0
  %v1784 = vsel %vm1557, %v1411, 0
  %v1787 = vsel %vm1557, %v1412, 0
  %v1790 = vsel %vm1557, %v1413, 0
  %v1793 = vsel %vm1557, %v1414, 0
  %v1796 = vsel %vm1557, %v1415, 0
  %v1799 = vsel %vm1557, %v1416, 0
  %v1802 = vsel %vm1557, %v1417, 0
  %v1805 = vsel %vm1557, %v1418, 0
  %v1808 = vsel %vm1557, %v1419, 0
  %v1811 = vsel %vm1557, %v1420, 0
  %v1814 = vsel %vm1557, %v1421, 0
  %v1817 = vsel %vm1557, %v1422, 0
  %v1820 = vsel %vm1557, %v1423, 0
  %v1823 = vsel %vm1557, %v1424, 0
  %v1826 = vsel %vm1557, %v1425, 0
  %v1829 = vsel %vm1557, %v1426, 0
  %v1832 = vsel %vm1557, %v1427, 0
  %v1835 = vsel %vm1557, %v1428, 0
  %v1838 = vsel %vm1557, %v1429, 0
  %v1841 = vsel %vm1557, %v1430, 0
  %v1844 = vsel %vm1557, %v1431, 0
  %v1847 = vsel %vm1557, %v1432, 0
  %v1850 = vsel %vm1557, %v1433, 0
  %v1853 = vsel %vm1557, %v1434, 0
  %v1856 = vsel %vm1557, %v1435, 0
  %v1859 = vsel %vm1557, %v1436, 0
  %v1862 = vsel %vm1557, %v1437, 0
  %v1865 = vsel %vm1557, %v1438, 0
  %v1868 = vsel %vm1557, %v1439, 0
  %v1871 = vsel %vm1557, %v1440, 0
  %v1874 = vsel %vm1557, %v1441, 0
  %v1877 = vsel %vm1557, %v1442, 0
  %v1880 = vsel %vm1557, %v1443, 0
  %v1883 = vsel %vm1557, %v1444, 0
  %v1886 = vsel %vm1557, %v1445, 0
  %v1889 = vsel %vm1557, %v1446, 0
  %v1892 = vsel %vm1557, %v1447, 0
  %v1895 = vsel %vm1557, %v1448, 0
  %v1898 = vsel %vm1557, %v1449, 0
  %v1901 = vsel %vm1557, %v1450, 0
  %v1904 = vsel %vm1557, %v1451, 0
  %v1907 = vsel %vm1557, %v1452, 0
  %v1910 = vsel %vm1557, %v1453, 0
  %v1913 = vsel %vm1557, %v1454, 0
  %v1916 = vsel %vm1557, %v1455, 0
  %v1919 = vsel %vm1557, %v1456, 0
  %v1922 = vsel %vm1557, %v1457, 0
  %v1925 = vsel %vm1557, %v1458, 0
  %v1928 = vsel %vm1557, %v1459, 0
  %v1931 = vsel %vm1557, %v1460, 0
  %v1934 = vsel %vm1557, %v1461, 0
  %v1937 = vsel %vm1557, %v1462, 0
  %v1940 = vsel %vm1557, %v1463, 0
  %v1943 = vsel %vm1557, %v1464, 0
  %v1946 = vsel %vm1557, %v1465, 0
  %v1949 = vsel %vm1557, %v1466, 0
  %v1952 = vsel %vm1557, %v1467, 0
  %v1955 = vsel %vm1557, %v1468, 0
  %v1958 = vsel %vm1557, %v1469, 0
  %v1961 = vsel %vm1557, %v1470, 0
  %v1964 = vsel %vm1557, %v1471, 0
  %v1967 = vsel %vm1557, %v1472, 0
  %v1970 = vsel %vm1557, %v1473, 0
  %v1973 = vsel %vm1557, %v1474, 0
  %v1976 = vsel %vm1557, %v1475, 0
  %v1979 = vsel %vm1557, %v1476, 0
  %v1982 = vsel %vm1557, %v1477, 0
  %v1985 = vsel %vm1557, %v1478, 0
  %v1988 = vsel %vm1557, %v1479, 0
  %v1991 = vsel %vm1557, %v1480, 0
  %v1994 = vsel %vm1557, %v1481, 0
  %v1997 = vsel %vm1557, %v1482, 0
  %v2000 = vsel %vm1557, %v1483, 0
  %v2003 = vsel %vm1557, %v1484, 0
  %v2006 = vsel %vm1557, %v1485, 0
  %v2009 = vsel %vm1557, %v1486, 0
  %v2012 = vsel %vm1557, %v1487, 0
  %v2015 = vsel %vm1557, %v1488, 0
  %v2018 = vsel %vm1557, %v1489, 0
  %v2021 = vsel %vm1557, %v1490, 0
  %v2024 = vsel %vm1557, %v1491, 0
  %v2027 = vsel %vm1557, %v1492, 0
  %v2030 = vsel %vm1557, %v1493, 0
  %v2033 = vsel %vm1557, %v1494, 0
  %v2036 = vsel %vm1557, %v1495, 0
  %v2039 = vsel %vm1557, %v1496, 0
  %v2042 = vsel %vm1557, %v1497, 0
  %v2045 = vsel %vm1557, %v1498, 0
  %v2048 = vsel %vm1557, %v1499, 0
  %v2051 = vsel %vm1557, %v1500, 0
  %v2054 = vsel %vm1557, %v1501, 0
  %v2057 = vsel %vm1557, %v1502, 0
  %v2060 = vsel %vm1557, %v1503, 0
  %v2063 = vsel %vm1557, %v1504, 0
  %v2066 = vsel %vm1557, %v1505, 0
  %v2069 = vsel %vm1557, %v1506, 0
  %v2072 = vsel %vm1557, %v1507, 0
  %v2075 = vsel %vm1557, %v1508, 0
  %v2078 = vsel %vm1557, %v1509, 0
  %v2081 = vsel %vm1557, %v1510, 0
  %v2084 = vsel %vm1557, %v1511, 0
  %v2087 = vsel %vm1557, %v1512, 0
  %v2090 = vsel %vm1557, %v1513, 0
  %v2093 = vsel %vm1557, %v1514, 0
  %v2096 = vsel %vm1557, %v1515, 0
  %v2099 = vsel %vm1557, %v1516, 0
  %v2102 = vsel %vm1557, %v1517, 0
  %v2105 = vsel %vm1557, %v1518, 0
  %v2108 = vsel %vm1557, %v1519, 0
  %v2111 = vsel %vm1557, %v1520, 0
  %v2114 = vsel %vm1557, %v1521, 0
  %v2117 = vsel %vm1557, %v1522, 0
  %v2120 = vsel %vm1557, %v1523, 0
  %v2123 = vsel %vm1557, %v1524, 0
  %v2126 = vsel %vm1557, %v1525, 0
  %v2129 = vsel %vm1557, %v1526, 0
  %v2132 = vsel %vm1557, %v1527, 0
  %v2135 = vsel %vm1557, %v1528, 0
  %v2138 = vsel %vm1557, %v1529, 0
  %v2141 = vsel %vm1557, %v1530, 0
  %v2144 = vsel %vm1557, %v1531, 0
  %v2147 = vsel %vm1557, %v1532, 0
  %v2150 = vsel %vm1557, %v1533, 0
  %v2153 = vsel %vm1557, %v1534, 0
  %v2156 = vsel %vm1557, %v1535, 0
  %v2159 = vsel %vm1557, %v1536, 0
  %v2162 = vsel %vm1557, %v1537, 0
  %v2165 = vsel %vm1557, %v1538, 0
  %v2168 = vsel %vm1557, %v1539, 0
  %v2171 = vsel %vm1557, %v1540, 0
  %v2174 = vsel %vm1557, %v1541, 0
  %v2177 = vsel %vm1557, %v1542, 0
  %v2180 = vsel %vm1557, %v1543, 0
  %v2183 = vsel %vm1557, %v1544, 0
  %v2186 = vsel %vm1557, %v1545, 0
  %v2189 = vsel %vm1557, %v1546, 0
  %v2192 = vsel %vm1557, %v1547, 0
  %v2195 = vsel %vm1557, %v1548, 0
  %v2198 = vsel %vm1557, %v1549, 0
  %v2201 = vsel %vm1557, %v1550, 0
  %v2204 = vsel %vm1557, %v1551, 0
  %v2207 = vsel %vm1557, %v1552, 0
  %v2210 = vsel %vm1557, %v1553, 0
  %v2213 = vsel %vm1557, %v1554, 0
  %v2216 = vsel %vm1557, %v1555, 0
  %v2219 = vsel %vm1557, %v1556, 0
  %vm2221 = vcmask 1043456
  %v2223 = vsel %vm2221, %v453, 0
  %2225 = vmatprep.subr.bf16.mxu0 0
  %2226 = vmatpush1.bf16.msra.mxu0 %v2223
  %2227 = vmatprep.subr.bf16.mxu0 0
  %2228 = vmatpush1.bf16.msra.mxu0 0
  %2229 = vmatprep.subr.bf16.mxu0 0
  %2230 = vmatpush1.bf16.msra.mxu0 0
  %2231 = vmatprep.subr.bf16.mxu0 0
  %2232 = vmatpush1.bf16.msra.mxu0 0
  %2233 = vmatprep.subr.bf16.mxu0 0
  %2234 = vmatpush1.bf16.msra.mxu0 0
  %2235 = vmatprep.subr.bf16.mxu0 0
  %2236 = vmatpush1.bf16.msra.mxu0 0
  %2237 = vmatprep.subr.bf16.mxu0 0
  %2238 = vmatpush1.bf16.msra.mxu0 0
  %2239 = vmatprep.subr.bf16.mxu0 0
  %2240 = vmatpush1.bf16.msra.mxu0 0
  %2241 = vmatprep.subr.bf16.mxu0 0
  %2242 = vmatpush1.bf16.msra.mxu0 0
  %2243 = vmatprep.subr.bf16.mxu0 0
  %2244 = vmatpush1.bf16.msra.mxu0 0
  %2245 = vmatprep.subr.bf16.mxu0 0
  %2246 = vmatpush1.bf16.msra.mxu0 0
  %2247 = vmatprep.subr.bf16.mxu0 0
  %2248 = vmatpush1.bf16.msra.mxu0 0
  %2249 = vmatprep.subr.bf16.mxu0 0
  %2250 = vmatpush1.bf16.msra.mxu0 0
  %2251 = vmatprep.subr.bf16.mxu0 0
  %2252 = vmatpush1.bf16.msra.mxu0 0
  %2253 = vmatprep.subr.bf16.mxu0 0
  %2254 = vmatpush1.bf16.msra.mxu0 0
  %2255 = vmatprep.subr.bf16.mxu0 0
  %2256 = vmatpush1.bf16.msra.mxu0 0
  %2257 = vmatprep.mubr.bf16.mxu0 0
  %2258 = vmatmul.mubr.bf16.gmra.mrb[0].mxu0 %v1559
  %v2259 = vpop.f32.mrb[0].mxu0
  %v2260 = vadd.f32 0.0, %v2259
  %v2261 = vpop.f32.mrb[0].mxu0
  %v2262 = vpop.f32.mrb[0].mxu0
  %v2263 = vadd.f32 0.0, %v2262
  %v2264 = vpop.f32.mrb[0].mxu0
  %2265 = vmatprep.mubr.bf16.mxu0 0
  %2266 = vmatmul.mubr.bf16.gmra.mrb[0].mxu0 %v1562
  %v2267 = vpop.f32.mrb[0].mxu0
  %v2268 = vadd.f32 0.0, %v2267
  %v2269 = vpop.f32.mrb[0].mxu0
  %v2270 = vpop.f32.mrb[0].mxu0
  %v2271 = vadd.f32 0.0, %v2270
  %v2272 = vpop.f32.mrb[0].mxu0
  %2273 = vmatprep.mubr.bf16.mxu0 0
  %2274 = vmatmul.mubr.bf16.gmra.mrb[0].mxu0 %v1565
  %v2275 = vpop.f32.mrb[0].mxu0
  %v2276 = vadd.f32 0.0, %v2275
  %v2277 = vpop.f32.mrb[0].mxu0
  %v2278 = vpop.f32.mrb[0].mxu0
  %v2279 = vadd.f32 0.0, %v2278
  %v2280 = vpop.f32.mrb[0].mxu0
  %2281 = vmatprep.mubr.bf16.mxu0 0
  %2282 = vmatmul.mubr.bf16.gmra.mrb[0].mxu0 %v1568
  %v2283 = vpop.f32.mrb[0].mxu0
  %v2284 = vadd.f32 0.0, %v2283
  %v2285 = vpop.f32.mrb[0].mxu0
  %v2286 = vpop.f32.mrb[0].mxu0
  %v2287 = vadd.f32 0.0, %v2286
  %v2288 = vpop.f32.mrb[0].mxu0
  %2289 = vmatprep.mubr.bf16.mxu0 0
  %2290 = vmatmul.mubr.bf16.gmra.mrb[0].mxu0 %v1571
  %v2291 = vpop.f32.mrb[0].mxu0
  %v2292 = vadd.f32 0.0, %v2291
  %v2293 = vpop.f32.mrb[0].mxu0
  %v2294 = vpop.f32.mrb[0].mxu0
  %v2295 = vadd.f32 0.0, %v2294
  %v2296 = vpop.f32.mrb[0].mxu0
  %2297 = vmatprep.mubr.bf16.mxu0 0
  %2298 = vmatmul.mubr.bf16.gmra.mrb[0].mxu0 %v1574
  %v2299 = vpop.f32.mrb[0].mxu0
  %v2300 = vadd.f32 0.0, %v2299
  %v2301 = vpop.f32.mrb[0].mxu0
  %v2302 = vpop.f32.mrb[0].mxu0
  %v2303 = vadd.f32 0.0, %v2302
  %v2304 = vpop.f32.mrb[0].mxu0
  %2305 = vmatprep.mubr.bf16.mxu0 0
  %2306 = vmatmul.mubr.bf16.gmra.mrb[0].mxu0 %v1577
  %v2307 = vpop.f32.mrb[0].mxu0
  %v2308 = vadd.f32 0.0, %v2307
  %v2309 = vpop.f32.mrb[0].mxu0
  %v2310 = vpop.f32.mrb[0].mxu0
  %v2311 = vadd.f32 0.0, %v2310
  %v2312 = vpop.f32.mrb[0].mxu0
  %2313 = vmatprep.mubr.bf16.mxu0 0
  %2314 = vmatmul.mubr.bf16.gmra.mrb[0].mxu0 %v1580
  %v2315 = vpop.f32.mrb[0].mxu0
  %v2316 = vadd.f32 0.0, %v2315
  %v2317 = vpop.f32.mrb[0].mxu0
  %v2318 = vpop.f32.mrb[0].mxu0
  %v2319 = vadd.f32 0.0, %v2318
  %v2320 = vpop.f32.mrb[0].mxu0
  %2321 = vmatprep.mubr.bf16.mxu0 0
  %2322 = vmatmul.mubr.bf16.gmra.mrb[0].mxu0 %v1583
  %v2323 = vpop.f32.mrb[0].mxu0
  %v2324 = vadd.f32 0.0, %v2323
  %v2325 = vpop.f32.mrb[0].mxu0
  %v2326 = vpop.f32.mrb[0].mxu0
  %v2327 = vadd.f32 0.0, %v2326
  %v2328 = vpop.f32.mrb[0].mxu0
  %2329 = vmatprep.mubr.bf16.mxu0 0
  %2330 = vmatmul.mubr.bf16.gmra.mrb[0].mxu0 %v1586
  %v2331 = vpop.f32.mrb[0].mxu0
  %v2332 = vadd.f32 0.0, %v2331
  %v2333 = vpop.f32.mrb[0].mxu0
  %v2334 = vpop.f32.mrb[0].mxu0
  %v2335 = vadd.f32 0.0, %v2334
  %v2336 = vpop.f32.mrb[0].mxu0
  %2337 = vmatprep.mubr.bf16.mxu0 0
  %2338 = vmatmul.mubr.bf16.gmra.mrb[0].mxu0 %v1589
  %v2339 = vpop.f32.mrb[0].mxu0
  %v2340 = vadd.f32 0.0, %v2339
  %v2341 = vpop.f32.mrb[0].mxu0
  %v2342 = vpop.f32.mrb[0].mxu0
  %v2343 = vadd.f32 0.0, %v2342
  %v2344 = vpop.f32.mrb[0].mxu0
  %2345 = vmatprep.mubr.bf16.mxu0 0
  %2346 = vmatmul.mubr.bf16.gmra.mrb[0].mxu0 %v1592
  %v2347 = vpop.f32.mrb[0].mxu0
  %v2348 = vadd.f32 0.0, %v2347
  %v2349 = vpop.f32.mrb[0].mxu0
  %v2350 = vpop.f32.mrb[0].mxu0
  %v2351 = vadd.f32 0.0, %v2350
  %v2352 = vpop.f32.mrb[0].mxu0
  %2353 = vmatprep.mubr.bf16.mxu0 0
  %2354 = vmatmul.mubr.bf16.gmra.mrb[0].mxu0 %v1595
  %v2355 = vpop.f32.mrb[0].mxu0
  %v2356 = vadd.f32 0.0, %v2355
  %v2357 = vpop.f32.mrb[0].mxu0
  %v2358 = vpop.f32.mrb[0].mxu0
  %v2359 = vadd.f32 0.0, %v2358
  %v2360 = vpop.f32.mrb[0].mxu0
  %2361 = vmatprep.mubr.bf16.mxu0 0
  %2362 = vmatmul.mubr.bf16.gmra.mrb[0].mxu0 %v1598
  %v2363 = vpop.f32.mrb[0].mxu0
  %v2364 = vadd.f32 0.0, %v2363
  %v2365 = vpop.f32.mrb[0].mxu0
  %v2366 = vpop.f32.mrb[0].mxu0
  %v2367 = vadd.f32 0.0, %v2366
  %v2368 = vpop.f32.mrb[0].mxu0
  %2369 = vmatprep.mubr.bf16.mxu0 0
  %2370 = vmatmul.mubr.bf16.gmra.mrb[0].mxu0 %v1601
  %v2371 = vpop.f32.mrb[0].mxu0
  %v2372 = vadd.f32 0.0, %v2371
  %v2373 = vpop.f32.mrb[0].mxu0
  %v2374 = vpop.f32.mrb[0].mxu0
  %v2375 = vadd.f32 0.0, %v2374
  %v2376 = vpop.f32.mrb[0].mxu0
  %2377 = vmatprep.mubr.bf16.mxu0 0
  %2378 = vmatmul.mubr.bf16.gmra.mrb[0].mxu0 %v1604
  %v2379 = vpop.f32.mrb[0].mxu0
  %v2380 = vadd.f32 0.0, %v2379
  %v2381 = vpop.f32.mrb[0].mxu0
  %v2382 = vpop.f32.mrb[0].mxu0
  %v2383 = vadd.f32 0.0, %v2382
  %v2384 = vpop.f32.mrb[0].mxu0
  %2385 = vmatprep.mubr.bf16.mxu0 0
  %2386 = vmatmul.mubr.bf16.gmra.mrb[0].mxu0 %v1607
  %v2387 = vpop.f32.mrb[0].mxu0
  %v2388 = vadd.f32 0.0, %v2387
  %v2389 = vpop.f32.mrb[0].mxu0
  %v2390 = vpop.f32.mrb[0].mxu0
  %v2391 = vadd.f32 0.0, %v2390
  %v2392 = vpop.f32.mrb[0].mxu0
  %2393 = vmatprep.mubr.bf16.mxu0 0
  %2394 = vmatmul.mubr.bf16.gmra.mrb[0].mxu0 %v1610
  %v2395 = vpop.f32.mrb[0].mxu0
  %v2396 = vadd.f32 0.0, %v2395
  %v2397 = vpop.f32.mrb[0].mxu0
  %v2398 = vpop.f32.mrb[0].mxu0
  %v2399 = vadd.f32 0.0, %v2398
  %v2400 = vpop.f32.mrb[0].mxu0
  %2401 = vmatprep.mubr.bf16.mxu0 0
  %2402 = vmatmul.mubr.bf16.gmra.mrb[0].mxu0 %v1613
  %v2403 = vpop.f32.mrb[0].mxu0
  %v2404 = vadd.f32 0.0, %v2403
  %v2405 = vpop.f32.mrb[0].mxu0
  %v2406 = vpop.f32.mrb[0].mxu0
  %v2407 = vadd.f32 0.0, %v2406
  %v2408 = vpop.f32.mrb[0].mxu0
  %2409 = vmatprep.mubr.bf16.mxu0 0
  %2410 = vmatmul.mubr.bf16.gmra.mrb[0].mxu0 %v1616
  %v2411 = vpop.f32.mrb[0].mxu0
  %v2412 = vadd.f32 0.0, %v2411
  %v2413 = vpop.f32.mrb[0].mxu0
  %v2414 = vpop.f32.mrb[0].mxu0
  %v2415 = vadd.f32 0.0, %v2414
  %v2416 = vpop.f32.mrb[0].mxu0
  %2417 = vmatprep.mubr.bf16.mxu0 0
  %2418 = vmatmul.mubr.bf16.gmra.mrb[0].mxu0 %v1619
  %v2419 = vpop.f32.mrb[0].mxu0
  %v2420 = vadd.f32 0.0, %v2419
  %v2421 = vpop.f32.mrb[0].mxu0
  %v2422 = vpop.f32.mrb[0].mxu0
  %v2423 = vadd.f32 0.0, %v2422
  %v2424 = vpop.f32.mrb[0].mxu0
  %2425 = vmatprep.mubr.bf16.mxu0 0
  %2426 = vmatmul.mubr.bf16.gmra.mrb[0].mxu0 %v1622
  %v2427 = vpop.f32.mrb[0].mxu0
  %v2428 = vadd.f32 0.0, %v2427
  %v2429 = vpop.f32.mrb[0].mxu0
  %v2430 = vpop.f32.mrb[0].mxu0
  %v2431 = vadd.f32 0.0, %v2430
  %v2432 = vpop.f32.mrb[0].mxu0
  %2433 = vmatprep.mubr.bf16.mxu0 0
  %2434 = vmatmul.mubr.bf16.gmra.mrb[0].mxu0 %v1625
  %v2435 = vpop.f32.mrb[0].mxu0
  %v2436 = vadd.f32 0.0, %v2435
  %v2437 = vpop.f32.mrb[0].mxu0
  %v2438 = vpop.f32.mrb[0].mxu0
  %v2439 = vadd.f32 0.0, %v2438
  %v2440 = vpop.f32.mrb[0].mxu0
  %2441 = vmatprep.mubr.bf16.mxu0 0
  %2442 = vmatmul.mubr.bf16.gmra.mrb[0].mxu0 %v1628
  %v2443 = vpop.f32.mrb[0].mxu0
  %v2444 = vadd.f32 0.0, %v2443
  %v2445 = vpop.f32.mrb[0].mxu0
  %v2446 = vpop.f32.mrb[0].mxu0
  %v2447 = vadd.f32 0.0, %v2446
  %v2448 = vpop.f32.mrb[0].mxu0
  %2449 = vmatprep.mubr.bf16.mxu0 0
  %2450 = vmatmul.mubr.bf16.gmra.mrb[0].mxu0 %v1631
  %v2451 = vpop.f32.mrb[0].mxu0
  %v2452 = vadd.f32 0.0, %v2451
  %v2453 = vpop.f32.mrb[0].mxu0
  %v2454 = vpop.f32.mrb[0].mxu0
  %v2455 = vadd.f32 0.0, %v2454
  %v2456 = vpop.f32.mrb[0].mxu0
  %2457 = vmatprep.mubr.bf16.mxu0 0
  %2458 = vmatmul.mubr.bf16.gmra.mrb[0].mxu0 %v1634
  %v2459 = vpop.f32.mrb[0].mxu0
  %v2460 = vadd.f32 0.0, %v2459
  %v2461 = vpop.f32.mrb[0].mxu0
  %v2462 = vpop.f32.mrb[0].mxu0
  %v2463 = vadd.f32 0.0, %v2462
  %v2464 = vpop.f32.mrb[0].mxu0
  %2465 = vmatprep.mubr.bf16.mxu0 0
  %2466 = vmatmul.mubr.bf16.gmra.mrb[0].mxu0 %v1637
  %v2467 = vpop.f32.mrb[0].mxu0
  %v2468 = vadd.f32 0.0, %v2467
  %v2469 = vpop.f32.mrb[0].mxu0
  %v2470 = vpop.f32.mrb[0].mxu0
  %v2471 = vadd.f32 0.0, %v2470
  %v2472 = vpop.f32.mrb[0].mxu0
  %2473 = vmatprep.mubr.bf16.mxu0 0
  %2474 = vmatmul.mubr.bf16.gmra.mrb[0].mxu0 %v1640
  %v2475 = vpop.f32.mrb[0].mxu0
  %v2476 = vadd.f32 0.0, %v2475
  %v2477 = vpop.f32.mrb[0].mxu0
  %v2478 = vpop.f32.mrb[0].mxu0
  %v2479 = vadd.f32 0.0, %v2478
  %v2480 = vpop.f32.mrb[0].mxu0
  %2481 = vmatprep.mubr.bf16.mxu0 0
  %2482 = vmatmul.mubr.bf16.gmra.mrb[0].mxu0 %v1643
  %v2483 = vpop.f32.mrb[0].mxu0
  %v2484 = vadd.f32 0.0, %v2483
  %v2485 = vpop.f32.mrb[0].mxu0
  %v2486 = vpop.f32.mrb[0].mxu0
  %v2487 = vadd.f32 0.0, %v2486
  %v2488 = vpop.f32.mrb[0].mxu0
  %2489 = vmatprep.mubr.bf16.mxu0 0
  %2490 = vmatmul.mubr.bf16.gmra.mrb[0].mxu0 %v1646
  %v2491 = vpop.f32.mrb[0].mxu0
  %v2492 = vadd.f32 0.0, %v2491
  %v2493 = vpop.f32.mrb[0].mxu0
  %v2494 = vpop.f32.mrb[0].mxu0
  %v2495 = vadd.f32 0.0, %v2494
  %v2496 = vpop.f32.mrb[0].mxu0
  %2497 = vmatprep.mubr.bf16.mxu0 0
  %2498 = vmatmul.mubr.bf16.gmra.mrb[0].mxu0 %v1649
  %v2499 = vpop.f32.mrb[0].mxu0
  %v2500 = vadd.f32 0.0, %v2499
  %v2501 = vpop.f32.mrb[0].mxu0
  %v2502 = vpop.f32.mrb[0].mxu0
  %v2503 = vadd.f32 0.0, %v2502
  %v2504 = vpop.f32.mrb[0].mxu0
  %2505 = vmatprep.mubr.bf16.mxu0 0
  %2506 = vmatmul.mubr.bf16.gmra.mrb[0].mxu0 %v1652
  %v2507 = vpop.f32.mrb[0].mxu0
  %v2508 = vadd.f32 0.0, %v2507
  %v2509 = vpop.f32.mrb[0].mxu0
  %v2510 = vpop.f32.mrb[0].mxu0
  %v2511 = vadd.f32 0.0, %v2510
  %v2512 = vpop.f32.mrb[0].mxu0
  %2513 = vmatprep.mubr.bf16.mxu0 0
  %2514 = vmatmul.mubr.bf16.gmra.mrb[0].mxu0 %v1655
  %v2515 = vpop.f32.mrb[0].mxu0
  %v2516 = vadd.f32 0.0, %v2515
  %v2517 = vpop.f32.mrb[0].mxu0
  %v2518 = vpop.f32.mrb[0].mxu0
  %v2519 = vadd.f32 0.0, %v2518
  %v2520 = vpop.f32.mrb[0].mxu0
  %2521 = vmatprep.mubr.bf16.mxu0 0
  %2522 = vmatmul.mubr.bf16.gmra.mrb[0].mxu0 %v1658
  %v2523 = vpop.f32.mrb[0].mxu0
  %v2524 = vadd.f32 0.0, %v2523
  %v2525 = vpop.f32.mrb[0].mxu0
  %v2526 = vpop.f32.mrb[0].mxu0
  %v2527 = vadd.f32 0.0, %v2526
  %v2528 = vpop.f32.mrb[0].mxu0
  %2529 = vmatprep.mubr.bf16.mxu0 0
  %2530 = vmatmul.mubr.bf16.gmra.mrb[0].mxu0 %v1661
  %v2531 = vpop.f32.mrb[0].mxu0
  %v2532 = vadd.f32 0.0, %v2531
  %v2533 = vpop.f32.mrb[0].mxu0
  %v2534 = vpop.f32.mrb[0].mxu0
  %v2535 = vadd.f32 0.0, %v2534
  %v2536 = vpop.f32.mrb[0].mxu0
  %2537 = vmatprep.mubr.bf16.mxu0 0
  %2538 = vmatmul.mubr.bf16.gmra.mrb[0].mxu0 %v1664
  %v2539 = vpop.f32.mrb[0].mxu0
  %v2540 = vadd.f32 0.0, %v2539
  %v2541 = vpop.f32.mrb[0].mxu0
  %v2542 = vpop.f32.mrb[0].mxu0
  %v2543 = vadd.f32 0.0, %v2542
  %v2544 = vpop.f32.mrb[0].mxu0
  %2545 = vmatprep.mubr.bf16.mxu0 0
  %2546 = vmatmul.mubr.bf16.gmra.mrb[0].mxu0 %v1667
  %v2547 = vpop.f32.mrb[0].mxu0
  %v2548 = vadd.f32 0.0, %v2547
  %v2549 = vpop.f32.mrb[0].mxu0
  %v2550 = vpop.f32.mrb[0].mxu0
  %v2551 = vadd.f32 0.0, %v2550
  %v2552 = vpop.f32.mrb[0].mxu0
  %2553 = vmatprep.mubr.bf16.mxu0 0
  %2554 = vmatmul.mubr.bf16.gmra.mrb[0].mxu0 %v1670
  %v2555 = vpop.f32.mrb[0].mxu0
  %v2556 = vadd.f32 0.0, %v2555
  %v2557 = vpop.f32.mrb[0].mxu0
  %v2558 = vpop.f32.mrb[0].mxu0
  %v2559 = vadd.f32 0.0, %v2558
  %v2560 = vpop.f32.mrb[0].mxu0
  %2561 = vmatprep.mubr.bf16.mxu0 0
  %2562 = vmatmul.mubr.bf16.gmra.mrb[0].mxu0 %v1673
  %v2563 = vpop.f32.mrb[0].mxu0
  %v2564 = vadd.f32 0.0, %v2563
  %v2565 = vpop.f32.mrb[0].mxu0
  %v2566 = vpop.f32.mrb[0].mxu0
  %v2567 = vadd.f32 0.0, %v2566
  %v2568 = vpop.f32.mrb[0].mxu0
  %2569 = vmatprep.mubr.bf16.mxu0 0
  %2570 = vmatmul.mubr.bf16.gmra.mrb[0].mxu0 %v1676
  %v2571 = vpop.f32.mrb[0].mxu0
  %v2572 = vadd.f32 0.0, %v2571
  %v2573 = vpop.f32.mrb[0].mxu0
  %v2574 = vpop.f32.mrb[0].mxu0
  %v2575 = vadd.f32 0.0, %v2574
  %v2576 = vpop.f32.mrb[0].mxu0
  %2577 = vmatprep.mubr.bf16.mxu0 0
  %2578 = vmatmul.mubr.bf16.gmra.mrb[0].mxu0 %v1679
  %v2579 = vpop.f32.mrb[0].mxu0
  %v2580 = vadd.f32 0.0, %v2579
  %v2581 = vpop.f32.mrb[0].mxu0
  %v2582 = vpop.f32.mrb[0].mxu0
  %v2583 = vadd.f32 0.0, %v2582
  %v2584 = vpop.f32.mrb[0].mxu0
  %2585 = vmatprep.mubr.bf16.mxu0 0
  %2586 = vmatmul.mubr.bf16.gmra.mrb[0].mxu0 %v1682
  %v2587 = vpop.f32.mrb[0].mxu0
  %v2588 = vadd.f32 0.0, %v2587
  %v2589 = vpop.f32.mrb[0].mxu0
  %v2590 = vpop.f32.mrb[0].mxu0
  %v2591 = vadd.f32 0.0, %v2590
  %v2592 = vpop.f32.mrb[0].mxu0
  %2593 = vmatprep.mubr.bf16.mxu0 0
  %2594 = vmatmul.mubr.bf16.gmra.mrb[0].mxu0 %v1685
  %v2595 = vpop.f32.mrb[0].mxu0
  %v2596 = vadd.f32 0.0, %v2595
  %v2597 = vpop.f32.mrb[0].mxu0
  %v2598 = vpop.f32.mrb[0].mxu0
  %v2599 = vadd.f32 0.0, %v2598
  %v2600 = vpop.f32.mrb[0].mxu0
  %2601 = vmatprep.mubr.bf16.mxu0 0
  %2602 = vmatmul.mubr.bf16.gmra.mrb[0].mxu0 %v1688
  %v2603 = vpop.f32.mrb[0].mxu0
  %v2604 = vadd.f32 0.0, %v2603
  %v2605 = vpop.f32.mrb[0].mxu0
  %v2606 = vpop.f32.mrb[0].mxu0
  %v2607 = vadd.f32 0.0, %v2606
  %v2608 = vpop.f32.mrb[0].mxu0
  %2609 = vmatprep.mubr.bf16.mxu0 0
  %2610 = vmatmul.mubr.bf16.gmra.mrb[0].mxu0 %v1691
  %v2611 = vpop.f32.mrb[0].mxu0
  %v2612 = vadd.f32 0.0, %v2611
  %v2613 = vpop.f32.mrb[0].mxu0
  %v2614 = vpop.f32.mrb[0].mxu0
  %v2615 = vadd.f32 0.0, %v2614
  %v2616 = vpop.f32.mrb[0].mxu0
  %2617 = vmatprep.mubr.bf16.mxu0 0
  %2618 = vmatmul.mubr.bf16.gmra.mrb[0].mxu0 %v1694
  %v2619 = vpop.f32.mrb[0].mxu0
  %v2620 = vadd.f32 0.0, %v2619
  %v2621 = vpop.f32.mrb[0].mxu0
  %v2622 = vpop.f32.mrb[0].mxu0
  %v2623 = vadd.f32 0.0, %v2622
  %v2624 = vpop.f32.mrb[0].mxu0
  %2625 = vmatprep.mubr.bf16.mxu0 0
  %2626 = vmatmul.mubr.bf16.gmra.mrb[0].mxu0 %v1697
  %v2627 = vpop.f32.mrb[0].mxu0
  %v2628 = vadd.f32 0.0, %v2627
  %v2629 = vpop.f32.mrb[0].mxu0
  %v2630 = vpop.f32.mrb[0].mxu0
  %v2631 = vadd.f32 0.0, %v2630
  %v2632 = vpop.f32.mrb[0].mxu0
  %2633 = vmatprep.mubr.bf16.mxu0 0
  %2634 = vmatmul.mubr.bf16.gmra.mrb[0].mxu0 %v1700
  %v2635 = vpop.f32.mrb[0].mxu0
  %v2636 = vadd.f32 0.0, %v2635
  %v2637 = vpop.f32.mrb[0].mxu0
  %v2638 = vpop.f32.mrb[0].mxu0
  %v2639 = vadd.f32 0.0, %v2638
  %v2640 = vpop.f32.mrb[0].mxu0
  %2641 = vmatprep.mubr.bf16.mxu0 0
  %2642 = vmatmul.mubr.bf16.gmra.mrb[0].mxu0 %v1703
  %v2643 = vpop.f32.mrb[0].mxu0
  %v2644 = vadd.f32 0.0, %v2643
  %v2645 = vpop.f32.mrb[0].mxu0
  %v2646 = vpop.f32.mrb[0].mxu0
  %v2647 = vadd.f32 0.0, %v2646
  %v2648 = vpop.f32.mrb[0].mxu0
  %2649 = vmatprep.mubr.bf16.mxu0 0
  %2650 = vmatmul.mubr.bf16.gmra.mrb[0].mxu0 %v1706
  %v2651 = vpop.f32.mrb[0].mxu0
  %v2652 = vadd.f32 0.0, %v2651
  %v2653 = vpop.f32.mrb[0].mxu0
  %v2654 = vpop.f32.mrb[0].mxu0
  %v2655 = vadd.f32 0.0, %v2654
  %v2656 = vpop.f32.mrb[0].mxu0
  %2657 = vmatprep.mubr.bf16.mxu0 0
  %2658 = vmatmul.mubr.bf16.gmra.mrb[0].mxu0 %v1709
  %v2659 = vpop.f32.mrb[0].mxu0
  %v2660 = vadd.f32 0.0, %v2659
  %v2661 = vpop.f32.mrb[0].mxu0
  %v2662 = vpop.f32.mrb[0].mxu0
  %v2663 = vadd.f32 0.0, %v2662
  %v2664 = vpop.f32.mrb[0].mxu0
  %2665 = vmatprep.mubr.bf16.mxu0 0
  %2666 = vmatmul.mubr.bf16.gmra.mrb[0].mxu0 %v1712
  %v2667 = vpop.f32.mrb[0].mxu0
  %v2668 = vadd.f32 0.0, %v2667
  %v2669 = vpop.f32.mrb[0].mxu0
  %v2670 = vpop.f32.mrb[0].mxu0
  %v2671 = vadd.f32 0.0, %v2670
  %v2672 = vpop.f32.mrb[0].mxu0
  %2673 = vmatprep.mubr.bf16.mxu0 0
  %2674 = vmatmul.mubr.bf16.gmra.mrb[0].mxu0 %v1715
  %v2675 = vpop.f32.mrb[0].mxu0
  %v2676 = vadd.f32 0.0, %v2675
  %v2677 = vpop.f32.mrb[0].mxu0
  %v2678 = vpop.f32.mrb[0].mxu0
  %v2679 = vadd.f32 0.0, %v2678
  %v2680 = vpop.f32.mrb[0].mxu0
  %2681 = vmatprep.mubr.bf16.mxu0 0
  %2682 = vmatmul.mubr.bf16.gmra.mrb[0].mxu0 %v1718
  %v2683 = vpop.f32.mrb[0].mxu0
  %v2684 = vadd.f32 0.0, %v2683
  %v2685 = vpop.f32.mrb[0].mxu0
  %v2686 = vpop.f32.mrb[0].mxu0
  %v2687 = vadd.f32 0.0, %v2686
  %v2688 = vpop.f32.mrb[0].mxu0
  %2689 = vmatprep.mubr.bf16.mxu0 0
  %2690 = vmatmul.mubr.bf16.gmra.mrb[0].mxu0 %v1721
  %v2691 = vpop.f32.mrb[0].mxu0
  %v2692 = vadd.f32 0.0, %v2691
  %v2693 = vpop.f32.mrb[0].mxu0
  %v2694 = vpop.f32.mrb[0].mxu0
  %v2695 = vadd.f32 0.0, %v2694
  %v2696 = vpop.f32.mrb[0].mxu0
  %2697 = vmatprep.mubr.bf16.mxu0 0
  %2698 = vmatmul.mubr.bf16.gmra.mrb[0].mxu0 %v1724
  %v2699 = vpop.f32.mrb[0].mxu0
  %v2700 = vadd.f32 0.0, %v2699
  %v2701 = vpop.f32.mrb[0].mxu0
  %v2702 = vpop.f32.mrb[0].mxu0
  %v2703 = vadd.f32 0.0, %v2702
  %v2704 = vpop.f32.mrb[0].mxu0
  %2705 = vmatprep.mubr.bf16.mxu0 0
  %2706 = vmatmul.mubr.bf16.gmra.mrb[0].mxu0 %v1727
  %v2707 = vpop.f32.mrb[0].mxu0
  %v2708 = vadd.f32 0.0, %v2707
  %v2709 = vpop.f32.mrb[0].mxu0
  %v2710 = vpop.f32.mrb[0].mxu0
  %v2711 = vadd.f32 0.0, %v2710
  %v2712 = vpop.f32.mrb[0].mxu0
  %2713 = vmatprep.mubr.bf16.mxu0 0
  %2714 = vmatmul.mubr.bf16.gmra.mrb[0].mxu0 %v1730
  %v2715 = vpop.f32.mrb[0].mxu0
  %v2716 = vadd.f32 0.0, %v2715
  %v2717 = vpop.f32.mrb[0].mxu0
  %v2718 = vpop.f32.mrb[0].mxu0
  %v2719 = vadd.f32 0.0, %v2718
  %v2720 = vpop.f32.mrb[0].mxu0
  %2721 = vmatprep.mubr.bf16.mxu0 0
  %2722 = vmatmul.mubr.bf16.gmra.mrb[0].mxu0 %v1733
  %v2723 = vpop.f32.mrb[0].mxu0
  %v2724 = vadd.f32 0.0, %v2723
  %v2725 = vpop.f32.mrb[0].mxu0
  %v2726 = vpop.f32.mrb[0].mxu0
  %v2727 = vadd.f32 0.0, %v2726
  %v2728 = vpop.f32.mrb[0].mxu0
  %2729 = vmatprep.mubr.bf16.mxu0 0
  %2730 = vmatmul.mubr.bf16.gmra.mrb[0].mxu0 %v1736
  %v2731 = vpop.f32.mrb[0].mxu0
  %v2732 = vadd.f32 0.0, %v2731
  %v2733 = vpop.f32.mrb[0].mxu0
  %v2734 = vpop.f32.mrb[0].mxu0
  %v2735 = vadd.f32 0.0, %v2734
  %v2736 = vpop.f32.mrb[0].mxu0
  %2737 = vmatprep.mubr.bf16.mxu0 0
  %2738 = vmatmul.mubr.bf16.gmra.mrb[0].mxu0 %v1739
  %v2739 = vpop.f32.mrb[0].mxu0
  %v2740 = vadd.f32 0.0, %v2739
  %v2741 = vpop.f32.mrb[0].mxu0
  %v2742 = vpop.f32.mrb[0].mxu0
  %v2743 = vadd.f32 0.0, %v2742
  %v2744 = vpop.f32.mrb[0].mxu0
  %2745 = vmatprep.mubr.bf16.mxu0 0
  %2746 = vmatmul.mubr.bf16.gmra.mrb[0].mxu0 %v1742
  %v2747 = vpop.f32.mrb[0].mxu0
  %v2748 = vadd.f32 0.0, %v2747
  %v2749 = vpop.f32.mrb[0].mxu0
  %v2750 = vpop.f32.mrb[0].mxu0
  %v2751 = vadd.f32 0.0, %v2750
  %v2752 = vpop.f32.mrb[0].mxu0
  %2753 = vmatprep.mubr.bf16.mxu0 0
  %2754 = vmatmul.mubr.bf16.gmra.mrb[0].mxu0 %v1745
  %v2755 = vpop.f32.mrb[0].mxu0
  %v2756 = vadd.f32 0.0, %v2755
  %v2757 = vpop.f32.mrb[0].mxu0
  %v2758 = vpop.f32.mrb[0].mxu0
  %v2759 = vadd.f32 0.0, %v2758
  %v2760 = vpop.f32.mrb[0].mxu0
  %2761 = vmatprep.mubr.bf16.mxu0 0
  %2762 = vmatmul.mubr.bf16.gmra.mrb[0].mxu0 %v1748
  %v2763 = vpop.f32.mrb[0].mxu0
  %v2764 = vadd.f32 0.0, %v2763
  %v2765 = vpop.f32.mrb[0].mxu0
  %v2766 = vpop.f32.mrb[0].mxu0
  %v2767 = vadd.f32 0.0, %v2766
  %v2768 = vpop.f32.mrb[0].mxu0
  %2769 = vmatprep.mubr.bf16.mxu0 0
  %2770 = vmatmul.mubr.bf16.gmra.mrb[0].mxu0 %v1751
  %v2771 = vpop.f32.mrb[0].mxu0
  %v2772 = vadd.f32 0.0, %v2771
  %v2773 = vpop.f32.mrb[0].mxu0
  %v2774 = vpop.f32.mrb[0].mxu0
  %v2775 = vadd.f32 0.0, %v2774
  %v2776 = vpop.f32.mrb[0].mxu0
  %2777 = vmatprep.mubr.bf16.mxu0 0
  %2778 = vmatmul.mubr.bf16.gmra.mrb[0].mxu0 %v1754
  %v2779 = vpop.f32.mrb[0].mxu0
  %v2780 = vadd.f32 0.0, %v2779
  %v2781 = vpop.f32.mrb[0].mxu0
  %v2782 = vpop.f32.mrb[0].mxu0
  %v2783 = vadd.f32 0.0, %v2782
  %v2784 = vpop.f32.mrb[0].mxu0
  %2785 = vmatprep.mubr.bf16.mxu0 0
  %2786 = vmatmul.mubr.bf16.gmra.mrb[0].mxu0 %v1757
  %v2787 = vpop.f32.mrb[0].mxu0
  %v2788 = vadd.f32 0.0, %v2787
  %v2789 = vpop.f32.mrb[0].mxu0
  %v2790 = vpop.f32.mrb[0].mxu0
  %v2791 = vadd.f32 0.0, %v2790
  %v2792 = vpop.f32.mrb[0].mxu0
  %2793 = vmatprep.mubr.bf16.mxu0 0
  %2794 = vmatmul.mubr.bf16.gmra.mrb[0].mxu0 %v1760
  %v2795 = vpop.f32.mrb[0].mxu0
  %v2796 = vadd.f32 0.0, %v2795
  %v2797 = vpop.f32.mrb[0].mxu0
  %v2798 = vpop.f32.mrb[0].mxu0
  %v2799 = vadd.f32 0.0, %v2798
  %v2800 = vpop.f32.mrb[0].mxu0
  %2801 = vmatprep.mubr.bf16.mxu0 0
  %2802 = vmatmul.mubr.bf16.gmra.mrb[0].mxu0 %v1763
  %v2803 = vpop.f32.mrb[0].mxu0
  %v2804 = vadd.f32 0.0, %v2803
  %v2805 = vpop.f32.mrb[0].mxu0
  %v2806 = vpop.f32.mrb[0].mxu0
  %v2807 = vadd.f32 0.0, %v2806
  %v2808 = vpop.f32.mrb[0].mxu0
  %2809 = vmatprep.mubr.bf16.mxu0 0
  %2810 = vmatmul.mubr.bf16.gmra.mrb[0].mxu0 %v1766
  %v2811 = vpop.f32.mrb[0].mxu0
  %v2812 = vadd.f32 0.0, %v2811
  %v2813 = vpop.f32.mrb[0].mxu0
  %v2814 = vpop.f32.mrb[0].mxu0
  %v2815 = vadd.f32 0.0, %v2814
  %v2816 = vpop.f32.mrb[0].mxu0
  %2817 = vmatprep.mubr.bf16.mxu0 0
  %2818 = vmatmul.mubr.bf16.gmra.mrb[0].mxu0 %v1769
  %v2819 = vpop.f32.mrb[0].mxu0
  %v2820 = vadd.f32 0.0, %v2819
  %v2821 = vpop.f32.mrb[0].mxu0
  %v2822 = vpop.f32.mrb[0].mxu0
  %v2823 = vadd.f32 0.0, %v2822
  %v2824 = vpop.f32.mrb[0].mxu0
  %2825 = vmatprep.mubr.bf16.mxu0 0
  %2826 = vmatmul.mubr.bf16.gmra.mrb[0].mxu0 %v1772
  %v2827 = vpop.f32.mrb[0].mxu0
  %v2828 = vadd.f32 0.0, %v2827
  %v2829 = vpop.f32.mrb[0].mxu0
  %v2830 = vpop.f32.mrb[0].mxu0
  %v2831 = vadd.f32 0.0, %v2830
  %v2832 = vpop.f32.mrb[0].mxu0
  %2833 = vmatprep.mubr.bf16.mxu0 0
  %2834 = vmatmul.mubr.bf16.gmra.mrb[0].mxu0 %v1775
  %v2835 = vpop.f32.mrb[0].mxu0
  %v2836 = vadd.f32 0.0, %v2835
  %v2837 = vpop.f32.mrb[0].mxu0
  %v2838 = vpop.f32.mrb[0].mxu0
  %v2839 = vadd.f32 0.0, %v2838
  %v2840 = vpop.f32.mrb[0].mxu0
  %2841 = vmatprep.mubr.bf16.mxu0 0
  %2842 = vmatmul.mubr.bf16.gmra.mrb[0].mxu0 %v1778
  %v2843 = vpop.f32.mrb[0].mxu0
  %v2844 = vadd.f32 0.0, %v2843
  %v2845 = vpop.f32.mrb[0].mxu0
  %v2846 = vpop.f32.mrb[0].mxu0
  %v2847 = vadd.f32 0.0, %v2846
  %v2848 = vpop.f32.mrb[0].mxu0
  %2849 = vmatprep.mubr.bf16.mxu0 0
  %2850 = vmatmul.mubr.bf16.gmra.mrb[0].mxu0 %v1781
  %v2851 = vpop.f32.mrb[0].mxu0
  %v2852 = vadd.f32 0.0, %v2851
  %v2853 = vpop.f32.mrb[0].mxu0
  %v2854 = vpop.f32.mrb[0].mxu0
  %v2855 = vadd.f32 0.0, %v2854
  %v2856 = vpop.f32.mrb[0].mxu0
  %2857 = vmatprep.mubr.bf16.mxu0 0
  %2858 = vmatmul.mubr.bf16.gmra.mrb[0].mxu0 %v1784
  %v2859 = vpop.f32.mrb[0].mxu0
  %v2860 = vadd.f32 0.0, %v2859
  %v2861 = vpop.f32.mrb[0].mxu0
  %v2862 = vpop.f32.mrb[0].mxu0
  %v2863 = vadd.f32 0.0, %v2862
  %v2864 = vpop.f32.mrb[0].mxu0
  %2865 = vmatprep.mubr.bf16.mxu0 0
  %2866 = vmatmul.mubr.bf16.gmra.mrb[0].mxu0 %v1787
  %v2867 = vpop.f32.mrb[0].mxu0
  %v2868 = vadd.f32 0.0, %v2867
  %v2869 = vpop.f32.mrb[0].mxu0
  %v2870 = vpop.f32.mrb[0].mxu0
  %v2871 = vadd.f32 0.0, %v2870
  %v2872 = vpop.f32.mrb[0].mxu0
  %2873 = vmatprep.mubr.bf16.mxu0 0
  %2874 = vmatmul.mubr.bf16.gmra.mrb[0].mxu0 %v1790
  %v2875 = vpop.f32.mrb[0].mxu0
  %v2876 = vadd.f32 0.0, %v2875
  %v2877 = vpop.f32.mrb[0].mxu0
  %v2878 = vpop.f32.mrb[0].mxu0
  %v2879 = vadd.f32 0.0, %v2878
  %v2880 = vpop.f32.mrb[0].mxu0
  %2881 = vmatprep.mubr.bf16.mxu0 0
  %2882 = vmatmul.mubr.bf16.gmra.mrb[0].mxu0 %v1793
  %v2883 = vpop.f32.mrb[0].mxu0
  %v2884 = vadd.f32 0.0, %v2883
  %v2885 = vpop.f32.mrb[0].mxu0
  %v2886 = vpop.f32.mrb[0].mxu0
  %v2887 = vadd.f32 0.0, %v2886
  %v2888 = vpop.f32.mrb[0].mxu0
  %2889 = vmatprep.mubr.bf16.mxu0 0
  %2890 = vmatmul.mubr.bf16.gmra.mrb[0].mxu0 %v1796
  %v2891 = vpop.f32.mrb[0].mxu0
  %v2892 = vadd.f32 0.0, %v2891
  %v2893 = vpop.f32.mrb[0].mxu0
  %v2894 = vpop.f32.mrb[0].mxu0
  %v2895 = vadd.f32 0.0, %v2894
  %v2896 = vpop.f32.mrb[0].mxu0
  %2897 = vmatprep.mubr.bf16.mxu0 0
  %2898 = vmatmul.mubr.bf16.gmra.mrb[0].mxu0 %v1799
  %v2899 = vpop.f32.mrb[0].mxu0
  %v2900 = vadd.f32 0.0, %v2899
  %v2901 = vpop.f32.mrb[0].mxu0
  %v2902 = vpop.f32.mrb[0].mxu0
  %v2903 = vadd.f32 0.0, %v2902
  %v2904 = vpop.f32.mrb[0].mxu0
  %2905 = vmatprep.mubr.bf16.mxu0 0
  %2906 = vmatmul.mubr.bf16.gmra.mrb[0].mxu0 %v1802
  %v2907 = vpop.f32.mrb[0].mxu0
  %v2908 = vadd.f32 0.0, %v2907
  %v2909 = vpop.f32.mrb[0].mxu0
  %v2910 = vpop.f32.mrb[0].mxu0
  %v2911 = vadd.f32 0.0, %v2910
  %v2912 = vpop.f32.mrb[0].mxu0
  %2913 = vmatprep.mubr.bf16.mxu0 0
  %2914 = vmatmul.mubr.bf16.gmra.mrb[0].mxu0 %v1805
  %v2915 = vpop.f32.mrb[0].mxu0
  %v2916 = vadd.f32 0.0, %v2915
  %v2917 = vpop.f32.mrb[0].mxu0
  %v2918 = vpop.f32.mrb[0].mxu0
  %v2919 = vadd.f32 0.0, %v2918
  %v2920 = vpop.f32.mrb[0].mxu0
  %2921 = vmatprep.mubr.bf16.mxu0 0
  %2922 = vmatmul.mubr.bf16.gmra.mrb[0].mxu0 %v1808
  %v2923 = vpop.f32.mrb[0].mxu0
  %v2924 = vadd.f32 0.0, %v2923
  %v2925 = vpop.f32.mrb[0].mxu0
  %v2926 = vpop.f32.mrb[0].mxu0
  %v2927 = vadd.f32 0.0, %v2926
  %v2928 = vpop.f32.mrb[0].mxu0
  %2929 = vmatprep.mubr.bf16.mxu0 0
  %2930 = vmatmul.mubr.bf16.gmra.mrb[0].mxu0 %v1811
  %v2931 = vpop.f32.mrb[0].mxu0
  %v2932 = vadd.f32 0.0, %v2931
  %v2933 = vpop.f32.mrb[0].mxu0
  %v2934 = vpop.f32.mrb[0].mxu0
  %v2935 = vadd.f32 0.0, %v2934
  %v2936 = vpop.f32.mrb[0].mxu0
  %2937 = vmatprep.mubr.bf16.mxu0 0
  %2938 = vmatmul.mubr.bf16.gmra.mrb[0].mxu0 %v1814
  %v2939 = vpop.f32.mrb[0].mxu0
  %v2940 = vadd.f32 0.0, %v2939
  %v2941 = vpop.f32.mrb[0].mxu0
  %v2942 = vpop.f32.mrb[0].mxu0
  %v2943 = vadd.f32 0.0, %v2942
  %v2944 = vpop.f32.mrb[0].mxu0
  %2945 = vmatprep.mubr.bf16.mxu0 0
  %2946 = vmatmul.mubr.bf16.gmra.mrb[0].mxu0 %v1817
  %v2947 = vpop.f32.mrb[0].mxu0
  %v2948 = vadd.f32 0.0, %v2947
  %v2949 = vpop.f32.mrb[0].mxu0
  %v2950 = vpop.f32.mrb[0].mxu0
  %v2951 = vadd.f32 0.0, %v2950
  %v2952 = vpop.f32.mrb[0].mxu0
  %2953 = vmatprep.mubr.bf16.mxu0 0
  %2954 = vmatmul.mubr.bf16.gmra.mrb[0].mxu0 %v1820
  %v2955 = vpop.f32.mrb[0].mxu0
  %v2956 = vadd.f32 0.0, %v2955
  %v2957 = vpop.f32.mrb[0].mxu0
  %v2958 = vpop.f32.mrb[0].mxu0
  %v2959 = vadd.f32 0.0, %v2958
  %v2960 = vpop.f32.mrb[0].mxu0
  %2961 = vmatprep.mubr.bf16.mxu0 0
  %2962 = vmatmul.mubr.bf16.gmra.mrb[0].mxu0 %v1823
  %v2963 = vpop.f32.mrb[0].mxu0
  %v2964 = vadd.f32 0.0, %v2963
  %v2965 = vpop.f32.mrb[0].mxu0
  %v2966 = vpop.f32.mrb[0].mxu0
  %v2967 = vadd.f32 0.0, %v2966
  %v2968 = vpop.f32.mrb[0].mxu0
  %2969 = vmatprep.mubr.bf16.mxu0 0
  %2970 = vmatmul.mubr.bf16.gmra.mrb[0].mxu0 %v1826
  %v2971 = vpop.f32.mrb[0].mxu0
  %v2972 = vadd.f32 0.0, %v2971
  %v2973 = vpop.f32.mrb[0].mxu0
  %v2974 = vpop.f32.mrb[0].mxu0
  %v2975 = vadd.f32 0.0, %v2974
  %v2976 = vpop.f32.mrb[0].mxu0
  %2977 = vmatprep.mubr.bf16.mxu0 0
  %2978 = vmatmul.mubr.bf16.gmra.mrb[0].mxu0 %v1829
  %v2979 = vpop.f32.mrb[0].mxu0
  %v2980 = vadd.f32 0.0, %v2979
  %v2981 = vpop.f32.mrb[0].mxu0
  %v2982 = vpop.f32.mrb[0].mxu0
  %v2983 = vadd.f32 0.0, %v2982
  %v2984 = vpop.f32.mrb[0].mxu0
  %2985 = vmatprep.mubr.bf16.mxu0 0
  %2986 = vmatmul.mubr.bf16.gmra.mrb[0].mxu0 %v1832
  %v2987 = vpop.f32.mrb[0].mxu0
  %v2988 = vadd.f32 0.0, %v2987
  %v2989 = vpop.f32.mrb[0].mxu0
  %v2990 = vpop.f32.mrb[0].mxu0
  %v2991 = vadd.f32 0.0, %v2990
  %v2992 = vpop.f32.mrb[0].mxu0
  %2993 = vmatprep.mubr.bf16.mxu0 0
  %2994 = vmatmul.mubr.bf16.gmra.mrb[0].mxu0 %v1835
  %v2995 = vpop.f32.mrb[0].mxu0
  %v2996 = vadd.f32 0.0, %v2995
  %v2997 = vpop.f32.mrb[0].mxu0
  %v2998 = vpop.f32.mrb[0].mxu0
  %v2999 = vadd.f32 0.0, %v2998
  %v3000 = vpop.f32.mrb[0].mxu0
  %3001 = vmatprep.mubr.bf16.mxu0 0
  %3002 = vmatmul.mubr.bf16.gmra.mrb[0].mxu0 %v1838
  %v3003 = vpop.f32.mrb[0].mxu0
  %v3004 = vadd.f32 0.0, %v3003
  %v3005 = vpop.f32.mrb[0].mxu0
  %v3006 = vpop.f32.mrb[0].mxu0
  %v3007 = vadd.f32 0.0, %v3006
  %v3008 = vpop.f32.mrb[0].mxu0
  %3009 = vmatprep.mubr.bf16.mxu0 0
  %3010 = vmatmul.mubr.bf16.gmra.mrb[0].mxu0 %v1841
  %v3011 = vpop.f32.mrb[0].mxu0
  %v3012 = vadd.f32 0.0, %v3011
  %v3013 = vpop.f32.mrb[0].mxu0
  %v3014 = vpop.f32.mrb[0].mxu0
  %v3015 = vadd.f32 0.0, %v3014
  %v3016 = vpop.f32.mrb[0].mxu0
  %3017 = vmatprep.mubr.bf16.mxu0 0
  %3018 = vmatmul.mubr.bf16.gmra.mrb[0].mxu0 %v1844
  %v3019 = vpop.f32.mrb[0].mxu0
  %v3020 = vadd.f32 0.0, %v3019
  %v3021 = vpop.f32.mrb[0].mxu0
  %v3022 = vpop.f32.mrb[0].mxu0
  %v3023 = vadd.f32 0.0, %v3022
  %v3024 = vpop.f32.mrb[0].mxu0
  %3025 = vmatprep.mubr.bf16.mxu0 0
  %3026 = vmatmul.mubr.bf16.gmra.mrb[0].mxu0 %v1847
  %v3027 = vpop.f32.mrb[0].mxu0
  %v3028 = vadd.f32 0.0, %v3027
  %v3029 = vpop.f32.mrb[0].mxu0
  %v3030 = vpop.f32.mrb[0].mxu0
  %v3031 = vadd.f32 0.0, %v3030
  %v3032 = vpop.f32.mrb[0].mxu0
  %3033 = vmatprep.mubr.bf16.mxu0 0
  %3034 = vmatmul.mubr.bf16.gmra.mrb[0].mxu0 %v1850
  %v3035 = vpop.f32.mrb[0].mxu0
  %v3036 = vadd.f32 0.0, %v3035
  %v3037 = vpop.f32.mrb[0].mxu0
  %v3038 = vpop.f32.mrb[0].mxu0
  %v3039 = vadd.f32 0.0, %v3038
  %v3040 = vpop.f32.mrb[0].mxu0
  %3041 = vmatprep.mubr.bf16.mxu0 0
  %3042 = vmatmul.mubr.bf16.gmra.mrb[0].mxu0 %v1853
  %v3043 = vpop.f32.mrb[0].mxu0
  %v3044 = vadd.f32 0.0, %v3043
  %v3045 = vpop.f32.mrb[0].mxu0
  %v3046 = vpop.f32.mrb[0].mxu0
  %v3047 = vadd.f32 0.0, %v3046
  %v3048 = vpop.f32.mrb[0].mxu0
  %3049 = vmatprep.mubr.bf16.mxu0 0
  %3050 = vmatmul.mubr.bf16.gmra.mrb[0].mxu0 %v1856
  %v3051 = vpop.f32.mrb[0].mxu0
  %v3052 = vadd.f32 0.0, %v3051
  %v3053 = vpop.f32.mrb[0].mxu0
  %v3054 = vpop.f32.mrb[0].mxu0
  %v3055 = vadd.f32 0.0, %v3054
  %v3056 = vpop.f32.mrb[0].mxu0
  %3057 = vmatprep.mubr.bf16.mxu0 0
  %3058 = vmatmul.mubr.bf16.gmra.mrb[0].mxu0 %v1859
  %v3059 = vpop.f32.mrb[0].mxu0
  %v3060 = vadd.f32 0.0, %v3059
  %v3061 = vpop.f32.mrb[0].mxu0
  %v3062 = vpop.f32.mrb[0].mxu0
  %v3063 = vadd.f32 0.0, %v3062
  %v3064 = vpop.f32.mrb[0].mxu0
  %3065 = vmatprep.mubr.bf16.mxu0 0
  %3066 = vmatmul.mubr.bf16.gmra.mrb[0].mxu0 %v1862
  %v3067 = vpop.f32.mrb[0].mxu0
  %v3068 = vadd.f32 0.0, %v3067
  %v3069 = vpop.f32.mrb[0].mxu0
  %v3070 = vpop.f32.mrb[0].mxu0
  %v3071 = vadd.f32 0.0, %v3070
  %v3072 = vpop.f32.mrb[0].mxu0
  %3073 = vmatprep.mubr.bf16.mxu0 0
  %3074 = vmatmul.mubr.bf16.gmra.mrb[0].mxu0 %v1865
  %v3075 = vpop.f32.mrb[0].mxu0
  %v3076 = vadd.f32 0.0, %v3075
  %v3077 = vpop.f32.mrb[0].mxu0
  %v3078 = vpop.f32.mrb[0].mxu0
  %v3079 = vadd.f32 0.0, %v3078
  %v3080 = vpop.f32.mrb[0].mxu0
  %3081 = vmatprep.mubr.bf16.mxu0 0
  %3082 = vmatmul.mubr.bf16.gmra.mrb[0].mxu0 %v1868
  %v3083 = vpop.f32.mrb[0].mxu0
  %v3084 = vadd.f32 0.0, %v3083
  %v3085 = vpop.f32.mrb[0].mxu0
  %v3086 = vpop.f32.mrb[0].mxu0
  %v3087 = vadd.f32 0.0, %v3086
  %v3088 = vpop.f32.mrb[0].mxu0
  %3089 = vmatprep.mubr.bf16.mxu0 0
  %3090 = vmatmul.mubr.bf16.gmra.mrb[0].mxu0 %v1871
  %v3091 = vpop.f32.mrb[0].mxu0
  %v3092 = vadd.f32 0.0, %v3091
  %v3093 = vpop.f32.mrb[0].mxu0
  %v3094 = vpop.f32.mrb[0].mxu0
  %v3095 = vadd.f32 0.0, %v3094
  %v3096 = vpop.f32.mrb[0].mxu0
  %3097 = vmatprep.mubr.bf16.mxu0 0
  %3098 = vmatmul.mubr.bf16.gmra.mrb[0].mxu0 %v1874
  %v3099 = vpop.f32.mrb[0].mxu0
  %v3100 = vadd.f32 0.0, %v3099
  %v3101 = vpop.f32.mrb[0].mxu0
  %v3102 = vpop.f32.mrb[0].mxu0
  %v3103 = vadd.f32 0.0, %v3102
  %v3104 = vpop.f32.mrb[0].mxu0
  %3105 = vmatprep.mubr.bf16.mxu0 0
  %3106 = vmatmul.mubr.bf16.gmra.mrb[0].mxu0 %v1877
  %v3107 = vpop.f32.mrb[0].mxu0
  %v3108 = vadd.f32 0.0, %v3107
  %v3109 = vpop.f32.mrb[0].mxu0
  %v3110 = vpop.f32.mrb[0].mxu0
  %v3111 = vadd.f32 0.0, %v3110
  %v3112 = vpop.f32.mrb[0].mxu0
  %3113 = vmatprep.mubr.bf16.mxu0 0
  %3114 = vmatmul.mubr.bf16.gmra.mrb[0].mxu0 %v1880
  %v3115 = vpop.f32.mrb[0].mxu0
  %v3116 = vadd.f32 0.0, %v3115
  %v3117 = vpop.f32.mrb[0].mxu0
  %v3118 = vpop.f32.mrb[0].mxu0
  %v3119 = vadd.f32 0.0, %v3118
  %v3120 = vpop.f32.mrb[0].mxu0
  %3121 = vmatprep.mubr.bf16.mxu0 0
  %3122 = vmatmul.mubr.bf16.gmra.mrb[0].mxu0 %v1883
  %v3123 = vpop.f32.mrb[0].mxu0
  %v3124 = vadd.f32 0.0, %v3123
  %v3125 = vpop.f32.mrb[0].mxu0
  %v3126 = vpop.f32.mrb[0].mxu0
  %v3127 = vadd.f32 0.0, %v3126
  %v3128 = vpop.f32.mrb[0].mxu0
  %3129 = vmatprep.mubr.bf16.mxu0 0
  %3130 = vmatmul.mubr.bf16.gmra.mrb[0].mxu0 %v1886
  %v3131 = vpop.f32.mrb[0].mxu0
  %v3132 = vadd.f32 0.0, %v3131
  %v3133 = vpop.f32.mrb[0].mxu0
  %v3134 = vpop.f32.mrb[0].mxu0
  %v3135 = vadd.f32 0.0, %v3134
  %v3136 = vpop.f32.mrb[0].mxu0
  %3137 = vmatprep.mubr.bf16.mxu0 0
  %3138 = vmatmul.mubr.bf16.gmra.mrb[0].mxu0 %v1889
  %v3139 = vpop.f32.mrb[0].mxu0
  %v3140 = vadd.f32 0.0, %v3139
  %v3141 = vpop.f32.mrb[0].mxu0
  %v3142 = vpop.f32.mrb[0].mxu0
  %v3143 = vadd.f32 0.0, %v3142
  %v3144 = vpop.f32.mrb[0].mxu0
  %3145 = vmatprep.mubr.bf16.mxu0 0
  %3146 = vmatmul.mubr.bf16.gmra.mrb[0].mxu0 %v1892
  %v3147 = vpop.f32.mrb[0].mxu0
  %v3148 = vadd.f32 0.0, %v3147
  %v3149 = vpop.f32.mrb[0].mxu0
  %v3150 = vpop.f32.mrb[0].mxu0
  %v3151 = vadd.f32 0.0, %v3150
  %v3152 = vpop.f32.mrb[0].mxu0
  %3153 = vmatprep.mubr.bf16.mxu0 0
  %3154 = vmatmul.mubr.bf16.gmra.mrb[0].mxu0 %v1895
  %v3155 = vpop.f32.mrb[0].mxu0
  %v3156 = vadd.f32 0.0, %v3155
  %v3157 = vpop.f32.mrb[0].mxu0
  %v3158 = vpop.f32.mrb[0].mxu0
  %v3159 = vadd.f32 0.0, %v3158
  %v3160 = vpop.f32.mrb[0].mxu0
  %3161 = vmatprep.mubr.bf16.mxu0 0
  %3162 = vmatmul.mubr.bf16.gmra.mrb[0].mxu0 %v1898
  %v3163 = vpop.f32.mrb[0].mxu0
  %v3164 = vadd.f32 0.0, %v3163
  %v3165 = vpop.f32.mrb[0].mxu0
  %v3166 = vpop.f32.mrb[0].mxu0
  %v3167 = vadd.f32 0.0, %v3166
  %v3168 = vpop.f32.mrb[0].mxu0
  %3169 = vmatprep.mubr.bf16.mxu0 0
  %3170 = vmatmul.mubr.bf16.gmra.mrb[0].mxu0 %v1901
  %v3171 = vpop.f32.mrb[0].mxu0
  %v3172 = vadd.f32 0.0, %v3171
  %v3173 = vpop.f32.mrb[0].mxu0
  %v3174 = vpop.f32.mrb[0].mxu0
  %v3175 = vadd.f32 0.0, %v3174
  %v3176 = vpop.f32.mrb[0].mxu0
  %3177 = vmatprep.mubr.bf16.mxu0 0
  %3178 = vmatmul.mubr.bf16.gmra.mrb[0].mxu0 %v1904
  %v3179 = vpop.f32.mrb[0].mxu0
  %v3180 = vadd.f32 0.0, %v3179
  %v3181 = vpop.f32.mrb[0].mxu0
  %v3182 = vpop.f32.mrb[0].mxu0
  %v3183 = vadd.f32 0.0, %v3182
  %v3184 = vpop.f32.mrb[0].mxu0
  %3185 = vmatprep.mubr.bf16.mxu0 0
  %3186 = vmatmul.mubr.bf16.gmra.mrb[0].mxu0 %v1907
  %v3187 = vpop.f32.mrb[0].mxu0
  %v3188 = vadd.f32 0.0, %v3187
  %v3189 = vpop.f32.mrb[0].mxu0
  %v3190 = vpop.f32.mrb[0].mxu0
  %v3191 = vadd.f32 0.0, %v3190
  %v3192 = vpop.f32.mrb[0].mxu0
  %3193 = vmatprep.mubr.bf16.mxu0 0
  %3194 = vmatmul.mubr.bf16.gmra.mrb[0].mxu0 %v1910
  %v3195 = vpop.f32.mrb[0].mxu0
  %v3196 = vadd.f32 0.0, %v3195
  %v3197 = vpop.f32.mrb[0].mxu0
  %v3198 = vpop.f32.mrb[0].mxu0
  %v3199 = vadd.f32 0.0, %v3198
  %v3200 = vpop.f32.mrb[0].mxu0
  %3201 = vmatprep.mubr.bf16.mxu0 0
  %3202 = vmatmul.mubr.bf16.gmra.mrb[0].mxu0 %v1913
  %v3203 = vpop.f32.mrb[0].mxu0
  %v3204 = vadd.f32 0.0, %v3203
  %v3205 = vpop.f32.mrb[0].mxu0
  %v3206 = vpop.f32.mrb[0].mxu0
  %v3207 = vadd.f32 0.0, %v3206
  %v3208 = vpop.f32.mrb[0].mxu0
  %3209 = vmatprep.mubr.bf16.mxu0 0
  %3210 = vmatmul.mubr.bf16.gmra.mrb[0].mxu0 %v1916
  %v3211 = vpop.f32.mrb[0].mxu0
  %v3212 = vadd.f32 0.0, %v3211
  %v3213 = vpop.f32.mrb[0].mxu0
  %v3214 = vpop.f32.mrb[0].mxu0
  %v3215 = vadd.f32 0.0, %v3214
  %v3216 = vpop.f32.mrb[0].mxu0
  %3217 = vmatprep.mubr.bf16.mxu0 0
  %3218 = vmatmul.mubr.bf16.gmra.mrb[0].mxu0 %v1919
  %v3219 = vpop.f32.mrb[0].mxu0
  %v3220 = vadd.f32 0.0, %v3219
  %v3221 = vpop.f32.mrb[0].mxu0
  %v3222 = vpop.f32.mrb[0].mxu0
  %v3223 = vadd.f32 0.0, %v3222
  %v3224 = vpop.f32.mrb[0].mxu0
  %3225 = vmatprep.mubr.bf16.mxu0 0
  %3226 = vmatmul.mubr.bf16.gmra.mrb[0].mxu0 %v1922
  %v3227 = vpop.f32.mrb[0].mxu0
  %v3228 = vadd.f32 0.0, %v3227
  %v3229 = vpop.f32.mrb[0].mxu0
  %v3230 = vpop.f32.mrb[0].mxu0
  %v3231 = vadd.f32 0.0, %v3230
  %v3232 = vpop.f32.mrb[0].mxu0
  %3233 = vmatprep.mubr.bf16.mxu0 0
  %3234 = vmatmul.mubr.bf16.gmra.mrb[0].mxu0 %v1925
  %v3235 = vpop.f32.mrb[0].mxu0
  %v3236 = vadd.f32 0.0, %v3235
  %v3237 = vpop.f32.mrb[0].mxu0
  %v3238 = vpop.f32.mrb[0].mxu0
  %v3239 = vadd.f32 0.0, %v3238
  %v3240 = vpop.f32.mrb[0].mxu0
  %3241 = vmatprep.mubr.bf16.mxu0 0
  %3242 = vmatmul.mubr.bf16.gmra.mrb[0].mxu0 %v1928
  %v3243 = vpop.f32.mrb[0].mxu0
  %v3244 = vadd.f32 0.0, %v3243
  %v3245 = vpop.f32.mrb[0].mxu0
  %v3246 = vpop.f32.mrb[0].mxu0
  %v3247 = vadd.f32 0.0, %v3246
  %v3248 = vpop.f32.mrb[0].mxu0
  %3249 = vmatprep.mubr.bf16.mxu0 0
  %3250 = vmatmul.mubr.bf16.gmra.mrb[0].mxu0 %v1931
  %v3251 = vpop.f32.mrb[0].mxu0
  %v3252 = vadd.f32 0.0, %v3251
  %v3253 = vpop.f32.mrb[0].mxu0
  %v3254 = vpop.f32.mrb[0].mxu0
  %v3255 = vadd.f32 0.0, %v3254
  %v3256 = vpop.f32.mrb[0].mxu0
  %3257 = vmatprep.mubr.bf16.mxu0 0
  %3258 = vmatmul.mubr.bf16.gmra.mrb[0].mxu0 %v1934
  %v3259 = vpop.f32.mrb[0].mxu0
  %v3260 = vadd.f32 0.0, %v3259
  %v3261 = vpop.f32.mrb[0].mxu0
  %v3262 = vpop.f32.mrb[0].mxu0
  %v3263 = vadd.f32 0.0, %v3262
  %v3264 = vpop.f32.mrb[0].mxu0
  %3265 = vmatprep.mubr.bf16.mxu0 0
  %3266 = vmatmul.mubr.bf16.gmra.mrb[0].mxu0 %v1937
  %v3267 = vpop.f32.mrb[0].mxu0
  %v3268 = vadd.f32 0.0, %v3267
  %v3269 = vpop.f32.mrb[0].mxu0
  %v3270 = vpop.f32.mrb[0].mxu0
  %v3271 = vadd.f32 0.0, %v3270
  %v3272 = vpop.f32.mrb[0].mxu0
  %3273 = vmatprep.mubr.bf16.mxu0 0
  %3274 = vmatmul.mubr.bf16.gmra.mrb[0].mxu0 %v1940
  %v3275 = vpop.f32.mrb[0].mxu0
  %v3276 = vadd.f32 0.0, %v3275
  %v3277 = vpop.f32.mrb[0].mxu0
  %v3278 = vpop.f32.mrb[0].mxu0
  %v3279 = vadd.f32 0.0, %v3278
  %v3280 = vpop.f32.mrb[0].mxu0
  %3281 = vmatprep.mubr.bf16.mxu0 0
  %3282 = vmatmul.mubr.bf16.gmra.mrb[0].mxu0 %v1943
  %v3283 = vpop.f32.mrb[0].mxu0
  %v3284 = vadd.f32 0.0, %v3283
  %v3285 = vpop.f32.mrb[0].mxu0
  %v3286 = vpop.f32.mrb[0].mxu0
  %v3287 = vadd.f32 0.0, %v3286
  %v3288 = vpop.f32.mrb[0].mxu0
  %3289 = vmatprep.mubr.bf16.mxu0 0
  %3290 = vmatmul.mubr.bf16.gmra.mrb[0].mxu0 %v1946
  %v3291 = vpop.f32.mrb[0].mxu0
  %v3292 = vadd.f32 0.0, %v3291
  %v3293 = vpop.f32.mrb[0].mxu0
  %v3294 = vpop.f32.mrb[0].mxu0
  %v3295 = vadd.f32 0.0, %v3294
  %v3296 = vpop.f32.mrb[0].mxu0
  %3297 = vmatprep.mubr.bf16.mxu0 0
  %3298 = vmatmul.mubr.bf16.gmra.mrb[0].mxu0 %v1949
  %v3299 = vpop.f32.mrb[0].mxu0
  %v3300 = vadd.f32 0.0, %v3299
  %v3301 = vpop.f32.mrb[0].mxu0
  %v3302 = vpop.f32.mrb[0].mxu0
  %v3303 = vadd.f32 0.0, %v3302
  %v3304 = vpop.f32.mrb[0].mxu0
  %3305 = vmatprep.mubr.bf16.mxu0 0
  %3306 = vmatmul.mubr.bf16.gmra.mrb[0].mxu0 %v1952
  %v3307 = vpop.f32.mrb[0].mxu0
  %v3308 = vadd.f32 0.0, %v3307
  %v3309 = vpop.f32.mrb[0].mxu0
  %v3310 = vpop.f32.mrb[0].mxu0
  %v3311 = vadd.f32 0.0, %v3310
  %v3312 = vpop.f32.mrb[0].mxu0
  %3313 = vmatprep.mubr.bf16.mxu0 0
  %3314 = vmatmul.mubr.bf16.gmra.mrb[0].mxu0 %v1955
  %v3315 = vpop.f32.mrb[0].mxu0
  %v3316 = vadd.f32 0.0, %v3315
  %v3317 = vpop.f32.mrb[0].mxu0
  %v3318 = vpop.f32.mrb[0].mxu0
  %v3319 = vadd.f32 0.0, %v3318
  %v3320 = vpop.f32.mrb[0].mxu0
  %3321 = vmatprep.mubr.bf16.mxu0 0
  %3322 = vmatmul.mubr.bf16.gmra.mrb[0].mxu0 %v1958
  %v3323 = vpop.f32.mrb[0].mxu0
  %v3324 = vadd.f32 0.0, %v3323
  %v3325 = vpop.f32.mrb[0].mxu0
  %v3326 = vpop.f32.mrb[0].mxu0
  %v3327 = vadd.f32 0.0, %v3326
  %v3328 = vpop.f32.mrb[0].mxu0
  %3329 = vmatprep.mubr.bf16.mxu0 0
  %3330 = vmatmul.mubr.bf16.gmra.mrb[0].mxu0 %v1961
  %v3331 = vpop.f32.mrb[0].mxu0
  %v3332 = vadd.f32 0.0, %v3331
  %v3333 = vpop.f32.mrb[0].mxu0
  %v3334 = vpop.f32.mrb[0].mxu0
  %v3335 = vadd.f32 0.0, %v3334
  %v3336 = vpop.f32.mrb[0].mxu0
  %3337 = vmatprep.mubr.bf16.mxu0 0
  %3338 = vmatmul.mubr.bf16.gmra.mrb[0].mxu0 %v1964
  %v3339 = vpop.f32.mrb[0].mxu0
  %v3340 = vadd.f32 0.0, %v3339
  %v3341 = vpop.f32.mrb[0].mxu0
  %v3342 = vpop.f32.mrb[0].mxu0
  %v3343 = vadd.f32 0.0, %v3342
  %v3344 = vpop.f32.mrb[0].mxu0
  %3345 = vmatprep.mubr.bf16.mxu0 0
  %3346 = vmatmul.mubr.bf16.gmra.mrb[0].mxu0 %v1967
  %v3347 = vpop.f32.mrb[0].mxu0
  %v3348 = vadd.f32 0.0, %v3347
  %v3349 = vpop.f32.mrb[0].mxu0
  %v3350 = vpop.f32.mrb[0].mxu0
  %v3351 = vadd.f32 0.0, %v3350
  %v3352 = vpop.f32.mrb[0].mxu0
  %3353 = vmatprep.mubr.bf16.mxu0 0
  %3354 = vmatmul.mubr.bf16.gmra.mrb[0].mxu0 %v1970
  %v3355 = vpop.f32.mrb[0].mxu0
  %v3356 = vadd.f32 0.0, %v3355
  %v3357 = vpop.f32.mrb[0].mxu0
  %v3358 = vpop.f32.mrb[0].mxu0
  %v3359 = vadd.f32 0.0, %v3358
  %v3360 = vpop.f32.mrb[0].mxu0
  %3361 = vmatprep.mubr.bf16.mxu0 0
  %3362 = vmatmul.mubr.bf16.gmra.mrb[0].mxu0 %v1973
  %v3363 = vpop.f32.mrb[0].mxu0
  %v3364 = vadd.f32 0.0, %v3363
  %v3365 = vpop.f32.mrb[0].mxu0
  %v3366 = vpop.f32.mrb[0].mxu0
  %v3367 = vadd.f32 0.0, %v3366
  %v3368 = vpop.f32.mrb[0].mxu0
  %3369 = vmatprep.mubr.bf16.mxu0 0
  %3370 = vmatmul.mubr.bf16.gmra.mrb[0].mxu0 %v1976
  %v3371 = vpop.f32.mrb[0].mxu0
  %v3372 = vadd.f32 0.0, %v3371
  %v3373 = vpop.f32.mrb[0].mxu0
  %v3374 = vpop.f32.mrb[0].mxu0
  %v3375 = vadd.f32 0.0, %v3374
  %v3376 = vpop.f32.mrb[0].mxu0
  %3377 = vmatprep.mubr.bf16.mxu0 0
  %3378 = vmatmul.mubr.bf16.gmra.mrb[0].mxu0 %v1979
  %v3379 = vpop.f32.mrb[0].mxu0
  %v3380 = vadd.f32 0.0, %v3379
  %v3381 = vpop.f32.mrb[0].mxu0
  %v3382 = vpop.f32.mrb[0].mxu0
  %v3383 = vadd.f32 0.0, %v3382
  %v3384 = vpop.f32.mrb[0].mxu0
  %3385 = vmatprep.mubr.bf16.mxu0 0
  %3386 = vmatmul.mubr.bf16.gmra.mrb[0].mxu0 %v1982
  %v3387 = vpop.f32.mrb[0].mxu0
  %v3388 = vadd.f32 0.0, %v3387
  %v3389 = vpop.f32.mrb[0].mxu0
  %v3390 = vpop.f32.mrb[0].mxu0
  %v3391 = vadd.f32 0.0, %v3390
  %v3392 = vpop.f32.mrb[0].mxu0
  %3393 = vmatprep.mubr.bf16.mxu0 0
  %3394 = vmatmul.mubr.bf16.gmra.mrb[0].mxu0 %v1985
  %v3395 = vpop.f32.mrb[0].mxu0
  %v3396 = vadd.f32 0.0, %v3395
  %v3397 = vpop.f32.mrb[0].mxu0
  %v3398 = vpop.f32.mrb[0].mxu0
  %v3399 = vadd.f32 0.0, %v3398
  %v3400 = vpop.f32.mrb[0].mxu0
  %3401 = vmatprep.mubr.bf16.mxu0 0
  %3402 = vmatmul.mubr.bf16.gmra.mrb[0].mxu0 %v1988
  %v3403 = vpop.f32.mrb[0].mxu0
  %v3404 = vadd.f32 0.0, %v3403
  %v3405 = vpop.f32.mrb[0].mxu0
  %v3406 = vpop.f32.mrb[0].mxu0
  %v3407 = vadd.f32 0.0, %v3406
  %v3408 = vpop.f32.mrb[0].mxu0
  %3409 = vmatprep.mubr.bf16.mxu0 0
  %3410 = vmatmul.mubr.bf16.gmra.mrb[0].mxu0 %v1991
  %v3411 = vpop.f32.mrb[0].mxu0
  %v3412 = vadd.f32 0.0, %v3411
  %v3413 = vpop.f32.mrb[0].mxu0
  %v3414 = vpop.f32.mrb[0].mxu0
  %v3415 = vadd.f32 0.0, %v3414
  %v3416 = vpop.f32.mrb[0].mxu0
  %3417 = vmatprep.mubr.bf16.mxu0 0
  %3418 = vmatmul.mubr.bf16.gmra.mrb[0].mxu0 %v1994
  %v3419 = vpop.f32.mrb[0].mxu0
  %v3420 = vadd.f32 0.0, %v3419
  %v3421 = vpop.f32.mrb[0].mxu0
  %v3422 = vpop.f32.mrb[0].mxu0
  %v3423 = vadd.f32 0.0, %v3422
  %v3424 = vpop.f32.mrb[0].mxu0
  %3425 = vmatprep.mubr.bf16.mxu0 0
  %3426 = vmatmul.mubr.bf16.gmra.mrb[0].mxu0 %v1997
  %v3427 = vpop.f32.mrb[0].mxu0
  %v3428 = vadd.f32 0.0, %v3427
  %v3429 = vpop.f32.mrb[0].mxu0
  %v3430 = vpop.f32.mrb[0].mxu0
  %v3431 = vadd.f32 0.0, %v3430
  %v3432 = vpop.f32.mrb[0].mxu0
  %3433 = vmatprep.mubr.bf16.mxu0 0
  %3434 = vmatmul.mubr.bf16.gmra.mrb[0].mxu0 %v2000
  %v3435 = vpop.f32.mrb[0].mxu0
  %v3436 = vadd.f32 0.0, %v3435
  %v3437 = vpop.f32.mrb[0].mxu0
  %v3438 = vpop.f32.mrb[0].mxu0
  %v3439 = vadd.f32 0.0, %v3438
  %v3440 = vpop.f32.mrb[0].mxu0
  %3441 = vmatprep.mubr.bf16.mxu0 0
  %3442 = vmatmul.mubr.bf16.gmra.mrb[0].mxu0 %v2003
  %v3443 = vpop.f32.mrb[0].mxu0
  %v3444 = vadd.f32 0.0, %v3443
  %v3445 = vpop.f32.mrb[0].mxu0
  %v3446 = vpop.f32.mrb[0].mxu0
  %v3447 = vadd.f32 0.0, %v3446
  %v3448 = vpop.f32.mrb[0].mxu0
  %3449 = vmatprep.mubr.bf16.mxu0 0
  %3450 = vmatmul.mubr.bf16.gmra.mrb[0].mxu0 %v2006
  %v3451 = vpop.f32.mrb[0].mxu0
  %v3452 = vadd.f32 0.0, %v3451
  %v3453 = vpop.f32.mrb[0].mxu0
  %v3454 = vpop.f32.mrb[0].mxu0
  %v3455 = vadd.f32 0.0, %v3454
  %v3456 = vpop.f32.mrb[0].mxu0
  %3457 = vmatprep.mubr.bf16.mxu0 0
  %3458 = vmatmul.mubr.bf16.gmra.mrb[0].mxu0 %v2009
  %v3459 = vpop.f32.mrb[0].mxu0
  %v3460 = vadd.f32 0.0, %v3459
  %v3461 = vpop.f32.mrb[0].mxu0
  %v3462 = vpop.f32.mrb[0].mxu0
  %v3463 = vadd.f32 0.0, %v3462
  %v3464 = vpop.f32.mrb[0].mxu0
  %3465 = vmatprep.mubr.bf16.mxu0 0
  %3466 = vmatmul.mubr.bf16.gmra.mrb[0].mxu0 %v2012
  %v3467 = vpop.f32.mrb[0].mxu0
  %v3468 = vadd.f32 0.0, %v3467
  %v3469 = vpop.f32.mrb[0].mxu0
  %v3470 = vpop.f32.mrb[0].mxu0
  %v3471 = vadd.f32 0.0, %v3470
  %v3472 = vpop.f32.mrb[0].mxu0
  %3473 = vmatprep.mubr.bf16.mxu0 0
  %3474 = vmatmul.mubr.bf16.gmra.mrb[0].mxu0 %v2015
  %v3475 = vpop.f32.mrb[0].mxu0
  %v3476 = vadd.f32 0.0, %v3475
  %v3477 = vpop.f32.mrb[0].mxu0
  %v3478 = vpop.f32.mrb[0].mxu0
  %v3479 = vadd.f32 0.0, %v3478
  %v3480 = vpop.f32.mrb[0].mxu0
  %3481 = vmatprep.mubr.bf16.mxu0 0
  %3482 = vmatmul.mubr.bf16.gmra.mrb[0].mxu0 %v2018
  %v3483 = vpop.f32.mrb[0].mxu0
  %v3484 = vadd.f32 0.0, %v3483
  %v3485 = vpop.f32.mrb[0].mxu0
  %v3486 = vpop.f32.mrb[0].mxu0
  %v3487 = vadd.f32 0.0, %v3486
  %v3488 = vpop.f32.mrb[0].mxu0
  %3489 = vmatprep.mubr.bf16.mxu0 0
  %3490 = vmatmul.mubr.bf16.gmra.mrb[0].mxu0 %v2021
  %v3491 = vpop.f32.mrb[0].mxu0
  %v3492 = vadd.f32 0.0, %v3491
  %v3493 = vpop.f32.mrb[0].mxu0
  %v3494 = vpop.f32.mrb[0].mxu0
  %v3495 = vadd.f32 0.0, %v3494
  %v3496 = vpop.f32.mrb[0].mxu0
  %3497 = vmatprep.mubr.bf16.mxu0 0
  %3498 = vmatmul.mubr.bf16.gmra.mrb[0].mxu0 %v2024
  %v3499 = vpop.f32.mrb[0].mxu0
  %v3500 = vadd.f32 0.0, %v3499
  %v3501 = vpop.f32.mrb[0].mxu0
  %v3502 = vpop.f32.mrb[0].mxu0
  %v3503 = vadd.f32 0.0, %v3502
  %v3504 = vpop.f32.mrb[0].mxu0
  %3505 = vmatprep.mubr.bf16.mxu0 0
  %3506 = vmatmul.mubr.bf16.gmra.mrb[0].mxu0 %v2027
  %v3507 = vpop.f32.mrb[0].mxu0
  %v3508 = vadd.f32 0.0, %v3507
  %v3509 = vpop.f32.mrb[0].mxu0
  %v3510 = vpop.f32.mrb[0].mxu0
  %v3511 = vadd.f32 0.0, %v3510
  %v3512 = vpop.f32.mrb[0].mxu0
  %3513 = vmatprep.mubr.bf16.mxu0 0
  %3514 = vmatmul.mubr.bf16.gmra.mrb[0].mxu0 %v2030
  %v3515 = vpop.f32.mrb[0].mxu0
  %v3516 = vadd.f32 0.0, %v3515
  %v3517 = vpop.f32.mrb[0].mxu0
  %v3518 = vpop.f32.mrb[0].mxu0
  %v3519 = vadd.f32 0.0, %v3518
  %v3520 = vpop.f32.mrb[0].mxu0
  %3521 = vmatprep.mubr.bf16.mxu0 0
  %3522 = vmatmul.mubr.bf16.gmra.mrb[0].mxu0 %v2033
  %v3523 = vpop.f32.mrb[0].mxu0
  %v3524 = vadd.f32 0.0, %v3523
  %v3525 = vpop.f32.mrb[0].mxu0
  %v3526 = vpop.f32.mrb[0].mxu0
  %v3527 = vadd.f32 0.0, %v3526
  %v3528 = vpop.f32.mrb[0].mxu0
  %3529 = vmatprep.mubr.bf16.mxu0 0
  %3530 = vmatmul.mubr.bf16.gmra.mrb[0].mxu0 %v2036
  %v3531 = vpop.f32.mrb[0].mxu0
  %v3532 = vadd.f32 0.0, %v3531
  %v3533 = vpop.f32.mrb[0].mxu0
  %v3534 = vpop.f32.mrb[0].mxu0
  %v3535 = vadd.f32 0.0, %v3534
  %v3536 = vpop.f32.mrb[0].mxu0
  %3537 = vmatprep.mubr.bf16.mxu0 0
  %3538 = vmatmul.mubr.bf16.gmra.mrb[0].mxu0 %v2039
  %v3539 = vpop.f32.mrb[0].mxu0
  %v3540 = vadd.f32 0.0, %v3539
  %v3541 = vpop.f32.mrb[0].mxu0
  %v3542 = vpop.f32.mrb[0].mxu0
  %v3543 = vadd.f32 0.0, %v3542
  %v3544 = vpop.f32.mrb[0].mxu0
  %3545 = vmatprep.mubr.bf16.mxu0 0
  %3546 = vmatmul.mubr.bf16.gmra.mrb[0].mxu0 %v2042
  %v3547 = vpop.f32.mrb[0].mxu0
  %v3548 = vadd.f32 0.0, %v3547
  %v3549 = vpop.f32.mrb[0].mxu0
  %v3550 = vpop.f32.mrb[0].mxu0
  %v3551 = vadd.f32 0.0, %v3550
  %v3552 = vpop.f32.mrb[0].mxu0
  %3553 = vmatprep.mubr.bf16.mxu0 0
  %3554 = vmatmul.mubr.bf16.gmra.mrb[0].mxu0 %v2045
  %v3555 = vpop.f32.mrb[0].mxu0
  %v3556 = vadd.f32 0.0, %v3555
  %v3557 = vpop.f32.mrb[0].mxu0
  %v3558 = vpop.f32.mrb[0].mxu0
  %v3559 = vadd.f32 0.0, %v3558
  %v3560 = vpop.f32.mrb[0].mxu0
  %3561 = vmatprep.mubr.bf16.mxu0 0
  %3562 = vmatmul.mubr.bf16.gmra.mrb[0].mxu0 %v2048
  %v3563 = vpop.f32.mrb[0].mxu0
  %v3564 = vadd.f32 0.0, %v3563
  %v3565 = vpop.f32.mrb[0].mxu0
  %v3566 = vpop.f32.mrb[0].mxu0
  %v3567 = vadd.f32 0.0, %v3566
  %v3568 = vpop.f32.mrb[0].mxu0
  %3569 = vmatprep.mubr.bf16.mxu0 0
  %3570 = vmatmul.mubr.bf16.gmra.mrb[0].mxu0 %v2051
  %v3571 = vpop.f32.mrb[0].mxu0
  %v3572 = vadd.f32 0.0, %v3571
  %v3573 = vpop.f32.mrb[0].mxu0
  %v3574 = vpop.f32.mrb[0].mxu0
  %v3575 = vadd.f32 0.0, %v3574
  %v3576 = vpop.f32.mrb[0].mxu0
  %3577 = vmatprep.mubr.bf16.mxu0 0
  %3578 = vmatmul.mubr.bf16.gmra.mrb[0].mxu0 %v2054
  %v3579 = vpop.f32.mrb[0].mxu0
  %v3580 = vadd.f32 0.0, %v3579
  %v3581 = vpop.f32.mrb[0].mxu0
  %v3582 = vpop.f32.mrb[0].mxu0
  %v3583 = vadd.f32 0.0, %v3582
  %v3584 = vpop.f32.mrb[0].mxu0
  %3585 = vmatprep.mubr.bf16.mxu0 0
  %3586 = vmatmul.mubr.bf16.gmra.mrb[0].mxu0 %v2057
  %v3587 = vpop.f32.mrb[0].mxu0
  %v3588 = vadd.f32 0.0, %v3587
  %v3589 = vpop.f32.mrb[0].mxu0
  %v3590 = vpop.f32.mrb[0].mxu0
  %v3591 = vadd.f32 0.0, %v3590
  %v3592 = vpop.f32.mrb[0].mxu0
  %3593 = vmatprep.mubr.bf16.mxu0 0
  %3594 = vmatmul.mubr.bf16.gmra.mrb[0].mxu0 %v2060
  %v3595 = vpop.f32.mrb[0].mxu0
  %v3596 = vadd.f32 0.0, %v3595
  %v3597 = vpop.f32.mrb[0].mxu0
  %v3598 = vpop.f32.mrb[0].mxu0
  %v3599 = vadd.f32 0.0, %v3598
  %v3600 = vpop.f32.mrb[0].mxu0
  %3601 = vmatprep.mubr.bf16.mxu0 0
  %3602 = vmatmul.mubr.bf16.gmra.mrb[0].mxu0 %v2063
  %v3603 = vpop.f32.mrb[0].mxu0
  %v3604 = vadd.f32 0.0, %v3603
  %v3605 = vpop.f32.mrb[0].mxu0
  %v3606 = vpop.f32.mrb[0].mxu0
  %v3607 = vadd.f32 0.0, %v3606
  %v3608 = vpop.f32.mrb[0].mxu0
  %3609 = vmatprep.mubr.bf16.mxu0 0
  %3610 = vmatmul.mubr.bf16.gmra.mrb[0].mxu0 %v2066
  %v3611 = vpop.f32.mrb[0].mxu0
  %v3612 = vadd.f32 0.0, %v3611
  %v3613 = vpop.f32.mrb[0].mxu0
  %v3614 = vpop.f32.mrb[0].mxu0
  %v3615 = vadd.f32 0.0, %v3614
  %v3616 = vpop.f32.mrb[0].mxu0
  %3617 = vmatprep.mubr.bf16.mxu0 0
  %3618 = vmatmul.mubr.bf16.gmra.mrb[0].mxu0 %v2069
  %v3619 = vpop.f32.mrb[0].mxu0
  %v3620 = vadd.f32 0.0, %v3619
  %v3621 = vpop.f32.mrb[0].mxu0
  %v3622 = vpop.f32.mrb[0].mxu0
  %v3623 = vadd.f32 0.0, %v3622
  %v3624 = vpop.f32.mrb[0].mxu0
  %3625 = vmatprep.mubr.bf16.mxu0 0
  %3626 = vmatmul.mubr.bf16.gmra.mrb[0].mxu0 %v2072
  %v3627 = vpop.f32.mrb[0].mxu0
  %v3628 = vadd.f32 0.0, %v3627
  %v3629 = vpop.f32.mrb[0].mxu0
  %v3630 = vpop.f32.mrb[0].mxu0
  %v3631 = vadd.f32 0.0, %v3630
  %v3632 = vpop.f32.mrb[0].mxu0
  %3633 = vmatprep.mubr.bf16.mxu0 0
  %3634 = vmatmul.mubr.bf16.gmra.mrb[0].mxu0 %v2075
  %v3635 = vpop.f32.mrb[0].mxu0
  %v3636 = vadd.f32 0.0, %v3635
  %v3637 = vpop.f32.mrb[0].mxu0
  %v3638 = vpop.f32.mrb[0].mxu0
  %v3639 = vadd.f32 0.0, %v3638
  %v3640 = vpop.f32.mrb[0].mxu0
  %3641 = vmatprep.mubr.bf16.mxu0 0
  %3642 = vmatmul.mubr.bf16.gmra.mrb[0].mxu0 %v2078
  %v3643 = vpop.f32.mrb[0].mxu0
  %v3644 = vadd.f32 0.0, %v3643
  %v3645 = vpop.f32.mrb[0].mxu0
  %v3646 = vpop.f32.mrb[0].mxu0
  %v3647 = vadd.f32 0.0, %v3646
  %v3648 = vpop.f32.mrb[0].mxu0
  %3649 = vmatprep.mubr.bf16.mxu0 0
  %3650 = vmatmul.mubr.bf16.gmra.mrb[0].mxu0 %v2081
  %v3651 = vpop.f32.mrb[0].mxu0
  %v3652 = vadd.f32 0.0, %v3651
  %v3653 = vpop.f32.mrb[0].mxu0
  %v3654 = vpop.f32.mrb[0].mxu0
  %v3655 = vadd.f32 0.0, %v3654
  %v3656 = vpop.f32.mrb[0].mxu0
  %3657 = vmatprep.mubr.bf16.mxu0 0
  %3658 = vmatmul.mubr.bf16.gmra.mrb[0].mxu0 %v2084
  %v3659 = vpop.f32.mrb[0].mxu0
  %v3660 = vadd.f32 0.0, %v3659
  %v3661 = vpop.f32.mrb[0].mxu0
  %v3662 = vpop.f32.mrb[0].mxu0
  %v3663 = vadd.f32 0.0, %v3662
  %v3664 = vpop.f32.mrb[0].mxu0
  %3665 = vmatprep.mubr.bf16.mxu0 0
  %3666 = vmatmul.mubr.bf16.gmra.mrb[0].mxu0 %v2087
  %v3667 = vpop.f32.mrb[0].mxu0
  %v3668 = vadd.f32 0.0, %v3667
  %v3669 = vpop.f32.mrb[0].mxu0
  %v3670 = vpop.f32.mrb[0].mxu0
  %v3671 = vadd.f32 0.0, %v3670
  %v3672 = vpop.f32.mrb[0].mxu0
  %3673 = vmatprep.mubr.bf16.mxu0 0
  %3674 = vmatmul.mubr.bf16.gmra.mrb[0].mxu0 %v2090
  %v3675 = vpop.f32.mrb[0].mxu0
  %v3676 = vadd.f32 0.0, %v3675
  %v3677 = vpop.f32.mrb[0].mxu0
  %v3678 = vpop.f32.mrb[0].mxu0
  %v3679 = vadd.f32 0.0, %v3678
  %v3680 = vpop.f32.mrb[0].mxu0
  %3681 = vmatprep.mubr.bf16.mxu0 0
  %3682 = vmatmul.mubr.bf16.gmra.mrb[0].mxu0 %v2093
  %v3683 = vpop.f32.mrb[0].mxu0
  %v3684 = vadd.f32 0.0, %v3683
  %v3685 = vpop.f32.mrb[0].mxu0
  %v3686 = vpop.f32.mrb[0].mxu0
  %v3687 = vadd.f32 0.0, %v3686
  %v3688 = vpop.f32.mrb[0].mxu0
  %3689 = vmatprep.mubr.bf16.mxu0 0
  %3690 = vmatmul.mubr.bf16.gmra.mrb[0].mxu0 %v2096
  %v3691 = vpop.f32.mrb[0].mxu0
  %v3692 = vadd.f32 0.0, %v3691
  %v3693 = vpop.f32.mrb[0].mxu0
  %v3694 = vpop.f32.mrb[0].mxu0
  %v3695 = vadd.f32 0.0, %v3694
  %v3696 = vpop.f32.mrb[0].mxu0
  %3697 = vmatprep.mubr.bf16.mxu0 0
  %3698 = vmatmul.mubr.bf16.gmra.mrb[0].mxu0 %v2099
  %v3699 = vpop.f32.mrb[0].mxu0
  %v3700 = vadd.f32 0.0, %v3699
  %v3701 = vpop.f32.mrb[0].mxu0
  %v3702 = vpop.f32.mrb[0].mxu0
  %v3703 = vadd.f32 0.0, %v3702
  %v3704 = vpop.f32.mrb[0].mxu0
  %3705 = vmatprep.mubr.bf16.mxu0 0
  %3706 = vmatmul.mubr.bf16.gmra.mrb[0].mxu0 %v2102
  %v3707 = vpop.f32.mrb[0].mxu0
  %v3708 = vadd.f32 0.0, %v3707
  %v3709 = vpop.f32.mrb[0].mxu0
  %v3710 = vpop.f32.mrb[0].mxu0
  %v3711 = vadd.f32 0.0, %v3710
  %v3712 = vpop.f32.mrb[0].mxu0
  %3713 = vmatprep.mubr.bf16.mxu0 0
  %3714 = vmatmul.mubr.bf16.gmra.mrb[0].mxu0 %v2105
  %v3715 = vpop.f32.mrb[0].mxu0
  %v3716 = vadd.f32 0.0, %v3715
  %v3717 = vpop.f32.mrb[0].mxu0
  %v3718 = vpop.f32.mrb[0].mxu0
  %v3719 = vadd.f32 0.0, %v3718
  %v3720 = vpop.f32.mrb[0].mxu0
  %3721 = vmatprep.mubr.bf16.mxu0 0
  %3722 = vmatmul.mubr.bf16.gmra.mrb[0].mxu0 %v2108
  %v3723 = vpop.f32.mrb[0].mxu0
  %v3724 = vadd.f32 0.0, %v3723
  %v3725 = vpop.f32.mrb[0].mxu0
  %v3726 = vpop.f32.mrb[0].mxu0
  %v3727 = vadd.f32 0.0, %v3726
  %v3728 = vpop.f32.mrb[0].mxu0
  %3729 = vmatprep.mubr.bf16.mxu0 0
  %3730 = vmatmul.mubr.bf16.gmra.mrb[0].mxu0 %v2111
  %v3731 = vpop.f32.mrb[0].mxu0
  %v3732 = vadd.f32 0.0, %v3731
  %v3733 = vpop.f32.mrb[0].mxu0
  %v3734 = vpop.f32.mrb[0].mxu0
  %v3735 = vadd.f32 0.0, %v3734
  %v3736 = vpop.f32.mrb[0].mxu0
  %3737 = vmatprep.mubr.bf16.mxu0 0
  %3738 = vmatmul.mubr.bf16.gmra.mrb[0].mxu0 %v2114
  %v3739 = vpop.f32.mrb[0].mxu0
  %v3740 = vadd.f32 0.0, %v3739
  %v3741 = vpop.f32.mrb[0].mxu0
  %v3742 = vpop.f32.mrb[0].mxu0
  %v3743 = vadd.f32 0.0, %v3742
  %v3744 = vpop.f32.mrb[0].mxu0
  %3745 = vmatprep.mubr.bf16.mxu0 0
  %3746 = vmatmul.mubr.bf16.gmra.mrb[0].mxu0 %v2117
  %v3747 = vpop.f32.mrb[0].mxu0
  %v3748 = vadd.f32 0.0, %v3747
  %v3749 = vpop.f32.mrb[0].mxu0
  %v3750 = vpop.f32.mrb[0].mxu0
  %v3751 = vadd.f32 0.0, %v3750
  %v3752 = vpop.f32.mrb[0].mxu0
  %3753 = vmatprep.mubr.bf16.mxu0 0
  %3754 = vmatmul.mubr.bf16.gmra.mrb[0].mxu0 %v2120
  %v3755 = vpop.f32.mrb[0].mxu0
  %v3756 = vadd.f32 0.0, %v3755
  %v3757 = vpop.f32.mrb[0].mxu0
  %v3758 = vpop.f32.mrb[0].mxu0
  %v3759 = vadd.f32 0.0, %v3758
  %v3760 = vpop.f32.mrb[0].mxu0
  %3761 = vmatprep.mubr.bf16.mxu0 0
  %3762 = vmatmul.mubr.bf16.gmra.mrb[0].mxu0 %v2123
  %v3763 = vpop.f32.mrb[0].mxu0
  %v3764 = vadd.f32 0.0, %v3763
  %v3765 = vpop.f32.mrb[0].mxu0
  %v3766 = vpop.f32.mrb[0].mxu0
  %v3767 = vadd.f32 0.0, %v3766
  %v3768 = vpop.f32.mrb[0].mxu0
  %3769 = vmatprep.mubr.bf16.mxu0 0
  %3770 = vmatmul.mubr.bf16.gmra.mrb[0].mxu0 %v2126
  %v3771 = vpop.f32.mrb[0].mxu0
  %v3772 = vadd.f32 0.0, %v3771
  %v3773 = vpop.f32.mrb[0].mxu0
  %v3774 = vpop.f32.mrb[0].mxu0
  %v3775 = vadd.f32 0.0, %v3774
  %v3776 = vpop.f32.mrb[0].mxu0
  %3777 = vmatprep.mubr.bf16.mxu0 0
  %3778 = vmatmul.mubr.bf16.gmra.mrb[0].mxu0 %v2129
  %v3779 = vpop.f32.mrb[0].mxu0
  %v3780 = vadd.f32 0.0, %v3779
  %v3781 = vpop.f32.mrb[0].mxu0
  %v3782 = vpop.f32.mrb[0].mxu0
  %v3783 = vadd.f32 0.0, %v3782
  %v3784 = vpop.f32.mrb[0].mxu0
  %3785 = vmatprep.mubr.bf16.mxu0 0
  %3786 = vmatmul.mubr.bf16.gmra.mrb[0].mxu0 %v2132
  %v3787 = vpop.f32.mrb[0].mxu0
  %v3788 = vadd.f32 0.0, %v3787
  %v3789 = vpop.f32.mrb[0].mxu0
  %v3790 = vpop.f32.mrb[0].mxu0
  %v3791 = vadd.f32 0.0, %v3790
  %v3792 = vpop.f32.mrb[0].mxu0
  %3793 = vmatprep.mubr.bf16.mxu0 0
  %3794 = vmatmul.mubr.bf16.gmra.mrb[0].mxu0 %v2135
  %v3795 = vpop.f32.mrb[0].mxu0
  %v3796 = vadd.f32 0.0, %v3795
  %v3797 = vpop.f32.mrb[0].mxu0
  %v3798 = vpop.f32.mrb[0].mxu0
  %v3799 = vadd.f32 0.0, %v3798
  %v3800 = vpop.f32.mrb[0].mxu0
  %3801 = vmatprep.mubr.bf16.mxu0 0
  %3802 = vmatmul.mubr.bf16.gmra.mrb[0].mxu0 %v2138
  %v3803 = vpop.f32.mrb[0].mxu0
  %v3804 = vadd.f32 0.0, %v3803
  %v3805 = vpop.f32.mrb[0].mxu0
  %v3806 = vpop.f32.mrb[0].mxu0
  %v3807 = vadd.f32 0.0, %v3806
  %v3808 = vpop.f32.mrb[0].mxu0
  %3809 = vmatprep.mubr.bf16.mxu0 0
  %3810 = vmatmul.mubr.bf16.gmra.mrb[0].mxu0 %v2141
  %v3811 = vpop.f32.mrb[0].mxu0
  %v3812 = vadd.f32 0.0, %v3811
  %v3813 = vpop.f32.mrb[0].mxu0
  %v3814 = vpop.f32.mrb[0].mxu0
  %v3815 = vadd.f32 0.0, %v3814
  %v3816 = vpop.f32.mrb[0].mxu0
  %3817 = vmatprep.mubr.bf16.mxu0 0
  %3818 = vmatmul.mubr.bf16.gmra.mrb[0].mxu0 %v2144
  %v3819 = vpop.f32.mrb[0].mxu0
  %v3820 = vadd.f32 0.0, %v3819
  %v3821 = vpop.f32.mrb[0].mxu0
  %v3822 = vpop.f32.mrb[0].mxu0
  %v3823 = vadd.f32 0.0, %v3822
  %v3824 = vpop.f32.mrb[0].mxu0
  %3825 = vmatprep.mubr.bf16.mxu0 0
  %3826 = vmatmul.mubr.bf16.gmra.mrb[0].mxu0 %v2147
  %v3827 = vpop.f32.mrb[0].mxu0
  %v3828 = vadd.f32 0.0, %v3827
  %v3829 = vpop.f32.mrb[0].mxu0
  %v3830 = vpop.f32.mrb[0].mxu0
  %v3831 = vadd.f32 0.0, %v3830
  %v3832 = vpop.f32.mrb[0].mxu0
  %3833 = vmatprep.mubr.bf16.mxu0 0
  %3834 = vmatmul.mubr.bf16.gmra.mrb[0].mxu0 %v2150
  %v3835 = vpop.f32.mrb[0].mxu0
  %v3836 = vadd.f32 0.0, %v3835
  %v3837 = vpop.f32.mrb[0].mxu0
  %v3838 = vpop.f32.mrb[0].mxu0
  %v3839 = vadd.f32 0.0, %v3838
  %v3840 = vpop.f32.mrb[0].mxu0
  %3841 = vmatprep.mubr.bf16.mxu0 0
  %3842 = vmatmul.mubr.bf16.gmra.mrb[0].mxu0 %v2153
  %v3843 = vpop.f32.mrb[0].mxu0
  %v3844 = vadd.f32 0.0, %v3843
  %v3845 = vpop.f32.mrb[0].mxu0
  %v3846 = vpop.f32.mrb[0].mxu0
  %v3847 = vadd.f32 0.0, %v3846
  %v3848 = vpop.f32.mrb[0].mxu0
  %3849 = vmatprep.mubr.bf16.mxu0 0
  %3850 = vmatmul.mubr.bf16.gmra.mrb[0].mxu0 %v2156
  %v3851 = vpop.f32.mrb[0].mxu0
  %v3852 = vadd.f32 0.0, %v3851
  %v3853 = vpop.f32.mrb[0].mxu0
  %v3854 = vpop.f32.mrb[0].mxu0
  %v3855 = vadd.f32 0.0, %v3854
  %v3856 = vpop.f32.mrb[0].mxu0
  %3857 = vmatprep.mubr.bf16.mxu0 0
  %3858 = vmatmul.mubr.bf16.gmra.mrb[0].mxu0 %v2159
  %v3859 = vpop.f32.mrb[0].mxu0
  %v3860 = vadd.f32 0.0, %v3859
  %v3861 = vpop.f32.mrb[0].mxu0
  %v3862 = vpop.f32.mrb[0].mxu0
  %v3863 = vadd.f32 0.0, %v3862
  %v3864 = vpop.f32.mrb[0].mxu0
  %3865 = vmatprep.mubr.bf16.mxu0 0
  %3866 = vmatmul.mubr.bf16.gmra.mrb[0].mxu0 %v2162
  %v3867 = vpop.f32.mrb[0].mxu0
  %v3868 = vadd.f32 0.0, %v3867
  %v3869 = vpop.f32.mrb[0].mxu0
  %v3870 = vpop.f32.mrb[0].mxu0
  %v3871 = vadd.f32 0.0, %v3870
  %v3872 = vpop.f32.mrb[0].mxu0
  %3873 = vmatprep.mubr.bf16.mxu0 0
  %3874 = vmatmul.mubr.bf16.gmra.mrb[0].mxu0 %v2165
  %v3875 = vpop.f32.mrb[0].mxu0
  %v3876 = vadd.f32 0.0, %v3875
  %v3877 = vpop.f32.mrb[0].mxu0
  %v3878 = vpop.f32.mrb[0].mxu0
  %v3879 = vadd.f32 0.0, %v3878
  %v3880 = vpop.f32.mrb[0].mxu0
  %3881 = vmatprep.mubr.bf16.mxu0 0
  %3882 = vmatmul.mubr.bf16.gmra.mrb[0].mxu0 %v2168
  %v3883 = vpop.f32.mrb[0].mxu0
  %v3884 = vadd.f32 0.0, %v3883
  %v3885 = vpop.f32.mrb[0].mxu0
  %v3886 = vpop.f32.mrb[0].mxu0
  %v3887 = vadd.f32 0.0, %v3886
  %v3888 = vpop.f32.mrb[0].mxu0
  %3889 = vmatprep.mubr.bf16.mxu0 0
  %3890 = vmatmul.mubr.bf16.gmra.mrb[0].mxu0 %v2171
  %v3891 = vpop.f32.mrb[0].mxu0
  %v3892 = vadd.f32 0.0, %v3891
  %v3893 = vpop.f32.mrb[0].mxu0
  %v3894 = vpop.f32.mrb[0].mxu0
  %v3895 = vadd.f32 0.0, %v3894
  %v3896 = vpop.f32.mrb[0].mxu0
  %3897 = vmatprep.mubr.bf16.mxu0 0
  %3898 = vmatmul.mubr.bf16.gmra.mrb[0].mxu0 %v2174
  %v3899 = vpop.f32.mrb[0].mxu0
  %v3900 = vadd.f32 0.0, %v3899
  %v3901 = vpop.f32.mrb[0].mxu0
  %v3902 = vpop.f32.mrb[0].mxu0
  %v3903 = vadd.f32 0.0, %v3902
  %v3904 = vpop.f32.mrb[0].mxu0
  %3905 = vmatprep.mubr.bf16.mxu0 0
  %3906 = vmatmul.mubr.bf16.gmra.mrb[0].mxu0 %v2177
  %v3907 = vpop.f32.mrb[0].mxu0
  %v3908 = vadd.f32 0.0, %v3907
  %v3909 = vpop.f32.mrb[0].mxu0
  %v3910 = vpop.f32.mrb[0].mxu0
  %v3911 = vadd.f32 0.0, %v3910
  %v3912 = vpop.f32.mrb[0].mxu0
  %3913 = vmatprep.mubr.bf16.mxu0 0
  %3914 = vmatmul.mubr.bf16.gmra.mrb[0].mxu0 %v2180
  %v3915 = vpop.f32.mrb[0].mxu0
  %v3916 = vadd.f32 0.0, %v3915
  %v3917 = vpop.f32.mrb[0].mxu0
  %v3918 = vpop.f32.mrb[0].mxu0
  %v3919 = vadd.f32 0.0, %v3918
  %v3920 = vpop.f32.mrb[0].mxu0
  %3921 = vmatprep.mubr.bf16.mxu0 0
  %3922 = vmatmul.mubr.bf16.gmra.mrb[0].mxu0 %v2183
  %v3923 = vpop.f32.mrb[0].mxu0
  %v3924 = vadd.f32 0.0, %v3923
  %v3925 = vpop.f32.mrb[0].mxu0
  %v3926 = vpop.f32.mrb[0].mxu0
  %v3927 = vadd.f32 0.0, %v3926
  %v3928 = vpop.f32.mrb[0].mxu0
  %3929 = vmatprep.mubr.bf16.mxu0 0
  %3930 = vmatmul.mubr.bf16.gmra.mrb[0].mxu0 %v2186
  %v3931 = vpop.f32.mrb[0].mxu0
  %v3932 = vadd.f32 0.0, %v3931
  %v3933 = vpop.f32.mrb[0].mxu0
  %v3934 = vpop.f32.mrb[0].mxu0
  %v3935 = vadd.f32 0.0, %v3934
  %v3936 = vpop.f32.mrb[0].mxu0
  %3937 = vmatprep.mubr.bf16.mxu0 0
  %3938 = vmatmul.mubr.bf16.gmra.mrb[0].mxu0 %v2189
  %v3939 = vpop.f32.mrb[0].mxu0
  %v3940 = vadd.f32 0.0, %v3939
  %v3941 = vpop.f32.mrb[0].mxu0
  %v3942 = vpop.f32.mrb[0].mxu0
  %v3943 = vadd.f32 0.0, %v3942
  %v3944 = vpop.f32.mrb[0].mxu0
  %3945 = vmatprep.mubr.bf16.mxu0 0
  %3946 = vmatmul.mubr.bf16.gmra.mrb[0].mxu0 %v2192
  %v3947 = vpop.f32.mrb[0].mxu0
  %v3948 = vadd.f32 0.0, %v3947
  %v3949 = vpop.f32.mrb[0].mxu0
  %v3950 = vpop.f32.mrb[0].mxu0
  %v3951 = vadd.f32 0.0, %v3950
  %v3952 = vpop.f32.mrb[0].mxu0
  %3953 = vmatprep.mubr.bf16.mxu0 0
  %3954 = vmatmul.mubr.bf16.gmra.mrb[0].mxu0 %v2195
  %v3955 = vpop.f32.mrb[0].mxu0
  %v3956 = vadd.f32 0.0, %v3955
  %v3957 = vpop.f32.mrb[0].mxu0
  %v3958 = vpop.f32.mrb[0].mxu0
  %v3959 = vadd.f32 0.0, %v3958
  %v3960 = vpop.f32.mrb[0].mxu0
  %3961 = vmatprep.mubr.bf16.mxu0 0
  %3962 = vmatmul.mubr.bf16.gmra.mrb[0].mxu0 %v2198
  %v3963 = vpop.f32.mrb[0].mxu0
  %v3964 = vadd.f32 0.0, %v3963
  %v3965 = vpop.f32.mrb[0].mxu0
  %v3966 = vpop.f32.mrb[0].mxu0
  %v3967 = vadd.f32 0.0, %v3966
  %v3968 = vpop.f32.mrb[0].mxu0
  %3969 = vmatprep.mubr.bf16.mxu0 0
  %3970 = vmatmul.mubr.bf16.gmra.mrb[0].mxu0 %v2201
  %v3971 = vpop.f32.mrb[0].mxu0
  %v3972 = vadd.f32 0.0, %v3971
  %v3973 = vpop.f32.mrb[0].mxu0
  %v3974 = vpop.f32.mrb[0].mxu0
  %v3975 = vadd.f32 0.0, %v3974
  %v3976 = vpop.f32.mrb[0].mxu0
  %3977 = vmatprep.mubr.bf16.mxu0 0
  %3978 = vmatmul.mubr.bf16.gmra.mrb[0].mxu0 %v2204
  %v3979 = vpop.f32.mrb[0].mxu0
  %v3980 = vadd.f32 0.0, %v3979
  %v3981 = vpop.f32.mrb[0].mxu0
  %v3982 = vpop.f32.mrb[0].mxu0
  %v3983 = vadd.f32 0.0, %v3982
  %v3984 = vpop.f32.mrb[0].mxu0
  %3985 = vmatprep.mubr.bf16.mxu0 0
  %3986 = vmatmul.mubr.bf16.gmra.mrb[0].mxu0 %v2207
  %v3987 = vpop.f32.mrb[0].mxu0
  %v3988 = vadd.f32 0.0, %v3987
  %v3989 = vpop.f32.mrb[0].mxu0
  %v3990 = vpop.f32.mrb[0].mxu0
  %v3991 = vadd.f32 0.0, %v3990
  %v3992 = vpop.f32.mrb[0].mxu0
  %3993 = vmatprep.mubr.bf16.mxu0 0
  %3994 = vmatmul.mubr.bf16.gmra.mrb[0].mxu0 %v2210
  %v3995 = vpop.f32.mrb[0].mxu0
  %v3996 = vadd.f32 0.0, %v3995
  %v3997 = vpop.f32.mrb[0].mxu0
  %v3998 = vpop.f32.mrb[0].mxu0
  %v3999 = vadd.f32 0.0, %v3998
  %v4000 = vpop.f32.mrb[0].mxu0
  %4001 = vmatprep.mubr.bf16.mxu0 0
  %4002 = vmatmul.mubr.bf16.gmra.mrb[0].mxu0 %v2213
  %v4003 = vpop.f32.mrb[0].mxu0
  %v4004 = vadd.f32 0.0, %v4003
  %v4005 = vpop.f32.mrb[0].mxu0
  %v4006 = vpop.f32.mrb[0].mxu0
  %v4007 = vadd.f32 0.0, %v4006
  %v4008 = vpop.f32.mrb[0].mxu0
  %4009 = vmatprep.mubr.bf16.mxu0 0
  %4010 = vmatmul.mubr.bf16.gmra.mrb[0].mxu0 %v2216
  %v4011 = vpop.f32.mrb[0].mxu0
  %v4012 = vadd.f32 0.0, %v4011
  %v4013 = vpop.f32.mrb[0].mxu0
  %v4014 = vpop.f32.mrb[0].mxu0
  %v4015 = vadd.f32 0.0, %v4014
  %v4016 = vpop.f32.mrb[0].mxu0
  %4017 = vmatprep.mubr.bf16.mxu0 0
  %4018 = vmatmul.mubr.bf16.gmra.mrb[0].mxu0 %v2219
  %v4019 = vpop.f32.mrb[0].mxu0
  %v4020 = vadd.f32 0.0, %v4019
  %v4021 = vpop.f32.mrb[0].mxu0
  %v4022 = vpop.f32.mrb[0].mxu0
  %v4023 = vpop.f32.mrb[0].mxu0
  %4024 = vdwg.mxu0
  %vm4025 = vcmask 130048
  %4026 = vst.msk [vmem:[%s2] sm:$0xff] %vm4025, %v2260
  %4027 = vst.msk [vmem:[%s2 + $0x8] sm:$0xff] %vm4025, %v2263
  %4028 = vst.msk [vmem:[%s2 + $0x10] sm:$0xff] %vm4025, %v2268
  %4029 = vst.msk [vmem:[%s2 + $0x18] sm:$0xff] %vm4025, %v2271
  %4030 = vst.msk [vmem:[%s2 + $0x20] sm:$0xff] %vm4025, %v2276
  %4031 = vst.msk [vmem:[%s2 + $0x28] sm:$0xff] %vm4025, %v2279
  %4032 = vst.msk [vmem:[%s2 + $0x30] sm:$0xff] %vm4025, %v2284
  %4033 = vst.msk [vmem:[%s2 + $0x38] sm:$0xff] %vm4025, %v2287
  %4034 = vst.msk [vmem:[%s2 + $0x40] sm:$0xff] %vm4025, %v2292
  %4035 = vst.msk [vmem:[%s2 + $0x48] sm:$0xff] %vm4025, %v2295
  %4036 = vst.msk [vmem:[%s2 + $0x50] sm:$0xff] %vm4025, %v2300
  %4037 = vst.msk [vmem:[%s2 + $0x58] sm:$0xff] %vm4025, %v2303
  %4038 = vst.msk [vmem:[%s2 + $0x60] sm:$0xff] %vm4025, %v2308
  %4039 = vst.msk [vmem:[%s2 + $0x68] sm:$0xff] %vm4025, %v2311
  %4040 = vst.msk [vmem:[%s2 + $0x70] sm:$0xff] %vm4025, %v2316
  %4041 = vst.msk [vmem:[%s2 + $0x78] sm:$0xff] %vm4025, %v2319
  %4042 = vst.msk [vmem:[%s2 + $0x80] sm:$0xff] %vm4025, %v2324
  %4043 = vst.msk [vmem:[%s2 + $0x88] sm:$0xff] %vm4025, %v2327
  %4044 = vst.msk [vmem:[%s2 + $0x90] sm:$0xff] %vm4025, %v2332
  %4045 = vst.msk [vmem:[%s2 + $0x98] sm:$0xff] %vm4025, %v2335
  %4046 = vst.msk [vmem:[%s2 + $0xa0] sm:$0xff] %vm4025, %v2340
  %4047 = vst.msk [vmem:[%s2 + $0xa8] sm:$0xff] %vm4025, %v2343
  %4048 = vst.msk [vmem:[%s2 + $0xb0] sm:$0xff] %vm4025, %v2348
  %4049 = vst.msk [vmem:[%s2 + $0xb8] sm:$0xff] %vm4025, %v2351
  %4050 = vst.msk [vmem:[%s2 + $0xc0] sm:$0xff] %vm4025, %v2356
  %4051 = vst.msk [vmem:[%s2 + $0xc8] sm:$0xff] %vm4025, %v2359
  %4052 = vst.msk [vmem:[%s2 + $0xd0] sm:$0xff] %vm4025, %v2364
  %4053 = vst.msk [vmem:[%s2 + $0xd8] sm:$0xff] %vm4025, %v2367
  %4054 = vst.msk [vmem:[%s2 + $0xe0] sm:$0xff] %vm4025, %v2372
  %4055 = vst.msk [vmem:[%s2 + $0xe8] sm:$0xff] %vm4025, %v2375
  %4056 = vst.msk [vmem:[%s2 + $0xf0] sm:$0xff] %vm4025, %v2380
  %4057 = vst.msk [vmem:[%s2 + $0xf8] sm:$0xff] %vm4025, %v2383
  %4058 = vst.msk [vmem:[%s2 + $0x100] sm:$0xff] %vm4025, %v2388
  %4059 = vst.msk [vmem:[%s2 + $0x108] sm:$0xff] %vm4025, %v2391
  %4060 = vst.msk [vmem:[%s2 + $0x110] sm:$0xff] %vm4025, %v2396
  %4061 = vst.msk [vmem:[%s2 + $0x118] sm:$0xff] %vm4025, %v2399
  %4062 = vst.msk [vmem:[%s2 + $0x120] sm:$0xff] %vm4025, %v2404
  %4063 = vst.msk [vmem:[%s2 + $0x128] sm:$0xff] %vm4025, %v2407
  %4064 = vst.msk [vmem:[%s2 + $0x130] sm:$0xff] %vm4025, %v2412
  %4065 = vst.msk [vmem:[%s2 + $0x138] sm:$0xff] %vm4025, %v2415
  %4066 = vst.msk [vmem:[%s2 + $0x140] sm:$0xff] %vm4025, %v2420
  %4067 = vst.msk [vmem:[%s2 + $0x148] sm:$0xff] %vm4025, %v2423
  %4068 = vst.msk [vmem:[%s2 + $0x150] sm:$0xff] %vm4025, %v2428
  %4069 = vst.msk [vmem:[%s2 + $0x158] sm:$0xff] %vm4025, %v2431
  %4070 = vst.msk [vmem:[%s2 + $0x160] sm:$0xff] %vm4025, %v2436
  %4071 = vst.msk [vmem:[%s2 + $0x168] sm:$0xff] %vm4025, %v2439
  %4072 = vst.msk [vmem:[%s2 + $0x170] sm:$0xff] %vm4025, %v2444
  %4073 = vst.msk [vmem:[%s2 + $0x178] sm:$0xff] %vm4025, %v2447
  %4074 = vst.msk [vmem:[%s2 + $0x180] sm:$0xff] %vm4025, %v2452
  %4075 = vst.msk [vmem:[%s2 + $0x188] sm:$0xff] %vm4025, %v2455
  %4076 = vst.msk [vmem:[%s2 + $0x190] sm:$0xff] %vm4025, %v2460
  %4077 = vst.msk [vmem:[%s2 + $0x198] sm:$0xff] %vm4025, %v2463
  %4078 = vst.msk [vmem:[%s2 + $0x1a0] sm:$0xff] %vm4025, %v2468
  %4079 = vst.msk [vmem:[%s2 + $0x1a8] sm:$0xff] %vm4025, %v2471
  %4080 = vst.msk [vmem:[%s2 + $0x1b0] sm:$0xff] %vm4025, %v2476
  %4081 = vst.msk [vmem:[%s2 + $0x1b8] sm:$0xff] %vm4025, %v2479
  %4082 = vst.msk [vmem:[%s2 + $0x1c0] sm:$0xff] %vm4025, %v2484
  %4083 = vst.msk [vmem:[%s2 + $0x1c8] sm:$0xff] %vm4025, %v2487
  %4084 = vst.msk [vmem:[%s2 + $0x1d0] sm:$0xff] %vm4025, %v2492
  %4085 = vst.msk [vmem:[%s2 + $0x1d8] sm:$0xff] %vm4025, %v2495
  %4086 = vst.msk [vmem:[%s2 + $0x1e0] sm:$0xff] %vm4025, %v2500
  %4087 = vst.msk [vmem:[%s2 + $0x1e8] sm:$0xff] %vm4025, %v2503
  %4088 = vst.msk [vmem:[%s2 + $0x1f0] sm:$0xff] %vm4025, %v2508
  %4089 = vst.msk [vmem:[%s2 + $0x1f8] sm:$0xff] %vm4025, %v2511
  %4090 = vst.msk [vmem:[%s2 + $0x200] sm:$0xff] %vm4025, %v2516
  %4091 = vst.msk [vmem:[%s2 + $0x208] sm:$0xff] %vm4025, %v2519
  %4092 = vst.msk [vmem:[%s2 + $0x210] sm:$0xff] %vm4025, %v2524
  %4093 = vst.msk [vmem:[%s2 + $0x218] sm:$0xff] %vm4025, %v2527
  %4094 = vst.msk [vmem:[%s2 + $0x220] sm:$0xff] %vm4025, %v2532
  %4095 = vst.msk [vmem:[%s2 + $0x228] sm:$0xff] %vm4025, %v2535
  %4096 = vst.msk [vmem:[%s2 + $0x230] sm:$0xff] %vm4025, %v2540
  %4097 = vst.msk [vmem:[%s2 + $0x238] sm:$0xff] %vm4025, %v2543
  %4098 = vst.msk [vmem:[%s2 + $0x240] sm:$0xff] %vm4025, %v2548
  %4099 = vst.msk [vmem:[%s2 + $0x248] sm:$0xff] %vm4025, %v2551
  %4100 = vst.msk [vmem:[%s2 + $0x250] sm:$0xff] %vm4025, %v2556
  %4101 = vst.msk [vmem:[%s2 + $0x258] sm:$0xff] %vm4025, %v2559
  %4102 = vst.msk [vmem:[%s2 + $0x260] sm:$0xff] %vm4025, %v2564
  %4103 = vst.msk [vmem:[%s2 + $0x268] sm:$0xff] %vm4025, %v2567
  %4104 = vst.msk [vmem:[%s2 + $0x270] sm:$0xff] %vm4025, %v2572
  %4105 = vst.msk [vmem:[%s2 + $0x278] sm:$0xff] %vm4025, %v2575
  %4106 = vst.msk [vmem:[%s2 + $0x280] sm:$0xff] %vm4025, %v2580
  %4107 = vst.msk [vmem:[%s2 + $0x288] sm:$0xff] %vm4025, %v2583
  %4108 = vst.msk [vmem:[%s2 + $0x290] sm:$0xff] %vm4025, %v2588
  %4109 = vst.msk [vmem:[%s2 + $0x298] sm:$0xff] %vm4025, %v2591
  %4110 = vst.msk [vmem:[%s2 + $0x2a0] sm:$0xff] %vm4025, %v2596
  %4111 = vst.msk [vmem:[%s2 + $0x2a8] sm:$0xff] %vm4025, %v2599
  %4112 = vst.msk [vmem:[%s2 + $0x2b0] sm:$0xff] %vm4025, %v2604
  %4113 = vst.msk [vmem:[%s2 + $0x2b8] sm:$0xff] %vm4025, %v2607
  %4114 = vst.msk [vmem:[%s2 + $0x2c0] sm:$0xff] %vm4025, %v2612
  %4115 = vst.msk [vmem:[%s2 + $0x2c8] sm:$0xff] %vm4025, %v2615
  %4116 = vst.msk [vmem:[%s2 + $0x2d0] sm:$0xff] %vm4025, %v2620
  %4117 = vst.msk [vmem:[%s2 + $0x2d8] sm:$0xff] %vm4025, %v2623
  %4118 = vst.msk [vmem:[%s2 + $0x2e0] sm:$0xff] %vm4025, %v2628
  %4119 = vst.msk [vmem:[%s2 + $0x2e8] sm:$0xff] %vm4025, %v2631
  %4120 = vst.msk [vmem:[%s2 + $0x2f0] sm:$0xff] %vm4025, %v2636
  %4121 = vst.msk [vmem:[%s2 + $0x2f8] sm:$0xff] %vm4025, %v2639
  %4122 = vst.msk [vmem:[%s2 + $0x300] sm:$0xff] %vm4025, %v2644
  %4123 = vst.msk [vmem:[%s2 + $0x308] sm:$0xff] %vm4025, %v2647
  %4124 = vst.msk [vmem:[%s2 + $0x310] sm:$0xff] %vm4025, %v2652
  %4125 = vst.msk [vmem:[%s2 + $0x318] sm:$0xff] %vm4025, %v2655
  %4126 = vst.msk [vmem:[%s2 + $0x320] sm:$0xff] %vm4025, %v2660
  %4127 = vst.msk [vmem:[%s2 + $0x328] sm:$0xff] %vm4025, %v2663
  %4128 = vst.msk [vmem:[%s2 + $0x330] sm:$0xff] %vm4025, %v2668
  %4129 = vst.msk [vmem:[%s2 + $0x338] sm:$0xff] %vm4025, %v2671
  %4130 = vst.msk [vmem:[%s2 + $0x340] sm:$0xff] %vm4025, %v2676
  %4131 = vst.msk [vmem:[%s2 + $0x348] sm:$0xff] %vm4025, %v2679
  %4132 = vst.msk [vmem:[%s2 + $0x350] sm:$0xff] %vm4025, %v2684
  %4133 = vst.msk [vmem:[%s2 + $0x358] sm:$0xff] %vm4025, %v2687
  %4134 = vst.msk [vmem:[%s2 + $0x360] sm:$0xff] %vm4025, %v2692
  %4135 = vst.msk [vmem:[%s2 + $0x368] sm:$0xff] %vm4025, %v2695
  %4136 = vst.msk [vmem:[%s2 + $0x370] sm:$0xff] %vm4025, %v2700
  %4137 = vst.msk [vmem:[%s2 + $0x378] sm:$0xff] %vm4025, %v2703
  %4138 = vst.msk [vmem:[%s2 + $0x380] sm:$0xff] %vm4025, %v2708
  %4139 = vst.msk [vmem:[%s2 + $0x388] sm:$0xff] %vm4025, %v2711
  %4140 = vst.msk [vmem:[%s2 + $0x390] sm:$0xff] %vm4025, %v2716
  %4141 = vst.msk [vmem:[%s2 + $0x398] sm:$0xff] %vm4025, %v2719
  %4142 = vst.msk [vmem:[%s2 + $0x3a0] sm:$0xff] %vm4025, %v2724
  %4143 = vst.msk [vmem:[%s2 + $0x3a8] sm:$0xff] %vm4025, %v2727
  %4144 = vst.msk [vmem:[%s2 + $0x3b0] sm:$0xff] %vm4025, %v2732
  %4145 = vst.msk [vmem:[%s2 + $0x3b8] sm:$0xff] %vm4025, %v2735
  %4146 = vst.msk [vmem:[%s2 + $0x3c0] sm:$0xff] %vm4025, %v2740
  %4147 = vst.msk [vmem:[%s2 + $0x3c8] sm:$0xff] %vm4025, %v2743
  %4148 = vst.msk [vmem:[%s2 + $0x3d0] sm:$0xff] %vm4025, %v2748
  %4149 = vst.msk [vmem:[%s2 + $0x3d8] sm:$0xff] %vm4025, %v2751
  %4150 = vst.msk [vmem:[%s2 + $0x3e0] sm:$0xff] %vm4025, %v2756
  %4151 = vst.msk [vmem:[%s2 + $0x3e8] sm:$0xff] %vm4025, %v2759
  %4152 = vst.msk [vmem:[%s2 + $0x3f0] sm:$0xff] %vm4025, %v2764
  %4153 = vst.msk [vmem:[%s2 + $0x3f8] sm:$0xff] %vm4025, %v2767
  %4154 = vst.msk [vmem:[%s2 + $0x400] sm:$0xff] %vm4025, %v2772
  %4155 = vst.msk [vmem:[%s2 + $0x408] sm:$0xff] %vm4025, %v2775
  %4156 = vst.msk [vmem:[%s2 + $0x410] sm:$0xff] %vm4025, %v2780
  %4157 = vst.msk [vmem:[%s2 + $0x418] sm:$0xff] %vm4025, %v2783
  %4158 = vst.msk [vmem:[%s2 + $0x420] sm:$0xff] %vm4025, %v2788
  %4159 = vst.msk [vmem:[%s2 + $0x428] sm:$0xff] %vm4025, %v2791
  %4160 = vst.msk [vmem:[%s2 + $0x430] sm:$0xff] %vm4025, %v2796
  %4161 = vst.msk [vmem:[%s2 + $0x438] sm:$0xff] %vm4025, %v2799
  %4162 = vst.msk [vmem:[%s2 + $0x440] sm:$0xff] %vm4025, %v2804
  %4163 = vst.msk [vmem:[%s2 + $0x448] sm:$0xff] %vm4025, %v2807
  %4164 = vst.msk [vmem:[%s2 + $0x450] sm:$0xff] %vm4025, %v2812
  %4165 = vst.msk [vmem:[%s2 + $0x458] sm:$0xff] %vm4025, %v2815
  %4166 = vst.msk [vmem:[%s2 + $0x460] sm:$0xff] %vm4025, %v2820
  %4167 = vst.msk [vmem:[%s2 + $0x468] sm:$0xff] %vm4025, %v2823
  %4168 = vst.msk [vmem:[%s2 + $0x470] sm:$0xff] %vm4025, %v2828
  %4169 = vst.msk [vmem:[%s2 + $0x478] sm:$0xff] %vm4025, %v2831
  %4170 = vst.msk [vmem:[%s2 + $0x480] sm:$0xff] %vm4025, %v2836
  %4171 = vst.msk [vmem:[%s2 + $0x488] sm:$0xff] %vm4025, %v2839
  %4172 = vst.msk [vmem:[%s2 + $0x490] sm:$0xff] %vm4025, %v2844
  %4173 = vst.msk [vmem:[%s2 + $0x498] sm:$0xff] %vm4025, %v2847
  %4174 = vst.msk [vmem:[%s2 + $0x4a0] sm:$0xff] %vm4025, %v2852
  %4175 = vst.msk [vmem:[%s2 + $0x4a8] sm:$0xff] %vm4025, %v2855
  %4176 = vst.msk [vmem:[%s2 + $0x4b0] sm:$0xff] %vm4025, %v2860
  %4177 = vst.msk [vmem:[%s2 + $0x4b8] sm:$0xff] %vm4025, %v2863
  %4178 = vst.msk [vmem:[%s2 + $0x4c0] sm:$0xff] %vm4025, %v2868
  %4179 = vst.msk [vmem:[%s2 + $0x4c8] sm:$0xff] %vm4025, %v2871
  %4180 = vst.msk [vmem:[%s2 + $0x4d0] sm:$0xff] %vm4025, %v2876
  %4181 = vst.msk [vmem:[%s2 + $0x4d8] sm:$0xff] %vm4025, %v2879
  %4182 = vst.msk [vmem:[%s2 + $0x4e0] sm:$0xff] %vm4025, %v2884
  %4183 = vst.msk [vmem:[%s2 + $0x4e8] sm:$0xff] %vm4025, %v2887
  %4184 = vst.msk [vmem:[%s2 + $0x4f0] sm:$0xff] %vm4025, %v2892
  %4185 = vst.msk [vmem:[%s2 + $0x4f8] sm:$0xff] %vm4025, %v2895
  %4186 = vst.msk [vmem:[%s2 + $0x500] sm:$0xff] %vm4025, %v2900
  %4187 = vst.msk [vmem:[%s2 + $0x508] sm:$0xff] %vm4025, %v2903
  %4188 = vst.msk [vmem:[%s2 + $0x510] sm:$0xff] %vm4025, %v2908
  %4189 = vst.msk [vmem:[%s2 + $0x518] sm:$0xff] %vm4025, %v2911
  %4190 = vst.msk [vmem:[%s2 + $0x520] sm:$0xff] %vm4025, %v2916
  %4191 = vst.msk [vmem:[%s2 + $0x528] sm:$0xff] %vm4025, %v2919
  %4192 = vst.msk [vmem:[%s2 + $0x530] sm:$0xff] %vm4025, %v2924
  %4193 = vst.msk [vmem:[%s2 + $0x538] sm:$0xff] %vm4025, %v2927
  %4194 = vst.msk [vmem:[%s2 + $0x540] sm:$0xff] %vm4025, %v2932
  %4195 = vst.msk [vmem:[%s2 + $0x548] sm:$0xff] %vm4025, %v2935
  %4196 = vst.msk [vmem:[%s2 + $0x550] sm:$0xff] %vm4025, %v2940
  %4197 = vst.msk [vmem:[%s2 + $0x558] sm:$0xff] %vm4025, %v2943
  %4198 = vst.msk [vmem:[%s2 + $0x560] sm:$0xff] %vm4025, %v2948
  %4199 = vst.msk [vmem:[%s2 + $0x568] sm:$0xff] %vm4025, %v2951
  %4200 = vst.msk [vmem:[%s2 + $0x570] sm:$0xff] %vm4025, %v2956
  %4201 = vst.msk [vmem:[%s2 + $0x578] sm:$0xff] %vm4025, %v2959
  %4202 = vst.msk [vmem:[%s2 + $0x580] sm:$0xff] %vm4025, %v2964
  %4203 = vst.msk [vmem:[%s2 + $0x588] sm:$0xff] %vm4025, %v2967
  %4204 = vst.msk [vmem:[%s2 + $0x590] sm:$0xff] %vm4025, %v2972
  %4205 = vst.msk [vmem:[%s2 + $0x598] sm:$0xff] %vm4025, %v2975
  %4206 = vst.msk [vmem:[%s2 + $0x5a0] sm:$0xff] %vm4025, %v2980
  %4207 = vst.msk [vmem:[%s2 + $0x5a8] sm:$0xff] %vm4025, %v2983
  %4208 = vst.msk [vmem:[%s2 + $0x5b0] sm:$0xff] %vm4025, %v2988
  %4209 = vst.msk [vmem:[%s2 + $0x5b8] sm:$0xff] %vm4025, %v2991
  %4210 = vst.msk [vmem:[%s2 + $0x5c0] sm:$0xff] %vm4025, %v2996
  %4211 = vst.msk [vmem:[%s2 + $0x5c8] sm:$0xff] %vm4025, %v2999
  %4212 = vst.msk [vmem:[%s2 + $0x5d0] sm:$0xff] %vm4025, %v3004
  %4213 = vst.msk [vmem:[%s2 + $0x5d8] sm:$0xff] %vm4025, %v3007
  %4214 = vst.msk [vmem:[%s2 + $0x5e0] sm:$0xff] %vm4025, %v3012
  %4215 = vst.msk [vmem:[%s2 + $0x5e8] sm:$0xff] %vm4025, %v3015
  %4216 = vst.msk [vmem:[%s2 + $0x5f0] sm:$0xff] %vm4025, %v3020
  %4217 = vst.msk [vmem:[%s2 + $0x5f8] sm:$0xff] %vm4025, %v3023
  %4218 = vst.msk [vmem:[%s2 + $0x600] sm:$0xff] %vm4025, %v3028
  %4219 = vst.msk [vmem:[%s2 + $0x608] sm:$0xff] %vm4025, %v3031
  %4220 = vst.msk [vmem:[%s2 + $0x610] sm:$0xff] %vm4025, %v3036
  %4221 = vst.msk [vmem:[%s2 + $0x618] sm:$0xff] %vm4025, %v3039
  %4222 = vst.msk [vmem:[%s2 + $0x620] sm:$0xff] %vm4025, %v3044
  %4223 = vst.msk [vmem:[%s2 + $0x628] sm:$0xff] %vm4025, %v3047
  %4224 = vst.msk [vmem:[%s2 + $0x630] sm:$0xff] %vm4025, %v3052
  %4225 = vst.msk [vmem:[%s2 + $0x638] sm:$0xff] %vm4025, %v3055
  %4226 = vst.msk [vmem:[%s2 + $0x640] sm:$0xff] %vm4025, %v3060
  %4227 = vst.msk [vmem:[%s2 + $0x648] sm:$0xff] %vm4025, %v3063
  %4228 = vst.msk [vmem:[%s2 + $0x650] sm:$0xff] %vm4025, %v3068
  %4229 = vst.msk [vmem:[%s2 + $0x658] sm:$0xff] %vm4025, %v3071
  %4230 = vst.msk [vmem:[%s2 + $0x660] sm:$0xff] %vm4025, %v3076
  %4231 = vst.msk [vmem:[%s2 + $0x668] sm:$0xff] %vm4025, %v3079
  %4232 = vst.msk [vmem:[%s2 + $0x670] sm:$0xff] %vm4025, %v3084
  %4233 = vst.msk [vmem:[%s2 + $0x678] sm:$0xff] %vm4025, %v3087
  %4234 = vst.msk [vmem:[%s2 + $0x680] sm:$0xff] %vm4025, %v3092
  %4235 = vst.msk [vmem:[%s2 + $0x688] sm:$0xff] %vm4025, %v3095
  %4236 = vst.msk [vmem:[%s2 + $0x690] sm:$0xff] %vm4025, %v3100
  %4237 = vst.msk [vmem:[%s2 + $0x698] sm:$0xff] %vm4025, %v3103
  %4238 = vst.msk [vmem:[%s2 + $0x6a0] sm:$0xff] %vm4025, %v3108
  %4239 = vst.msk [vmem:[%s2 + $0x6a8] sm:$0xff] %vm4025, %v3111
  %4240 = vst.msk [vmem:[%s2 + $0x6b0] sm:$0xff] %vm4025, %v3116
  %4241 = vst.msk [vmem:[%s2 + $0x6b8] sm:$0xff] %vm4025, %v3119
  %4242 = vst.msk [vmem:[%s2 + $0x6c0] sm:$0xff] %vm4025, %v3124
  %4243 = vst.msk [vmem:[%s2 + $0x6c8] sm:$0xff] %vm4025, %v3127
  %4244 = vst.msk [vmem:[%s2 + $0x6d0] sm:$0xff] %vm4025, %v3132
  %4245 = vst.msk [vmem:[%s2 + $0x6d8] sm:$0xff] %vm4025, %v3135
  %4246 = vst.msk [vmem:[%s2 + $0x6e0] sm:$0xff] %vm4025, %v3140
  %4247 = vst.msk [vmem:[%s2 + $0x6e8] sm:$0xff] %vm4025, %v3143
  %4248 = vst.msk [vmem:[%s2 + $0x6f0] sm:$0xff] %vm4025, %v3148
  %4249 = vst.msk [vmem:[%s2 + $0x6f8] sm:$0xff] %vm4025, %v3151
  %4250 = vst.msk [vmem:[%s2 + $0x700] sm:$0xff] %vm4025, %v3156
  %4251 = vst.msk [vmem:[%s2 + $0x708] sm:$0xff] %vm4025, %v3159
  %4252 = vst.msk [vmem:[%s2 + $0x710] sm:$0xff] %vm4025, %v3164
  %4253 = vst.msk [vmem:[%s2 + $0x718] sm:$0xff] %vm4025, %v3167
  %4254 = vst.msk [vmem:[%s2 + $0x720] sm:$0xff] %vm4025, %v3172
  %4255 = vst.msk [vmem:[%s2 + $0x728] sm:$0xff] %vm4025, %v3175
  %4256 = vst.msk [vmem:[%s2 + $0x730] sm:$0xff] %vm4025, %v3180
  %4257 = vst.msk [vmem:[%s2 + $0x738] sm:$0xff] %vm4025, %v3183
  %4258 = vst.msk [vmem:[%s2 + $0x740] sm:$0xff] %vm4025, %v3188
  %4259 = vst.msk [vmem:[%s2 + $0x748] sm:$0xff] %vm4025, %v3191
  %4260 = vst.msk [vmem:[%s2 + $0x750] sm:$0xff] %vm4025, %v3196
  %4261 = vst.msk [vmem:[%s2 + $0x758] sm:$0xff] %vm4025, %v3199
  %4262 = vst.msk [vmem:[%s2 + $0x760] sm:$0xff] %vm4025, %v3204
  %4263 = vst.msk [vmem:[%s2 + $0x768] sm:$0xff] %vm4025, %v3207
  %4264 = vst.msk [vmem:[%s2 + $0x770] sm:$0xff] %vm4025, %v3212
  %4265 = vst.msk [vmem:[%s2 + $0x778] sm:$0xff] %vm4025, %v3215
  %4266 = vst.msk [vmem:[%s2 + $0x780] sm:$0xff] %vm4025, %v3220
  %4267 = vst.msk [vmem:[%s2 + $0x788] sm:$0xff] %vm4025, %v3223
  %4268 = vst.msk [vmem:[%s2 + $0x790] sm:$0xff] %vm4025, %v3228
  %4269 = vst.msk [vmem:[%s2 + $0x798] sm:$0xff] %vm4025, %v3231
  %4270 = vst.msk [vmem:[%s2 + $0x7a0] sm:$0xff] %vm4025, %v3236
  %4271 = vst.msk [vmem:[%s2 + $0x7a8] sm:$0xff] %vm4025, %v3239
  %4272 = vst.msk [vmem:[%s2 + $0x7b0] sm:$0xff] %vm4025, %v3244
  %4273 = vst.msk [vmem:[%s2 + $0x7b8] sm:$0xff] %vm4025, %v3247
  %4274 = vst.msk [vmem:[%s2 + $0x7c0] sm:$0xff] %vm4025, %v3252
  %4275 = vst.msk [vmem:[%s2 + $0x7c8] sm:$0xff] %vm4025, %v3255
  %4276 = vst.msk [vmem:[%s2 + $0x7d0] sm:$0xff] %vm4025, %v3260
  %4277 = vst.msk [vmem:[%s2 + $0x7d8] sm:$0xff] %vm4025, %v3263
  %4278 = vst.msk [vmem:[%s2 + $0x7e0] sm:$0xff] %vm4025, %v3268
  %4279 = vst.msk [vmem:[%s2 + $0x7e8] sm:$0xff] %vm4025, %v3271
  %4280 = vst.msk [vmem:[%s2 + $0x7f0] sm:$0xff] %vm4025, %v3276
  %4281 = vst.msk [vmem:[%s2 + $0x7f8] sm:$0xff] %vm4025, %v3279
  %4282 = vst.msk [vmem:[%s2 + $0x800] sm:$0xff] %vm4025, %v3284
  %4283 = vst.msk [vmem:[%s2 + $0x808] sm:$0xff] %vm4025, %v3287
  %4284 = vst.msk [vmem:[%s2 + $0x810] sm:$0xff] %vm4025, %v3292
  %4285 = vst.msk [vmem:[%s2 + $0x818] sm:$0xff] %vm4025, %v3295
  %4286 = vst.msk [vmem:[%s2 + $0x820] sm:$0xff] %vm4025, %v3300
  %4287 = vst.msk [vmem:[%s2 + $0x828] sm:$0xff] %vm4025, %v3303
  %4288 = vst.msk [vmem:[%s2 + $0x830] sm:$0xff] %vm4025, %v3308
  %4289 = vst.msk [vmem:[%s2 + $0x838] sm:$0xff] %vm4025, %v3311
  %4290 = vst.msk [vmem:[%s2 + $0x840] sm:$0xff] %vm4025, %v3316
  %4291 = vst.msk [vmem:[%s2 + $0x848] sm:$0xff] %vm4025, %v3319
  %4292 = vst.msk [vmem:[%s2 + $0x850] sm:$0xff] %vm4025, %v3324
  %4293 = vst.msk [vmem:[%s2 + $0x858] sm:$0xff] %vm4025, %v3327
  %4294 = vst.msk [vmem:[%s2 + $0x860] sm:$0xff] %vm4025, %v3332
  %4295 = vst.msk [vmem:[%s2 + $0x868] sm:$0xff] %vm4025, %v3335
  %4296 = vst.msk [vmem:[%s2 + $0x870] sm:$0xff] %vm4025, %v3340
  %4297 = vst.msk [vmem:[%s2 + $0x878] sm:$0xff] %vm4025, %v3343
  %4298 = vst.msk [vmem:[%s2 + $0x880] sm:$0xff] %vm4025, %v3348
  %4299 = vst.msk [vmem:[%s2 + $0x888] sm:$0xff] %vm4025, %v3351
  %4300 = vst.msk [vmem:[%s2 + $0x890] sm:$0xff] %vm4025, %v3356
  %4301 = vst.msk [vmem:[%s2 + $0x898] sm:$0xff] %vm4025, %v3359
  %4302 = vst.msk [vmem:[%s2 + $0x8a0] sm:$0xff] %vm4025, %v3364
  %4303 = vst.msk [vmem:[%s2 + $0x8a8] sm:$0xff] %vm4025, %v3367
  %4304 = vst.msk [vmem:[%s2 + $0x8b0] sm:$0xff] %vm4025, %v3372
  %4305 = vst.msk [vmem:[%s2 + $0x8b8] sm:$0xff] %vm4025, %v3375
  %4306 = vst.msk [vmem:[%s2 + $0x8c0] sm:$0xff] %vm4025, %v3380
  %4307 = vst.msk [vmem:[%s2 + $0x8c8] sm:$0xff] %vm4025, %v3383
  %4308 = vst.msk [vmem:[%s2 + $0x8d0] sm:$0xff] %vm4025, %v3388
  %4309 = vst.msk [vmem:[%s2 + $0x8d8] sm:$0xff] %vm4025, %v3391
  %4310 = vst.msk [vmem:[%s2 + $0x8e0] sm:$0xff] %vm4025, %v3396
  %4311 = vst.msk [vmem:[%s2 + $0x8e8] sm:$0xff] %vm4025, %v3399
  %4312 = vst.msk [vmem:[%s2 + $0x8f0] sm:$0xff] %vm4025, %v3404
  %4313 = vst.msk [vmem:[%s2 + $0x8f8] sm:$0xff] %vm4025, %v3407
  %4314 = vst.msk [vmem:[%s2 + $0x900] sm:$0xff] %vm4025, %v3412
  %4315 = vst.msk [vmem:[%s2 + $0x908] sm:$0xff] %vm4025, %v3415
  %4316 = vst.msk [vmem:[%s2 + $0x910] sm:$0xff] %vm4025, %v3420
  %4317 = vst.msk [vmem:[%s2 + $0x918] sm:$0xff] %vm4025, %v3423
  %4318 = vst.msk [vmem:[%s2 + $0x920] sm:$0xff] %vm4025, %v3428
  %4319 = vst.msk [vmem:[%s2 + $0x928] sm:$0xff] %vm4025, %v3431
  %4320 = vst.msk [vmem:[%s2 + $0x930] sm:$0xff] %vm4025, %v3436
  %4321 = vst.msk [vmem:[%s2 + $0x938] sm:$0xff] %vm4025, %v3439
  %4322 = vst.msk [vmem:[%s2 + $0x940] sm:$0xff] %vm4025, %v3444
  %4323 = vst.msk [vmem:[%s2 + $0x948] sm:$0xff] %vm4025, %v3447
  %4324 = vst.msk [vmem:[%s2 + $0x950] sm:$0xff] %vm4025, %v3452
  %4325 = vst.msk [vmem:[%s2 + $0x958] sm:$0xff] %vm4025, %v3455
  %4326 = vst.msk [vmem:[%s2 + $0x960] sm:$0xff] %vm4025, %v3460
  %4327 = vst.msk [vmem:[%s2 + $0x968] sm:$0xff] %vm4025, %v3463
  %4328 = vst.msk [vmem:[%s2 + $0x970] sm:$0xff] %vm4025, %v3468
  %4329 = vst.msk [vmem:[%s2 + $0x978] sm:$0xff] %vm4025, %v3471
  %4330 = vst.msk [vmem:[%s2 + $0x980] sm:$0xff] %vm4025, %v3476
  %4331 = vst.msk [vmem:[%s2 + $0x988] sm:$0xff] %vm4025, %v3479
  %4332 = vst.msk [vmem:[%s2 + $0x990] sm:$0xff] %vm4025, %v3484
  %4333 = vst.msk [vmem:[%s2 + $0x998] sm:$0xff] %vm4025, %v3487
  %4334 = vst.msk [vmem:[%s2 + $0x9a0] sm:$0xff] %vm4025, %v3492
  %4335 = vst.msk [vmem:[%s2 + $0x9a8] sm:$0xff] %vm4025, %v3495
  %4336 = vst.msk [vmem:[%s2 + $0x9b0] sm:$0xff] %vm4025, %v3500
  %4337 = vst.msk [vmem:[%s2 + $0x9b8] sm:$0xff] %vm4025, %v3503
  %4338 = vst.msk [vmem:[%s2 + $0x9c0] sm:$0xff] %vm4025, %v3508
  %4339 = vst.msk [vmem:[%s2 + $0x9c8] sm:$0xff] %vm4025, %v3511
  %4340 = vst.msk [vmem:[%s2 + $0x9d0] sm:$0xff] %vm4025, %v3516
  %4341 = vst.msk [vmem:[%s2 + $0x9d8] sm:$0xff] %vm4025, %v3519
  %4342 = vst.msk [vmem:[%s2 + $0x9e0] sm:$0xff] %vm4025, %v3524
  %4343 = vst.msk [vmem:[%s2 + $0x9e8] sm:$0xff] %vm4025, %v3527
  %4344 = vst.msk [vmem:[%s2 + $0x9f0] sm:$0xff] %vm4025, %v3532
  %4345 = vst.msk [vmem:[%s2 + $0x9f8] sm:$0xff] %vm4025, %v3535
  %4346 = vst.msk [vmem:[%s2 + $0xa00] sm:$0xff] %vm4025, %v3540
  %4347 = vst.msk [vmem:[%s2 + $0xa08] sm:$0xff] %vm4025, %v3543
  %4348 = vst.msk [vmem:[%s2 + $0xa10] sm:$0xff] %vm4025, %v3548
  %4349 = vst.msk [vmem:[%s2 + $0xa18] sm:$0xff] %vm4025, %v3551
  %4350 = vst.msk [vmem:[%s2 + $0xa20] sm:$0xff] %vm4025, %v3556
  %4351 = vst.msk [vmem:[%s2 + $0xa28] sm:$0xff] %vm4025, %v3559
  %4352 = vst.msk [vmem:[%s2 + $0xa30] sm:$0xff] %vm4025, %v3564
  %4353 = vst.msk [vmem:[%s2 + $0xa38] sm:$0xff] %vm4025, %v3567
  %4354 = vst.msk [vmem:[%s2 + $0xa40] sm:$0xff] %vm4025, %v3572
  %4355 = vst.msk [vmem:[%s2 + $0xa48] sm:$0xff] %vm4025, %v3575
  %4356 = vst.msk [vmem:[%s2 + $0xa50] sm:$0xff] %vm4025, %v3580
  %4357 = vst.msk [vmem:[%s2 + $0xa58] sm:$0xff] %vm4025, %v3583
  %4358 = vst.msk [vmem:[%s2 + $0xa60] sm:$0xff] %vm4025, %v3588
  %4359 = vst.msk [vmem:[%s2 + $0xa68] sm:$0xff] %vm4025, %v3591
  %4360 = vst.msk [vmem:[%s2 + $0xa70] sm:$0xff] %vm4025, %v3596
  %4361 = vst.msk [vmem:[%s2 + $0xa78] sm:$0xff] %vm4025, %v3599
  %4362 = vst.msk [vmem:[%s2 + $0xa80] sm:$0xff] %vm4025, %v3604
  %4363 = vst.msk [vmem:[%s2 + $0xa88] sm:$0xff] %vm4025, %v3607
  %4364 = vst.msk [vmem:[%s2 + $0xa90] sm:$0xff] %vm4025, %v3612
  %4365 = vst.msk [vmem:[%s2 + $0xa98] sm:$0xff] %vm4025, %v3615
  %4366 = vst.msk [vmem:[%s2 + $0xaa0] sm:$0xff] %vm4025, %v3620
  %4367 = vst.msk [vmem:[%s2 + $0xaa8] sm:$0xff] %vm4025, %v3623
  %4368 = vst.msk [vmem:[%s2 + $0xab0] sm:$0xff] %vm4025, %v3628
  %4369 = vst.msk [vmem:[%s2 + $0xab8] sm:$0xff] %vm4025, %v3631
  %4370 = vst.msk [vmem:[%s2 + $0xac0] sm:$0xff] %vm4025, %v3636
  %4371 = vst.msk [vmem:[%s2 + $0xac8] sm:$0xff] %vm4025, %v3639
  %4372 = vst.msk [vmem:[%s2 + $0xad0] sm:$0xff] %vm4025, %v3644
  %4373 = vst.msk [vmem:[%s2 + $0xad8] sm:$0xff] %vm4025, %v3647
  %4374 = vst.msk [vmem:[%s2 + $0xae0] sm:$0xff] %vm4025, %v3652
  %4375 = vst.msk [vmem:[%s2 + $0xae8] sm:$0xff] %vm4025, %v3655
  %4376 = vst.msk [vmem:[%s2 + $0xaf0] sm:$0xff] %vm4025, %v3660
  %4377 = vst.msk [vmem:[%s2 + $0xaf8] sm:$0xff] %vm4025, %v3663
  %4378 = vst.msk [vmem:[%s2 + $0xb00] sm:$0xff] %vm4025, %v3668
  %4379 = vst.msk [vmem:[%s2 + $0xb08] sm:$0xff] %vm4025, %v3671
  %4380 = vst.msk [vmem:[%s2 + $0xb10] sm:$0xff] %vm4025, %v3676
  %4381 = vst.msk [vmem:[%s2 + $0xb18] sm:$0xff] %vm4025, %v3679
  %4382 = vst.msk [vmem:[%s2 + $0xb20] sm:$0xff] %vm4025, %v3684
  %4383 = vst.msk [vmem:[%s2 + $0xb28] sm:$0xff] %vm4025, %v3687
  %4384 = vst.msk [vmem:[%s2 + $0xb30] sm:$0xff] %vm4025, %v3692
  %4385 = vst.msk [vmem:[%s2 + $0xb38] sm:$0xff] %vm4025, %v3695
  %4386 = vst.msk [vmem:[%s2 + $0xb40] sm:$0xff] %vm4025, %v3700
  %4387 = vst.msk [vmem:[%s2 + $0xb48] sm:$0xff] %vm4025, %v3703
  %4388 = vst.msk [vmem:[%s2 + $0xb50] sm:$0xff] %vm4025, %v3708
  %4389 = vst.msk [vmem:[%s2 + $0xb58] sm:$0xff] %vm4025, %v3711
  %4390 = vst.msk [vmem:[%s2 + $0xb60] sm:$0xff] %vm4025, %v3716
  %4391 = vst.msk [vmem:[%s2 + $0xb68] sm:$0xff] %vm4025, %v3719
  %4392 = vst.msk [vmem:[%s2 + $0xb70] sm:$0xff] %vm4025, %v3724
  %4393 = vst.msk [vmem:[%s2 + $0xb78] sm:$0xff] %vm4025, %v3727
  %4394 = vst.msk [vmem:[%s2 + $0xb80] sm:$0xff] %vm4025, %v3732
  %4395 = vst.msk [vmem:[%s2 + $0xb88] sm:$0xff] %vm4025, %v3735
  %4396 = vst.msk [vmem:[%s2 + $0xb90] sm:$0xff] %vm4025, %v3740
  %4397 = vst.msk [vmem:[%s2 + $0xb98] sm:$0xff] %vm4025, %v3743
  %4398 = vst.msk [vmem:[%s2 + $0xba0] sm:$0xff] %vm4025, %v3748
  %4399 = vst.msk [vmem:[%s2 + $0xba8] sm:$0xff] %vm4025, %v3751
  %4400 = vst.msk [vmem:[%s2 + $0xbb0] sm:$0xff] %vm4025, %v3756
  %4401 = vst.msk [vmem:[%s2 + $0xbb8] sm:$0xff] %vm4025, %v3759
  %4402 = vst.msk [vmem:[%s2 + $0xbc0] sm:$0xff] %vm4025, %v3764
  %4403 = vst.msk [vmem:[%s2 + $0xbc8] sm:$0xff] %vm4025, %v3767
  %4404 = vst.msk [vmem:[%s2 + $0xbd0] sm:$0xff] %vm4025, %v3772
  %4405 = vst.msk [vmem:[%s2 + $0xbd8] sm:$0xff] %vm4025, %v3775
  %4406 = vst.msk [vmem:[%s2 + $0xbe0] sm:$0xff] %vm4025, %v3780
  %4407 = vst.msk [vmem:[%s2 + $0xbe8] sm:$0xff] %vm4025, %v3783
  %4408 = vst.msk [vmem:[%s2 + $0xbf0] sm:$0xff] %vm4025, %v3788
  %4409 = vst.msk [vmem:[%s2 + $0xbf8] sm:$0xff] %vm4025, %v3791
  %4410 = vst.msk [vmem:[%s2 + $0xc00] sm:$0xff] %vm4025, %v3796
  %4411 = vst.msk [vmem:[%s2 + $0xc08] sm:$0xff] %vm4025, %v3799
  %4412 = vst.msk [vmem:[%s2 + $0xc10] sm:$0xff] %vm4025, %v3804
  %4413 = vst.msk [vmem:[%s2 + $0xc18] sm:$0xff] %vm4025, %v3807
  %4414 = vst.msk [vmem:[%s2 + $0xc20] sm:$0xff] %vm4025, %v3812
  %4415 = vst.msk [vmem:[%s2 + $0xc28] sm:$0xff] %vm4025, %v3815
  %4416 = vst.msk [vmem:[%s2 + $0xc30] sm:$0xff] %vm4025, %v3820
  %4417 = vst.msk [vmem:[%s2 + $0xc38] sm:$0xff] %vm4025, %v3823
  %4418 = vst.msk [vmem:[%s2 + $0xc40] sm:$0xff] %vm4025, %v3828
  %4419 = vst.msk [vmem:[%s2 + $0xc48] sm:$0xff] %vm4025, %v3831
  %4420 = vst.msk [vmem:[%s2 + $0xc50] sm:$0xff] %vm4025, %v3836
  %4421 = vst.msk [vmem:[%s2 + $0xc58] sm:$0xff] %vm4025, %v3839
  %4422 = vst.msk [vmem:[%s2 + $0xc60] sm:$0xff] %vm4025, %v3844
  %4423 = vst.msk [vmem:[%s2 + $0xc68] sm:$0xff] %vm4025, %v3847
  %4424 = vst.msk [vmem:[%s2 + $0xc70] sm:$0xff] %vm4025, %v3852
  %4425 = vst.msk [vmem:[%s2 + $0xc78] sm:$0xff] %vm4025, %v3855
  %4426 = vst.msk [vmem:[%s2 + $0xc80] sm:$0xff] %vm4025, %v3860
  %4427 = vst.msk [vmem:[%s2 + $0xc88] sm:$0xff] %vm4025, %v3863
  %4428 = vst.msk [vmem:[%s2 + $0xc90] sm:$0xff] %vm4025, %v3868
  %4429 = vst.msk [vmem:[%s2 + $0xc98] sm:$0xff] %vm4025, %v3871
  %4430 = vst.msk [vmem:[%s2 + $0xca0] sm:$0xff] %vm4025, %v3876
  %4431 = vst.msk [vmem:[%s2 + $0xca8] sm:$0xff] %vm4025, %v3879
  %4432 = vst.msk [vmem:[%s2 + $0xcb0] sm:$0xff] %vm4025, %v3884
  %4433 = vst.msk [vmem:[%s2 + $0xcb8] sm:$0xff] %vm4025, %v3887
  %4434 = vst.msk [vmem:[%s2 + $0xcc0] sm:$0xff] %vm4025, %v3892
  %4435 = vst.msk [vmem:[%s2 + $0xcc8] sm:$0xff] %vm4025, %v3895
  %4436 = vst.msk [vmem:[%s2 + $0xcd0] sm:$0xff] %vm4025, %v3900
  %4437 = vst.msk [vmem:[%s2 + $0xcd8] sm:$0xff] %vm4025, %v3903
  %4438 = vst.msk [vmem:[%s2 + $0xce0] sm:$0xff] %vm4025, %v3908
  %4439 = vst.msk [vmem:[%s2 + $0xce8] sm:$0xff] %vm4025, %v3911
  %4440 = vst.msk [vmem:[%s2 + $0xcf0] sm:$0xff] %vm4025, %v3916
  %4441 = vst.msk [vmem:[%s2 + $0xcf8] sm:$0xff] %vm4025, %v3919
  %4442 = vst.msk [vmem:[%s2 + $0xd00] sm:$0xff] %vm4025, %v3924
  %4443 = vst.msk [vmem:[%s2 + $0xd08] sm:$0xff] %vm4025, %v3927
  %4444 = vst.msk [vmem:[%s2 + $0xd10] sm:$0xff] %vm4025, %v3932
  %4445 = vst.msk [vmem:[%s2 + $0xd18] sm:$0xff] %vm4025, %v3935
  %4446 = vst.msk [vmem:[%s2 + $0xd20] sm:$0xff] %vm4025, %v3940
  %4447 = vst.msk [vmem:[%s2 + $0xd28] sm:$0xff] %vm4025, %v3943
  %4448 = vst.msk [vmem:[%s2 + $0xd30] sm:$0xff] %vm4025, %v3948
  %4449 = vst.msk [vmem:[%s2 + $0xd38] sm:$0xff] %vm4025, %v3951
  %4450 = vst.msk [vmem:[%s2 + $0xd40] sm:$0xff] %vm4025, %v3956
  %4451 = vst.msk [vmem:[%s2 + $0xd48] sm:$0xff] %vm4025, %v3959
  %4452 = vst.msk [vmem:[%s2 + $0xd50] sm:$0xff] %vm4025, %v3964
  %4453 = vst.msk [vmem:[%s2 + $0xd58] sm:$0xff] %vm4025, %v3967
  %4454 = vst.msk [vmem:[%s2 + $0xd60] sm:$0xff] %vm4025, %v3972
  %4455 = vst.msk [vmem:[%s2 + $0xd68] sm:$0xff] %vm4025, %v3975
  %4456 = vst.msk [vmem:[%s2 + $0xd70] sm:$0xff] %vm4025, %v3980
  %4457 = vst.msk [vmem:[%s2 + $0xd78] sm:$0xff] %vm4025, %v3983
  %4458 = vst.msk [vmem:[%s2 + $0xd80] sm:$0xff] %vm4025, %v3988
  %4459 = vst.msk [vmem:[%s2 + $0xd88] sm:$0xff] %vm4025, %v3991
  %4460 = vst.msk [vmem:[%s2 + $0xd90] sm:$0xff] %vm4025, %v3996
  %4461 = vst.msk [vmem:[%s2 + $0xd98] sm:$0xff] %vm4025, %v3999
  %4462 = vst.msk [vmem:[%s2 + $0xda0] sm:$0xff] %vm4025, %v4004
  %4463 = vst.msk [vmem:[%s2 + $0xda8] sm:$0xff] %vm4025, %v4007
  %4464 = vst.msk [vmem:[%s2 + $0xdb0] sm:$0xff] %vm4025, %v4012
  %4465 = vst.msk [vmem:[%s2 + $0xdb8] sm:$0xff] %vm4025, %v4015
  %4466 = vst.msk [vmem:[%s2 + $0xdc0] sm:$0xff] %vm4025, %v4020
  // Predicated region
  $region10: #{cnn_decoder_forward.7} parent=0 // pred_check
    _
  $region11: #{cnn_decoder_forward.7} parent=0 // pred_check_branch
    %4468 = sbr.rel (0) target = $region13
  $region12: #{cnn_decoder_forward.7} parent=0 // pred_region
    _
  $region13: #{cnn_decoder_forward.7} parent=0 // pred_fallthru
    _
  // Predicated region
  $region14: #{cnn_decoder_forward.7} parent=0 // pred_check
    _
  $region15: #{cnn_decoder_forward.7} parent=0 // pred_check_branch
    %4470 = sbr.rel (0) target = $region17
  $region16: #{cnn_decoder_forward.7} parent=0 // pred_region
    _
  $region17: #{cnn_decoder_forward.7} parent=0 // pred_fallthru
    _

</llo_original>
